<compile_context>
chip_gen: v7x
topology: tpu7x:2x2x1
jax: 0.10.0
libtpu: 0.0.40
codegen_flags: <defaults>
</compile_context>

<pallas_src>
import functools

import jax
import jax.numpy as jnp
from jax.experimental import pallas as pl
from jax.experimental.pallas import tpu as pltpu


_LANE_ALIGN = 256   # batch tile alignment: multiple of 2*128 so both sub-chunks stay lane aligned
_N_CHUNKS = 2       # independent row sub-chunks interleaved per tile (MXU/EUP overlap)


def _round_up(x, m):
    return ((x + m - 1) // m) * m


def _chip_generation():
    """Best-effort TPU generation from device_kind; 0 if unknown."""
    try:
        kind = jax.devices()[0].device_kind.lower()
    except Exception:
        return 0
    for g in (7, 6, 5, 4, 3, 2):
        if "v{}".format(g) in kind:
            return g
    return 0


def _activation_dtype():
    # v6e/v7x have bf16 VPU/EUP -> run the sigmoid exp at bf16 (~2x element rate).
    # v5e (no bf16 VPU/EUP) and unknown chips keep f32 element-wise math.
    return jnp.bfloat16 if _chip_generation() >= 6 else jnp.float32


def _vmem_estimate_bytes(tile_b, in_dim, layer_dims):
    """Rough per-TensorCore VMEM footprint for tile / limit selection."""
    w_bytes = sum(fi * fo * 2 for fi, fo in layer_dims)      # resident bf16 weights (single buffered)
    b_bytes = sum(fo * 4 for _, fo in layer_dims) + 256      # resident f32 biases
    x_bytes = 2 * tile_b * in_dim * 2                        # bf16 input tile, double buffered
    o_bytes = 2 * tile_b * 4                                 # f32 output tile, double buffered
    widest = max(fo for _, fo in layer_dims)
    act_bytes = tile_b * widest * 8                          # live f32 z + bf16 h activations
    return w_bytes + b_bytes + x_bytes + o_bytes + act_bytes + (2 << 20)


def _select_config(batch, in_dim, layer_dims):
    """Generation-aware batch tile and VMEM limit."""
    gen = _chip_generation()
    if gen >= 7:              # v7x: 64 MiB VMEM per TensorCore -> leave headroom
        vmem_budget = 48 << 20
        max_tile = 512
    elif gen in (5, 6):       # v5e / v6e: 128 MiB physical VMEM -> big tiles
        vmem_budget = 96 << 20
        max_tile = 1024
    else:                     # unknown / older chips: conservative
        vmem_budget = 32 << 20
        max_tile = 512

    # Adaptive tile: don't pay 512+ rows of MXU/EUP work for a tiny batch.
    tile_b = min(max_tile, _round_up(max(batch, 1), _LANE_ALIGN))
    while tile_b > _LANE_ALIGN and _vmem_estimate_bytes(tile_b, in_dim, layer_dims) > vmem_budget:
        tile_b -= _LANE_ALIGN

    est = _vmem_estimate_bytes(tile_b, in_dim, layer_dims)
    vmem_limit = int(min(vmem_budget, max(32 << 20, 2 * est)))
    # TODO(synk): if the bf16 weights alone exceed the budget (window*n >~ 600 on v7x),
    # layers 2-3 (4w x 8w, 8w x 4w) should be K-tiled via pltpu.emit_pipeline instead
    # of kept fully resident.
    return tile_b, vmem_limit


def _mlp_kernel(*refs, act_dtype, n_chunks):
    """refs = (x, w1, b1, ..., w9, b9, w_out_T, b_out_smem, out)."""
    x_ref = refs[0]           # (tile_b, in_dim) bf16
    out_ref = refs[-1]        # (1, 1, tile_b) f32, lane-dense
    b_out_ref = refs[-2]      # (3,) f32 in SMEM
    w_out_ref = refs[-3]      # (3, K) bf16 (PyTorch (out, in) layout)
    hidden = refs[1:-3]       # (w, b) * 9; w bf16 (in, out); b f32 (1, out)

    tile_b = x_ref.shape[0]
    chunk = tile_b // n_chunks

    # Two independent row sub-chunks walked through the layer chain together, giving
    # the scheduler independent MXU and EUP work to overlap.
    hs = [x_ref[c * chunk:(c + 1) * chunk, :] for c in range(n_chunks)]

    n_layers = len(hidden) // 2
    for layer in range(n_layers):
        w = hidden[2 * layer][...]
        b = hidden[2 * layer + 1][...]
        nxt = []
        for h in hs:
            z = jnp.dot(h, w, preferred_element_type=jnp.float32) + b       # MXU, f32 acc
            e = jnp.exp(-(z.astype(act_dtype)))                             # EUP exp (bf16 on v6e/v7x)
            s = pl.reciprocal(1.0 + e.astype(jnp.float32), approx=True)     # EUP vrcp -> sigmoid
            nxt.append(s.astype(jnp.bfloat16))                              # bf16 for next matmul
        hs = nxt

    # Output layer computed transposed: logits_t = W_out(3,K) @ h^T -> (3, chunk), so the
    # class axis lands on sublanes and the batch axis is lane-dense for the store.
    # TODO(synk): verify via pl.lower_as_mlir that this contraction does not materialize an
    # XLU transpose of h; K = w/4 is the smallest layer width so any such cost is bounded.
    for c, h in enumerate(hs):
        logits_t = jax.lax.dot_general(
            w_out_ref[...], h,
            dimension_numbers=(((1,), (1,)), ((), ())),
            preferred_element_type=jnp.float32)                             # (3, chunk)
        l0 = logits_t[0:1, :] + b_out_ref[0]
        l1 = logits_t[1:2, :] + b_out_ref[1]
        l2 = logits_t[2:3, :] + b_out_ref[2]
        m = jnp.maximum(jnp.maximum(l0, l1), l2)
        e0 = jnp.exp(l0 - m)
        e1 = jnp.exp(l1 - m)
        e2 = jnp.exp(l2 - m)
        p_last = e2 * pl.reciprocal(e0 + e1 + e2, approx=True)              # (1, chunk)
        out_ref[:, :, c * chunk:(c + 1) * chunk] = (
            p_last.reshape(1, 1, chunk).astype(out_ref.dtype))


def _build_call(tile_b, in_dim, n_tiles, hidden_ws, hidden_bs, w_out_t,
                act_dtype, vmem_limit, single_buffer_weights):
    kernel = functools.partial(_mlp_kernel, act_dtype=act_dtype, n_chunks=_N_CHUNKS)

    def const_spec(shape):
        if single_buffer_weights:
            # Resident operands: constant index_map, so a single VMEM buffer suffices
            # (default double-buffering would only double the resident weight footprint).
            return pl.BlockSpec(shape, lambda i: (0, 0), pipeline_mode=pl.Buffered(1))
        return pl.BlockSpec(shape, lambda i: (0, 0))

    in_specs = [pl.BlockSpec((tile_b, in_dim), lambda i: (i, 0))]   # streamed bf16 batch tiles
    for W, b in zip(hidden_ws, hidden_bs):
        in_specs.append(const_spec(W.shape))
        in_specs.append(const_spec(b.shape))
    in_specs.append(const_spec(w_out_t.shape))
    in_specs.append(pl.BlockSpec(memory_space=pltpu.MemorySpace.SMEM))  # (3,) f32 scalars

    return pl.pallas_call(
        kernel,
        out_shape=jax.ShapeDtypeStruct((n_tiles, 1, tile_b), jnp.float32),
        grid=(n_tiles,),
        in_specs=in_specs,
        out_specs=pl.BlockSpec((1, 1, tile_b), lambda i: (i, 0, 0)),
        compiler_params=pltpu.CompilerParams(
            dimension_semantics=("parallel",),
            vmem_limit_bytes=vmem_limit),
    )


def large_network_forward(x, prepared):
    """x: (B, window*n) float32.  prepared from prepare_params().
    Returns (B,) float32 = softmax(OutputLayer(...))[:, -1]."""
    hidden_ws, hidden_bs, w_out_t, b_out = prepared
    B, in_dim = x.shape
    layer_dims = [tuple(W.shape) for W in hidden_ws] + [(w_out_t.shape[1], w_out_t.shape[0])]

    tile_b, vmem_limit = _select_config(B, in_dim, layer_dims)
    n_tiles = max(1, -(-B // tile_b))
    padded_b = n_tiles * tile_b

    x_bf16 = x.astype(jnp.bfloat16)                 # stream x as bf16 (halves HBM read + VMEM)
    if padded_b != B:
        x_bf16 = jnp.pad(x_bf16, ((0, padded_b - B), (0, 0)))   # handle partial last tile

    flat = []
    for W, b in zip(hidden_ws, hidden_bs):
        flat.append(W)
        flat.append(b)
    flat.append(w_out_t)
    flat.append(b_out)

    # Optimized config first; fall back to the conservative, previously-proven baseline
    # (f32 activations, default buffering) if this Pallas build rejects it at lowering.
    attempts = ((_activation_dtype(), True), (jnp.float32, False))
    last_err = None
    for adt, single_buf in attempts:
        try:
            call = _build_call(tile_b, in_dim, n_tiles, hidden_ws, hidden_bs, w_out_t,
                               adt, vmem_limit, single_buf)
            out = call(x_bf16, *flat)
            return out.reshape(-1)[:B]
        except Exception as e:   # lowering/compile rejection of the optimized config
            last_err = e
    raise last_err


def init_params(key, window, n):
    """Deterministic init matching the PyTorch layer shapes.
    Returns list of 10 (W, b): W f32 (in, out), b f32 (out,)."""
    w = window * n
    dims = [
        (w, 4 * w),
        (4 * w, 8 * w),
        (8 * w, 4 * w),
        (4 * w, w // 2),
        (w // 2, w // 2),
        (w // 2, w // 2),
        (w // 2, w // 4),
        (w // 4, w // 4),
        (w // 4, w // 4),
        (w // 4, 3),
    ]
    params = []
    for fan_in, fan_out in dims:
        key, kw, kb = jax.random.split(key, 3)
        bound = 1.0 / (float(fan_in) ** 0.5)
        W = jax.random.uniform(kw, (fan_in, fan_out), jnp.float32, -bound, bound)
        b = jax.random.uniform(kb, (fan_out,), jnp.float32, -bound, bound)
        params.append((W, b))
    return params


def prepare_params(params):
    """Kernel layouts: hidden W bf16 (in,out), hidden b f32 (1,out),
    output W bf16 in PyTorch (out,in)=(3,K) layout, output b f32 (3,)."""
    hidden_ws = [W.astype(jnp.bfloat16) for W, _ in params[:-1]]
    hidden_bs = [b.reshape(1, -1).astype(jnp.float32) for _, b in params[:-1]]
    W_out, b_out = params[-1]
    w_out_t = W_out.T.astype(jnp.bfloat16)
    return hidden_ws, hidden_bs, w_out_t, b_out.astype(jnp.float32)


def reference_forward(x, prepared):
    """Pure-JAX reference with the same bf16 MXU operands / f32 accumulation recipe.
    Kernel additionally uses approx reciprocals (and bf16 exp on v6e/v7x); divergence
    is well below the 1e-2 check tolerance."""
    hidden_ws, hidden_bs, w_out_t, b_out = prepared
    h = x.astype(jnp.bfloat16)
    for W, b in zip(hidden_ws, hidden_bs):
        z = jnp.dot(h, W, preferred_element_type=jnp.float32) + b
        h = jax.nn.sigmoid(z).astype(jnp.bfloat16)
    logits = jnp.dot(h, w_out_t.T, preferred_element_type=jnp.float32) + b_out
    return jax.nn.softmax(logits, axis=-1)[:, -1]


if __name__ == "__main__":
    window, n = 8, 4          # window *= n  ->  input dim 32
    batch = 2

    key = jax.random.PRNGKey(0)
    key, kx = jax.random.split(key)
    x = jax.random.normal(kx, (batch, window * n), jnp.float32)

    params = init_params(key, window, n)
    prepared = prepare_params(params)

    out = large_network_forward(x, prepared)
    out = jax.block_until_ready(out)

    ref = reference_forward(x, prepared)
    assert out.shape == (batch,)
    assert bool(jnp.all(jnp.isfinite(out)))
    assert jnp.allclose(out, ref, atol=1e-2, rtol=1e-2), (out, ref)

    print("KERNEL_OK")
</pallas_src>

<mosaic_0001>
module attributes {stable_mosaic.version = 11 : i64} {
  func.func @_mlp_kernel(%arg0: i32, %arg1: memref<256x32xbf16, #tpu.memory_space<vmem>>, %arg2: memref<32x128xbf16, #tpu.memory_space<vmem>>, %arg3: memref<1x128xf32, #tpu.memory_space<vmem>>, %arg4: memref<128x256xbf16, #tpu.memory_space<vmem>>, %arg5: memref<1x256xf32, #tpu.memory_space<vmem>>, %arg6: memref<256x128xbf16, #tpu.memory_space<vmem>>, %arg7: memref<1x128xf32, #tpu.memory_space<vmem>>, %arg8: memref<128x16xbf16, #tpu.memory_space<vmem>>, %arg9: memref<1x16xf32, #tpu.memory_space<vmem>>, %arg10: memref<16x16xbf16, #tpu.memory_space<vmem>>, %arg11: memref<1x16xf32, #tpu.memory_space<vmem>>, %arg12: memref<16x16xbf16, #tpu.memory_space<vmem>>, %arg13: memref<1x16xf32, #tpu.memory_space<vmem>>, %arg14: memref<16x8xbf16, #tpu.memory_space<vmem>>, %arg15: memref<1x8xf32, #tpu.memory_space<vmem>>, %arg16: memref<8x8xbf16, #tpu.memory_space<vmem>>, %arg17: memref<1x8xf32, #tpu.memory_space<vmem>>, %arg18: memref<8x8xbf16, #tpu.memory_space<vmem>>, %arg19: memref<1x8xf32, #tpu.memory_space<vmem>>, %arg20: memref<3x8xbf16, #tpu.memory_space<vmem>>, %arg21: memref<3xf32, #tpu.memory_space<smem>>, %arg22: memref<1x1x256xf32, #tpu.memory_space<vmem>>) attributes {dimension_semantics = [#tpu.dimension_semantics<parallel>], iteration_bounds = array<i64: 1>, scalar_prefetch = 0 : i64, scratch_operands = 0 : i64, tpu.core_type = #tpu.core_type<tc>, window_params = [{transform_indices = @transform_0, window_bounds = array<i64: 256, 32>}, {pipeline_mode = #tpu.pipeline_mode<synchronous>, transform_indices = @transform_1, window_bounds = array<i64: 32, 128>}, {pipeline_mode = #tpu.pipeline_mode<synchronous>, transform_indices = @transform_2, window_bounds = array<i64: 1, 128>}, {pipeline_mode = #tpu.pipeline_mode<synchronous>, transform_indices = @transform_3, window_bounds = array<i64: 128, 256>}, {pipeline_mode = #tpu.pipeline_mode<synchronous>, transform_indices = @transform_4, window_bounds = array<i64: 1, 256>}, {pipeline_mode = #tpu.pipeline_mode<synchronous>, transform_indices = @transform_5, window_bounds = array<i64: 256, 128>}, {pipeline_mode = #tpu.pipeline_mode<synchronous>, transform_indices = @transform_6, window_bounds = array<i64: 1, 128>}, {pipeline_mode = #tpu.pipeline_mode<synchronous>, transform_indices = @transform_7, window_bounds = array<i64: 128, 16>}, {pipeline_mode = #tpu.pipeline_mode<synchronous>, transform_indices = @transform_8, window_bounds = array<i64: 1, 16>}, {pipeline_mode = #tpu.pipeline_mode<synchronous>, transform_indices = @transform_9, window_bounds = array<i64: 16, 16>}, {pipeline_mode = #tpu.pipeline_mode<synchronous>, transform_indices = @transform_10, window_bounds = array<i64: 1, 16>}, {pipeline_mode = #tpu.pipeline_mode<synchronous>, transform_indices = @transform_11, window_bounds = array<i64: 16, 16>}, {pipeline_mode = #tpu.pipeline_mode<synchronous>, transform_indices = @transform_12, window_bounds = array<i64: 1, 16>}, {pipeline_mode = #tpu.pipeline_mode<synchronous>, transform_indices = @transform_13, window_bounds = array<i64: 16, 8>}, {pipeline_mode = #tpu.pipeline_mode<synchronous>, transform_indices = @transform_14, window_bounds = array<i64: 1, 8>}, {pipeline_mode = #tpu.pipeline_mode<synchronous>, transform_indices = @transform_15, window_bounds = array<i64: 8, 8>}, {pipeline_mode = #tpu.pipeline_mode<synchronous>, transform_indices = @transform_16, window_bounds = array<i64: 1, 8>}, {pipeline_mode = #tpu.pipeline_mode<synchronous>, transform_indices = @transform_17, window_bounds = array<i64: 8, 8>}, {pipeline_mode = #tpu.pipeline_mode<synchronous>, transform_indices = @transform_18, window_bounds = array<i64: 1, 8>}, {pipeline_mode = #tpu.pipeline_mode<synchronous>, transform_indices = @transform_19, window_bounds = array<i64: 3, 8>}, {transform_indices = @transform_20, window_bounds = array<i64: 3>}, {transform_indices = @transform_21, window_bounds = array<i64: 1, 1, 256>}]} {
    %c0 = arith.constant 0 : index
    %c0_0 = arith.constant 0 : index
    %0 = vector.load %arg1[%c0, %c0_0] : memref<256x32xbf16, #tpu.memory_space<vmem>>, vector<128x32xbf16>
    %c128 = arith.constant 128 : index
    %c0_1 = arith.constant 0 : index
    %1 = vector.load %arg1[%c128, %c0_1] : memref<256x32xbf16, #tpu.memory_space<vmem>>, vector<128x32xbf16>
    %c0_2 = arith.constant 0 : index
    %c0_3 = arith.constant 0 : index
    %2 = vector.load %arg2[%c0_2, %c0_3] : memref<32x128xbf16, #tpu.memory_space<vmem>>, vector<32x128xbf16>
    %c0_4 = arith.constant 0 : index
    %c0_5 = arith.constant 0 : index
    %3 = vector.load %arg3[%c0_4, %c0_5] : memref<1x128xf32, #tpu.memory_space<vmem>>, vector<1x128xf32>
    %cst = arith.constant dense<0.000000e+00> : vector<128x128xf32>
    %4 = tpu.matmul %0, %2, %cst {dimension_numbers = #tpu.dot_dimension_numbers<[1], [0], [0], [1], [0, 0, 1, 1], [], []>} : vector<128x32xbf16>, vector<32x128xbf16>, vector<128x128xf32> -> vector<128x128xf32>
    %5 = vector.broadcast %3 : vector<1x128xf32> to vector<128x128xf32>
    %6 = arith.addf %4, %5 : vector<128x128xf32>
    %cst_6 = arith.constant 0.000000e+00 : f32
    %7 = vector.broadcast %cst_6 : f32 to vector<128x128xf32>
    %8 = arith.subf %7, %6 : vector<128x128xf32>
    %9 = math.exp %8 : vector<128x128xf32>
    %cst_7 = arith.constant 1.000000e+00 : f32
    %10 = vector.broadcast %cst_7 : f32 to vector<128x128xf32>
    %11 = arith.addf %10, %9 : vector<128x128xf32>
    %12 = tpu.reciprocal %11 {approx = true} : vector<128x128xf32> -> vector<128x128xf32>
    %13 = arith.truncf %12 : vector<128x128xf32> to vector<128x128xbf16>
    %cst_8 = arith.constant dense<0.000000e+00> : vector<128x128xf32>
    %14 = tpu.matmul %1, %2, %cst_8 {dimension_numbers = #tpu.dot_dimension_numbers<[1], [0], [0], [1], [0, 0, 1, 1], [], []>} : vector<128x32xbf16>, vector<32x128xbf16>, vector<128x128xf32> -> vector<128x128xf32>
    %15 = vector.broadcast %3 : vector<1x128xf32> to vector<128x128xf32>
    %16 = arith.addf %14, %15 : vector<128x128xf32>
    %cst_9 = arith.constant 0.000000e+00 : f32
    %17 = vector.broadcast %cst_9 : f32 to vector<128x128xf32>
    %18 = arith.subf %17, %16 : vector<128x128xf32>
    %19 = math.exp %18 : vector<128x128xf32>
    %cst_10 = arith.constant 1.000000e+00 : f32
    %20 = vector.broadcast %cst_10 : f32 to vector<128x128xf32>
    %21 = arith.addf %20, %19 : vector<128x128xf32>
    %22 = tpu.reciprocal %21 {approx = true} : vector<128x128xf32> -> vector<128x128xf32>
    %23 = arith.truncf %22 : vector<128x128xf32> to vector<128x128xbf16>
    %c0_11 = arith.constant 0 : index
    %c0_12 = arith.constant 0 : index
    %24 = vector.load %arg4[%c0_11, %c0_12] : memref<128x256xbf16, #tpu.memory_space<vmem>>, vector<128x256xbf16>
    %c0_13 = arith.constant 0 : index
    %c0_14 = arith.constant 0 : index
    %25 = vector.load %arg5[%c0_13, %c0_14] : memref<1x256xf32, #tpu.memory_space<vmem>>, vector<1x256xf32>
    %cst_15 = arith.constant dense<0.000000e+00> : vector<128x256xf32>
    %26 = tpu.matmul %13, %24, %cst_15 {dimension_numbers = #tpu.dot_dimension_numbers<[1], [0], [0], [1], [0, 0, 1, 1], [], []>} : vector<128x128xbf16>, vector<128x256xbf16>, vector<128x256xf32> -> vector<128x256xf32>
    %27 = vector.broadcast %25 : vector<1x256xf32> to vector<128x256xf32>
    %28 = arith.addf %26, %27 : vector<128x256xf32>
    %cst_16 = arith.constant 0.000000e+00 : f32
    %29 = vector.broadcast %cst_16 : f32 to vector<128x256xf32>
    %30 = arith.subf %29, %28 : vector<128x256xf32>
    %31 = math.exp %30 : vector<128x256xf32>
    %cst_17 = arith.constant 1.000000e+00 : f32
    %32 = vector.broadcast %cst_17 : f32 to vector<128x256xf32>
    %33 = arith.addf %32, %31 : vector<128x256xf32>
    %34 = tpu.reciprocal %33 {approx = true} : vector<128x256xf32> -> vector<128x256xf32>
    %35 = arith.truncf %34 : vector<128x256xf32> to vector<128x256xbf16>
    %cst_18 = arith.constant dense<0.000000e+00> : vector<128x256xf32>
    %36 = tpu.matmul %23, %24, %cst_18 {dimension_numbers = #tpu.dot_dimension_numbers<[1], [0], [0], [1], [0, 0, 1, 1], [], []>} : vector<128x128xbf16>, vector<128x256xbf16>, vector<128x256xf32> -> vector<128x256xf32>
    %37 = vector.broadcast %25 : vector<1x256xf32> to vector<128x256xf32>
    %38 = arith.addf %36, %37 : vector<128x256xf32>
    %cst_19 = arith.constant 0.000000e+00 : f32
    %39 = vector.broadcast %cst_19 : f32 to vector<128x256xf32>
    %40 = arith.subf %39, %38 : vector<128x256xf32>
    %41 = math.exp %40 : vector<128x256xf32>
    %cst_20 = arith.constant 1.000000e+00 : f32
    %42 = vector.broadcast %cst_20 : f32 to vector<128x256xf32>
    %43 = arith.addf %42, %41 : vector<128x256xf32>
    %44 = tpu.reciprocal %43 {approx = true} : vector<128x256xf32> -> vector<128x256xf32>
    %45 = arith.truncf %44 : vector<128x256xf32> to vector<128x256xbf16>
    %c0_21 = arith.constant 0 : index
    %c0_22 = arith.constant 0 : index
    %46 = vector.load %arg6[%c0_21, %c0_22] : memref<256x128xbf16, #tpu.memory_space<vmem>>, vector<256x128xbf16>
    %c0_23 = arith.constant 0 : index
    %c0_24 = arith.constant 0 : index
    %47 = vector.load %arg7[%c0_23, %c0_24] : memref<1x128xf32, #tpu.memory_space<vmem>>, vector<1x128xf32>
    %cst_25 = arith.constant dense<0.000000e+00> : vector<128x128xf32>
    %48 = tpu.matmul %35, %46, %cst_25 {dimension_numbers = #tpu.dot_dimension_numbers<[1], [0], [0], [1], [0, 0, 1, 1], [], []>} : vector<128x256xbf16>, vector<256x128xbf16>, vector<128x128xf32> -> vector<128x128xf32>
    %49 = vector.broadcast %47 : vector<1x128xf32> to vector<128x128xf32>
    %50 = arith.addf %48, %49 : vector<128x128xf32>
    %cst_26 = arith.constant 0.000000e+00 : f32
    %51 = vector.broadcast %cst_26 : f32 to vector<128x128xf32>
    %52 = arith.subf %51, %50 : vector<128x128xf32>
    %53 = math.exp %52 : vector<128x128xf32>
    %cst_27 = arith.constant 1.000000e+00 : f32
    %54 = vector.broadcast %cst_27 : f32 to vector<128x128xf32>
    %55 = arith.addf %54, %53 : vector<128x128xf32>
    %56 = tpu.reciprocal %55 {approx = true} : vector<128x128xf32> -> vector<128x128xf32>
    %57 = arith.truncf %56 : vector<128x128xf32> to vector<128x128xbf16>
    %cst_28 = arith.constant dense<0.000000e+00> : vector<128x128xf32>
    %58 = tpu.matmul %45, %46, %cst_28 {dimension_numbers = #tpu.dot_dimension_numbers<[1], [0], [0], [1], [0, 0, 1, 1], [], []>} : vector<128x256xbf16>, vector<256x128xbf16>, vector<128x128xf32> -> vector<128x128xf32>
    %59 = vector.broadcast %47 : vector<1x128xf32> to vector<128x128xf32>
    %60 = arith.addf %58, %59 : vector<128x128xf32>
    %cst_29 = arith.constant 0.000000e+00 : f32
    %61 = vector.broadcast %cst_29 : f32 to vector<128x128xf32>
    %62 = arith.subf %61, %60 : vector<128x128xf32>
    %63 = math.exp %62 : vector<128x128xf32>
    %cst_30 = arith.constant 1.000000e+00 : f32
    %64 = vector.broadcast %cst_30 : f32 to vector<128x128xf32>
    %65 = arith.addf %64, %63 : vector<128x128xf32>
    %66 = tpu.reciprocal %65 {approx = true} : vector<128x128xf32> -> vector<128x128xf32>
    %67 = arith.truncf %66 : vector<128x128xf32> to vector<128x128xbf16>
    %c0_31 = arith.constant 0 : index
    %c0_32 = arith.constant 0 : index
    %68 = vector.load %arg8[%c0_31, %c0_32] : memref<128x16xbf16, #tpu.memory_space<vmem>>, vector<128x16xbf16>
    %c0_33 = arith.constant 0 : index
    %c0_34 = arith.constant 0 : index
    %69 = vector.load %arg9[%c0_33, %c0_34] : memref<1x16xf32, #tpu.memory_space<vmem>>, vector<1x16xf32>
    %cst_35 = arith.constant dense<0.000000e+00> : vector<128x16xf32>
    %70 = tpu.matmul %57, %68, %cst_35 {dimension_numbers = #tpu.dot_dimension_numbers<[1], [0], [0], [1], [0, 0, 1, 1], [], []>} : vector<128x128xbf16>, vector<128x16xbf16>, vector<128x16xf32> -> vector<128x16xf32>
    %71 = vector.broadcast %69 : vector<1x16xf32> to vector<128x16xf32>
    %72 = arith.addf %70, %71 : vector<128x16xf32>
    %cst_36 = arith.constant 0.000000e+00 : f32
    %73 = vector.broadcast %cst_36 : f32 to vector<128x16xf32>
    %74 = arith.subf %73, %72 : vector<128x16xf32>
    %75 = math.exp %74 : vector<128x16xf32>
    %cst_37 = arith.constant 1.000000e+00 : f32
    %76 = vector.broadcast %cst_37 : f32 to vector<128x16xf32>
    %77 = arith.addf %76, %75 : vector<128x16xf32>
    %78 = tpu.reciprocal %77 {approx = true} : vector<128x16xf32> -> vector<128x16xf32>
    %79 = arith.truncf %78 : vector<128x16xf32> to vector<128x16xbf16>
    %cst_38 = arith.constant dense<0.000000e+00> : vector<128x16xf32>
    %80 = tpu.matmul %67, %68, %cst_38 {dimension_numbers = #tpu.dot_dimension_numbers<[1], [0], [0], [1], [0, 0, 1, 1], [], []>} : vector<128x128xbf16>, vector<128x16xbf16>, vector<128x16xf32> -> vector<128x16xf32>
    %81 = vector.broadcast %69 : vector<1x16xf32> to vector<128x16xf32>
    %82 = arith.addf %80, %81 : vector<128x16xf32>
    %cst_39 = arith.constant 0.000000e+00 : f32
    %83 = vector.broadcast %cst_39 : f32 to vector<128x16xf32>
    %84 = arith.subf %83, %82 : vector<128x16xf32>
    %85 = math.exp %84 : vector<128x16xf32>
    %cst_40 = arith.constant 1.000000e+00 : f32
    %86 = vector.broadcast %cst_40 : f32 to vector<128x16xf32>
    %87 = arith.addf %86, %85 : vector<128x16xf32>
    %88 = tpu.reciprocal %87 {approx = true} : vector<128x16xf32> -> vector<128x16xf32>
    %89 = arith.truncf %88 : vector<128x16xf32> to vector<128x16xbf16>
    %c0_41 = arith.constant 0 : index
    %c0_42 = arith.constant 0 : index
    %90 = vector.load %arg10[%c0_41, %c0_42] : memref<16x16xbf16, #tpu.memory_space<vmem>>, vector<16x16xbf16>
    %c0_43 = arith.constant 0 : index
    %c0_44 = arith.constant 0 : index
    %91 = vector.load %arg11[%c0_43, %c0_44] : memref<1x16xf32, #tpu.memory_space<vmem>>, vector<1x16xf32>
    %cst_45 = arith.constant dense<0.000000e+00> : vector<128x16xf32>
    %92 = tpu.matmul %79, %90, %cst_45 {dimension_numbers = #tpu.dot_dimension_numbers<[1], [0], [0], [1], [0, 0, 1, 1], [], []>} : vector<128x16xbf16>, vector<16x16xbf16>, vector<128x16xf32> -> vector<128x16xf32>
    %93 = vector.broadcast %91 : vector<1x16xf32> to vector<128x16xf32>
    %94 = arith.addf %92, %93 : vector<128x16xf32>
    %cst_46 = arith.constant 0.000000e+00 : f32
    %95 = vector.broadcast %cst_46 : f32 to vector<128x16xf32>
    %96 = arith.subf %95, %94 : vector<128x16xf32>
    %97 = math.exp %96 : vector<128x16xf32>
    %cst_47 = arith.constant 1.000000e+00 : f32
    %98 = vector.broadcast %cst_47 : f32 to vector<128x16xf32>
    %99 = arith.addf %98, %97 : vector<128x16xf32>
    %100 = tpu.reciprocal %99 {approx = true} : vector<128x16xf32> -> vector<128x16xf32>
    %101 = arith.truncf %100 : vector<128x16xf32> to vector<128x16xbf16>
    %cst_48 = arith.constant dense<0.000000e+00> : vector<128x16xf32>
    %102 = tpu.matmul %89, %90, %cst_48 {dimension_numbers = #tpu.dot_dimension_numbers<[1], [0], [0], [1], [0, 0, 1, 1], [], []>} : vector<128x16xbf16>, vector<16x16xbf16>, vector<128x16xf32> -> vector<128x16xf32>
    %103 = vector.broadcast %91 : vector<1x16xf32> to vector<128x16xf32>
    %104 = arith.addf %102, %103 : vector<128x16xf32>
    %cst_49 = arith.constant 0.000000e+00 : f32
    %105 = vector.broadcast %cst_49 : f32 to vector<128x16xf32>
    %106 = arith.subf %105, %104 : vector<128x16xf32>
    %107 = math.exp %106 : vector<128x16xf32>
    %cst_50 = arith.constant 1.000000e+00 : f32
    %108 = vector.broadcast %cst_50 : f32 to vector<128x16xf32>
    %109 = arith.addf %108, %107 : vector<128x16xf32>
    %110 = tpu.reciprocal %109 {approx = true} : vector<128x16xf32> -> vector<128x16xf32>
    %111 = arith.truncf %110 : vector<128x16xf32> to vector<128x16xbf16>
    %c0_51 = arith.constant 0 : index
    %c0_52 = arith.constant 0 : index
    %112 = vector.load %arg12[%c0_51, %c0_52] : memref<16x16xbf16, #tpu.memory_space<vmem>>, vector<16x16xbf16>
    %c0_53 = arith.constant 0 : index
    %c0_54 = arith.constant 0 : index
    %113 = vector.load %arg13[%c0_53, %c0_54] : memref<1x16xf32, #tpu.memory_space<vmem>>, vector<1x16xf32>
    %cst_55 = arith.constant dense<0.000000e+00> : vector<128x16xf32>
    %114 = tpu.matmul %101, %112, %cst_55 {dimension_numbers = #tpu.dot_dimension_numbers<[1], [0], [0], [1], [0, 0, 1, 1], [], []>} : vector<128x16xbf16>, vector<16x16xbf16>, vector<128x16xf32> -> vector<128x16xf32>
    %115 = vector.broadcast %113 : vector<1x16xf32> to vector<128x16xf32>
    %116 = arith.addf %114, %115 : vector<128x16xf32>
    %cst_56 = arith.constant 0.000000e+00 : f32
    %117 = vector.broadcast %cst_56 : f32 to vector<128x16xf32>
    %118 = arith.subf %117, %116 : vector<128x16xf32>
    %119 = math.exp %118 : vector<128x16xf32>
    %cst_57 = arith.constant 1.000000e+00 : f32
    %120 = vector.broadcast %cst_57 : f32 to vector<128x16xf32>
    %121 = arith.addf %120, %119 : vector<128x16xf32>
    %122 = tpu.reciprocal %121 {approx = true} : vector<128x16xf32> -> vector<128x16xf32>
    %123 = arith.truncf %122 : vector<128x16xf32> to vector<128x16xbf16>
    %cst_58 = arith.constant dense<0.000000e+00> : vector<128x16xf32>
    %124 = tpu.matmul %111, %112, %cst_58 {dimension_numbers = #tpu.dot_dimension_numbers<[1], [0], [0], [1], [0, 0, 1, 1], [], []>} : vector<128x16xbf16>, vector<16x16xbf16>, vector<128x16xf32> -> vector<128x16xf32>
    %125 = vector.broadcast %113 : vector<1x16xf32> to vector<128x16xf32>
    %126 = arith.addf %124, %125 : vector<128x16xf32>
    %cst_59 = arith.constant 0.000000e+00 : f32
    %127 = vector.broadcast %cst_59 : f32 to vector<128x16xf32>
    %128 = arith.subf %127, %126 : vector<128x16xf32>
    %129 = math.exp %128 : vector<128x16xf32>
    %cst_60 = arith.constant 1.000000e+00 : f32
    %130 = vector.broadcast %cst_60 : f32 to vector<128x16xf32>
    %131 = arith.addf %130, %129 : vector<128x16xf32>
    %132 = tpu.reciprocal %131 {approx = true} : vector<128x16xf32> -> vector<128x16xf32>
    %133 = arith.truncf %132 : vector<128x16xf32> to vector<128x16xbf16>
    %c0_61 = arith.constant 0 : index
    %c0_62 = arith.constant 0 : index
    %134 = vector.load %arg14[%c0_61, %c0_62] : memref<16x8xbf16, #tpu.memory_space<vmem>>, vector<16x8xbf16>
    %c0_63 = arith.constant 0 : index
    %c0_64 = arith.constant 0 : index
    %135 = vector.load %arg15[%c0_63, %c0_64] : memref<1x8xf32, #tpu.memory_space<vmem>>, vector<1x8xf32>
    %cst_65 = arith.constant dense<0.000000e+00> : vector<128x8xf32>
    %136 = tpu.matmul %123, %134, %cst_65 {dimension_numbers = #tpu.dot_dimension_numbers<[1], [0], [0], [1], [0, 0, 1, 1], [], []>} : vector<128x16xbf16>, vector<16x8xbf16>, vector<128x8xf32> -> vector<128x8xf32>
    %137 = vector.broadcast %135 : vector<1x8xf32> to vector<128x8xf32>
    %138 = arith.addf %136, %137 : vector<128x8xf32>
    %cst_66 = arith.constant 0.000000e+00 : f32
    %139 = vector.broadcast %cst_66 : f32 to vector<128x8xf32>
    %140 = arith.subf %139, %138 : vector<128x8xf32>
    %141 = math.exp %140 : vector<128x8xf32>
    %cst_67 = arith.constant 1.000000e+00 : f32
    %142 = vector.broadcast %cst_67 : f32 to vector<128x8xf32>
    %143 = arith.addf %142, %141 : vector<128x8xf32>
    %144 = tpu.reciprocal %143 {approx = true} : vector<128x8xf32> -> vector<128x8xf32>
    %145 = arith.truncf %144 : vector<128x8xf32> to vector<128x8xbf16>
    %cst_68 = arith.constant dense<0.000000e+00> : vector<128x8xf32>
    %146 = tpu.matmul %133, %134, %cst_68 {dimension_numbers = #tpu.dot_dimension_numbers<[1], [0], [0], [1], [0, 0, 1, 1], [], []>} : vector<128x16xbf16>, vector<16x8xbf16>, vector<128x8xf32> -> vector<128x8xf32>
    %147 = vector.broadcast %135 : vector<1x8xf32> to vector<128x8xf32>
    %148 = arith.addf %146, %147 : vector<128x8xf32>
    %cst_69 = arith.constant 0.000000e+00 : f32
    %149 = vector.broadcast %cst_69 : f32 to vector<128x8xf32>
    %150 = arith.subf %149, %148 : vector<128x8xf32>
    %151 = math.exp %150 : vector<128x8xf32>
    %cst_70 = arith.constant 1.000000e+00 : f32
    %152 = vector.broadcast %cst_70 : f32 to vector<128x8xf32>
    %153 = arith.addf %152, %151 : vector<128x8xf32>
    %154 = tpu.reciprocal %153 {approx = true} : vector<128x8xf32> -> vector<128x8xf32>
    %155 = arith.truncf %154 : vector<128x8xf32> to vector<128x8xbf16>
    %c0_71 = arith.constant 0 : index
    %c0_72 = arith.constant 0 : index
    %156 = vector.load %arg16[%c0_71, %c0_72] : memref<8x8xbf16, #tpu.memory_space<vmem>>, vector<8x8xbf16>
    %c0_73 = arith.constant 0 : index
    %c0_74 = arith.constant 0 : index
    %157 = vector.load %arg17[%c0_73, %c0_74] : memref<1x8xf32, #tpu.memory_space<vmem>>, vector<1x8xf32>
    %cst_75 = arith.constant dense<0.000000e+00> : vector<128x8xf32>
    %158 = tpu.matmul %145, %156, %cst_75 {dimension_numbers = #tpu.dot_dimension_numbers<[1], [0], [0], [1], [0, 0, 1, 1], [], []>} : vector<128x8xbf16>, vector<8x8xbf16>, vector<128x8xf32> -> vector<128x8xf32>
    %159 = vector.broadcast %157 : vector<1x8xf32> to vector<128x8xf32>
    %160 = arith.addf %158, %159 : vector<128x8xf32>
    %cst_76 = arith.constant 0.000000e+00 : f32
    %161 = vector.broadcast %cst_76 : f32 to vector<128x8xf32>
    %162 = arith.subf %161, %160 : vector<128x8xf32>
    %163 = math.exp %162 : vector<128x8xf32>
    %cst_77 = arith.constant 1.000000e+00 : f32
    %164 = vector.broadcast %cst_77 : f32 to vector<128x8xf32>
    %165 = arith.addf %164, %163 : vector<128x8xf32>
    %166 = tpu.reciprocal %165 {approx = true} : vector<128x8xf32> -> vector<128x8xf32>
    %167 = arith.truncf %166 : vector<128x8xf32> to vector<128x8xbf16>
    %cst_78 = arith.constant dense<0.000000e+00> : vector<128x8xf32>
    %168 = tpu.matmul %155, %156, %cst_78 {dimension_numbers = #tpu.dot_dimension_numbers<[1], [0], [0], [1], [0, 0, 1, 1], [], []>} : vector<128x8xbf16>, vector<8x8xbf16>, vector<128x8xf32> -> vector<128x8xf32>
    %169 = vector.broadcast %157 : vector<1x8xf32> to vector<128x8xf32>
    %170 = arith.addf %168, %169 : vector<128x8xf32>
    %cst_79 = arith.constant 0.000000e+00 : f32
    %171 = vector.broadcast %cst_79 : f32 to vector<128x8xf32>
    %172 = arith.subf %171, %170 : vector<128x8xf32>
    %173 = math.exp %172 : vector<128x8xf32>
    %cst_80 = arith.constant 1.000000e+00 : f32
    %174 = vector.broadcast %cst_80 : f32 to vector<128x8xf32>
    %175 = arith.addf %174, %173 : vector<128x8xf32>
    %176 = tpu.reciprocal %175 {approx = true} : vector<128x8xf32> -> vector<128x8xf32>
    %177 = arith.truncf %176 : vector<128x8xf32> to vector<128x8xbf16>
    %c0_81 = arith.constant 0 : index
    %c0_82 = arith.constant 0 : index
    %178 = vector.load %arg18[%c0_81, %c0_82] : memref<8x8xbf16, #tpu.memory_space<vmem>>, vector<8x8xbf16>
    %c0_83 = arith.constant 0 : index
    %c0_84 = arith.constant 0 : index
    %179 = vector.load %arg19[%c0_83, %c0_84] : memref<1x8xf32, #tpu.memory_space<vmem>>, vector<1x8xf32>
    %cst_85 = arith.constant dense<0.000000e+00> : vector<128x8xf32>
    %180 = tpu.matmul %167, %178, %cst_85 {dimension_numbers = #tpu.dot_dimension_numbers<[1], [0], [0], [1], [0, 0, 1, 1], [], []>} : vector<128x8xbf16>, vector<8x8xbf16>, vector<128x8xf32> -> vector<128x8xf32>
    %181 = vector.broadcast %179 : vector<1x8xf32> to vector<128x8xf32>
    %182 = arith.addf %180, %181 : vector<128x8xf32>
    %cst_86 = arith.constant 0.000000e+00 : f32
    %183 = vector.broadcast %cst_86 : f32 to vector<128x8xf32>
    %184 = arith.subf %183, %182 : vector<128x8xf32>
    %185 = math.exp %184 : vector<128x8xf32>
    %cst_87 = arith.constant 1.000000e+00 : f32
    %186 = vector.broadcast %cst_87 : f32 to vector<128x8xf32>
    %187 = arith.addf %186, %185 : vector<128x8xf32>
    %188 = tpu.reciprocal %187 {approx = true} : vector<128x8xf32> -> vector<128x8xf32>
    %189 = arith.truncf %188 : vector<128x8xf32> to vector<128x8xbf16>
    %cst_88 = arith.constant dense<0.000000e+00> : vector<128x8xf32>
    %190 = tpu.matmul %177, %178, %cst_88 {dimension_numbers = #tpu.dot_dimension_numbers<[1], [0], [0], [1], [0, 0, 1, 1], [], []>} : vector<128x8xbf16>, vector<8x8xbf16>, vector<128x8xf32> -> vector<128x8xf32>
    %191 = vector.broadcast %179 : vector<1x8xf32> to vector<128x8xf32>
    %192 = arith.addf %190, %191 : vector<128x8xf32>
    %cst_89 = arith.constant 0.000000e+00 : f32
    %193 = vector.broadcast %cst_89 : f32 to vector<128x8xf32>
    %194 = arith.subf %193, %192 : vector<128x8xf32>
    %195 = math.exp %194 : vector<128x8xf32>
    %cst_90 = arith.constant 1.000000e+00 : f32
    %196 = vector.broadcast %cst_90 : f32 to vector<128x8xf32>
    %197 = arith.addf %196, %195 : vector<128x8xf32>
    %198 = tpu.reciprocal %197 {approx = true} : vector<128x8xf32> -> vector<128x8xf32>
    %199 = arith.truncf %198 : vector<128x8xf32> to vector<128x8xbf16>
    %c0_91 = arith.constant 0 : index
    %c0_92 = arith.constant 0 : index
    %200 = vector.load %arg20[%c0_91, %c0_92] : memref<3x8xbf16, #tpu.memory_space<vmem>>, vector<3x8xbf16>
    %cst_93 = arith.constant dense<0.000000e+00> : vector<3x128xf32>
    %201 = tpu.matmul %200, %189, %cst_93 {dimension_numbers = #tpu.dot_dimension_numbers<[1], [1], [0], [0], [0, 0, 1, 0], [], []>} : vector<3x8xbf16>, vector<128x8xbf16>, vector<3x128xf32> -> vector<3x128xf32>
    %202 = vector.extract_strided_slice %201 {offsets = [0, 0], sizes = [1, 128], strides = [1, 1]} : vector<3x128xf32> to vector<1x128xf32>
    %c0_94 = arith.constant 0 : index
    %203 = memref.load %arg21[%c0_94] : memref<3xf32, #tpu.memory_space<smem>>
    %204 = vector.broadcast %203 : f32 to vector<1x128xf32>
    %205 = arith.addf %202, %204 : vector<1x128xf32>
    %206 = vector.extract_strided_slice %201 {offsets = [1, 0], sizes = [1, 128], strides = [1, 1]} : vector<3x128xf32> to vector<1x128xf32>
    %c1 = arith.constant 1 : index
    %207 = memref.load %arg21[%c1] : memref<3xf32, #tpu.memory_space<smem>>
    %208 = vector.broadcast %207 : f32 to vector<1x128xf32>
    %209 = arith.addf %206, %208 : vector<1x128xf32>
    %210 = vector.extract_strided_slice %201 {offsets = [2, 0], sizes = [1, 128], strides = [1, 1]} : vector<3x128xf32> to vector<1x128xf32>
    %c2 = arith.constant 2 : index
    %211 = memref.load %arg21[%c2] : memref<3xf32, #tpu.memory_space<smem>>
    %212 = vector.broadcast %211 : f32 to vector<1x128xf32>
    %213 = arith.addf %210, %212 : vector<1x128xf32>
    %214 = arith.maximumf %205, %209 : vector<1x128xf32>
    %215 = arith.maximumf %214, %213 : vector<1x128xf32>
    %216 = arith.subf %205, %215 : vector<1x128xf32>
    %217 = math.exp %216 : vector<1x128xf32>
    %218 = arith.subf %209, %215 : vector<1x128xf32>
    %219 = math.exp %218 : vector<1x128xf32>
    %220 = arith.subf %213, %215 : vector<1x128xf32>
    %221 = math.exp %220 : vector<1x128xf32>
    %222 = arith.addf %217, %219 : vector<1x128xf32>
    %223 = arith.addf %222, %221 : vector<1x128xf32>
    %224 = tpu.reciprocal %223 {approx = true} : vector<1x128xf32> -> vector<1x128xf32>
    %225 = arith.mulf %221, %224 : vector<1x128xf32>
    %226 = vector.shape_cast %225 : vector<1x128xf32> to vector<1x1x128xf32>
    %c0_95 = arith.constant 0 : index
    %c0_96 = arith.constant 0 : index
    %c0_97 = arith.constant 0 : index
    %227 = vector.load %arg22[%c0_95, %c0_96, %c0_97] : memref<1x1x256xf32, #tpu.memory_space<vmem>>, vector<1x1x128xf32>
    tpu.vector_store %arg22[%c0_95, %c0_96, %c0_97], %226 {strides = array<i32>} : memref<1x1x256xf32, #tpu.memory_space<vmem>>, vector<1x1x128xf32>,
    %c0_98 = arith.constant 0 : index
    %c0_99 = arith.constant 0 : index
    %228 = vector.load %arg20[%c0_98, %c0_99] : memref<3x8xbf16, #tpu.memory_space<vmem>>, vector<3x8xbf16>
    %cst_100 = arith.constant dense<0.000000e+00> : vector<3x128xf32>
    %229 = tpu.matmul %228, %199, %cst_100 {dimension_numbers = #tpu.dot_dimension_numbers<[1], [1], [0], [0], [0, 0, 1, 0], [], []>} : vector<3x8xbf16>, vector<128x8xbf16>, vector<3x128xf32> -> vector<3x128xf32>
    %230 = vector.extract_strided_slice %229 {offsets = [0, 0], sizes = [1, 128], strides = [1, 1]} : vector<3x128xf32> to vector<1x128xf32>
    %c0_101 = arith.constant 0 : index
    %231 = memref.load %arg21[%c0_101] : memref<3xf32, #tpu.memory_space<smem>>
    %232 = vector.broadcast %231 : f32 to vector<1x128xf32>
    %233 = arith.addf %230, %232 : vector<1x128xf32>
    %234 = vector.extract_strided_slice %229 {offsets = [1, 0], sizes = [1, 128], strides = [1, 1]} : vector<3x128xf32> to vector<1x128xf32>
    %c1_102 = arith.constant 1 : index
    %235 = memref.load %arg21[%c1_102] : memref<3xf32, #tpu.memory_space<smem>>
    %236 = vector.broadcast %235 : f32 to vector<1x128xf32>
    %237 = arith.addf %234, %236 : vector<1x128xf32>
    %238 = vector.extract_strided_slice %229 {offsets = [2, 0], sizes = [1, 128], strides = [1, 1]} : vector<3x128xf32> to vector<1x128xf32>
    %c2_103 = arith.constant 2 : index
    %239 = memref.load %arg21[%c2_103] : memref<3xf32, #tpu.memory_space<smem>>
    %240 = vector.broadcast %239 : f32 to vector<1x128xf32>
    %241 = arith.addf %238, %240 : vector<1x128xf32>
    %242 = arith.maximumf %233, %237 : vector<1x128xf32>
    %243 = arith.maximumf %242, %241 : vector<1x128xf32>
    %244 = arith.subf %233, %243 : vector<1x128xf32>
    %245 = math.exp %244 : vector<1x128xf32>
    %246 = arith.subf %237, %243 : vector<1x128xf32>
    %247 = math.exp %246 : vector<1x128xf32>
    %248 = arith.subf %241, %243 : vector<1x128xf32>
    %249 = math.exp %248 : vector<1x128xf32>
    %250 = arith.addf %245, %247 : vector<1x128xf32>
    %251 = arith.addf %250, %249 : vector<1x128xf32>
    %252 = tpu.reciprocal %251 {approx = true} : vector<1x128xf32> -> vector<1x128xf32>
    %253 = arith.mulf %249, %252 : vector<1x128xf32>
    %254 = vector.shape_cast %253 : vector<1x128xf32> to vector<1x1x128xf32>
    %c0_104 = arith.constant 0 : index
    %c0_105 = arith.constant 0 : index
    %c128_106 = arith.constant 128 : index
    %255 = vector.load %arg22[%c0_104, %c0_105, %c128_106] : memref<1x1x256xf32, #tpu.memory_space<vmem>>, vector<1x1x128xf32>
    tpu.vector_store %arg22[%c0_104, %c0_105, %c128_106], %254 {strides = array<i32>} : memref<1x1x256xf32, #tpu.memory_space<vmem>>, vector<1x1x128xf32>,
    return
  }
  func.func @transform_0(%arg0: i32) -> (i32, i32) {
    %c0_i32 = arith.constant 0 : i32
    %c0_i32_0 = arith.constant 0 : i32
    return %arg0, %c0_i32 : i32, i32
  }
  func.func @transform_1(%arg0: i32) -> (i32, i32) {
    %c0_i32 = arith.constant 0 : i32
    %c0_i32_0 = arith.constant 0 : i32
    %c0_i32_1 = arith.constant 0 : i32
    return %c0_i32, %c0_i32_0 : i32, i32
  }
  func.func @transform_2(%arg0: i32) -> (i32, i32) {
    %c0_i32 = arith.constant 0 : i32
    %c0_i32_0 = arith.constant 0 : i32
    %c0_i32_1 = arith.constant 0 : i32
    return %c0_i32, %c0_i32_0 : i32, i32
  }
  func.func @transform_3(%arg0: i32) -> (i32, i32) {
    %c0_i32 = arith.constant 0 : i32
    %c0_i32_0 = arith.constant 0 : i32
    %c0_i32_1 = arith.constant 0 : i32
    return %c0_i32, %c0_i32_0 : i32, i32
  }
  func.func @transform_4(%arg0: i32) -> (i32, i32) {
    %c0_i32 = arith.constant 0 : i32
    %c0_i32_0 = arith.constant 0 : i32
    %c0_i32_1 = arith.constant 0 : i32
    return %c0_i32, %c0_i32_0 : i32, i32
  }
  func.func @transform_5(%arg0: i32) -> (i32, i32) {
    %c0_i32 = arith.constant 0 : i32
    %c0_i32_0 = arith.constant 0 : i32
    %c0_i32_1 = arith.constant 0 : i32
    return %c0_i32, %c0_i32_0 : i32, i32
  }
  func.func @transform_6(%arg0: i32) -> (i32, i32) {
    %c0_i32 = arith.constant 0 : i32
    %c0_i32_0 = arith.constant 0 : i32
    %c0_i32_1 = arith.constant 0 : i32
    return %c0_i32, %c0_i32_0 : i32, i32
  }
  func.func @transform_7(%arg0: i32) -> (i32, i32) {
    %c0_i32 = arith.constant 0 : i32
    %c0_i32_0 = arith.constant 0 : i32
    %c0_i32_1 = arith.constant 0 : i32
    return %c0_i32, %c0_i32_0 : i32, i32
  }
  func.func @transform_8(%arg0: i32) -> (i32, i32) {
    %c0_i32 = arith.constant 0 : i32
    %c0_i32_0 = arith.constant 0 : i32
    %c0_i32_1 = arith.constant 0 : i32
    return %c0_i32, %c0_i32_0 : i32, i32
  }
  func.func @transform_9(%arg0: i32) -> (i32, i32) {
    %c0_i32 = arith.constant 0 : i32
    %c0_i32_0 = arith.constant 0 : i32
    %c0_i32_1 = arith.constant 0 : i32
    return %c0_i32, %c0_i32_0 : i32, i32
  }
  func.func @transform_10(%arg0: i32) -> (i32, i32) {
    %c0_i32 = arith.constant 0 : i32
    %c0_i32_0 = arith.constant 0 : i32
    %c0_i32_1 = arith.constant 0 : i32
    return %c0_i32, %c0_i32_0 : i32, i32
  }
  func.func @transform_11(%arg0: i32) -> (i32, i32) {
    %c0_i32 = arith.constant 0 : i32
    %c0_i32_0 = arith.constant 0 : i32
    %c0_i32_1 = arith.constant 0 : i32
    return %c0_i32, %c0_i32_0 : i32, i32
  }
  func.func @transform_12(%arg0: i32) -> (i32, i32) {
    %c0_i32 = arith.constant 0 : i32
    %c0_i32_0 = arith.constant 0 : i32
    %c0_i32_1 = arith.constant 0 : i32
    return %c0_i32, %c0_i32_0 : i32, i32
  }
  func.func @transform_13(%arg0: i32) -> (i32, i32) {
    %c0_i32 = arith.constant 0 : i32
    %c0_i32_0 = arith.constant 0 : i32
    %c0_i32_1 = arith.constant 0 : i32
    return %c0_i32, %c0_i32_0 : i32, i32
  }
  func.func @transform_14(%arg0: i32) -> (i32, i32) {
    %c0_i32 = arith.constant 0 : i32
    %c0_i32_0 = arith.constant 0 : i32
    %c0_i32_1 = arith.constant 0 : i32
    return %c0_i32, %c0_i32_0 : i32, i32
  }
  func.func @transform_15(%arg0: i32) -> (i32, i32) {
    %c0_i32 = arith.constant 0 : i32
    %c0_i32_0 = arith.constant 0 : i32
    %c0_i32_1 = arith.constant 0 : i32
    return %c0_i32, %c0_i32_0 : i32, i32
  }
  func.func @transform_16(%arg0: i32) -> (i32, i32) {
    %c0_i32 = arith.constant 0 : i32
    %c0_i32_0 = arith.constant 0 : i32
    %c0_i32_1 = arith.constant 0 : i32
    return %c0_i32, %c0_i32_0 : i32, i32
  }
  func.func @transform_17(%arg0: i32) -> (i32, i32) {
    %c0_i32 = arith.constant 0 : i32
    %c0_i32_0 = arith.constant 0 : i32
    %c0_i32_1 = arith.constant 0 : i32
    return %c0_i32, %c0_i32_0 : i32, i32
  }
  func.func @transform_18(%arg0: i32) -> (i32, i32) {
    %c0_i32 = arith.constant 0 : i32
    %c0_i32_0 = arith.constant 0 : i32
    %c0_i32_1 = arith.constant 0 : i32
    return %c0_i32, %c0_i32_0 : i32, i32
  }
  func.func @transform_19(%arg0: i32) -> (i32, i32) {
    %c0_i32 = arith.constant 0 : i32
    %c0_i32_0 = arith.constant 0 : i32
    %c0_i32_1 = arith.constant 0 : i32
    return %c0_i32, %c0_i32_0 : i32, i32
  }
  func.func @transform_20(%arg0: i32) -> i32 {
    %c0_i32 = arith.constant 0 : i32
    %c0_i32_0 = arith.constant 0 : i32
    return %c0_i32 : i32
  }
  func.func @transform_21(%arg0: i32) -> (i32, i32, i32) {
    %c0_i32 = arith.constant 0 : i32
    %c0_i32_0 = arith.constant 0 : i32
    %c0_i32_1 = arith.constant 0 : i32
    return %arg0, %c0_i32, %c0_i32_0 : i32, i32, i32
  }
}

module attributes {stable_mosaic.version = 11 : i64} {
  func.func @_mlp_kernel(%arg0: i32, %arg1: memref<256x32xbf16, #tpu.memory_space<vmem>>, %arg2: memref<32x128xbf16, #tpu.memory_space<vmem>>, %arg3: memref<1x128xf32, #tpu.memory_space<vmem>>, %arg4: memref<128x256xbf16, #tpu.memory_space<vmem>>, %arg5: memref<1x256xf32, #tpu.memory_space<vmem>>, %arg6: memref<256x128xbf16, #tpu.memory_space<vmem>>, %arg7: memref<1x128xf32, #tpu.memory_space<vmem>>, %arg8: memref<128x16xbf16, #tpu.memory_space<vmem>>, %arg9: memref<1x16xf32, #tpu.memory_space<vmem>>, %arg10: memref<16x16xbf16, #tpu.memory_space<vmem>>, %arg11: memref<1x16xf32, #tpu.memory_space<vmem>>, %arg12: memref<16x16xbf16, #tpu.memory_space<vmem>>, %arg13: memref<1x16xf32, #tpu.memory_space<vmem>>, %arg14: memref<16x8xbf16, #tpu.memory_space<vmem>>, %arg15: memref<1x8xf32, #tpu.memory_space<vmem>>, %arg16: memref<8x8xbf16, #tpu.memory_space<vmem>>, %arg17: memref<1x8xf32, #tpu.memory_space<vmem>>, %arg18: memref<8x8xbf16, #tpu.memory_space<vmem>>, %arg19: memref<1x8xf32, #tpu.memory_space<vmem>>, %arg20: memref<3x8xbf16, #tpu.memory_space<vmem>>, %arg21: memref<3xf32, #tpu.memory_space<smem>>, %arg22: memref<1x1x256xf32, #tpu.memory_space<vmem>>) attributes {dimension_semantics = [#tpu.dimension_semantics<parallel>], iteration_bounds = array<i64: 1>, scalar_prefetch = 0 : i64, scratch_operands = 0 : i64, tpu.core_type = #tpu.core_type<tc>, window_params = [{transform_indices = @transform_0, window_bounds = array<i64: 256, 32>}, {pipeline_mode = #tpu.pipeline_mode<synchronous>, transform_indices = @transform_1, window_bounds = array<i64: 32, 128>}, {pipeline_mode = #tpu.pipeline_mode<synchronous>, transform_indices = @transform_2, window_bounds = array<i64: 1, 128>}, {pipeline_mode = #tpu.pipeline_mode<synchronous>, transform_indices = @transform_3, window_bounds = array<i64: 128, 256>}, {pipeline_mode = #tpu.pipeline_mode<synchronous>, transform_indices = @transform_4, window_bounds = array<i64: 1, 256>}, {pipeline_mode = #tpu.pipeline_mode<synchronous>, transform_indices = @transform_5, window_bounds = array<i64: 256, 128>}, {pipeline_mode = #tpu.pipeline_mode<synchronous>, transform_indices = @transform_6, window_bounds = array<i64: 1, 128>}, {pipeline_mode = #tpu.pipeline_mode<synchronous>, transform_indices = @transform_7, window_bounds = array<i64: 128, 16>}, {pipeline_mode = #tpu.pipeline_mode<synchronous>, transform_indices = @transform_8, window_bounds = array<i64: 1, 16>}, {pipeline_mode = #tpu.pipeline_mode<synchronous>, transform_indices = @transform_9, window_bounds = array<i64: 16, 16>}, {pipeline_mode = #tpu.pipeline_mode<synchronous>, transform_indices = @transform_10, window_bounds = array<i64: 1, 16>}, {pipeline_mode = #tpu.pipeline_mode<synchronous>, transform_indices = @transform_11, window_bounds = array<i64: 16, 16>}, {pipeline_mode = #tpu.pipeline_mode<synchronous>, transform_indices = @transform_12, window_bounds = array<i64: 1, 16>}, {pipeline_mode = #tpu.pipeline_mode<synchronous>, transform_indices = @transform_13, window_bounds = array<i64: 16, 8>}, {pipeline_mode = #tpu.pipeline_mode<synchronous>, transform_indices = @transform_14, window_bounds = array<i64: 1, 8>}, {pipeline_mode = #tpu.pipeline_mode<synchronous>, transform_indices = @transform_15, window_bounds = array<i64: 8, 8>}, {pipeline_mode = #tpu.pipeline_mode<synchronous>, transform_indices = @transform_16, window_bounds = array<i64: 1, 8>}, {pipeline_mode = #tpu.pipeline_mode<synchronous>, transform_indices = @transform_17, window_bounds = array<i64: 8, 8>}, {pipeline_mode = #tpu.pipeline_mode<synchronous>, transform_indices = @transform_18, window_bounds = array<i64: 1, 8>}, {pipeline_mode = #tpu.pipeline_mode<synchronous>, transform_indices = @transform_19, window_bounds = array<i64: 3, 8>}, {transform_indices = @transform_20, window_bounds = array<i64: 3>}, {transform_indices = @transform_21, window_bounds = array<i64: 1, 1, 256>}]} {
    %c0 = arith.constant 0 : index
    %c0_0 = arith.constant 0 : index
    %0 = vector.load %arg1[%c0, %c0_0] : memref<256x32xbf16, #tpu.memory_space<vmem>>, vector<128x32xbf16>
    %c128 = arith.constant 128 : index
    %c0_1 = arith.constant 0 : index
    %1 = vector.load %arg1[%c128, %c0_1] : memref<256x32xbf16, #tpu.memory_space<vmem>>, vector<128x32xbf16>
    %c0_2 = arith.constant 0 : index
    %c0_3 = arith.constant 0 : index
    %2 = vector.load %arg2[%c0_2, %c0_3] : memref<32x128xbf16, #tpu.memory_space<vmem>>, vector<32x128xbf16>
    %c0_4 = arith.constant 0 : index
    %c0_5 = arith.constant 0 : index
    %3 = vector.load %arg3[%c0_4, %c0_5] : memref<1x128xf32, #tpu.memory_space<vmem>>, vector<1x128xf32>
    %cst = arith.constant dense<0.000000e+00> : vector<128x128xf32>
    %4 = tpu.matmul %0, %2, %cst {dimension_numbers = #tpu.dot_dimension_numbers<[1], [0], [0], [1], [0, 0, 1, 1], [], []>} : vector<128x32xbf16>, vector<32x128xbf16>, vector<128x128xf32> -> vector<128x128xf32>
    %5 = vector.broadcast %3 : vector<1x128xf32> to vector<128x128xf32>
    %6 = arith.addf %4, %5 : vector<128x128xf32>
    %cst_6 = arith.constant 0.000000e+00 : f32
    %7 = vector.broadcast %cst_6 : f32 to vector<128x128xf32>
    %8 = arith.subf %7, %6 : vector<128x128xf32>
    %9 = math.exp %8 : vector<128x128xf32>
    %cst_7 = arith.constant 1.000000e+00 : f32
    %10 = vector.broadcast %cst_7 : f32 to vector<128x128xf32>
    %11 = arith.addf %10, %9 : vector<128x128xf32>
    %12 = tpu.reciprocal %11 {approx = true} : vector<128x128xf32> -> vector<128x128xf32>
    %13 = arith.truncf %12 : vector<128x128xf32> to vector<128x128xbf16>
    %cst_8 = arith.constant dense<0.000000e+00> : vector<128x128xf32>
    %14 = tpu.matmul %1, %2, %cst_8 {dimension_numbers = #tpu.dot_dimension_numbers<[1], [0], [0], [1], [0, 0, 1, 1], [], []>} : vector<128x32xbf16>, vector<32x128xbf16>, vector<128x128xf32> -> vector<128x128xf32>
    %15 = vector.broadcast %3 : vector<1x128xf32> to vector<128x128xf32>
    %16 = arith.addf %14, %15 : vector<128x128xf32>
    %cst_9 = arith.constant 0.000000e+00 : f32
    %17 = vector.broadcast %cst_9 : f32 to vector<128x128xf32>
    %18 = arith.subf %17, %16 : vector<128x128xf32>
    %19 = math.exp %18 : vector<128x128xf32>
    %cst_10 = arith.constant 1.000000e+00 : f32
    %20 = vector.broadcast %cst_10 : f32 to vector<128x128xf32>
    %21 = arith.addf %20, %19 : vector<128x128xf32>
    %22 = tpu.reciprocal %21 {approx = true} : vector<128x128xf32> -> vector<128x128xf32>
    %23 = arith.truncf %22 : vector<128x128xf32> to vector<128x128xbf16>
    %c0_11 = arith.constant 0 : index
    %c0_12 = arith.constant 0 : index
    %24 = vector.load %arg4[%c0_11, %c0_12] : memref<128x256xbf16, #tpu.memory_space<vmem>>, vector<128x256xbf16>
    %c0_13 = arith.constant 0 : index
    %c0_14 = arith.constant 0 : index
    %25 = vector.load %arg5[%c0_13, %c0_14] : memref<1x256xf32, #tpu.memory_space<vmem>>, vector<1x256xf32>
    %cst_15 = arith.constant dense<0.000000e+00> : vector<128x256xf32>
    %26 = tpu.matmul %13, %24, %cst_15 {dimension_numbers = #tpu.dot_dimension_numbers<[1], [0], [0], [1], [0, 0, 1, 1], [], []>} : vector<128x128xbf16>, vector<128x256xbf16>, vector<128x256xf32> -> vector<128x256xf32>
    %27 = vector.broadcast %25 : vector<1x256xf32> to vector<128x256xf32>
    %28 = arith.addf %26, %27 : vector<128x256xf32>
    %cst_16 = arith.constant 0.000000e+00 : f32
    %29 = vector.broadcast %cst_16 : f32 to vector<128x256xf32>
    %30 = arith.subf %29, %28 : vector<128x256xf32>
    %31 = math.exp %30 : vector<128x256xf32>
    %cst_17 = arith.constant 1.000000e+00 : f32
    %32 = vector.broadcast %cst_17 : f32 to vector<128x256xf32>
    %33 = arith.addf %32, %31 : vector<128x256xf32>
    %34 = tpu.reciprocal %33 {approx = true} : vector<128x256xf32> -> vector<128x256xf32>
    %35 = arith.truncf %34 : vector<128x256xf32> to vector<128x256xbf16>
    %cst_18 = arith.constant dense<0.000000e+00> : vector<128x256xf32>
    %36 = tpu.matmul %23, %24, %cst_18 {dimension_numbers = #tpu.dot_dimension_numbers<[1], [0], [0], [1], [0, 0, 1, 1], [], []>} : vector<128x128xbf16>, vector<128x256xbf16>, vector<128x256xf32> -> vector<128x256xf32>
    %37 = vector.broadcast %25 : vector<1x256xf32> to vector<128x256xf32>
    %38 = arith.addf %36, %37 : vector<128x256xf32>
    %cst_19 = arith.constant 0.000000e+00 : f32
    %39 = vector.broadcast %cst_19 : f32 to vector<128x256xf32>
    %40 = arith.subf %39, %38 : vector<128x256xf32>
    %41 = math.exp %40 : vector<128x256xf32>
    %cst_20 = arith.constant 1.000000e+00 : f32
    %42 = vector.broadcast %cst_20 : f32 to vector<128x256xf32>
    %43 = arith.addf %42, %41 : vector<128x256xf32>
    %44 = tpu.reciprocal %43 {approx = true} : vector<128x256xf32> -> vector<128x256xf32>
    %45 = arith.truncf %44 : vector<128x256xf32> to vector<128x256xbf16>
    %c0_21 = arith.constant 0 : index
    %c0_22 = arith.constant 0 : index
    %46 = vector.load %arg6[%c0_21, %c0_22] : memref<256x128xbf16, #tpu.memory_space<vmem>>, vector<256x128xbf16>
    %c0_23 = arith.constant 0 : index
    %c0_24 = arith.constant 0 : index
    %47 = vector.load %arg7[%c0_23, %c0_24] : memref<1x128xf32, #tpu.memory_space<vmem>>, vector<1x128xf32>
    %cst_25 = arith.constant dense<0.000000e+00> : vector<128x128xf32>
    %48 = tpu.matmul %35, %46, %cst_25 {dimension_numbers = #tpu.dot_dimension_numbers<[1], [0], [0], [1], [0, 0, 1, 1], [], []>} : vector<128x256xbf16>, vector<256x128xbf16>, vector<128x128xf32> -> vector<128x128xf32>
    %49 = vector.broadcast %47 : vector<1x128xf32> to vector<128x128xf32>
    %50 = arith.addf %48, %49 : vector<128x128xf32>
    %cst_26 = arith.constant 0.000000e+00 : f32
    %51 = vector.broadcast %cst_26 : f32 to vector<128x128xf32>
    %52 = arith.subf %51, %50 : vector<128x128xf32>
    %53 = math.exp %52 : vector<128x128xf32>
    %cst_27 = arith.constant 1.000000e+00 : f32
    %54 = vector.broadcast %cst_27 : f32 to vector<128x128xf32>
    %55 = arith.addf %54, %53 : vector<128x128xf32>
    %56 = tpu.reciprocal %55 {approx = true} : vector<128x128xf32> -> vector<128x128xf32>
    %57 = arith.truncf %56 : vector<128x128xf32> to vector<128x128xbf16>
    %cst_28 = arith.constant dense<0.000000e+00> : vector<128x128xf32>
    %58 = tpu.matmul %45, %46, %cst_28 {dimension_numbers = #tpu.dot_dimension_numbers<[1], [0], [0], [1], [0, 0, 1, 1], [], []>} : vector<128x256xbf16>, vector<256x128xbf16>, vector<128x128xf32> -> vector<128x128xf32>
    %59 = vector.broadcast %47 : vector<1x128xf32> to vector<128x128xf32>
    %60 = arith.addf %58, %59 : vector<128x128xf32>
    %cst_29 = arith.constant 0.000000e+00 : f32
    %61 = vector.broadcast %cst_29 : f32 to vector<128x128xf32>
    %62 = arith.subf %61, %60 : vector<128x128xf32>
    %63 = math.exp %62 : vector<128x128xf32>
    %cst_30 = arith.constant 1.000000e+00 : f32
    %64 = vector.broadcast %cst_30 : f32 to vector<128x128xf32>
    %65 = arith.addf %64, %63 : vector<128x128xf32>
    %66 = tpu.reciprocal %65 {approx = true} : vector<128x128xf32> -> vector<128x128xf32>
    %67 = arith.truncf %66 : vector<128x128xf32> to vector<128x128xbf16>
    %c0_31 = arith.constant 0 : index
    %c0_32 = arith.constant 0 : index
    %68 = vector.load %arg8[%c0_31, %c0_32] : memref<128x16xbf16, #tpu.memory_space<vmem>>, vector<128x16xbf16>
    %c0_33 = arith.constant 0 : index
    %c0_34 = arith.constant 0 : index
    %69 = vector.load %arg9[%c0_33, %c0_34] : memref<1x16xf32, #tpu.memory_space<vmem>>, vector<1x16xf32>
    %cst_35 = arith.constant dense<0.000000e+00> : vector<128x16xf32>
    %70 = tpu.matmul %57, %68, %cst_35 {dimension_numbers = #tpu.dot_dimension_numbers<[1], [0], [0], [1], [0, 0, 1, 1], [], []>} : vector<128x128xbf16>, vector<128x16xbf16>, vector<128x16xf32> -> vector<128x16xf32>
    %71 = vector.broadcast %69 : vector<1x16xf32> to vector<128x16xf32>
    %72 = arith.addf %70, %71 : vector<128x16xf32>
    %cst_36 = arith.constant 0.000000e+00 : f32
    %73 = vector.broadcast %cst_36 : f32 to vector<128x16xf32>
    %74 = arith.subf %73, %72 : vector<128x16xf32>
    %75 = math.exp %74 : vector<128x16xf32>
    %cst_37 = arith.constant 1.000000e+00 : f32
    %76 = vector.broadcast %cst_37 : f32 to vector<128x16xf32>
    %77 = arith.addf %76, %75 : vector<128x16xf32>
    %78 = tpu.reciprocal %77 {approx = true} : vector<128x16xf32> -> vector<128x16xf32>
    %79 = arith.truncf %78 : vector<128x16xf32> to vector<128x16xbf16>
    %cst_38 = arith.constant dense<0.000000e+00> : vector<128x16xf32>
    %80 = tpu.matmul %67, %68, %cst_38 {dimension_numbers = #tpu.dot_dimension_numbers<[1], [0], [0], [1], [0, 0, 1, 1], [], []>} : vector<128x128xbf16>, vector<128x16xbf16>, vector<128x16xf32> -> vector<128x16xf32>
    %81 = vector.broadcast %69 : vector<1x16xf32> to vector<128x16xf32>
    %82 = arith.addf %80, %81 : vector<128x16xf32>
    %cst_39 = arith.constant 0.000000e+00 : f32
    %83 = vector.broadcast %cst_39 : f32 to vector<128x16xf32>
    %84 = arith.subf %83, %82 : vector<128x16xf32>
    %85 = math.exp %84 : vector<128x16xf32>
    %cst_40 = arith.constant 1.000000e+00 : f32
    %86 = vector.broadcast %cst_40 : f32 to vector<128x16xf32>
    %87 = arith.addf %86, %85 : vector<128x16xf32>
    %88 = tpu.reciprocal %87 {approx = true} : vector<128x16xf32> -> vector<128x16xf32>
    %89 = arith.truncf %88 : vector<128x16xf32> to vector<128x16xbf16>
    %c0_41 = arith.constant 0 : index
    %c0_42 = arith.constant 0 : index
    %90 = vector.load %arg10[%c0_41, %c0_42] : memref<16x16xbf16, #tpu.memory_space<vmem>>, vector<16x16xbf16>
    %c0_43 = arith.constant 0 : index
    %c0_44 = arith.constant 0 : index
    %91 = vector.load %arg11[%c0_43, %c0_44] : memref<1x16xf32, #tpu.memory_space<vmem>>, vector<1x16xf32>
    %cst_45 = arith.constant dense<0.000000e+00> : vector<128x16xf32>
    %92 = tpu.matmul %79, %90, %cst_45 {dimension_numbers = #tpu.dot_dimension_numbers<[1], [0], [0], [1], [0, 0, 1, 1], [], []>} : vector<128x16xbf16>, vector<16x16xbf16>, vector<128x16xf32> -> vector<128x16xf32>
    %93 = vector.broadcast %91 : vector<1x16xf32> to vector<128x16xf32>
    %94 = arith.addf %92, %93 : vector<128x16xf32>
    %cst_46 = arith.constant 0.000000e+00 : f32
    %95 = vector.broadcast %cst_46 : f32 to vector<128x16xf32>
    %96 = arith.subf %95, %94 : vector<128x16xf32>
    %97 = math.exp %96 : vector<128x16xf32>
    %cst_47 = arith.constant 1.000000e+00 : f32
    %98 = vector.broadcast %cst_47 : f32 to vector<128x16xf32>
    %99 = arith.addf %98, %97 : vector<128x16xf32>
    %100 = tpu.reciprocal %99 {approx = true} : vector<128x16xf32> -> vector<128x16xf32>
    %101 = arith.truncf %100 : vector<128x16xf32> to vector<128x16xbf16>
    %cst_48 = arith.constant dense<0.000000e+00> : vector<128x16xf32>
    %102 = tpu.matmul %89, %90, %cst_48 {dimension_numbers = #tpu.dot_dimension_numbers<[1], [0], [0], [1], [0, 0, 1, 1], [], []>} : vector<128x16xbf16>, vector<16x16xbf16>, vector<128x16xf32> -> vector<128x16xf32>
    %103 = vector.broadcast %91 : vector<1x16xf32> to vector<128x16xf32>
    %104 = arith.addf %102, %103 : vector<128x16xf32>
    %cst_49 = arith.constant 0.000000e+00 : f32
    %105 = vector.broadcast %cst_49 : f32 to vector<128x16xf32>
    %106 = arith.subf %105, %104 : vector<128x16xf32>
    %107 = math.exp %106 : vector<128x16xf32>
    %cst_50 = arith.constant 1.000000e+00 : f32
    %108 = vector.broadcast %cst_50 : f32 to vector<128x16xf32>
    %109 = arith.addf %108, %107 : vector<128x16xf32>
    %110 = tpu.reciprocal %109 {approx = true} : vector<128x16xf32> -> vector<128x16xf32>
    %111 = arith.truncf %110 : vector<128x16xf32> to vector<128x16xbf16>
    %c0_51 = arith.constant 0 : index
    %c0_52 = arith.constant 0 : index
    %112 = vector.load %arg12[%c0_51, %c0_52] : memref<16x16xbf16, #tpu.memory_space<vmem>>, vector<16x16xbf16>
    %c0_53 = arith.constant 0 : index
    %c0_54 = arith.constant 0 : index
    %113 = vector.load %arg13[%c0_53, %c0_54] : memref<1x16xf32, #tpu.memory_space<vmem>>, vector<1x16xf32>
    %cst_55 = arith.constant dense<0.000000e+00> : vector<128x16xf32>
    %114 = tpu.matmul %101, %112, %cst_55 {dimension_numbers = #tpu.dot_dimension_numbers<[1], [0], [0], [1], [0, 0, 1, 1], [], []>} : vector<128x16xbf16>, vector<16x16xbf16>, vector<128x16xf32> -> vector<128x16xf32>
    %115 = vector.broadcast %113 : vector<1x16xf32> to vector<128x16xf32>
    %116 = arith.addf %114, %115 : vector<128x16xf32>
    %cst_56 = arith.constant 0.000000e+00 : f32
    %117 = vector.broadcast %cst_56 : f32 to vector<128x16xf32>
    %118 = arith.subf %117, %116 : vector<128x16xf32>
    %119 = math.exp %118 : vector<128x16xf32>
    %cst_57 = arith.constant 1.000000e+00 : f32
    %120 = vector.broadcast %cst_57 : f32 to vector<128x16xf32>
    %121 = arith.addf %120, %119 : vector<128x16xf32>
    %122 = tpu.reciprocal %121 {approx = true} : vector<128x16xf32> -> vector<128x16xf32>
    %123 = arith.truncf %122 : vector<128x16xf32> to vector<128x16xbf16>
    %cst_58 = arith.constant dense<0.000000e+00> : vector<128x16xf32>
    %124 = tpu.matmul %111, %112, %cst_58 {dimension_numbers = #tpu.dot_dimension_numbers<[1], [0], [0], [1], [0, 0, 1, 1], [], []>} : vector<128x16xbf16>, vector<16x16xbf16>, vector<128x16xf32> -> vector<128x16xf32>
    %125 = vector.broadcast %113 : vector<1x16xf32> to vector<128x16xf32>
    %126 = arith.addf %124, %125 : vector<128x16xf32>
    %cst_59 = arith.constant 0.000000e+00 : f32
    %127 = vector.broadcast %cst_59 : f32 to vector<128x16xf32>
    %128 = arith.subf %127, %126 : vector<128x16xf32>
    %129 = math.exp %128 : vector<128x16xf32>
    %cst_60 = arith.constant 1.000000e+00 : f32
    %130 = vector.broadcast %cst_60 : f32 to vector<128x16xf32>
    %131 = arith.addf %130, %129 : vector<128x16xf32>
    %132 = tpu.reciprocal %131 {approx = true} : vector<128x16xf32> -> vector<128x16xf32>
    %133 = arith.truncf %132 : vector<128x16xf32> to vector<128x16xbf16>
    %c0_61 = arith.constant 0 : index
    %c0_62 = arith.constant 0 : index
    %134 = vector.load %arg14[%c0_61, %c0_62] : memref<16x8xbf16, #tpu.memory_space<vmem>>, vector<16x8xbf16>
    %c0_63 = arith.constant 0 : index
    %c0_64 = arith.constant 0 : index
    %135 = vector.load %arg15[%c0_63, %c0_64] : memref<1x8xf32, #tpu.memory_space<vmem>>, vector<1x8xf32>
    %cst_65 = arith.constant dense<0.000000e+00> : vector<128x8xf32>
    %136 = tpu.matmul %123, %134, %cst_65 {dimension_numbers = #tpu.dot_dimension_numbers<[1], [0], [0], [1], [0, 0, 1, 1], [], []>} : vector<128x16xbf16>, vector<16x8xbf16>, vector<128x8xf32> -> vector<128x8xf32>
    %137 = vector.broadcast %135 : vector<1x8xf32> to vector<128x8xf32>
    %138 = arith.addf %136, %137 : vector<128x8xf32>
    %cst_66 = arith.constant 0.000000e+00 : f32
    %139 = vector.broadcast %cst_66 : f32 to vector<128x8xf32>
    %140 = arith.subf %139, %138 : vector<128x8xf32>
    %141 = math.exp %140 : vector<128x8xf32>
    %cst_67 = arith.constant 1.000000e+00 : f32
    %142 = vector.broadcast %cst_67 : f32 to vector<128x8xf32>
    %143 = arith.addf %142, %141 : vector<128x8xf32>
    %144 = tpu.reciprocal %143 {approx = true} : vector<128x8xf32> -> vector<128x8xf32>
    %145 = arith.truncf %144 : vector<128x8xf32> to vector<128x8xbf16>
    %cst_68 = arith.constant dense<0.000000e+00> : vector<128x8xf32>
    %146 = tpu.matmul %133, %134, %cst_68 {dimension_numbers = #tpu.dot_dimension_numbers<[1], [0], [0], [1], [0, 0, 1, 1], [], []>} : vector<128x16xbf16>, vector<16x8xbf16>, vector<128x8xf32> -> vector<128x8xf32>
    %147 = vector.broadcast %135 : vector<1x8xf32> to vector<128x8xf32>
    %148 = arith.addf %146, %147 : vector<128x8xf32>
    %cst_69 = arith.constant 0.000000e+00 : f32
    %149 = vector.broadcast %cst_69 : f32 to vector<128x8xf32>
    %150 = arith.subf %149, %148 : vector<128x8xf32>
    %151 = math.exp %150 : vector<128x8xf32>
    %cst_70 = arith.constant 1.000000e+00 : f32
    %152 = vector.broadcast %cst_70 : f32 to vector<128x8xf32>
    %153 = arith.addf %152, %151 : vector<128x8xf32>
    %154 = tpu.reciprocal %153 {approx = true} : vector<128x8xf32> -> vector<128x8xf32>
    %155 = arith.truncf %154 : vector<128x8xf32> to vector<128x8xbf16>
    %c0_71 = arith.constant 0 : index
    %c0_72 = arith.constant 0 : index
    %156 = vector.load %arg16[%c0_71, %c0_72] : memref<8x8xbf16, #tpu.memory_space<vmem>>, vector<8x8xbf16>
    %c0_73 = arith.constant 0 : index
    %c0_74 = arith.constant 0 : index
    %157 = vector.load %arg17[%c0_73, %c0_74] : memref<1x8xf32, #tpu.memory_space<vmem>>, vector<1x8xf32>
    %cst_75 = arith.constant dense<0.000000e+00> : vector<128x8xf32>
    %158 = tpu.matmul %145, %156, %cst_75 {dimension_numbers = #tpu.dot_dimension_numbers<[1], [0], [0], [1], [0, 0, 1, 1], [], []>} : vector<128x8xbf16>, vector<8x8xbf16>, vector<128x8xf32> -> vector<128x8xf32>
    %159 = vector.broadcast %157 : vector<1x8xf32> to vector<128x8xf32>
    %160 = arith.addf %158, %159 : vector<128x8xf32>
    %cst_76 = arith.constant 0.000000e+00 : f32
    %161 = vector.broadcast %cst_76 : f32 to vector<128x8xf32>
    %162 = arith.subf %161, %160 : vector<128x8xf32>
    %163 = math.exp %162 : vector<128x8xf32>
    %cst_77 = arith.constant 1.000000e+00 : f32
    %164 = vector.broadcast %cst_77 : f32 to vector<128x8xf32>
    %165 = arith.addf %164, %163 : vector<128x8xf32>
    %166 = tpu.reciprocal %165 {approx = true} : vector<128x8xf32> -> vector<128x8xf32>
    %167 = arith.truncf %166 : vector<128x8xf32> to vector<128x8xbf16>
    %cst_78 = arith.constant dense<0.000000e+00> : vector<128x8xf32>
    %168 = tpu.matmul %155, %156, %cst_78 {dimension_numbers = #tpu.dot_dimension_numbers<[1], [0], [0], [1], [0, 0, 1, 1], [], []>} : vector<128x8xbf16>, vector<8x8xbf16>, vector<128x8xf32> -> vector<128x8xf32>
    %169 = vector.broadcast %157 : vector<1x8xf32> to vector<128x8xf32>
    %170 = arith.addf %168, %169 : vector<128x8xf32>
    %cst_79 = arith.constant 0.000000e+00 : f32
    %171 = vector.broadcast %cst_79 : f32 to vector<128x8xf32>
    %172 = arith.subf %171, %170 : vector<128x8xf32>
    %173 = math.exp %172 : vector<128x8xf32>
    %cst_80 = arith.constant 1.000000e+00 : f32
    %174 = vector.broadcast %cst_80 : f32 to vector<128x8xf32>
    %175 = arith.addf %174, %173 : vector<128x8xf32>
    %176 = tpu.reciprocal %175 {approx = true} : vector<128x8xf32> -> vector<128x8xf32>
    %177 = arith.truncf %176 : vector<128x8xf32> to vector<128x8xbf16>
    %c0_81 = arith.constant 0 : index
    %c0_82 = arith.constant 0 : index
    %178 = vector.load %arg18[%c0_81, %c0_82] : memref<8x8xbf16, #tpu.memory_space<vmem>>, vector<8x8xbf16>
    %c0_83 = arith.constant 0 : index
    %c0_84 = arith.constant 0 : index
    %179 = vector.load %arg19[%c0_83, %c0_84] : memref<1x8xf32, #tpu.memory_space<vmem>>, vector<1x8xf32>
    %cst_85 = arith.constant dense<0.000000e+00> : vector<128x8xf32>
    %180 = tpu.matmul %167, %178, %cst_85 {dimension_numbers = #tpu.dot_dimension_numbers<[1], [0], [0], [1], [0, 0, 1, 1], [], []>} : vector<128x8xbf16>, vector<8x8xbf16>, vector<128x8xf32> -> vector<128x8xf32>
    %181 = vector.broadcast %179 : vector<1x8xf32> to vector<128x8xf32>
    %182 = arith.addf %180, %181 : vector<128x8xf32>
    %cst_86 = arith.constant 0.000000e+00 : f32
    %183 = vector.broadcast %cst_86 : f32 to vector<128x8xf32>
    %184 = arith.subf %183, %182 : vector<128x8xf32>
    %185 = math.exp %184 : vector<128x8xf32>
    %cst_87 = arith.constant 1.000000e+00 : f32
    %186 = vector.broadcast %cst_87 : f32 to vector<128x8xf32>
    %187 = arith.addf %186, %185 : vector<128x8xf32>
    %188 = tpu.reciprocal %187 {approx = true} : vector<128x8xf32> -> vector<128x8xf32>
    %189 = arith.truncf %188 : vector<128x8xf32> to vector<128x8xbf16>
    %cst_88 = arith.constant dense<0.000000e+00> : vector<128x8xf32>
    %190 = tpu.matmul %177, %178, %cst_88 {dimension_numbers = #tpu.dot_dimension_numbers<[1], [0], [0], [1], [0, 0, 1, 1], [], []>} : vector<128x8xbf16>, vector<8x8xbf16>, vector<128x8xf32> -> vector<128x8xf32>
    %191 = vector.broadcast %179 : vector<1x8xf32> to vector<128x8xf32>
    %192 = arith.addf %190, %191 : vector<128x8xf32>
    %cst_89 = arith.constant 0.000000e+00 : f32
    %193 = vector.broadcast %cst_89 : f32 to vector<128x8xf32>
    %194 = arith.subf %193, %192 : vector<128x8xf32>
    %195 = math.exp %194 : vector<128x8xf32>
    %cst_90 = arith.constant 1.000000e+00 : f32
    %196 = vector.broadcast %cst_90 : f32 to vector<128x8xf32>
    %197 = arith.addf %196, %195 : vector<128x8xf32>
    %198 = tpu.reciprocal %197 {approx = true} : vector<128x8xf32> -> vector<128x8xf32>
    %199 = arith.truncf %198 : vector<128x8xf32> to vector<128x8xbf16>
    %c0_91 = arith.constant 0 : index
    %c0_92 = arith.constant 0 : index
    %200 = vector.load %arg20[%c0_91, %c0_92] : memref<3x8xbf16, #tpu.memory_space<vmem>>, vector<3x8xbf16>
    %cst_93 = arith.constant dense<0.000000e+00> : vector<3x128xf32>
    %201 = tpu.matmul %200, %189, %cst_93 {dimension_numbers = #tpu.dot_dimension_numbers<[1], [1], [0], [0], [0, 0, 1, 0], [], []>} : vector<3x8xbf16>, vector<128x8xbf16>, vector<3x128xf32> -> vector<3x128xf32>
    %202 = vector.extract_strided_slice %201 {offsets = [0, 0], sizes = [1, 128], strides = [1, 1]} : vector<3x128xf32> to vector<1x128xf32>
    %c0_94 = arith.constant 0 : index
    %203 = memref.load %arg21[%c0_94] : memref<3xf32, #tpu.memory_space<smem>>
    %204 = vector.broadcast %203 : f32 to vector<1x128xf32>
    %205 = arith.addf %202, %204 : vector<1x128xf32>
    %206 = vector.extract_strided_slice %201 {offsets = [1, 0], sizes = [1, 128], strides = [1, 1]} : vector<3x128xf32> to vector<1x128xf32>
    %c1 = arith.constant 1 : index
    %207 = memref.load %arg21[%c1] : memref<3xf32, #tpu.memory_space<smem>>
    %208 = vector.broadcast %207 : f32 to vector<1x128xf32>
    %209 = arith.addf %206, %208 : vector<1x128xf32>
    %210 = vector.extract_strided_slice %201 {offsets = [2, 0], sizes = [1, 128], strides = [1, 1]} : vector<3x128xf32> to vector<1x128xf32>
    %c2 = arith.constant 2 : index
    %211 = memref.load %arg21[%c2] : memref<3xf32, #tpu.memory_space<smem>>
    %212 = vector.broadcast %211 : f32 to vector<1x128xf32>
    %213 = arith.addf %210, %212 : vector<1x128xf32>
    %214 = arith.maximumf %205, %209 : vector<1x128xf32>
    %215 = arith.maximumf %214, %213 : vector<1x128xf32>
    %216 = arith.subf %205, %215 : vector<1x128xf32>
    %217 = math.exp %216 : vector<1x128xf32>
    %218 = arith.subf %209, %215 : vector<1x128xf32>
    %219 = math.exp %218 : vector<1x128xf32>
    %220 = arith.subf %213, %215 : vector<1x128xf32>
    %221 = math.exp %220 : vector<1x128xf32>
    %222 = arith.addf %217, %219 : vector<1x128xf32>
    %223 = arith.addf %222, %221 : vector<1x128xf32>
    %224 = tpu.reciprocal %223 {approx = true} : vector<1x128xf32> -> vector<1x128xf32>
    %225 = arith.mulf %221, %224 : vector<1x128xf32>
    %226 = vector.shape_cast %225 : vector<1x128xf32> to vector<1x1x128xf32>
    %c0_95 = arith.constant 0 : index
    %c0_96 = arith.constant 0 : index
    %c0_97 = arith.constant 0 : index
    %227 = vector.load %arg22[%c0_95, %c0_96, %c0_97] : memref<1x1x256xf32, #tpu.memory_space<vmem>>, vector<1x1x128xf32>
    tpu.vector_store %arg22[%c0_95, %c0_96, %c0_97], %226 {strides = array<i32>} : memref<1x1x256xf32, #tpu.memory_space<vmem>>, vector<1x1x128xf32>,
    %c0_98 = arith.constant 0 : index
    %c0_99 = arith.constant 0 : index
    %228 = vector.load %arg20[%c0_98, %c0_99] : memref<3x8xbf16, #tpu.memory_space<vmem>>, vector<3x8xbf16>
    %cst_100 = arith.constant dense<0.000000e+00> : vector<3x128xf32>
    %229 = tpu.matmul %228, %199, %cst_100 {dimension_numbers = #tpu.dot_dimension_numbers<[1], [1], [0], [0], [0, 0, 1, 0], [], []>} : vector<3x8xbf16>, vector<128x8xbf16>, vector<3x128xf32> -> vector<3x128xf32>
    %230 = vector.extract_strided_slice %229 {offsets = [0, 0], sizes = [1, 128], strides = [1, 1]} : vector<3x128xf32> to vector<1x128xf32>
    %c0_101 = arith.constant 0 : index
    %231 = memref.load %arg21[%c0_101] : memref<3xf32, #tpu.memory_space<smem>>
    %232 = vector.broadcast %231 : f32 to vector<1x128xf32>
    %233 = arith.addf %230, %232 : vector<1x128xf32>
    %234 = vector.extract_strided_slice %229 {offsets = [1, 0], sizes = [1, 128], strides = [1, 1]} : vector<3x128xf32> to vector<1x128xf32>
    %c1_102 = arith.constant 1 : index
    %235 = memref.load %arg21[%c1_102] : memref<3xf32, #tpu.memory_space<smem>>
    %236 = vector.broadcast %235 : f32 to vector<1x128xf32>
    %237 = arith.addf %234, %236 : vector<1x128xf32>
    %238 = vector.extract_strided_slice %229 {offsets = [2, 0], sizes = [1, 128], strides = [1, 1]} : vector<3x128xf32> to vector<1x128xf32>
    %c2_103 = arith.constant 2 : index
    %239 = memref.load %arg21[%c2_103] : memref<3xf32, #tpu.memory_space<smem>>
    %240 = vector.broadcast %239 : f32 to vector<1x128xf32>
    %241 = arith.addf %238, %240 : vector<1x128xf32>
    %242 = arith.maximumf %233, %237 : vector<1x128xf32>
    %243 = arith.maximumf %242, %241 : vector<1x128xf32>
    %244 = arith.subf %233, %243 : vector<1x128xf32>
    %245 = math.exp %244 : vector<1x128xf32>
    %246 = arith.subf %237, %243 : vector<1x128xf32>
    %247 = math.exp %246 : vector<1x128xf32>
    %248 = arith.subf %241, %243 : vector<1x128xf32>
    %249 = math.exp %248 : vector<1x128xf32>
    %250 = arith.addf %245, %247 : vector<1x128xf32>
    %251 = arith.addf %250, %249 : vector<1x128xf32>
    %252 = tpu.reciprocal %251 {approx = true} : vector<1x128xf32> -> vector<1x128xf32>
    %253 = arith.mulf %249, %252 : vector<1x128xf32>
    %254 = vector.shape_cast %253 : vector<1x128xf32> to vector<1x1x128xf32>
    %c0_104 = arith.constant 0 : index
    %c0_105 = arith.constant 0 : index
    %c128_106 = arith.constant 128 : index
    %255 = vector.load %arg22[%c0_104, %c0_105, %c128_106] : memref<1x1x256xf32, #tpu.memory_space<vmem>>, vector<1x1x128xf32>
    tpu.vector_store %arg22[%c0_104, %c0_105, %c128_106], %254 {strides = array<i32>} : memref<1x1x256xf32, #tpu.memory_space<vmem>>, vector<1x1x128xf32>,
    return
  }
  func.func @transform_0(%arg0: i32) -> (i32, i32) {
    %c0_i32 = arith.constant 0 : i32
    %c0_i32_0 = arith.constant 0 : i32
    return %arg0, %c0_i32 : i32, i32
  }
  func.func @transform_1(%arg0: i32) -> (i32, i32) {
    %c0_i32 = arith.constant 0 : i32
    %c0_i32_0 = arith.constant 0 : i32
    %c0_i32_1 = arith.constant 0 : i32
    return %c0_i32, %c0_i32_0 : i32, i32
  }
  func.func @transform_2(%arg0: i32) -> (i32, i32) {
    %c0_i32 = arith.constant 0 : i32
    %c0_i32_0 = arith.constant 0 : i32
    %c0_i32_1 = arith.constant 0 : i32
    return %c0_i32, %c0_i32_0 : i32, i32
  }
  func.func @transform_3(%arg0: i32) -> (i32, i32) {
    %c0_i32 = arith.constant 0 : i32
    %c0_i32_0 = arith.constant 0 : i32
    %c0_i32_1 = arith.constant 0 : i32
    return %c0_i32, %c0_i32_0 : i32, i32
  }
  func.func @transform_4(%arg0: i32) -> (i32, i32) {
    %c0_i32 = arith.constant 0 : i32
    %c0_i32_0 = arith.constant 0 : i32
    %c0_i32_1 = arith.constant 0 : i32
    return %c0_i32, %c0_i32_0 : i32, i32
  }
  func.func @transform_5(%arg0: i32) -> (i32, i32) {
    %c0_i32 = arith.constant 0 : i32
    %c0_i32_0 = arith.constant 0 : i32
    %c0_i32_1 = arith.constant 0 : i32
    return %c0_i32, %c0_i32_0 : i32, i32
  }
  func.func @transform_6(%arg0: i32) -> (i32, i32) {
    %c0_i32 = arith.constant 0 : i32
    %c0_i32_0 = arith.constant 0 : i32
    %c0_i32_1 = arith.constant 0 : i32
    return %c0_i32, %c0_i32_0 : i32, i32
  }
  func.func @transform_7(%arg0: i32) -> (i32, i32) {
    %c0_i32 = arith.constant 0 : i32
    %c0_i32_0 = arith.constant 0 : i32
    %c0_i32_1 = arith.constant 0 : i32
    return %c0_i32, %c0_i32_0 : i32, i32
  }
  func.func @transform_8(%arg0: i32) -> (i32, i32) {
    %c0_i32 = arith.constant 0 : i32
    %c0_i32_0 = arith.constant 0 : i32
    %c0_i32_1 = arith.constant 0 : i32
    return %c0_i32, %c0_i32_0 : i32, i32
  }
  func.func @transform_9(%arg0: i32) -> (i32, i32) {
    %c0_i32 = arith.constant 0 : i32
    %c0_i32_0 = arith.constant 0 : i32
    %c0_i32_1 = arith.constant 0 : i32
    return %c0_i32, %c0_i32_0 : i32, i32
  }
  func.func @transform_10(%arg0: i32) -> (i32, i32) {
    %c0_i32 = arith.constant 0 : i32
    %c0_i32_0 = arith.constant 0 : i32
    %c0_i32_1 = arith.constant 0 : i32
    return %c0_i32, %c0_i32_0 : i32, i32
  }
  func.func @transform_11(%arg0: i32) -> (i32, i32) {
    %c0_i32 = arith.constant 0 : i32
    %c0_i32_0 = arith.constant 0 : i32
    %c0_i32_1 = arith.constant 0 : i32
    return %c0_i32, %c0_i32_0 : i32, i32
  }
  func.func @transform_12(%arg0: i32) -> (i32, i32) {
    %c0_i32 = arith.constant 0 : i32
    %c0_i32_0 = arith.constant 0 : i32
    %c0_i32_1 = arith.constant 0 : i32
    return %c0_i32, %c0_i32_0 : i32, i32
  }
  func.func @transform_13(%arg0: i32) -> (i32, i32) {
    %c0_i32 = arith.constant 0 : i32
    %c0_i32_0 = arith.constant 0 : i32
    %c0_i32_1 = arith.constant 0 : i32
    return %c0_i32, %c0_i32_0 : i32, i32
  }
  func.func @transform_14(%arg0: i32) -> (i32, i32) {
    %c0_i32 = arith.constant 0 : i32
    %c0_i32_0 = arith.constant 0 : i32
    %c0_i32_1 = arith.constant 0 : i32
    return %c0_i32, %c0_i32_0 : i32, i32
  }
  func.func @transform_15(%arg0: i32) -> (i32, i32) {
    %c0_i32 = arith.constant 0 : i32
    %c0_i32_0 = arith.constant 0 : i32
    %c0_i32_1 = arith.constant 0 : i32
    return %c0_i32, %c0_i32_0 : i32, i32
  }
  func.func @transform_16(%arg0: i32) -> (i32, i32) {
    %c0_i32 = arith.constant 0 : i32
    %c0_i32_0 = arith.constant 0 : i32
    %c0_i32_1 = arith.constant 0 : i32
    return %c0_i32, %c0_i32_0 : i32, i32
  }
  func.func @transform_17(%arg0: i32) -> (i32, i32) {
    %c0_i32 = arith.constant 0 : i32
    %c0_i32_0 = arith.constant 0 : i32
    %c0_i32_1 = arith.constant 0 : i32
    return %c0_i32, %c0_i32_0 : i32, i32
  }
  func.func @transform_18(%arg0: i32) -> (i32, i32) {
    %c0_i32 = arith.constant 0 : i32
    %c0_i32_0 = arith.constant 0 : i32
    %c0_i32_1 = arith.constant 0 : i32
    return %c0_i32, %c0_i32_0 : i32, i32
  }
  func.func @transform_19(%arg0: i32) -> (i32, i32) {
    %c0_i32 = arith.constant 0 : i32
    %c0_i32_0 = arith.constant 0 : i32
    %c0_i32_1 = arith.constant 0 : i32
    return %c0_i32, %c0_i32_0 : i32, i32
  }
  func.func @transform_20(%arg0: i32) -> i32 {
    %c0_i32 = arith.constant 0 : i32
    %c0_i32_0 = arith.constant 0 : i32
    return %c0_i32 : i32
  }
  func.func @transform_21(%arg0: i32) -> (i32, i32, i32) {
    %c0_i32 = arith.constant 0 : i32
    %c0_i32_0 = arith.constant 0 : i32
    %c0_i32_1 = arith.constant 0 : i32
    return %arg0, %c0_i32, %c0_i32_0 : i32, i32, i32
  }
}

</mosaic_0001>

<llo_original>
// kernel: tpu_custom_call.1
$region0: #{tpu_custom_call.1}
  #allocation0 [shape = 'u32[]', space=smem, size = 0x4, offset = 0x4, fixed_abs, tag = 'smem constant byte address 0x4 - core index']
  #allocation1 [shape = 'u32[144,128]{1,0:T(1,128)}', space=vmem, size = 0x12000, scoped, tag = 'internal scratch']
  %s0 = inlined_call_operand.vmem [shape: bf16[256,32], index: 0, kind: input, shape index: {}]
  %s1 = inlined_call_operand.hbm [shape: bf16[32,128], index: 1, kind: input, shape index: {}]
  %s2 = inlined_call_operand.vmem [shape: f32[1,128], index: 2, kind: input, shape index: {}]
  %s3 = inlined_call_operand.vmem [shape: bf16[128,256], index: 3, kind: input, shape index: {}]
  %s4 = inlined_call_operand.hbm [shape: f32[1,256], index: 4, kind: input, shape index: {}]
  %s5 = inlined_call_operand.vmem [shape: bf16[256,128], index: 5, kind: input, shape index: {}]
  %s6 = inlined_call_operand.hbm [shape: f32[1,128], index: 6, kind: input, shape index: {}]
  %s7 = inlined_call_operand.vmem [shape: bf16[128,16], index: 7, kind: input, shape index: {}]
  %s8 = inlined_call_operand.hbm [shape: f32[1,16], index: 8, kind: input, shape index: {}]
  %s9 = inlined_call_operand.vmem [shape: bf16[16,16], index: 9, kind: input, shape index: {}]
  %s10 = inlined_call_operand.hbm [shape: f32[1,16], index: 10, kind: input, shape index: {}]
  %s11 = inlined_call_operand.vmem [shape: bf16[16,16], index: 11, kind: input, shape index: {}]
  %s12 = inlined_call_operand.vmem [shape: f32[1,16], index: 12, kind: input, shape index: {}]
  %s13 = inlined_call_operand.vmem [shape: bf16[16,8], index: 13, kind: input, shape index: {}]
  %s14 = inlined_call_operand.vmem [shape: f32[1,8], index: 14, kind: input, shape index: {}]
  %s15 = inlined_call_operand.vmem [shape: bf16[8,8], index: 15, kind: input, shape index: {}]
  %s16 = inlined_call_operand.vmem [shape: f32[1,8], index: 16, kind: input, shape index: {}]
  %s17 = inlined_call_operand.vmem [shape: bf16[8,8], index: 17, kind: input, shape index: {}]
  %s18 = inlined_call_operand.vmem [shape: f32[1,8], index: 18, kind: input, shape index: {}]
  %s19 = inlined_call_operand.vmem [shape: bf16[3,8], index: 19, kind: input, shape index: {}]
  %s20 = inlined_call_operand.vmem [shape: f32[3], index: 20, kind: input, shape index: {}]
  %s21 = inlined_call_operand.hbm [shape: f32[1,1,256], index: 21, kind: output, shape index: {}]
  %s22 = sld [smem:[#allocation0]]
  $region118: #{tpu_custom_call.1} parent=0
    _
  %s24 = ssub.s32 1, %s22
  %s25 = scalar_select 0, %s24, %s22
  $region1: #{tpu_custom_call.1} parent=0
    #allocation2 [shape = 'u8[8192]{0}', space=vmem, size = 0x2000, scoped, tag = 'input window, operand 1, single buffered']
    #allocation3 [shape = 's32[1]{0}', space=sflag, size = 0x4, scoped, tag = 'scoped memory for tpu_custom_call.1']
    #allocation4 [shape = 's32[1]{0}', space=sflag, size = 0x4, scoped, tag = 'scoped memory for tpu_custom_call.1']
    #allocation5 [shape = 's32[1]{0}', space=sflag, size = 0x4, scoped, tag = 'scoped memory for tpu_custom_call.1']
    #allocation6 [shape = 'u8[1024]{0}', space=vmem, size = 0x400, scoped, tag = 'input window, operand 4, single buffered']
    #allocation7 [shape = 's32[1]{0}', space=sflag, size = 0x4, scoped, tag = 'scoped memory for tpu_custom_call.1']
    #allocation8 [shape = 'u8[512]{0}', space=vmem, size = 0x400, scoped, tag = 'input window, operand 6, single buffered']
    #allocation9 [shape = 'u8[512]{0}', space=vmem, size = 0x400, scoped, tag = 'input window, operand 8, single buffered']
    #allocation10 [shape = 's32[1]{0}', space=sflag, size = 0x4, scoped, tag = 'scoped memory for tpu_custom_call.1']
    #allocation11 [shape = 'u8[512]{0}', space=vmem, size = 0x400, scoped, tag = 'input window, operand 10, single buffered']
    #allocation12 [shape = 'u8[512]{0}', space=smem, size = 0x200, scoped, tag = 'input window, operand 20, single buffered']
    #allocation13 [shape = 'u8[1024]{0}', space=vmem, size = 0x400, scoped, tag = 'output window, operand 0, single buffered']
    %26 = vsyncpa [#allocation3], 0
    %27 = vsyncpa [#allocation7], 0
    %28 = vsyncpa [#allocation10], 0
    %29 = vsyncpa [#allocation5], 0
    %30 = vsyncpa [#allocation4], 0
    // Predicated region
    $region2: #{tpu_custom_call.1} parent=1 // pred_check
      _
    $region3: #{tpu_custom_call.1} parent=1 // pred_check_branch
      %32 = sbr.rel (0) target = $region5
    $region4: #{tpu_custom_call.1} parent=1 // pred_region
      _
    $region5: #{tpu_custom_call.1} parent=1 // pred_fallthru
      _
    // Predicated region
    $region6: #{tpu_custom_call.1} parent=1 // pred_check
      _
    $region7: #{tpu_custom_call.1} parent=1 // pred_check_branch
      %34 = sbr.rel (0) target = $region9
    $region8: #{tpu_custom_call.1} parent=1 // pred_region
      %s36 = ssub.s32 256, 256
      %37 = vsyncadd [#allocation3], %s36
      %s38 = sshll.u32 [#allocation2], 4
      %s39 = int_to_ptr.vmem [resolvable:$true] %s38
      %44 = dma.hbm_to_vmem [thread:$0]  %s1, 256, %s39, [#allocation3], 64, 64, 4
    $region9: #{tpu_custom_call.1} parent=1 // pred_fallthru
      _
    // Predicated region
    $region10: #{tpu_custom_call.1} parent=1 // pred_check
      _
    $region11: #{tpu_custom_call.1} parent=1 // pred_check_branch
      %46 = sbr.rel (0) target = $region13
    $region12: #{tpu_custom_call.1} parent=1 // pred_region
      _
    $region13: #{tpu_custom_call.1} parent=1 // pred_fallthru
      _
    // Predicated region
    $region14: #{tpu_custom_call.1} parent=1 // pred_check
      _
    $region15: #{tpu_custom_call.1} parent=1 // pred_check_branch
      %48 = sbr.rel (0) target = $region17
    $region16: #{tpu_custom_call.1} parent=1 // pred_region
      _
    $region17: #{tpu_custom_call.1} parent=1 // pred_fallthru
      _
    // Predicated region
    $region18: #{tpu_custom_call.1} parent=1 // pred_check
      _
    $region19: #{tpu_custom_call.1} parent=1 // pred_check_branch
      %50 = sbr.rel (0) target = $region21
    $region20: #{tpu_custom_call.1} parent=1 // pred_region
      %s52 = ssub.s32 32, 32
      %53 = vsyncadd [#allocation7], %s52
      %s55 = sshll.u32 [#allocation6], 4
      %s56 = int_to_ptr.vmem [resolvable:$true] %s55
      %58 = dma.hbm_to_vmem [thread:$0]  %s4, 32, %s56, [#allocation7]
    $region21: #{tpu_custom_call.1} parent=1 // pred_fallthru
      _
    // Predicated region
    $region22: #{tpu_custom_call.1} parent=1 // pred_check
      _
    $region23: #{tpu_custom_call.1} parent=1 // pred_check_branch
      %60 = sbr.rel (0) target = $region25
    $region24: #{tpu_custom_call.1} parent=1 // pred_region
      _
    $region25: #{tpu_custom_call.1} parent=1 // pred_fallthru
      _
    // Predicated region
    $region26: #{tpu_custom_call.1} parent=1 // pred_check
      _
    $region27: #{tpu_custom_call.1} parent=1 // pred_check_branch
      %62 = sbr.rel (0) target = $region29
    $region28: #{tpu_custom_call.1} parent=1 // pred_region
      %s64 = ssub.s32 16, 16
      %65 = vsyncadd [#allocation7], %s64
      %s67 = sshll.u32 [#allocation8], 4
      %s68 = int_to_ptr.vmem [resolvable:$true] %s67
      %70 = dma.hbm_to_vmem [thread:$0]  %s6, 16, %s68, [#allocation7]
    $region29: #{tpu_custom_call.1} parent=1 // pred_fallthru
      _
    // Predicated region
    $region30: #{tpu_custom_call.1} parent=1 // pred_check
      _
    $region31: #{tpu_custom_call.1} parent=1 // pred_check_branch
      %72 = sbr.rel (0) target = $region33
    $region32: #{tpu_custom_call.1} parent=1 // pred_region
      _
    $region33: #{tpu_custom_call.1} parent=1 // pred_fallthru
      _
    // Predicated region
    $region34: #{tpu_custom_call.1} parent=1 // pred_check
      _
    $region35: #{tpu_custom_call.1} parent=1 // pred_check_branch
      %74 = sbr.rel (0) target = $region37
    $region36: #{tpu_custom_call.1} parent=1 // pred_region
      %s76 = ssub.s32 16, 16
      %77 = vsyncadd [#allocation10], %s76
      %s79 = sshll.u32 [#allocation9], 4
      %s80 = int_to_ptr.vmem [resolvable:$true] %s79
      %82 = dma.hbm_to_vmem [thread:$0]  %s8, 16, %s80, [#allocation10]
    $region37: #{tpu_custom_call.1} parent=1 // pred_fallthru
      _
    // Predicated region
    $region38: #{tpu_custom_call.1} parent=1 // pred_check
      _
    $region39: #{tpu_custom_call.1} parent=1 // pred_check_branch
      %84 = sbr.rel (0) target = $region41
    $region40: #{tpu_custom_call.1} parent=1 // pred_region
      _
    $region41: #{tpu_custom_call.1} parent=1 // pred_fallthru
      _
    // Predicated region
    $region42: #{tpu_custom_call.1} parent=1 // pred_check
      _
    $region43: #{tpu_custom_call.1} parent=1 // pred_check_branch
      %86 = sbr.rel (0) target = $region45
    $region44: #{tpu_custom_call.1} parent=1 // pred_region
      %s88 = ssub.s32 16, 16
      %89 = vsyncadd [#allocation10], %s88
      %s91 = sshll.u32 [#allocation11], 4
      %s92 = int_to_ptr.vmem [resolvable:$true] %s91
      %94 = dma.hbm_to_vmem [thread:$0]  %s10, 16, %s92, [#allocation10]
    $region45: #{tpu_custom_call.1} parent=1 // pred_fallthru
      _
    // Predicated region
    $region46: #{tpu_custom_call.1} parent=1 // pred_check
      _
    $region47: #{tpu_custom_call.1} parent=1 // pred_check_branch
      %96 = sbr.rel (0) target = $region49
    $region48: #{tpu_custom_call.1} parent=1 // pred_region
      _
    $region49: #{tpu_custom_call.1} parent=1 // pred_fallthru
      _
    // Predicated region
    $region50: #{tpu_custom_call.1} parent=1 // pred_check
      _
    $region51: #{tpu_custom_call.1} parent=1 // pred_check_branch
      %98 = sbr.rel (0) target = $region53
    $region52: #{tpu_custom_call.1} parent=1 // pred_region
      _
    $region53: #{tpu_custom_call.1} parent=1 // pred_fallthru
      _
    // Predicated region
    $region54: #{tpu_custom_call.1} parent=1 // pred_check
      _
    $region55: #{tpu_custom_call.1} parent=1 // pred_check_branch
      %100 = sbr.rel (0) target = $region57
    $region56: #{tpu_custom_call.1} parent=1 // pred_region
      _
    $region57: #{tpu_custom_call.1} parent=1 // pred_fallthru
      _
    // Predicated region
    $region58: #{tpu_custom_call.1} parent=1 // pred_check
      _
    $region59: #{tpu_custom_call.1} parent=1 // pred_check_branch
      %102 = sbr.rel (0) target = $region61
    $region60: #{tpu_custom_call.1} parent=1 // pred_region
      _
    $region61: #{tpu_custom_call.1} parent=1 // pred_fallthru
      _
    // Predicated region
    $region62: #{tpu_custom_call.1} parent=1 // pred_check
      _
    $region63: #{tpu_custom_call.1} parent=1 // pred_check_branch
      %104 = sbr.rel (0) target = $region65
    $region64: #{tpu_custom_call.1} parent=1 // pred_region
      _
    $region65: #{tpu_custom_call.1} parent=1 // pred_fallthru
      _
    // Predicated region
    $region66: #{tpu_custom_call.1} parent=1 // pred_check
      _
    $region67: #{tpu_custom_call.1} parent=1 // pred_check_branch
      %106 = sbr.rel (0) target = $region69
    $region68: #{tpu_custom_call.1} parent=1 // pred_region
      _
    $region69: #{tpu_custom_call.1} parent=1 // pred_fallthru
      _
    // Predicated region
    $region70: #{tpu_custom_call.1} parent=1 // pred_check
      _
    $region71: #{tpu_custom_call.1} parent=1 // pred_check_branch
      %108 = sbr.rel (0) target = $region73
    $region72: #{tpu_custom_call.1} parent=1 // pred_region
      _
    $region73: #{tpu_custom_call.1} parent=1 // pred_fallthru
      _
    // Predicated region
    $region74: #{tpu_custom_call.1} parent=1 // pred_check
      _
    $region75: #{tpu_custom_call.1} parent=1 // pred_check_branch
      %110 = sbr.rel (0) target = $region77
    $region76: #{tpu_custom_call.1} parent=1 // pred_region
      _
    $region77: #{tpu_custom_call.1} parent=1 // pred_fallthru
      _
    // Predicated region
    $region78: #{tpu_custom_call.1} parent=1 // pred_check
      _
    $region79: #{tpu_custom_call.1} parent=1 // pred_check_branch
      %112 = sbr.rel (0) target = $region81
    $region80: #{tpu_custom_call.1} parent=1 // pred_region
      _
    $region81: #{tpu_custom_call.1} parent=1 // pred_fallthru
      _
    // Predicated region
    $region82: #{tpu_custom_call.1} parent=1 // pred_check
      _
    $region83: #{tpu_custom_call.1} parent=1 // pred_check_branch
      %114 = sbr.rel (0) target = $region85
    $region84: #{tpu_custom_call.1} parent=1 // pred_region
      %s116 = ssub.s32 16, 16
      %117 = vsyncadd [#allocation5], %s116
      %s119 = sshll.u32 %s20, 4
      %s120 = int_to_ptr.vmem [resolvable:$true] %s119
      %122 = dma.vmem_to_smem %s120, 16, [#allocation12], [#allocation5]
    $region85: #{tpu_custom_call.1} parent=1 // pred_fallthru
      _
    // Predicated region
    $region86: #{tpu_custom_call.1} parent=1 // pred_check
      _
    $region87: #{tpu_custom_call.1} parent=1 // pred_check_branch
      %124 = sbr.rel (0) target = $region89
    $region88: #{tpu_custom_call.1} parent=1 // pred_region
      %125 = dma.done [#allocation3], 256
    $region89: #{tpu_custom_call.1} parent=1 // pred_fallthru
      _
    // Predicated region
    $region90: #{tpu_custom_call.1} parent=1 // pred_check
      _
    $region91: #{tpu_custom_call.1} parent=1 // pred_check_branch
      %127 = sbr.rel (0) target = $region93
    $region92: #{tpu_custom_call.1} parent=1 // pred_region
      %128 = dma.done [#allocation7], 32
    $region93: #{tpu_custom_call.1} parent=1 // pred_fallthru
      _
    // Predicated region
    $region94: #{tpu_custom_call.1} parent=1 // pred_check
      _
    $region95: #{tpu_custom_call.1} parent=1 // pred_check_branch
      %130 = sbr.rel (0) target = $region97
    $region96: #{tpu_custom_call.1} parent=1 // pred_region
      %131 = dma.done [#allocation7], 16
    $region97: #{tpu_custom_call.1} parent=1 // pred_fallthru
      _
    // Predicated region
    $region98: #{tpu_custom_call.1} parent=1 // pred_check
      _
    $region99: #{tpu_custom_call.1} parent=1 // pred_check_branch
      %133 = sbr.rel (0) target = $region101
    $region100: #{tpu_custom_call.1} parent=1 // pred_region
      %134 = dma.done [#allocation10], 16
    $region101: #{tpu_custom_call.1} parent=1 // pred_fallthru
      _
    // Predicated region
    $region102: #{tpu_custom_call.1} parent=1 // pred_check
      _
    $region103: #{tpu_custom_call.1} parent=1 // pred_check_branch
      %136 = sbr.rel (0) target = $region105
    $region104: #{tpu_custom_call.1} parent=1 // pred_region
      %137 = dma.done [#allocation10], 16
    $region105: #{tpu_custom_call.1} parent=1 // pred_fallthru
      _
    // Predicated region
    $region106: #{tpu_custom_call.1} parent=1 // pred_check
      _
    $region107: #{tpu_custom_call.1} parent=1 // pred_check_branch
      %139 = sbr.rel (0) target = $region109
    $region108: #{tpu_custom_call.1} parent=1 // pred_region
      %140 = dma.done [#allocation5], 16
    $region109: #{tpu_custom_call.1} parent=1 // pred_fallthru
      _
    %141 = sfence
    %v143 = vld [vmem:[%s0] sm:$0xf]
    %v144 = vld [vmem:[%s0 + $0x4] sm:$0xf]
    %v145 = vld [vmem:[%s0 + $0x8] sm:$0xf]
    %v146 = vld [vmem:[%s0 + $0xc] sm:$0xf]
    %v147 = vld [vmem:[%s0 + $0x10] sm:$0xf]
    %v148 = vld [vmem:[%s0 + $0x14] sm:$0xf]
    %v149 = vld [vmem:[%s0 + $0x18] sm:$0xf]
    %v150 = vld [vmem:[%s0 + $0x1c] sm:$0xf]
    %v151 = vld [vmem:[%s0 + $0x20] sm:$0xf]
    %v152 = vld [vmem:[%s0 + $0x24] sm:$0xf]
    %v153 = vld [vmem:[%s0 + $0x28] sm:$0xf]
    %v154 = vld [vmem:[%s0 + $0x2c] sm:$0xf]
    %v155 = vld [vmem:[%s0 + $0x30] sm:$0xf]
    %v156 = vld [vmem:[%s0 + $0x34] sm:$0xf]
    %v157 = vld [vmem:[%s0 + $0x38] sm:$0xf]
    %v158 = vld [vmem:[%s0 + $0x3c] sm:$0xf]
    %v159 = vld [vmem:[%s0 + $0x40] sm:$0xf]
    %v160 = vld [vmem:[%s0 + $0x44] sm:$0xf]
    %v161 = vld [vmem:[%s0 + $0x48] sm:$0xf]
    %v162 = vld [vmem:[%s0 + $0x4c] sm:$0xf]
    %v163 = vld [vmem:[%s0 + $0x50] sm:$0xf]
    %v164 = vld [vmem:[%s0 + $0x54] sm:$0xf]
    %v165 = vld [vmem:[%s0 + $0x58] sm:$0xf]
    %v166 = vld [vmem:[%s0 + $0x5c] sm:$0xf]
    %v167 = vld [vmem:[%s0 + $0x60] sm:$0xf]
    %v168 = vld [vmem:[%s0 + $0x64] sm:$0xf]
    %v169 = vld [vmem:[%s0 + $0x68] sm:$0xf]
    %v170 = vld [vmem:[%s0 + $0x6c] sm:$0xf]
    %v171 = vld [vmem:[%s0 + $0x70] sm:$0xf]
    %v172 = vld [vmem:[%s0 + $0x74] sm:$0xf]
    %v173 = vld [vmem:[%s0 + $0x78] sm:$0xf]
    %v174 = vld [vmem:[%s0 + $0x7c] sm:$0xf]
    %v175 = vld [vmem:[#allocation2] sm:$0xf]
    %v176 = vld [vmem:[#allocation2 + $0x4] sm:$0xf]
    %v177 = vld [vmem:[#allocation2 + $0x8] sm:$0xf]
    %v178 = vld [vmem:[#allocation2 + $0xc] sm:$0xf]
    %v179 = vld [vmem:[%s2] sm:$0x1]
    %v181 = vlaneseq
    %v182 = vshrl.u32 %v181, 7
    %v183 = vsub.s32 0, %v182
    %v184 = vrot.slane %v179, %v183
    %v202 = vunpack.c.l.b16 %v143
    %v203 = vunpack.c.l.b16 %v144
    %v204 = vunpack.c.l.b16 %v145
    %v205 = vunpack.c.l.b16 %v146
    %v206 = vunpack.c.l.b16 %v147
    %v207 = vunpack.c.l.b16 %v148
    %v208 = vunpack.c.l.b16 %v149
    %v209 = vunpack.c.l.b16 %v150
    %v210 = vunpack.c.l.b16 %v151
    %v211 = vunpack.c.l.b16 %v152
    %v212 = vunpack.c.l.b16 %v153
    %v213 = vunpack.c.l.b16 %v154
    %v214 = vunpack.c.l.b16 %v155
    %v215 = vunpack.c.l.b16 %v156
    %v216 = vunpack.c.l.b16 %v157
    %v217 = vunpack.c.l.b16 %v158
    %v218 = vpack.c.b16 %v203, %v202
    %v219 = vpack.c.b16 %v205, %v204
    %v220 = vpack.c.b16 %v207, %v206
    %v221 = vpack.c.b16 %v209, %v208
    %v222 = vpack.c.b16 %v211, %v210
    %v223 = vpack.c.b16 %v213, %v212
    %v224 = vpack.c.b16 %v215, %v214
    %v225 = vpack.c.b16 %v217, %v216
    %v230 = vunpack.c.l.b16 %v175
    %v231 = vunpack.c.l.b16 %v176
    %v232 = vunpack.c.l.b16 %v177
    %v233 = vunpack.c.l.b16 %v178
    %v234 = vpack.c.b16 %v231, %v230
    %v235 = vpack.c.b16 %v233, %v232
    %vm238 = vcmask 261120
    %v240 = vsel %vm238, %v218, 0
    %v243 = vsel %vm238, %v219, 0
    %v246 = vsel %vm238, %v220, 0
    %v249 = vsel %vm238, %v221, 0
    %v252 = vsel %vm238, %v222, 0
    %v255 = vsel %vm238, %v223, 0
    %v258 = vsel %vm238, %v224, 0
    %v261 = vsel %vm238, %v225, 0
    %263 = vmatprep.subr.bf16.mxu0 0
    %264 = vmatpush1.bf16.msra.mxu0 %v234
    %265 = vmatprep.subr.bf16.mxu0 0
    %266 = vmatpush1.bf16.msra.mxu0 %v235
    %267 = vmatprep.subr.bf16.mxu0 0
    %268 = vmatpush1.bf16.msra.mxu0 0
    %269 = vmatprep.subr.bf16.mxu0 0
    %270 = vmatpush1.bf16.msra.mxu0 0
    %271 = vmatprep.subr.bf16.mxu0 0
    %272 = vmatpush1.bf16.msra.mxu0 0
    %273 = vmatprep.subr.bf16.mxu0 0
    %274 = vmatpush1.bf16.msra.mxu0 0
    %275 = vmatprep.subr.bf16.mxu0 0
    %276 = vmatpush1.bf16.msra.mxu0 0
    %277 = vmatprep.subr.bf16.mxu0 0
    %278 = vmatpush1.bf16.msra.mxu0 0
    %279 = vmatprep.subr.bf16.mxu0 0
    %280 = vmatpush1.bf16.msra.mxu0 0
    %281 = vmatprep.subr.bf16.mxu0 0
    %282 = vmatpush1.bf16.msra.mxu0 0
    %283 = vmatprep.subr.bf16.mxu0 0
    %284 = vmatpush1.bf16.msra.mxu0 0
    %285 = vmatprep.subr.bf16.mxu0 0
    %286 = vmatpush1.bf16.msra.mxu0 0
    %287 = vmatprep.subr.bf16.mxu0 0
    %288 = vmatpush1.bf16.msra.mxu0 0
    %289 = vmatprep.subr.bf16.mxu0 0
    %290 = vmatpush1.bf16.msra.mxu0 0
    %291 = vmatprep.subr.bf16.mxu0 0
    %292 = vmatpush1.bf16.msra.mxu0 0
    %293 = vmatprep.subr.bf16.mxu0 0
    %294 = vmatpush1.bf16.msra.mxu0 0
    %295 = vmatprep.mubr.bf16.mxu0 0
    %296 = vmatmul.mubr.bf16.gmra.mrb[0].mxu0 %v240
    %v297 = vpop.f32.mrb[0].mxu0
    %v298 = vadd.f32 %v184, %v297
    %v299 = vpop.f32.mrb[0].mxu0
    %v300 = vpop.f32.mrb[0].mxu0
    %v301 = vadd.f32 %v184, %v300
    %v302 = vpop.f32.mrb[0].mxu0
    %303 = vmatprep.mubr.bf16.mxu0 0
    %304 = vmatmul.mubr.bf16.gmra.mrb[0].mxu0 %v243
    %v305 = vpop.f32.mrb[0].mxu0
    %v306 = vadd.f32 %v184, %v305
    %v307 = vpop.f32.mrb[0].mxu0
    %v308 = vpop.f32.mrb[0].mxu0
    %v309 = vadd.f32 %v184, %v308
    %v310 = vpop.f32.mrb[0].mxu0
    %311 = vmatprep.mubr.bf16.mxu0 0
    %312 = vmatmul.mubr.bf16.gmra.mrb[0].mxu0 %v246
    %v313 = vpop.f32.mrb[0].mxu0
    %v314 = vadd.f32 %v184, %v313
    %v315 = vpop.f32.mrb[0].mxu0
    %v316 = vpop.f32.mrb[0].mxu0
    %v317 = vadd.f32 %v184, %v316
    %v318 = vpop.f32.mrb[0].mxu0
    %319 = vmatprep.mubr.bf16.mxu0 0
    %320 = vmatmul.mubr.bf16.gmra.mrb[0].mxu0 %v249
    %v321 = vpop.f32.mrb[0].mxu0
    %v322 = vadd.f32 %v184, %v321
    %v323 = vpop.f32.mrb[0].mxu0
    %v324 = vpop.f32.mrb[0].mxu0
    %v325 = vadd.f32 %v184, %v324
    %v326 = vpop.f32.mrb[0].mxu0
    %327 = vmatprep.mubr.bf16.mxu0 0
    %328 = vmatmul.mubr.bf16.gmra.mrb[0].mxu0 %v252
    %v329 = vpop.f32.mrb[0].mxu0
    %v330 = vadd.f32 %v184, %v329
    %v331 = vpop.f32.mrb[0].mxu0
    %v332 = vpop.f32.mrb[0].mxu0
    %v333 = vadd.f32 %v184, %v332
    %v334 = vpop.f32.mrb[0].mxu0
    %335 = vmatprep.mubr.bf16.mxu0 0
    %336 = vmatmul.mubr.bf16.gmra.mrb[0].mxu0 %v255
    %v337 = vpop.f32.mrb[0].mxu0
    %v338 = vadd.f32 %v184, %v337
    %v339 = vpop.f32.mrb[0].mxu0
    %v340 = vpop.f32.mrb[0].mxu0
    %v341 = vadd.f32 %v184, %v340
    %v342 = vpop.f32.mrb[0].mxu0
    %343 = vmatprep.mubr.bf16.mxu0 0
    %344 = vmatmul.mubr.bf16.gmra.mrb[0].mxu0 %v258
    %v345 = vpop.f32.mrb[0].mxu0
    %v346 = vadd.f32 %v184, %v345
    %v347 = vpop.f32.mrb[0].mxu0
    %v348 = vpop.f32.mrb[0].mxu0
    %v349 = vadd.f32 %v184, %v348
    %v350 = vpop.f32.mrb[0].mxu0
    %351 = vmatprep.mubr.bf16.mxu0 0
    %352 = vmatmul.mubr.bf16.gmra.mrb[0].mxu0 %v261
    %v353 = vpop.f32.mrb[0].mxu0
    %v354 = vadd.f32 %v184, %v353
    %v355 = vpop.f32.mrb[0].mxu0
    %v356 = vpop.f32.mrb[0].mxu0
    %v357 = vadd.f32 %v184, %v356
    %v358 = vpop.f32.mrb[0].mxu0
    %359 = vdwg.mxu0
    %v360 = vsub.f32 0.0, %v298
    %v361 = vsub.f32 0.0, %v301
    %v362 = vsub.f32 0.0, %v306
    %v363 = vsub.f32 0.0, %v309
    %v364 = vsub.f32 0.0, %v314
    %v365 = vsub.f32 0.0, %v317
    %v366 = vsub.f32 0.0, %v322
    %v367 = vsub.f32 0.0, %v325
    %v368 = vsub.f32 0.0, %v330
    %v369 = vsub.f32 0.0, %v333
    %v370 = vsub.f32 0.0, %v338
    %v371 = vsub.f32 0.0, %v341
    %v372 = vsub.f32 0.0, %v346
    %v373 = vsub.f32 0.0, %v349
    %v374 = vsub.f32 0.0, %v354
    %v375 = vsub.f32 0.0, %v357
    %v376 = vmul.f32 %v360, 1.442695
    %v377 = vpow.pop %v376
    %v378 = vmul.f32 %v361, 1.442695
    %v379 = vpow.pop %v378
    %v380 = vmul.f32 %v362, 1.442695
    %v381 = vpow.pop %v380
    %v382 = vmul.f32 %v363, 1.442695
    %v383 = vpow.pop %v382
    %v384 = vmul.f32 %v364, 1.442695
    %v385 = vpow.pop %v384
    %v386 = vmul.f32 %v365, 1.442695
    %v387 = vpow.pop %v386
    %v388 = vmul.f32 %v366, 1.442695
    %v389 = vpow.pop %v388
    %v390 = vmul.f32 %v367, 1.442695
    %v391 = vpow.pop %v390
    %v392 = vmul.f32 %v368, 1.442695
    %v393 = vpow.pop %v392
    %v394 = vmul.f32 %v369, 1.442695
    %v395 = vpow.pop %v394
    %v396 = vmul.f32 %v370, 1.442695
    %v397 = vpow.pop %v396
    %v398 = vmul.f32 %v371, 1.442695
    %v399 = vpow.pop %v398
    %v400 = vmul.f32 %v372, 1.442695
    %v401 = vpow.pop %v400
    %v402 = vmul.f32 %v373, 1.442695
    %v403 = vpow.pop %v402
    %v404 = vmul.f32 %v374, 1.442695
    %v405 = vpow.pop %v404
    %v406 = vmul.f32 %v375, 1.442695
    %v407 = vpow.pop %v406
    %v408 = vadd.f32 %v377, 1.0
    %v409 = vadd.f32 %v379, 1.0
    %v410 = vadd.f32 %v381, 1.0
    %v411 = vadd.f32 %v383, 1.0
    %v412 = vadd.f32 %v385, 1.0
    %v413 = vadd.f32 %v387, 1.0
    %v414 = vadd.f32 %v389, 1.0
    %v415 = vadd.f32 %v391, 1.0
    %v416 = vadd.f32 %v393, 1.0
    %v417 = vadd.f32 %v395, 1.0
    %v418 = vadd.f32 %v397, 1.0
    %v419 = vadd.f32 %v399, 1.0
    %v420 = vadd.f32 %v401, 1.0
    %v421 = vadd.f32 %v403, 1.0
    %v422 = vadd.f32 %v405, 1.0
    %v423 = vadd.f32 %v407, 1.0
    %v424 = vrcp.pop %v408
    %v425 = vrcp.pop %v409
    %v426 = vrcp.pop %v410
    %v427 = vrcp.pop %v411
    %v428 = vrcp.pop %v412
    %v429 = vrcp.pop %v413
    %v430 = vrcp.pop %v414
    %v431 = vrcp.pop %v415
    %v432 = vrcp.pop %v416
    %v433 = vrcp.pop %v417
    %v434 = vrcp.pop %v418
    %v435 = vrcp.pop %v419
    %v436 = vrcp.pop %v420
    %v437 = vrcp.pop %v421
    %v438 = vrcp.pop %v422
    %v439 = vrcp.pop %v423
    %v440 = vpack.c.bf16 %v425, %v424
    %v441 = vpack.c.bf16 %v427, %v426
    %v442 = vpack.c.bf16 %v429, %v428
    %v443 = vpack.c.bf16 %v431, %v430
    %v444 = vpack.c.bf16 %v433, %v432
    %v445 = vpack.c.bf16 %v435, %v434
    %v446 = vpack.c.bf16 %v437, %v436
    %v447 = vpack.c.bf16 %v439, %v438
    %v464 = vunpack.c.l.b16 %v159
    %v465 = vunpack.c.l.b16 %v160
    %v466 = vunpack.c.l.b16 %v161
    %v467 = vunpack.c.l.b16 %v162
    %v468 = vunpack.c.l.b16 %v163
    %v469 = vunpack.c.l.b16 %v164
    %v470 = vunpack.c.l.b16 %v165
    %v471 = vunpack.c.l.b16 %v166
    %v472 = vunpack.c.l.b16 %v167
    %v473 = vunpack.c.l.b16 %v168
    %v474 = vunpack.c.l.b16 %v169
    %v475 = vunpack.c.l.b16 %v170
    %v476 = vunpack.c.l.b16 %v171
    %v477 = vunpack.c.l.b16 %v172
    %v478 = vunpack.c.l.b16 %v173
    %v479 = vunpack.c.l.b16 %v174
    %v480 = vpack.c.b16 %v465, %v464
    %v481 = vpack.c.b16 %v467, %v466
    %v482 = vpack.c.b16 %v469, %v468
    %v483 = vpack.c.b16 %v471, %v470
    %v484 = vpack.c.b16 %v473, %v472
    %v485 = vpack.c.b16 %v475, %v474
    %v486 = vpack.c.b16 %v477, %v476
    %v487 = vpack.c.b16 %v479, %v478
    %v489 = vsel %vm238, %v480, 0
    %v492 = vsel %vm238, %v481, 0
    %v495 = vsel %vm238, %v482, 0
    %v498 = vsel %vm238, %v483, 0
    %v501 = vsel %vm238, %v484, 0
    %v504 = vsel %vm238, %v485, 0
    %v507 = vsel %vm238, %v486, 0
    %v510 = vsel %vm238, %v487, 0
    %512 = vmatprep.subr.bf16.mxu0 0
    %513 = vmatpush1.bf16.msra.mxu0 %v234
    %514 = vmatprep.subr.bf16.mxu0 0
    %515 = vmatpush1.bf16.msra.mxu0 %v235
    %516 = vmatprep.subr.bf16.mxu0 0
    %517 = vmatpush1.bf16.msra.mxu0 0
    %518 = vmatprep.subr.bf16.mxu0 0
    %519 = vmatpush1.bf16.msra.mxu0 0
    %520 = vmatprep.subr.bf16.mxu0 0
    %521 = vmatpush1.bf16.msra.mxu0 0
    %522 = vmatprep.subr.bf16.mxu0 0
    %523 = vmatpush1.bf16.msra.mxu0 0
    %524 = vmatprep.subr.bf16.mxu0 0
    %525 = vmatpush1.bf16.msra.mxu0 0
    %526 = vmatprep.subr.bf16.mxu0 0
    %527 = vmatpush1.bf16.msra.mxu0 0
    %528 = vmatprep.subr.bf16.mxu0 0
    %529 = vmatpush1.bf16.msra.mxu0 0
    %530 = vmatprep.subr.bf16.mxu0 0
    %531 = vmatpush1.bf16.msra.mxu0 0
    %532 = vmatprep.subr.bf16.mxu0 0
    %533 = vmatpush1.bf16.msra.mxu0 0
    %534 = vmatprep.subr.bf16.mxu0 0
    %535 = vmatpush1.bf16.msra.mxu0 0
    %536 = vmatprep.subr.bf16.mxu0 0
    %537 = vmatpush1.bf16.msra.mxu0 0
    %538 = vmatprep.subr.bf16.mxu0 0
    %539 = vmatpush1.bf16.msra.mxu0 0
    %540 = vmatprep.subr.bf16.mxu0 0
    %541 = vmatpush1.bf16.msra.mxu0 0
    %542 = vmatprep.subr.bf16.mxu0 0
    %543 = vmatpush1.bf16.msra.mxu0 0
    %544 = vmatprep.mubr.bf16.mxu0 0
    %545 = vmatmul.mubr.bf16.gmra.mrb[0].mxu0 %v489
    %v546 = vpop.f32.mrb[0].mxu0
    %v547 = vadd.f32 %v184, %v546
    %v548 = vpop.f32.mrb[0].mxu0
    %v549 = vpop.f32.mrb[0].mxu0
    %v550 = vadd.f32 %v184, %v549
    %v551 = vpop.f32.mrb[0].mxu0
    %552 = vmatprep.mubr.bf16.mxu0 0
    %553 = vmatmul.mubr.bf16.gmra.mrb[0].mxu0 %v492
    %v554 = vpop.f32.mrb[0].mxu0
    %v555 = vadd.f32 %v184, %v554
    %v556 = vpop.f32.mrb[0].mxu0
    %v557 = vpop.f32.mrb[0].mxu0
    %v558 = vadd.f32 %v184, %v557
    %v559 = vpop.f32.mrb[0].mxu0
    %560 = vmatprep.mubr.bf16.mxu0 0
    %561 = vmatmul.mubr.bf16.gmra.mrb[0].mxu0 %v495
    %v562 = vpop.f32.mrb[0].mxu0
    %v563 = vadd.f32 %v184, %v562
    %v564 = vpop.f32.mrb[0].mxu0
    %v565 = vpop.f32.mrb[0].mxu0
    %v566 = vadd.f32 %v184, %v565
    %v567 = vpop.f32.mrb[0].mxu0
    %568 = vmatprep.mubr.bf16.mxu0 0
    %569 = vmatmul.mubr.bf16.gmra.mrb[0].mxu0 %v498
    %v570 = vpop.f32.mrb[0].mxu0
    %v571 = vadd.f32 %v184, %v570
    %v572 = vpop.f32.mrb[0].mxu0
    %v573 = vpop.f32.mrb[0].mxu0
    %v574 = vadd.f32 %v184, %v573
    %v575 = vpop.f32.mrb[0].mxu0
    %576 = vmatprep.mubr.bf16.mxu0 0
    %577 = vmatmul.mubr.bf16.gmra.mrb[0].mxu0 %v501
    %v578 = vpop.f32.mrb[0].mxu0
    %v579 = vadd.f32 %v184, %v578
    %v580 = vpop.f32.mrb[0].mxu0
    %v581 = vpop.f32.mrb[0].mxu0
    %v582 = vadd.f32 %v184, %v581
    %v583 = vpop.f32.mrb[0].mxu0
    %584 = vmatprep.mubr.bf16.mxu0 0
    %585 = vmatmul.mubr.bf16.gmra.mrb[0].mxu0 %v504
    %v586 = vpop.f32.mrb[0].mxu0
    %v587 = vadd.f32 %v184, %v586
    %v588 = vpop.f32.mrb[0].mxu0
    %v589 = vpop.f32.mrb[0].mxu0
    %v590 = vadd.f32 %v184, %v589
    %v591 = vpop.f32.mrb[0].mxu0
    %592 = vmatprep.mubr.bf16.mxu0 0
    %593 = vmatmul.mubr.bf16.gmra.mrb[0].mxu0 %v507
    %v594 = vpop.f32.mrb[0].mxu0
    %v595 = vadd.f32 %v184, %v594
    %v596 = vpop.f32.mrb[0].mxu0
    %v597 = vpop.f32.mrb[0].mxu0
    %v598 = vadd.f32 %v184, %v597
    %v599 = vpop.f32.mrb[0].mxu0
    %600 = vmatprep.mubr.bf16.mxu0 0
    %601 = vmatmul.mubr.bf16.gmra.mrb[0].mxu0 %v510
    %v602 = vpop.f32.mrb[0].mxu0
    %v603 = vadd.f32 %v184, %v602
    %v604 = vpop.f32.mrb[0].mxu0
    %v605 = vpop.f32.mrb[0].mxu0
    %v606 = vadd.f32 %v184, %v605
    %v607 = vpop.f32.mrb[0].mxu0
    %608 = vdwg.mxu0
    %v609 = vsub.f32 0.0, %v547
    %v610 = vsub.f32 0.0, %v550
    %v611 = vsub.f32 0.0, %v555
    %v612 = vsub.f32 0.0, %v558
    %v613 = vsub.f32 0.0, %v563
    %v614 = vsub.f32 0.0, %v566
    %v615 = vsub.f32 0.0, %v571
    %v616 = vsub.f32 0.0, %v574
    %v617 = vsub.f32 0.0, %v579
    %v618 = vsub.f32 0.0, %v582
    %v619 = vsub.f32 0.0, %v587
    %v620 = vsub.f32 0.0, %v590
    %v621 = vsub.f32 0.0, %v595
    %v622 = vsub.f32 0.0, %v598
    %v623 = vsub.f32 0.0, %v603
    %v624 = vsub.f32 0.0, %v606
    %v625 = vmul.f32 %v609, 1.442695
    %v626 = vpow.pop %v625
    %v627 = vmul.f32 %v610, 1.442695
    %v628 = vpow.pop %v627
    %v629 = vmul.f32 %v611, 1.442695
    %v630 = vpow.pop %v629
    %v631 = vmul.f32 %v612, 1.442695
    %v632 = vpow.pop %v631
    %v633 = vmul.f32 %v613, 1.442695
    %v634 = vpow.pop %v633
    %v635 = vmul.f32 %v614, 1.442695
    %v636 = vpow.pop %v635
    %v637 = vmul.f32 %v615, 1.442695
    %v638 = vpow.pop %v637
    %v639 = vmul.f32 %v616, 1.442695
    %v640 = vpow.pop %v639
    %v641 = vmul.f32 %v617, 1.442695
    %v642 = vpow.pop %v641
    %v643 = vmul.f32 %v618, 1.442695
    %v644 = vpow.pop %v643
    %v645 = vmul.f32 %v619, 1.442695
    %v646 = vpow.pop %v645
    %v647 = vmul.f32 %v620, 1.442695
    %v648 = vpow.pop %v647
    %v649 = vmul.f32 %v621, 1.442695
    %v650 = vpow.pop %v649
    %v651 = vmul.f32 %v622, 1.442695
    %v652 = vpow.pop %v651
    %v653 = vmul.f32 %v623, 1.442695
    %v654 = vpow.pop %v653
    %v655 = vmul.f32 %v624, 1.442695
    %v656 = vpow.pop %v655
    %v657 = vadd.f32 %v626, 1.0
    %v658 = vadd.f32 %v628, 1.0
    %v659 = vadd.f32 %v630, 1.0
    %v660 = vadd.f32 %v632, 1.0
    %v661 = vadd.f32 %v634, 1.0
    %v662 = vadd.f32 %v636, 1.0
    %v663 = vadd.f32 %v638, 1.0
    %v664 = vadd.f32 %v640, 1.0
    %v665 = vadd.f32 %v642, 1.0
    %v666 = vadd.f32 %v644, 1.0
    %v667 = vadd.f32 %v646, 1.0
    %v668 = vadd.f32 %v648, 1.0
    %v669 = vadd.f32 %v650, 1.0
    %v670 = vadd.f32 %v652, 1.0
    %v671 = vadd.f32 %v654, 1.0
    %v672 = vadd.f32 %v656, 1.0
    %v673 = vrcp.pop %v657
    %v674 = vrcp.pop %v658
    %v675 = vrcp.pop %v659
    %v676 = vrcp.pop %v660
    %v677 = vrcp.pop %v661
    %v678 = vrcp.pop %v662
    %v679 = vrcp.pop %v663
    %v680 = vrcp.pop %v664
    %v681 = vrcp.pop %v665
    %v682 = vrcp.pop %v666
    %v683 = vrcp.pop %v667
    %v684 = vrcp.pop %v668
    %v685 = vrcp.pop %v669
    %v686 = vrcp.pop %v670
    %v687 = vrcp.pop %v671
    %v688 = vrcp.pop %v672
    %v689 = vpack.c.bf16 %v674, %v673
    %v690 = vpack.c.bf16 %v676, %v675
    %v691 = vpack.c.bf16 %v678, %v677
    %v692 = vpack.c.bf16 %v680, %v679
    %v693 = vpack.c.bf16 %v682, %v681
    %v694 = vpack.c.bf16 %v684, %v683
    %v695 = vpack.c.bf16 %v686, %v685
    %v696 = vpack.c.bf16 %v688, %v687
    %v697 = vld [vmem:[%s3] sm:$0xff]
    %v698 = vld [vmem:[%s3 + $0x8] sm:$0xff]
    %v699 = vld [vmem:[%s3 + $0x10] sm:$0xff]
    %v700 = vld [vmem:[%s3 + $0x18] sm:$0xff]
    %v701 = vld [vmem:[%s3 + $0x20] sm:$0xff]
    %v702 = vld [vmem:[%s3 + $0x28] sm:$0xff]
    %v703 = vld [vmem:[%s3 + $0x30] sm:$0xff]
    %v704 = vld [vmem:[%s3 + $0x38] sm:$0xff]
    %v705 = vld [vmem:[%s3 + $0x40] sm:$0xff]
    %v706 = vld [vmem:[%s3 + $0x48] sm:$0xff]
    %v707 = vld [vmem:[%s3 + $0x50] sm:$0xff]
    %v708 = vld [vmem:[%s3 + $0x58] sm:$0xff]
    %v709 = vld [vmem:[%s3 + $0x60] sm:$0xff]
    %v710 = vld [vmem:[%s3 + $0x68] sm:$0xff]
    %v711 = vld [vmem:[%s3 + $0x70] sm:$0xff]
    %v712 = vld [vmem:[%s3 + $0x78] sm:$0xff]
    %v713 = vld [vmem:[#allocation6] sm:$0x3]
    %v715 = vlaneseq
    %v716 = vshrl.u32 %v715, 7
    %v717 = vsub.s32 0, %v716
    %v718 = vrot.slane %v713, %v717
    %v719 = vlaneseq
    %v720 = vshrl.u32 %v719, 7
    %v721 = vsub.s32 1, %v720
    %v722 = vrot.slane %v713, %v721
    %v741 = vunpack.c.l.b16 %v697
    %v742 = vunpack.c.h.b16 %v697
    %v743 = vunpack.c.l.b16 %v698
    %v744 = vunpack.c.h.b16 %v698
    %v745 = vunpack.c.l.b16 %v699
    %v746 = vunpack.c.h.b16 %v699
    %v747 = vunpack.c.l.b16 %v700
    %v748 = vunpack.c.h.b16 %v700
    %v749 = vunpack.c.l.b16 %v701
    %v750 = vunpack.c.h.b16 %v701
    %v751 = vunpack.c.l.b16 %v702
    %v752 = vunpack.c.h.b16 %v702
    %v753 = vunpack.c.l.b16 %v703
    %v754 = vunpack.c.h.b16 %v703
    %v755 = vunpack.c.l.b16 %v704
    %v756 = vunpack.c.h.b16 %v704
    %v757 = vunpack.c.l.b16 %v705
    %v758 = vunpack.c.h.b16 %v705
    %v759 = vunpack.c.l.b16 %v706
    %v760 = vunpack.c.h.b16 %v706
    %v761 = vunpack.c.l.b16 %v707
    %v762 = vunpack.c.h.b16 %v707
    %v763 = vunpack.c.l.b16 %v708
    %v764 = vunpack.c.h.b16 %v708
    %v765 = vunpack.c.l.b16 %v709
    %v766 = vunpack.c.h.b16 %v709
    %v767 = vunpack.c.l.b16 %v710
    %v768 = vunpack.c.h.b16 %v710
    %v769 = vunpack.c.l.b16 %v711
    %v770 = vunpack.c.h.b16 %v711
    %v771 = vunpack.c.l.b16 %v712
    %v772 = vunpack.c.h.b16 %v712
    %v773 = vpack.c.b16 %v743, %v741
    %v774 = vpack.c.b16 %v744, %v742
    %v775 = vpack.c.b16 %v747, %v745
    %v776 = vpack.c.b16 %v748, %v746
    %v777 = vpack.c.b16 %v751, %v749
    %v778 = vpack.c.b16 %v752, %v750
    %v779 = vpack.c.b16 %v755, %v753
    %v780 = vpack.c.b16 %v756, %v754
    %v781 = vpack.c.b16 %v759, %v757
    %v782 = vpack.c.b16 %v760, %v758
    %v783 = vpack.c.b16 %v763, %v761
    %v784 = vpack.c.b16 %v764, %v762
    %v785 = vpack.c.b16 %v767, %v765
    %v786 = vpack.c.b16 %v768, %v766
    %v787 = vpack.c.b16 %v771, %v769
    %v788 = vpack.c.b16 %v772, %v770
    %805 = vmatprep.subr.bf16.mxu0 %v774
    %806 = vmatpush1.bf16.msra.mxu0 %v773
    %807 = vmatprep.subr.bf16.mxu0 %v776
    %808 = vmatpush1.bf16.msra.mxu0 %v775
    %809 = vmatprep.subr.bf16.mxu0 %v778
    %810 = vmatpush1.bf16.msra.mxu0 %v777
    %811 = vmatprep.subr.bf16.mxu0 %v780
    %812 = vmatpush1.bf16.msra.mxu0 %v779
    %813 = vmatprep.subr.bf16.mxu0 %v782
    %814 = vmatpush1.bf16.msra.mxu0 %v781
    %815 = vmatprep.subr.bf16.mxu0 %v784
    %816 = vmatpush1.bf16.msra.mxu0 %v783
    %817 = vmatprep.subr.bf16.mxu0 %v786
    %818 = vmatpush1.bf16.msra.mxu0 %v785
    %819 = vmatprep.subr.bf16.mxu0 %v788
    %820 = vmatpush1.bf16.msra.mxu0 %v787
    %821 = vmatprep.subr.bf16.mxu0 0
    %822 = vmatpush1.bf16.msra.mxu0 0
    %823 = vmatprep.subr.bf16.mxu0 0
    %824 = vmatpush1.bf16.msra.mxu0 0
    %825 = vmatprep.subr.bf16.mxu0 0
    %826 = vmatpush1.bf16.msra.mxu0 0
    %827 = vmatprep.subr.bf16.mxu0 0
    %828 = vmatpush1.bf16.msra.mxu0 0
    %829 = vmatprep.subr.bf16.mxu0 0
    %830 = vmatpush1.bf16.msra.mxu0 0
    %831 = vmatprep.subr.bf16.mxu0 0
    %832 = vmatpush1.bf16.msra.mxu0 0
    %833 = vmatprep.subr.bf16.mxu0 0
    %834 = vmatpush1.bf16.msra.mxu0 0
    %835 = vmatprep.subr.bf16.mxu0 0
    %836 = vmatpush1.bf16.msra.mxu0 0
    %837 = vmatprep.mubr.bf16.mxu0 0
    %838 = vmatmul.mubr.bf16.gmra.mrb[0].mxu0 %v440
    %v839 = vpop.f32.mrb[0].mxu0
    %v840 = vadd.f32 %v718, %v839
    %v841 = vpop.f32.mrb[0].mxu0
    %v842 = vadd.f32 %v722, %v841
    %v843 = vpop.f32.mrb[0].mxu0
    %v844 = vadd.f32 %v718, %v843
    %v845 = vpop.f32.mrb[0].mxu0
    %v846 = vadd.f32 %v722, %v845
    %847 = vmatprep.mubr.bf16.mxu0 0
    %848 = vmatmul.mubr.bf16.gmra.mrb[0].mxu0 %v441
    %v849 = vpop.f32.mrb[0].mxu0
    %v850 = vadd.f32 %v718, %v849
    %v851 = vpop.f32.mrb[0].mxu0
    %v852 = vadd.f32 %v722, %v851
    %v853 = vpop.f32.mrb[0].mxu0
    %v854 = vadd.f32 %v718, %v853
    %v855 = vpop.f32.mrb[0].mxu0
    %v856 = vadd.f32 %v722, %v855
    %857 = vmatprep.mubr.bf16.mxu0 0
    %858 = vmatmul.mubr.bf16.gmra.mrb[0].mxu0 %v442
    %v859 = vpop.f32.mrb[0].mxu0
    %v860 = vadd.f32 %v718, %v859
    %v861 = vpop.f32.mrb[0].mxu0
    %v862 = vadd.f32 %v722, %v861
    %v863 = vpop.f32.mrb[0].mxu0
    %v864 = vadd.f32 %v718, %v863
    %v865 = vpop.f32.mrb[0].mxu0
    %v866 = vadd.f32 %v722, %v865
    %867 = vmatprep.mubr.bf16.mxu0 0
    %868 = vmatmul.mubr.bf16.gmra.mrb[0].mxu0 %v443
    %v869 = vpop.f32.mrb[0].mxu0
    %v870 = vadd.f32 %v718, %v869
    %v871 = vpop.f32.mrb[0].mxu0
    %v872 = vadd.f32 %v722, %v871
    %v873 = vpop.f32.mrb[0].mxu0
    %v874 = vadd.f32 %v718, %v873
    %v875 = vpop.f32.mrb[0].mxu0
    %v876 = vadd.f32 %v722, %v875
    %877 = vmatprep.mubr.bf16.mxu0 0
    %878 = vmatmul.mubr.bf16.gmra.mrb[0].mxu0 %v444
    %v879 = vpop.f32.mrb[0].mxu0
    %v880 = vadd.f32 %v718, %v879
    %v881 = vpop.f32.mrb[0].mxu0
    %v882 = vadd.f32 %v722, %v881
    %v883 = vpop.f32.mrb[0].mxu0
    %v884 = vadd.f32 %v718, %v883
    %v885 = vpop.f32.mrb[0].mxu0
    %v886 = vadd.f32 %v722, %v885
    %887 = vmatprep.mubr.bf16.mxu0 0
    %888 = vmatmul.mubr.bf16.gmra.mrb[0].mxu0 %v445
    %v889 = vpop.f32.mrb[0].mxu0
    %v890 = vadd.f32 %v718, %v889
    %v891 = vpop.f32.mrb[0].mxu0
    %v892 = vadd.f32 %v722, %v891
    %v893 = vpop.f32.mrb[0].mxu0
    %v894 = vadd.f32 %v718, %v893
    %v895 = vpop.f32.mrb[0].mxu0
    %v896 = vadd.f32 %v722, %v895
    %897 = vmatprep.mubr.bf16.mxu0 0
    %898 = vmatmul.mubr.bf16.gmra.mrb[0].mxu0 %v446
    %v899 = vpop.f32.mrb[0].mxu0
    %v900 = vadd.f32 %v718, %v899
    %v901 = vpop.f32.mrb[0].mxu0
    %v902 = vadd.f32 %v722, %v901
    %v903 = vpop.f32.mrb[0].mxu0
    %v904 = vadd.f32 %v718, %v903
    %v905 = vpop.f32.mrb[0].mxu0
    %v906 = vadd.f32 %v722, %v905
    %907 = vmatprep.mubr.bf16.mxu0 0
    %908 = vmatmul.mubr.bf16.gmra.mrb[0].mxu0 %v447
    %v909 = vpop.f32.mrb[0].mxu0
    %v910 = vadd.f32 %v718, %v909
    %v911 = vpop.f32.mrb[0].mxu0
    %v912 = vadd.f32 %v722, %v911
    %v913 = vpop.f32.mrb[0].mxu0
    %v914 = vadd.f32 %v718, %v913
    %v915 = vpop.f32.mrb[0].mxu0
    %v916 = vadd.f32 %v722, %v915
    %917 = vdwg.mxu0
    %v918 = vsub.f32 0.0, %v840
    %v919 = vsub.f32 0.0, %v842
    %v920 = vsub.f32 0.0, %v844
    %v921 = vsub.f32 0.0, %v846
    %v922 = vsub.f32 0.0, %v850
    %v923 = vsub.f32 0.0, %v852
    %v924 = vsub.f32 0.0, %v854
    %v925 = vsub.f32 0.0, %v856
    %v926 = vsub.f32 0.0, %v860
    %v927 = vsub.f32 0.0, %v862
    %v928 = vsub.f32 0.0, %v864
    %v929 = vsub.f32 0.0, %v866
    %v930 = vsub.f32 0.0, %v870
    %v931 = vsub.f32 0.0, %v872
    %v932 = vsub.f32 0.0, %v874
    %v933 = vsub.f32 0.0, %v876
    %v934 = vsub.f32 0.0, %v880
    %v935 = vsub.f32 0.0, %v882
    %v936 = vsub.f32 0.0, %v884
    %v937 = vsub.f32 0.0, %v886
    %v938 = vsub.f32 0.0, %v890
    %v939 = vsub.f32 0.0, %v892
    %v940 = vsub.f32 0.0, %v894
    %v941 = vsub.f32 0.0, %v896
    %v942 = vsub.f32 0.0, %v900
    %v943 = vsub.f32 0.0, %v902
    %v944 = vsub.f32 0.0, %v904
    %v945 = vsub.f32 0.0, %v906
    %v946 = vsub.f32 0.0, %v910
    %v947 = vsub.f32 0.0, %v912
    %v948 = vsub.f32 0.0, %v914
    %v949 = vsub.f32 0.0, %v916
    %v950 = vmul.f32 %v918, 1.442695
    %v951 = vpow.pop %v950
    %v952 = vmul.f32 %v919, 1.442695
    %v953 = vpow.pop %v952
    %v954 = vmul.f32 %v920, 1.442695
    %v955 = vpow.pop %v954
    %v956 = vmul.f32 %v921, 1.442695
    %v957 = vpow.pop %v956
    %v958 = vmul.f32 %v922, 1.442695
    %v959 = vpow.pop %v958
    %v960 = vmul.f32 %v923, 1.442695
    %v961 = vpow.pop %v960
    %v962 = vmul.f32 %v924, 1.442695
    %v963 = vpow.pop %v962
    %v964 = vmul.f32 %v925, 1.442695
    %v965 = vpow.pop %v964
    %v966 = vmul.f32 %v926, 1.442695
    %v967 = vpow.pop %v966
    %v968 = vmul.f32 %v927, 1.442695
    %v969 = vpow.pop %v968
    %v970 = vmul.f32 %v928, 1.442695
    %v971 = vpow.pop %v970
    %v972 = vmul.f32 %v929, 1.442695
    %v973 = vpow.pop %v972
    %v974 = vmul.f32 %v930, 1.442695
    %v975 = vpow.pop %v974
    %v976 = vmul.f32 %v931, 1.442695
    %v977 = vpow.pop %v976
    %v978 = vmul.f32 %v932, 1.442695
    %v979 = vpow.pop %v978
    %v980 = vmul.f32 %v933, 1.442695
    %v981 = vpow.pop %v980
    %v982 = vmul.f32 %v934, 1.442695
    %v983 = vpow.pop %v982
    %v984 = vmul.f32 %v935, 1.442695
    %v985 = vpow.pop %v984
    %v986 = vmul.f32 %v936, 1.442695
    %v987 = vpow.pop %v986
    %v988 = vmul.f32 %v937, 1.442695
    %v989 = vpow.pop %v988
    %v990 = vmul.f32 %v938, 1.442695
    %v991 = vpow.pop %v990
    %v992 = vmul.f32 %v939, 1.442695
    %v993 = vpow.pop %v992
    %v994 = vmul.f32 %v940, 1.442695
    %v995 = vpow.pop %v994
    %v996 = vmul.f32 %v941, 1.442695
    %v997 = vpow.pop %v996
    %v998 = vmul.f32 %v942, 1.442695
    %v999 = vpow.pop %v998
    %v1000 = vmul.f32 %v943, 1.442695
    %v1001 = vpow.pop %v1000
    %v1002 = vmul.f32 %v944, 1.442695
    %v1003 = vpow.pop %v1002
    %v1004 = vmul.f32 %v945, 1.442695
    %v1005 = vpow.pop %v1004
    %v1006 = vmul.f32 %v946, 1.442695
    %v1007 = vpow.pop %v1006
    %v1008 = vmul.f32 %v947, 1.442695
    %v1009 = vpow.pop %v1008
    %v1010 = vmul.f32 %v948, 1.442695
    %v1011 = vpow.pop %v1010
    %v1012 = vmul.f32 %v949, 1.442695
    %v1013 = vpow.pop %v1012
    %v1014 = vadd.f32 %v951, 1.0
    %v1015 = vadd.f32 %v953, 1.0
    %v1016 = vadd.f32 %v955, 1.0
    %v1017 = vadd.f32 %v957, 1.0
    %v1018 = vadd.f32 %v959, 1.0
    %v1019 = vadd.f32 %v961, 1.0
    %v1020 = vadd.f32 %v963, 1.0
    %v1021 = vadd.f32 %v965, 1.0
    %v1022 = vadd.f32 %v967, 1.0
    %v1023 = vadd.f32 %v969, 1.0
    %v1024 = vadd.f32 %v971, 1.0
    %v1025 = vadd.f32 %v973, 1.0
    %v1026 = vadd.f32 %v975, 1.0
    %v1027 = vadd.f32 %v977, 1.0
    %v1028 = vadd.f32 %v979, 1.0
    %v1029 = vadd.f32 %v981, 1.0
    %v1030 = vadd.f32 %v983, 1.0
    %v1031 = vadd.f32 %v985, 1.0
    %v1032 = vadd.f32 %v987, 1.0
    %v1033 = vadd.f32 %v989, 1.0
    %v1034 = vadd.f32 %v991, 1.0
    %v1035 = vadd.f32 %v993, 1.0
    %v1036 = vadd.f32 %v995, 1.0
    %v1037 = vadd.f32 %v997, 1.0
    %v1038 = vadd.f32 %v999, 1.0
    %v1039 = vadd.f32 %v1001, 1.0
    %v1040 = vadd.f32 %v1003, 1.0
    %v1041 = vadd.f32 %v1005, 1.0
    %v1042 = vadd.f32 %v1007, 1.0
    %v1043 = vadd.f32 %v1009, 1.0
    %v1044 = vadd.f32 %v1011, 1.0
    %v1045 = vadd.f32 %v1013, 1.0
    %v1046 = vrcp.pop %v1014
    %v1047 = vrcp.pop %v1015
    %v1048 = vrcp.pop %v1016
    %v1049 = vrcp.pop %v1017
    %v1050 = vrcp.pop %v1018
    %v1051 = vrcp.pop %v1019
    %v1052 = vrcp.pop %v1020
    %v1053 = vrcp.pop %v1021
    %v1054 = vrcp.pop %v1022
    %v1055 = vrcp.pop %v1023
    %v1056 = vrcp.pop %v1024
    %v1057 = vrcp.pop %v1025
    %v1058 = vrcp.pop %v1026
    %v1059 = vrcp.pop %v1027
    %v1060 = vrcp.pop %v1028
    %v1061 = vrcp.pop %v1029
    %v1062 = vrcp.pop %v1030
    %v1063 = vrcp.pop %v1031
    %v1064 = vrcp.pop %v1032
    %v1065 = vrcp.pop %v1033
    %v1066 = vrcp.pop %v1034
    %v1067 = vrcp.pop %v1035
    %v1068 = vrcp.pop %v1036
    %v1069 = vrcp.pop %v1037
    %v1070 = vrcp.pop %v1038
    %v1071 = vrcp.pop %v1039
    %v1072 = vrcp.pop %v1040
    %v1073 = vrcp.pop %v1041
    %v1074 = vrcp.pop %v1042
    %v1075 = vrcp.pop %v1043
    %v1076 = vrcp.pop %v1044
    %v1077 = vrcp.pop %v1045
    %v1078 = vpack.c.bf16 %v1048, %v1046
    %v1079 = vpack.c.bf16 %v1049, %v1047
    %v1080 = vpack.c.bf16 %v1052, %v1050
    %v1081 = vpack.c.bf16 %v1053, %v1051
    %v1082 = vpack.c.bf16 %v1056, %v1054
    %v1083 = vpack.c.bf16 %v1057, %v1055
    %v1084 = vpack.c.bf16 %v1060, %v1058
    %v1085 = vpack.c.bf16 %v1061, %v1059
    %v1086 = vpack.c.bf16 %v1064, %v1062
    %v1087 = vpack.c.bf16 %v1065, %v1063
    %v1088 = vpack.c.bf16 %v1068, %v1066
    %v1089 = vpack.c.bf16 %v1069, %v1067
    %v1090 = vpack.c.bf16 %v1072, %v1070
    %v1091 = vpack.c.bf16 %v1073, %v1071
    %v1092 = vpack.c.bf16 %v1076, %v1074
    %v1093 = vpack.c.bf16 %v1077, %v1075
    %1094 = vmatprep.subr.bf16.mxu0 %v774
    %1095 = vmatpush1.bf16.msra.mxu0 %v773
    %1096 = vmatprep.subr.bf16.mxu0 %v776
    %1097 = vmatpush1.bf16.msra.mxu0 %v775
    %1098 = vmatprep.subr.bf16.mxu0 %v778
    %1099 = vmatpush1.bf16.msra.mxu0 %v777
    %1100 = vmatprep.subr.bf16.mxu0 %v780
    %1101 = vmatpush1.bf16.msra.mxu0 %v779
    %1102 = vmatprep.subr.bf16.mxu0 %v782
    %1103 = vmatpush1.bf16.msra.mxu0 %v781
    %1104 = vmatprep.subr.bf16.mxu0 %v784
    %1105 = vmatpush1.bf16.msra.mxu0 %v783
    %1106 = vmatprep.subr.bf16.mxu0 %v786
    %1107 = vmatpush1.bf16.msra.mxu0 %v785
    %1108 = vmatprep.subr.bf16.mxu0 %v788
    %1109 = vmatpush1.bf16.msra.mxu0 %v787
    %1110 = vmatprep.subr.bf16.mxu0 0
    %1111 = vmatpush1.bf16.msra.mxu0 0
    %1112 = vmatprep.subr.bf16.mxu0 0
    %1113 = vmatpush1.bf16.msra.mxu0 0
    %1114 = vmatprep.subr.bf16.mxu0 0
    %1115 = vmatpush1.bf16.msra.mxu0 0
    %1116 = vmatprep.subr.bf16.mxu0 0
    %1117 = vmatpush1.bf16.msra.mxu0 0
    %1118 = vmatprep.subr.bf16.mxu0 0
    %1119 = vmatpush1.bf16.msra.mxu0 0
    %1120 = vmatprep.subr.bf16.mxu0 0
    %1121 = vmatpush1.bf16.msra.mxu0 0
    %1122 = vmatprep.subr.bf16.mxu0 0
    %1123 = vmatpush1.bf16.msra.mxu0 0
    %1124 = vmatprep.subr.bf16.mxu0 0
    %1125 = vmatpush1.bf16.msra.mxu0 0
    %1126 = vmatprep.mubr.bf16.mxu0 0
    %1127 = vmatmul.mubr.bf16.gmra.mrb[0].mxu0 %v689
    %v1128 = vpop.f32.mrb[0].mxu0
    %v1129 = vadd.f32 %v718, %v1128
    %v1130 = vpop.f32.mrb[0].mxu0
    %v1131 = vadd.f32 %v722, %v1130
    %v1132 = vpop.f32.mrb[0].mxu0
    %v1133 = vadd.f32 %v718, %v1132
    %v1134 = vpop.f32.mrb[0].mxu0
    %v1135 = vadd.f32 %v722, %v1134
    %1136 = vmatprep.mubr.bf16.mxu0 0
    %1137 = vmatmul.mubr.bf16.gmra.mrb[0].mxu0 %v690
    %v1138 = vpop.f32.mrb[0].mxu0
    %v1139 = vadd.f32 %v718, %v1138
    %v1140 = vpop.f32.mrb[0].mxu0
    %v1141 = vadd.f32 %v722, %v1140
    %v1142 = vpop.f32.mrb[0].mxu0
    %v1143 = vadd.f32 %v718, %v1142
    %v1144 = vpop.f32.mrb[0].mxu0
    %v1145 = vadd.f32 %v722, %v1144
    %1146 = vmatprep.mubr.bf16.mxu0 0
    %1147 = vmatmul.mubr.bf16.gmra.mrb[0].mxu0 %v691
    %v1148 = vpop.f32.mrb[0].mxu0
    %v1149 = vadd.f32 %v718, %v1148
    %v1150 = vpop.f32.mrb[0].mxu0
    %v1151 = vadd.f32 %v722, %v1150
    %v1152 = vpop.f32.mrb[0].mxu0
    %v1153 = vadd.f32 %v718, %v1152
    %v1154 = vpop.f32.mrb[0].mxu0
    %v1155 = vadd.f32 %v722, %v1154
    %1156 = vmatprep.mubr.bf16.mxu0 0
    %1157 = vmatmul.mubr.bf16.gmra.mrb[0].mxu0 %v692
    %v1158 = vpop.f32.mrb[0].mxu0
    %v1159 = vadd.f32 %v718, %v1158
    %v1160 = vpop.f32.mrb[0].mxu0
    %v1161 = vadd.f32 %v722, %v1160
    %v1162 = vpop.f32.mrb[0].mxu0
    %v1163 = vadd.f32 %v718, %v1162
    %v1164 = vpop.f32.mrb[0].mxu0
    %v1165 = vadd.f32 %v722, %v1164
    %1166 = vmatprep.mubr.bf16.mxu0 0
    %1167 = vmatmul.mubr.bf16.gmra.mrb[0].mxu0 %v693
    %v1168 = vpop.f32.mrb[0].mxu0
    %v1169 = vadd.f32 %v718, %v1168
    %v1170 = vpop.f32.mrb[0].mxu0
    %v1171 = vadd.f32 %v722, %v1170
    %v1172 = vpop.f32.mrb[0].mxu0
    %v1173 = vadd.f32 %v718, %v1172
    %v1174 = vpop.f32.mrb[0].mxu0
    %v1175 = vadd.f32 %v722, %v1174
    %1176 = vmatprep.mubr.bf16.mxu0 0
    %1177 = vmatmul.mubr.bf16.gmra.mrb[0].mxu0 %v694
    %v1178 = vpop.f32.mrb[0].mxu0
    %v1179 = vadd.f32 %v718, %v1178
    %v1180 = vpop.f32.mrb[0].mxu0
    %v1181 = vadd.f32 %v722, %v1180
    %v1182 = vpop.f32.mrb[0].mxu0
    %v1183 = vadd.f32 %v718, %v1182
    %v1184 = vpop.f32.mrb[0].mxu0
    %v1185 = vadd.f32 %v722, %v1184
    %1186 = vmatprep.mubr.bf16.mxu0 0
    %1187 = vmatmul.mubr.bf16.gmra.mrb[0].mxu0 %v695
    %v1188 = vpop.f32.mrb[0].mxu0
    %v1189 = vadd.f32 %v718, %v1188
    %v1190 = vpop.f32.mrb[0].mxu0
    %v1191 = vadd.f32 %v722, %v1190
    %v1192 = vpop.f32.mrb[0].mxu0
    %v1193 = vadd.f32 %v718, %v1192
    %v1194 = vpop.f32.mrb[0].mxu0
    %v1195 = vadd.f32 %v722, %v1194
    %1196 = vmatprep.mubr.bf16.mxu0 0
    %1197 = vmatmul.mubr.bf16.gmra.mrb[0].mxu0 %v696
    %v1198 = vpop.f32.mrb[0].mxu0
    %v1199 = vadd.f32 %v718, %v1198
    %v1200 = vpop.f32.mrb[0].mxu0
    %v1201 = vadd.f32 %v722, %v1200
    %v1202 = vpop.f32.mrb[0].mxu0
    %v1203 = vadd.f32 %v718, %v1202
    %v1204 = vpop.f32.mrb[0].mxu0
    %v1205 = vadd.f32 %v722, %v1204
    %1206 = vdwg.mxu0
    %v1207 = vsub.f32 0.0, %v1129
    %v1208 = vsub.f32 0.0, %v1131
    %v1209 = vsub.f32 0.0, %v1133
    %v1210 = vsub.f32 0.0, %v1135
    %v1211 = vsub.f32 0.0, %v1139
    %v1212 = vsub.f32 0.0, %v1141
    %v1213 = vsub.f32 0.0, %v1143
    %v1214 = vsub.f32 0.0, %v1145
    %v1215 = vsub.f32 0.0, %v1149
    %v1216 = vsub.f32 0.0, %v1151
    %v1217 = vsub.f32 0.0, %v1153
    %v1218 = vsub.f32 0.0, %v1155
    %v1219 = vsub.f32 0.0, %v1159
    %v1220 = vsub.f32 0.0, %v1161
    %v1221 = vsub.f32 0.0, %v1163
    %v1222 = vsub.f32 0.0, %v1165
    %v1223 = vsub.f32 0.0, %v1169
    %v1224 = vsub.f32 0.0, %v1171
    %v1225 = vsub.f32 0.0, %v1173
    %v1226 = vsub.f32 0.0, %v1175
    %v1227 = vsub.f32 0.0, %v1179
    %v1228 = vsub.f32 0.0, %v1181
    %v1229 = vsub.f32 0.0, %v1183
    %v1230 = vsub.f32 0.0, %v1185
    %v1231 = vsub.f32 0.0, %v1189
    %v1232 = vsub.f32 0.0, %v1191
    %v1233 = vsub.f32 0.0, %v1193
    %v1234 = vsub.f32 0.0, %v1195
    %v1235 = vsub.f32 0.0, %v1199
    %v1236 = vsub.f32 0.0, %v1201
    %v1237 = vsub.f32 0.0, %v1203
    %v1238 = vsub.f32 0.0, %v1205
    %v1239 = vmul.f32 %v1207, 1.442695
    %v1240 = vpow.pop %v1239
    %v1241 = vmul.f32 %v1208, 1.442695
    %v1242 = vpow.pop %v1241
    %v1243 = vmul.f32 %v1209, 1.442695
    %v1244 = vpow.pop %v1243
    %v1245 = vmul.f32 %v1210, 1.442695
    %v1246 = vpow.pop %v1245
    %v1247 = vmul.f32 %v1211, 1.442695
    %v1248 = vpow.pop %v1247
    %v1249 = vmul.f32 %v1212, 1.442695
    %v1250 = vpow.pop %v1249
    %v1251 = vmul.f32 %v1213, 1.442695
    %v1252 = vpow.pop %v1251
    %v1253 = vmul.f32 %v1214, 1.442695
    %v1254 = vpow.pop %v1253
    %v1255 = vmul.f32 %v1215, 1.442695
    %v1256 = vpow.pop %v1255
    %v1257 = vmul.f32 %v1216, 1.442695
    %v1258 = vpow.pop %v1257
    %v1259 = vmul.f32 %v1217, 1.442695
    %v1260 = vpow.pop %v1259
    %v1261 = vmul.f32 %v1218, 1.442695
    %v1262 = vpow.pop %v1261
    %v1263 = vmul.f32 %v1219, 1.442695
    %v1264 = vpow.pop %v1263
    %v1265 = vmul.f32 %v1220, 1.442695
    %v1266 = vpow.pop %v1265
    %v1267 = vmul.f32 %v1221, 1.442695
    %v1268 = vpow.pop %v1267
    %v1269 = vmul.f32 %v1222, 1.442695
    %v1270 = vpow.pop %v1269
    %v1271 = vmul.f32 %v1223, 1.442695
    %v1272 = vpow.pop %v1271
    %v1273 = vmul.f32 %v1224, 1.442695
    %v1274 = vpow.pop %v1273
    %v1275 = vmul.f32 %v1225, 1.442695
    %v1276 = vpow.pop %v1275
    %v1277 = vmul.f32 %v1226, 1.442695
    %v1278 = vpow.pop %v1277
    %v1279 = vmul.f32 %v1227, 1.442695
    %v1280 = vpow.pop %v1279
    %v1281 = vmul.f32 %v1228, 1.442695
    %v1282 = vpow.pop %v1281
    %v1283 = vmul.f32 %v1229, 1.442695
    %v1284 = vpow.pop %v1283
    %v1285 = vmul.f32 %v1230, 1.442695
    %v1286 = vpow.pop %v1285
    %v1287 = vmul.f32 %v1231, 1.442695
    %v1288 = vpow.pop %v1287
    %v1289 = vmul.f32 %v1232, 1.442695
    %v1290 = vpow.pop %v1289
    %v1291 = vmul.f32 %v1233, 1.442695
    %v1292 = vpow.pop %v1291
    %v1293 = vmul.f32 %v1234, 1.442695
    %v1294 = vpow.pop %v1293
    %v1295 = vmul.f32 %v1235, 1.442695
    %v1296 = vpow.pop %v1295
    %v1297 = vmul.f32 %v1236, 1.442695
    %v1298 = vpow.pop %v1297
    %v1299 = vmul.f32 %v1237, 1.442695
    %v1300 = vpow.pop %v1299
    %v1301 = vmul.f32 %v1238, 1.442695
    %v1302 = vpow.pop %v1301
    %v1303 = vadd.f32 %v1240, 1.0
    %v1304 = vadd.f32 %v1242, 1.0
    %v1305 = vadd.f32 %v1244, 1.0
    %v1306 = vadd.f32 %v1246, 1.0
    %v1307 = vadd.f32 %v1248, 1.0
    %v1308 = vadd.f32 %v1250, 1.0
    %v1309 = vadd.f32 %v1252, 1.0
    %v1310 = vadd.f32 %v1254, 1.0
    %v1311 = vadd.f32 %v1256, 1.0
    %v1312 = vadd.f32 %v1258, 1.0
    %v1313 = vadd.f32 %v1260, 1.0
    %v1314 = vadd.f32 %v1262, 1.0
    %v1315 = vadd.f32 %v1264, 1.0
    %v1316 = vadd.f32 %v1266, 1.0
    %v1317 = vadd.f32 %v1268, 1.0
    %v1318 = vadd.f32 %v1270, 1.0
    %v1319 = vadd.f32 %v1272, 1.0
    %v1320 = vadd.f32 %v1274, 1.0
    %v1321 = vadd.f32 %v1276, 1.0
    %v1322 = vadd.f32 %v1278, 1.0
    %v1323 = vadd.f32 %v1280, 1.0
    %v1324 = vadd.f32 %v1282, 1.0
    %v1325 = vadd.f32 %v1284, 1.0
    %v1326 = vadd.f32 %v1286, 1.0
    %v1327 = vadd.f32 %v1288, 1.0
    %v1328 = vadd.f32 %v1290, 1.0
    %v1329 = vadd.f32 %v1292, 1.0
    %v1330 = vadd.f32 %v1294, 1.0
    %v1331 = vadd.f32 %v1296, 1.0
    %v1332 = vadd.f32 %v1298, 1.0
    %v1333 = vadd.f32 %v1300, 1.0
    %v1334 = vadd.f32 %v1302, 1.0
    %v1335 = vrcp.pop %v1303
    %v1336 = vrcp.pop %v1304
    %v1337 = vrcp.pop %v1305
    %v1338 = vrcp.pop %v1306
    %v1339 = vrcp.pop %v1307
    %v1340 = vrcp.pop %v1308
    %v1341 = vrcp.pop %v1309
    %v1342 = vrcp.pop %v1310
    %v1343 = vrcp.pop %v1311
    %v1344 = vrcp.pop %v1312
    %v1345 = vrcp.pop %v1313
    %v1346 = vrcp.pop %v1314
    %v1347 = vrcp.pop %v1315
    %v1348 = vrcp.pop %v1316
    %v1349 = vrcp.pop %v1317
    %v1350 = vrcp.pop %v1318
    %v1351 = vrcp.pop %v1319
    %v1352 = vrcp.pop %v1320
    %v1353 = vrcp.pop %v1321
    %v1354 = vrcp.pop %v1322
    %v1355 = vrcp.pop %v1323
    %v1356 = vrcp.pop %v1324
    %v1357 = vrcp.pop %v1325
    %v1358 = vrcp.pop %v1326
    %v1359 = vrcp.pop %v1327
    %v1360 = vrcp.pop %v1328
    %v1361 = vrcp.pop %v1329
    %v1362 = vrcp.pop %v1330
    %v1363 = vrcp.pop %v1331
    %v1364 = vrcp.pop %v1332
    %v1365 = vrcp.pop %v1333
    %v1366 = vrcp.pop %v1334
    %v1367 = vpack.c.bf16 %v1337, %v1335
    %v1368 = vpack.c.bf16 %v1338, %v1336
    %v1369 = vpack.c.bf16 %v1341, %v1339
    %v1370 = vpack.c.bf16 %v1342, %v1340
    %v1371 = vpack.c.bf16 %v1345, %v1343
    %v1372 = vpack.c.bf16 %v1346, %v1344
    %v1373 = vpack.c.bf16 %v1349, %v1347
    %v1374 = vpack.c.bf16 %v1350, %v1348
    %v1375 = vpack.c.bf16 %v1353, %v1351
    %v1376 = vpack.c.bf16 %v1354, %v1352
    %v1377 = vpack.c.bf16 %v1357, %v1355
    %v1378 = vpack.c.bf16 %v1358, %v1356
    %v1379 = vpack.c.bf16 %v1361, %v1359
    %v1380 = vpack.c.bf16 %v1362, %v1360
    %v1381 = vpack.c.bf16 %v1365, %v1363
    %v1382 = vpack.c.bf16 %v1366, %v1364
    %v1383 = vld [vmem:[%s5] sm:$0xf]
    %v1384 = vld [vmem:[%s5 + $0x4] sm:$0xf]
    %v1385 = vld [vmem:[%s5 + $0x8] sm:$0xf]
    %v1386 = vld [vmem:[%s5 + $0xc] sm:$0xf]
    %v1387 = vld [vmem:[%s5 + $0x10] sm:$0xf]
    %v1388 = vld [vmem:[%s5 + $0x14] sm:$0xf]
    %v1389 = vld [vmem:[%s5 + $0x18] sm:$0xf]
    %v1390 = vld [vmem:[%s5 + $0x1c] sm:$0xf]
    %v1391 = vld [vmem:[%s5 + $0x20] sm:$0xf]
    %v1392 = vld [vmem:[%s5 + $0x24] sm:$0xf]
    %v1393 = vld [vmem:[%s5 + $0x28] sm:$0xf]
    %v1394 = vld [vmem:[%s5 + $0x2c] sm:$0xf]
    %v1395 = vld [vmem:[%s5 + $0x30] sm:$0xf]
    %v1396 = vld [vmem:[%s5 + $0x34] sm:$0xf]
    %v1397 = vld [vmem:[%s5 + $0x38] sm:$0xf]
    %v1398 = vld [vmem:[%s5 + $0x3c] sm:$0xf]
    %v1399 = vld [vmem:[%s5 + $0x40] sm:$0xf]
    %v1400 = vld [vmem:[%s5 + $0x44] sm:$0xf]
    %v1401 = vld [vmem:[%s5 + $0x48] sm:$0xf]
    %v1402 = vld [vmem:[%s5 + $0x4c] sm:$0xf]
    %v1403 = vld [vmem:[%s5 + $0x50] sm:$0xf]
    %v1404 = vld [vmem:[%s5 + $0x54] sm:$0xf]
    %v1405 = vld [vmem:[%s5 + $0x58] sm:$0xf]
    %v1406 = vld [vmem:[%s5 + $0x5c] sm:$0xf]
    %v1407 = vld [vmem:[%s5 + $0x60] sm:$0xf]
    %v1408 = vld [vmem:[%s5 + $0x64] sm:$0xf]
    %v1409 = vld [vmem:[%s5 + $0x68] sm:$0xf]
    %v1410 = vld [vmem:[%s5 + $0x6c] sm:$0xf]
    %v1411 = vld [vmem:[%s5 + $0x70] sm:$0xf]
    %v1412 = vld [vmem:[%s5 + $0x74] sm:$0xf]
    %v1413 = vld [vmem:[%s5 + $0x78] sm:$0xf]
    %v1414 = vld [vmem:[%s5 + $0x7c] sm:$0xf]
    %v1415 = vld [vmem:[#allocation8] sm:$0x1]
    %v1417 = vlaneseq
    %v1418 = vshrl.u32 %v1417, 7
    %v1419 = vsub.s32 0, %v1418
    %v1420 = vrot.slane %v1415, %v1419
    %v1454 = vunpack.c.l.b16 %v1383
    %v1455 = vunpack.c.l.b16 %v1384
    %v1456 = vunpack.c.l.b16 %v1385
    %v1457 = vunpack.c.l.b16 %v1386
    %v1458 = vunpack.c.l.b16 %v1387
    %v1459 = vunpack.c.l.b16 %v1388
    %v1460 = vunpack.c.l.b16 %v1389
    %v1461 = vunpack.c.l.b16 %v1390
    %v1462 = vunpack.c.l.b16 %v1391
    %v1463 = vunpack.c.l.b16 %v1392
    %v1464 = vunpack.c.l.b16 %v1393
    %v1465 = vunpack.c.l.b16 %v1394
    %v1466 = vunpack.c.l.b16 %v1395
    %v1467 = vunpack.c.l.b16 %v1396
    %v1468 = vunpack.c.l.b16 %v1397
    %v1469 = vunpack.c.l.b16 %v1398
    %v1470 = vunpack.c.l.b16 %v1399
    %v1471 = vunpack.c.l.b16 %v1400
    %v1472 = vunpack.c.l.b16 %v1401
    %v1473 = vunpack.c.l.b16 %v1402
    %v1474 = vunpack.c.l.b16 %v1403
    %v1475 = vunpack.c.l.b16 %v1404
    %v1476 = vunpack.c.l.b16 %v1405
    %v1477 = vunpack.c.l.b16 %v1406
    %v1478 = vunpack.c.l.b16 %v1407
    %v1479 = vunpack.c.l.b16 %v1408
    %v1480 = vunpack.c.l.b16 %v1409
    %v1481 = vunpack.c.l.b16 %v1410
    %v1482 = vunpack.c.l.b16 %v1411
    %v1483 = vunpack.c.l.b16 %v1412
    %v1484 = vunpack.c.l.b16 %v1413
    %v1485 = vunpack.c.l.b16 %v1414
    %v1486 = vpack.c.b16 %v1455, %v1454
    %v1487 = vpack.c.b16 %v1457, %v1456
    %v1488 = vpack.c.b16 %v1459, %v1458
    %v1489 = vpack.c.b16 %v1461, %v1460
    %v1490 = vpack.c.b16 %v1463, %v1462
    %v1491 = vpack.c.b16 %v1465, %v1464
    %v1492 = vpack.c.b16 %v1467, %v1466
    %v1493 = vpack.c.b16 %v1469, %v1468
    %v1494 = vpack.c.b16 %v1471, %v1470
    %v1495 = vpack.c.b16 %v1473, %v1472
    %v1496 = vpack.c.b16 %v1475, %v1474
    %v1497 = vpack.c.b16 %v1477, %v1476
    %v1498 = vpack.c.b16 %v1479, %v1478
    %v1499 = vpack.c.b16 %v1481, %v1480
    %v1500 = vpack.c.b16 %v1483, %v1482
    %v1501 = vpack.c.b16 %v1485, %v1484
    %1518 = vmatprep.subr.bf16.mxu0 0
    %1519 = vmatpush1.bf16.msra.mxu0 %v1486
    %1520 = vmatprep.subr.bf16.mxu0 0
    %1521 = vmatpush1.bf16.msra.mxu0 %v1487
    %1522 = vmatprep.subr.bf16.mxu0 0
    %1523 = vmatpush1.bf16.msra.mxu0 %v1488
    %1524 = vmatprep.subr.bf16.mxu0 0
    %1525 = vmatpush1.bf16.msra.mxu0 %v1489
    %1526 = vmatprep.subr.bf16.mxu0 0
    %1527 = vmatpush1.bf16.msra.mxu0 %v1490
    %1528 = vmatprep.subr.bf16.mxu0 0
    %1529 = vmatpush1.bf16.msra.mxu0 %v1491
    %1530 = vmatprep.subr.bf16.mxu0 0
    %1531 = vmatpush1.bf16.msra.mxu0 %v1492
    %1532 = vmatprep.subr.bf16.mxu0 0
    %1533 = vmatpush1.bf16.msra.mxu0 %v1493
    %1534 = vmatprep.subr.bf16.mxu0 0
    %1535 = vmatpush1.bf16.msra.mxu0 %v1494
    %1536 = vmatprep.subr.bf16.mxu0 0
    %1537 = vmatpush1.bf16.msra.mxu0 %v1495
    %1538 = vmatprep.subr.bf16.mxu0 0
    %1539 = vmatpush1.bf16.msra.mxu0 %v1496
    %1540 = vmatprep.subr.bf16.mxu0 0
    %1541 = vmatpush1.bf16.msra.mxu0 %v1497
    %1542 = vmatprep.subr.bf16.mxu0 0
    %1543 = vmatpush1.bf16.msra.mxu0 %v1498
    %1544 = vmatprep.subr.bf16.mxu0 0
    %1545 = vmatpush1.bf16.msra.mxu0 %v1499
    %1546 = vmatprep.subr.bf16.mxu0 0
    %1547 = vmatpush1.bf16.msra.mxu0 %v1500
    %1548 = vmatprep.subr.bf16.mxu0 0
    %1549 = vmatpush1.bf16.msra.mxu0 %v1501
    %1550 = vmatprep.mubr.bf16.mxu0 %v1079
    %1551 = vmatmul.mubr.bf16.gmra.mrb[0].mxu0 %v1078
    %v1552 = vpop.f32.mrb[0].mxu0
    %v1553 = vadd.f32 %v1420, %v1552
    %v1554 = vpop.f32.mrb[0].mxu0
    %v1555 = vpop.f32.mrb[0].mxu0
    %v1556 = vadd.f32 %v1420, %v1555
    %v1557 = vpop.f32.mrb[0].mxu0
    %1558 = vmatprep.mubr.bf16.mxu0 %v1081
    %1559 = vmatmul.mubr.bf16.gmra.mrb[0].mxu0 %v1080
    %v1560 = vpop.f32.mrb[0].mxu0
    %v1561 = vadd.f32 %v1420, %v1560
    %v1562 = vpop.f32.mrb[0].mxu0
    %v1563 = vpop.f32.mrb[0].mxu0
    %v1564 = vadd.f32 %v1420, %v1563
    %v1565 = vpop.f32.mrb[0].mxu0
    %1566 = vmatprep.mubr.bf16.mxu0 %v1083
    %1567 = vmatmul.mubr.bf16.gmra.mrb[0].mxu0 %v1082
    %v1568 = vpop.f32.mrb[0].mxu0
    %v1569 = vadd.f32 %v1420, %v1568
    %v1570 = vpop.f32.mrb[0].mxu0
    %v1571 = vpop.f32.mrb[0].mxu0
    %v1572 = vadd.f32 %v1420, %v1571
    %v1573 = vpop.f32.mrb[0].mxu0
    %1574 = vmatprep.mubr.bf16.mxu0 %v1085
    %1575 = vmatmul.mubr.bf16.gmra.mrb[0].mxu0 %v1084
    %v1576 = vpop.f32.mrb[0].mxu0
    %v1577 = vadd.f32 %v1420, %v1576
    %v1578 = vpop.f32.mrb[0].mxu0
    %v1579 = vpop.f32.mrb[0].mxu0
    %v1580 = vadd.f32 %v1420, %v1579
    %v1581 = vpop.f32.mrb[0].mxu0
    %1582 = vmatprep.mubr.bf16.mxu0 %v1087
    %1583 = vmatmul.mubr.bf16.gmra.mrb[0].mxu0 %v1086
    %v1584 = vpop.f32.mrb[0].mxu0
    %v1585 = vadd.f32 %v1420, %v1584
    %v1586 = vpop.f32.mrb[0].mxu0
    %v1587 = vpop.f32.mrb[0].mxu0
    %v1588 = vadd.f32 %v1420, %v1587
    %v1589 = vpop.f32.mrb[0].mxu0
    %1590 = vmatprep.mubr.bf16.mxu0 %v1089
    %1591 = vmatmul.mubr.bf16.gmra.mrb[0].mxu0 %v1088
    %v1592 = vpop.f32.mrb[0].mxu0
    %v1593 = vadd.f32 %v1420, %v1592
    %v1594 = vpop.f32.mrb[0].mxu0
    %v1595 = vpop.f32.mrb[0].mxu0
    %v1596 = vadd.f32 %v1420, %v1595
    %v1597 = vpop.f32.mrb[0].mxu0
    %1598 = vmatprep.mubr.bf16.mxu0 %v1091
    %1599 = vmatmul.mubr.bf16.gmra.mrb[0].mxu0 %v1090
    %v1600 = vpop.f32.mrb[0].mxu0
    %v1601 = vadd.f32 %v1420, %v1600
    %v1602 = vpop.f32.mrb[0].mxu0
    %v1603 = vpop.f32.mrb[0].mxu0
    %v1604 = vadd.f32 %v1420, %v1603
    %v1605 = vpop.f32.mrb[0].mxu0
    %1606 = vmatprep.mubr.bf16.mxu0 %v1093
    %1607 = vmatmul.mubr.bf16.gmra.mrb[0].mxu0 %v1092
    %v1608 = vpop.f32.mrb[0].mxu0
    %v1609 = vadd.f32 %v1420, %v1608
    %v1610 = vpop.f32.mrb[0].mxu0
    %v1611 = vpop.f32.mrb[0].mxu0
    %v1612 = vadd.f32 %v1420, %v1611
    %v1613 = vpop.f32.mrb[0].mxu0
    %1614 = vdwg.mxu0
    %v1615 = vsub.f32 0.0, %v1553
    %v1616 = vsub.f32 0.0, %v1556
    %v1617 = vsub.f32 0.0, %v1561
    %v1618 = vsub.f32 0.0, %v1564
    %v1619 = vsub.f32 0.0, %v1569
    %v1620 = vsub.f32 0.0, %v1572
    %v1621 = vsub.f32 0.0, %v1577
    %v1622 = vsub.f32 0.0, %v1580
    %v1623 = vsub.f32 0.0, %v1585
    %v1624 = vsub.f32 0.0, %v1588
    %v1625 = vsub.f32 0.0, %v1593
    %v1626 = vsub.f32 0.0, %v1596
    %v1627 = vsub.f32 0.0, %v1601
    %v1628 = vsub.f32 0.0, %v1604
    %v1629 = vsub.f32 0.0, %v1609
    %v1630 = vsub.f32 0.0, %v1612
    %v1631 = vmul.f32 %v1615, 1.442695
    %v1632 = vpow.pop %v1631
    %v1633 = vmul.f32 %v1616, 1.442695
    %v1634 = vpow.pop %v1633
    %v1635 = vmul.f32 %v1617, 1.442695
    %v1636 = vpow.pop %v1635
    %v1637 = vmul.f32 %v1618, 1.442695
    %v1638 = vpow.pop %v1637
    %v1639 = vmul.f32 %v1619, 1.442695
    %v1640 = vpow.pop %v1639
    %v1641 = vmul.f32 %v1620, 1.442695
    %v1642 = vpow.pop %v1641
    %v1643 = vmul.f32 %v1621, 1.442695
    %v1644 = vpow.pop %v1643
    %v1645 = vmul.f32 %v1622, 1.442695
    %v1646 = vpow.pop %v1645
    %v1647 = vmul.f32 %v1623, 1.442695
    %v1648 = vpow.pop %v1647
    %v1649 = vmul.f32 %v1624, 1.442695
    %v1650 = vpow.pop %v1649
    %v1651 = vmul.f32 %v1625, 1.442695
    %v1652 = vpow.pop %v1651
    %v1653 = vmul.f32 %v1626, 1.442695
    %v1654 = vpow.pop %v1653
    %v1655 = vmul.f32 %v1627, 1.442695
    %v1656 = vpow.pop %v1655
    %v1657 = vmul.f32 %v1628, 1.442695
    %v1658 = vpow.pop %v1657
    %v1659 = vmul.f32 %v1629, 1.442695
    %v1660 = vpow.pop %v1659
    %v1661 = vmul.f32 %v1630, 1.442695
    %v1662 = vpow.pop %v1661
    %v1663 = vadd.f32 %v1632, 1.0
    %v1664 = vadd.f32 %v1634, 1.0
    %v1665 = vadd.f32 %v1636, 1.0
    %v1666 = vadd.f32 %v1638, 1.0
    %v1667 = vadd.f32 %v1640, 1.0
    %v1668 = vadd.f32 %v1642, 1.0
    %v1669 = vadd.f32 %v1644, 1.0
    %v1670 = vadd.f32 %v1646, 1.0
    %v1671 = vadd.f32 %v1648, 1.0
    %v1672 = vadd.f32 %v1650, 1.0
    %v1673 = vadd.f32 %v1652, 1.0
    %v1674 = vadd.f32 %v1654, 1.0
    %v1675 = vadd.f32 %v1656, 1.0
    %v1676 = vadd.f32 %v1658, 1.0
    %v1677 = vadd.f32 %v1660, 1.0
    %v1678 = vadd.f32 %v1662, 1.0
    %v1679 = vrcp.pop %v1663
    %v1680 = vrcp.pop %v1664
    %v1681 = vrcp.pop %v1665
    %v1682 = vrcp.pop %v1666
    %v1683 = vrcp.pop %v1667
    %v1684 = vrcp.pop %v1668
    %v1685 = vrcp.pop %v1669
    %v1686 = vrcp.pop %v1670
    %v1687 = vrcp.pop %v1671
    %v1688 = vrcp.pop %v1672
    %v1689 = vrcp.pop %v1673
    %v1690 = vrcp.pop %v1674
    %v1691 = vrcp.pop %v1675
    %v1692 = vrcp.pop %v1676
    %v1693 = vrcp.pop %v1677
    %v1694 = vrcp.pop %v1678
    %v1695 = vpack.c.bf16 %v1680, %v1679
    %v1696 = vpack.c.bf16 %v1682, %v1681
    %v1697 = vpack.c.bf16 %v1684, %v1683
    %v1698 = vpack.c.bf16 %v1686, %v1685
    %v1699 = vpack.c.bf16 %v1688, %v1687
    %v1700 = vpack.c.bf16 %v1690, %v1689
    %v1701 = vpack.c.bf16 %v1692, %v1691
    %v1702 = vpack.c.bf16 %v1694, %v1693
    %1703 = vmatprep.subr.bf16.mxu0 0
    %1704 = vmatpush1.bf16.msra.mxu0 %v1486
    %1705 = vmatprep.subr.bf16.mxu0 0
    %1706 = vmatpush1.bf16.msra.mxu0 %v1487
    %1707 = vmatprep.subr.bf16.mxu0 0
    %1708 = vmatpush1.bf16.msra.mxu0 %v1488
    %1709 = vmatprep.subr.bf16.mxu0 0
    %1710 = vmatpush1.bf16.msra.mxu0 %v1489
    %1711 = vmatprep.subr.bf16.mxu0 0
    %1712 = vmatpush1.bf16.msra.mxu0 %v1490
    %1713 = vmatprep.subr.bf16.mxu0 0
    %1714 = vmatpush1.bf16.msra.mxu0 %v1491
    %1715 = vmatprep.subr.bf16.mxu0 0
    %1716 = vmatpush1.bf16.msra.mxu0 %v1492
    %1717 = vmatprep.subr.bf16.mxu0 0
    %1718 = vmatpush1.bf16.msra.mxu0 %v1493
    %1719 = vmatprep.subr.bf16.mxu0 0
    %1720 = vmatpush1.bf16.msra.mxu0 %v1494
    %1721 = vmatprep.subr.bf16.mxu0 0
    %1722 = vmatpush1.bf16.msra.mxu0 %v1495
    %1723 = vmatprep.subr.bf16.mxu0 0
    %1724 = vmatpush1.bf16.msra.mxu0 %v1496
    %1725 = vmatprep.subr.bf16.mxu0 0
    %1726 = vmatpush1.bf16.msra.mxu0 %v1497
    %1727 = vmatprep.subr.bf16.mxu0 0
    %1728 = vmatpush1.bf16.msra.mxu0 %v1498
    %1729 = vmatprep.subr.bf16.mxu0 0
    %1730 = vmatpush1.bf16.msra.mxu0 %v1499
    %1731 = vmatprep.subr.bf16.mxu0 0
    %1732 = vmatpush1.bf16.msra.mxu0 %v1500
    %1733 = vmatprep.subr.bf16.mxu0 0
    %1734 = vmatpush1.bf16.msra.mxu0 %v1501
    %1735 = vmatprep.mubr.bf16.mxu0 %v1368
    %1736 = vmatmul.mubr.bf16.gmra.mrb[0].mxu0 %v1367
    %v1737 = vpop.f32.mrb[0].mxu0
    %v1738 = vadd.f32 %v1420, %v1737
    %v1739 = vpop.f32.mrb[0].mxu0
    %v1740 = vpop.f32.mrb[0].mxu0
    %v1741 = vadd.f32 %v1420, %v1740
    %v1742 = vpop.f32.mrb[0].mxu0
    %1743 = vmatprep.mubr.bf16.mxu0 %v1370
    %1744 = vmatmul.mubr.bf16.gmra.mrb[0].mxu0 %v1369
    %v1745 = vpop.f32.mrb[0].mxu0
    %v1746 = vadd.f32 %v1420, %v1745
    %v1747 = vpop.f32.mrb[0].mxu0
    %v1748 = vpop.f32.mrb[0].mxu0
    %v1749 = vadd.f32 %v1420, %v1748
    %v1750 = vpop.f32.mrb[0].mxu0
    %1751 = vmatprep.mubr.bf16.mxu0 %v1372
    %1752 = vmatmul.mubr.bf16.gmra.mrb[0].mxu0 %v1371
    %v1753 = vpop.f32.mrb[0].mxu0
    %v1754 = vadd.f32 %v1420, %v1753
    %v1755 = vpop.f32.mrb[0].mxu0
    %v1756 = vpop.f32.mrb[0].mxu0
    %v1757 = vadd.f32 %v1420, %v1756
    %v1758 = vpop.f32.mrb[0].mxu0
    %1759 = vmatprep.mubr.bf16.mxu0 %v1374
    %1760 = vmatmul.mubr.bf16.gmra.mrb[0].mxu0 %v1373
    %v1761 = vpop.f32.mrb[0].mxu0
    %v1762 = vadd.f32 %v1420, %v1761
    %v1763 = vpop.f32.mrb[0].mxu0
    %v1764 = vpop.f32.mrb[0].mxu0
    %v1765 = vadd.f32 %v1420, %v1764
    %v1766 = vpop.f32.mrb[0].mxu0
    %1767 = vmatprep.mubr.bf16.mxu0 %v1376
    %1768 = vmatmul.mubr.bf16.gmra.mrb[0].mxu0 %v1375
    %v1769 = vpop.f32.mrb[0].mxu0
    %v1770 = vadd.f32 %v1420, %v1769
    %v1771 = vpop.f32.mrb[0].mxu0
    %v1772 = vpop.f32.mrb[0].mxu0
    %v1773 = vadd.f32 %v1420, %v1772
    %v1774 = vpop.f32.mrb[0].mxu0
    %1775 = vmatprep.mubr.bf16.mxu0 %v1378
    %1776 = vmatmul.mubr.bf16.gmra.mrb[0].mxu0 %v1377
    %v1777 = vpop.f32.mrb[0].mxu0
    %v1778 = vadd.f32 %v1420, %v1777
    %v1779 = vpop.f32.mrb[0].mxu0
    %v1780 = vpop.f32.mrb[0].mxu0
    %v1781 = vadd.f32 %v1420, %v1780
    %v1782 = vpop.f32.mrb[0].mxu0
    %1783 = vmatprep.mubr.bf16.mxu0 %v1380
    %1784 = vmatmul.mubr.bf16.gmra.mrb[0].mxu0 %v1379
    %v1785 = vpop.f32.mrb[0].mxu0
    %v1786 = vadd.f32 %v1420, %v1785
    %v1787 = vpop.f32.mrb[0].mxu0
    %v1788 = vpop.f32.mrb[0].mxu0
    %v1789 = vadd.f32 %v1420, %v1788
    %v1790 = vpop.f32.mrb[0].mxu0
    %1791 = vmatprep.mubr.bf16.mxu0 %v1382
    %1792 = vmatmul.mubr.bf16.gmra.mrb[0].mxu0 %v1381
    %v1793 = vpop.f32.mrb[0].mxu0
    %v1794 = vadd.f32 %v1420, %v1793
    %v1795 = vpop.f32.mrb[0].mxu0
    %v1796 = vpop.f32.mrb[0].mxu0
    %v1797 = vadd.f32 %v1420, %v1796
    %v1798 = vpop.f32.mrb[0].mxu0
    %1799 = vdwg.mxu0
    %v1800 = vsub.f32 0.0, %v1738
    %v1801 = vsub.f32 0.0, %v1741
    %v1802 = vsub.f32 0.0, %v1746
    %v1803 = vsub.f32 0.0, %v1749
    %v1804 = vsub.f32 0.0, %v1754
    %v1805 = vsub.f32 0.0, %v1757
    %v1806 = vsub.f32 0.0, %v1762
    %v1807 = vsub.f32 0.0, %v1765
    %v1808 = vsub.f32 0.0, %v1770
    %v1809 = vsub.f32 0.0, %v1773
    %v1810 = vsub.f32 0.0, %v1778
    %v1811 = vsub.f32 0.0, %v1781
    %v1812 = vsub.f32 0.0, %v1786
    %v1813 = vsub.f32 0.0, %v1789
    %v1814 = vsub.f32 0.0, %v1794
    %v1815 = vsub.f32 0.0, %v1797
    %v1816 = vmul.f32 %v1800, 1.442695
    %v1817 = vpow.pop %v1816
    %v1818 = vmul.f32 %v1801, 1.442695
    %v1819 = vpow.pop %v1818
    %v1820 = vmul.f32 %v1802, 1.442695
    %v1821 = vpow.pop %v1820
    %v1822 = vmul.f32 %v1803, 1.442695
    %v1823 = vpow.pop %v1822
    %v1824 = vmul.f32 %v1804, 1.442695
    %v1825 = vpow.pop %v1824
    %v1826 = vmul.f32 %v1805, 1.442695
    %v1827 = vpow.pop %v1826
    %v1828 = vmul.f32 %v1806, 1.442695
    %v1829 = vpow.pop %v1828
    %v1830 = vmul.f32 %v1807, 1.442695
    %v1831 = vpow.pop %v1830
    %v1832 = vmul.f32 %v1808, 1.442695
    %v1833 = vpow.pop %v1832
    %v1834 = vmul.f32 %v1809, 1.442695
    %v1835 = vpow.pop %v1834
    %v1836 = vmul.f32 %v1810, 1.442695
    %v1837 = vpow.pop %v1836
    %v1838 = vmul.f32 %v1811, 1.442695
    %v1839 = vpow.pop %v1838
    %v1840 = vmul.f32 %v1812, 1.442695
    %v1841 = vpow.pop %v1840
    %v1842 = vmul.f32 %v1813, 1.442695
    %v1843 = vpow.pop %v1842
    %v1844 = vmul.f32 %v1814, 1.442695
    %v1845 = vpow.pop %v1844
    %v1846 = vmul.f32 %v1815, 1.442695
    %v1847 = vpow.pop %v1846
    %v1848 = vadd.f32 %v1817, 1.0
    %v1849 = vadd.f32 %v1819, 1.0
    %v1850 = vadd.f32 %v1821, 1.0
    %v1851 = vadd.f32 %v1823, 1.0
    %v1852 = vadd.f32 %v1825, 1.0
    %v1853 = vadd.f32 %v1827, 1.0
    %v1854 = vadd.f32 %v1829, 1.0
    %v1855 = vadd.f32 %v1831, 1.0
    %v1856 = vadd.f32 %v1833, 1.0
    %v1857 = vadd.f32 %v1835, 1.0
    %v1858 = vadd.f32 %v1837, 1.0
    %v1859 = vadd.f32 %v1839, 1.0
    %v1860 = vadd.f32 %v1841, 1.0
    %v1861 = vadd.f32 %v1843, 1.0
    %v1862 = vadd.f32 %v1845, 1.0
    %v1863 = vadd.f32 %v1847, 1.0
    %v1864 = vrcp.pop %v1848
    %v1865 = vrcp.pop %v1849
    %v1866 = vrcp.pop %v1850
    %v1867 = vrcp.pop %v1851
    %v1868 = vrcp.pop %v1852
    %v1869 = vrcp.pop %v1853
    %v1870 = vrcp.pop %v1854
    %v1871 = vrcp.pop %v1855
    %v1872 = vrcp.pop %v1856
    %v1873 = vrcp.pop %v1857
    %v1874 = vrcp.pop %v1858
    %v1875 = vrcp.pop %v1859
    %v1876 = vrcp.pop %v1860
    %v1877 = vrcp.pop %v1861
    %v1878 = vrcp.pop %v1862
    %v1879 = vrcp.pop %v1863
    %v1880 = vpack.c.bf16 %v1865, %v1864
    %v1881 = vpack.c.bf16 %v1867, %v1866
    %v1882 = vpack.c.bf16 %v1869, %v1868
    %v1883 = vpack.c.bf16 %v1871, %v1870
    %v1884 = vpack.c.bf16 %v1873, %v1872
    %v1885 = vpack.c.bf16 %v1875, %v1874
    %v1886 = vpack.c.bf16 %v1877, %v1876
    %v1887 = vpack.c.bf16 %v1879, %v1878
    %v1888 = vld [vmem:[%s7] sm:$0xf]
    %v1889 = vld [vmem:[%s7 + $0x4] sm:$0xf]
    %v1890 = vld [vmem:[%s7 + $0x8] sm:$0xf]
    %v1891 = vld [vmem:[%s7 + $0xc] sm:$0xf]
    %v1892 = vld [vmem:[%s7 + $0x10] sm:$0xf]
    %v1893 = vld [vmem:[%s7 + $0x14] sm:$0xf]
    %v1894 = vld [vmem:[%s7 + $0x18] sm:$0xf]
    %v1895 = vld [vmem:[%s7 + $0x1c] sm:$0xf]
    %v1896 = vld [vmem:[%s7 + $0x20] sm:$0xf]
    %v1897 = vld [vmem:[%s7 + $0x24] sm:$0xf]
    %v1898 = vld [vmem:[%s7 + $0x28] sm:$0xf]
    %v1899 = vld [vmem:[%s7 + $0x2c] sm:$0xf]
    %v1900 = vld [vmem:[%s7 + $0x30] sm:$0xf]
    %v1901 = vld [vmem:[%s7 + $0x34] sm:$0xf]
    %v1902 = vld [vmem:[%s7 + $0x38] sm:$0xf]
    %v1903 = vld [vmem:[%s7 + $0x3c] sm:$0xf]
    %v1904 = vld [vmem:[#allocation9] sm:$0x1]
    %v1906 = vlaneseq
    %v1907 = vshrl.u32 %v1906, 7
    %v1908 = vsub.s32 0, %v1907
    %v1909 = vrot.slane %v1904, %v1908
    %v1927 = vunpack.c.l.b16 %v1888
    %v1928 = vunpack.c.l.b16 %v1889
    %v1929 = vunpack.c.l.b16 %v1890
    %v1930 = vunpack.c.l.b16 %v1891
    %v1931 = vunpack.c.l.b16 %v1892
    %v1932 = vunpack.c.l.b16 %v1893
    %v1933 = vunpack.c.l.b16 %v1894
    %v1934 = vunpack.c.l.b16 %v1895
    %v1935 = vunpack.c.l.b16 %v1896
    %v1936 = vunpack.c.l.b16 %v1897
    %v1937 = vunpack.c.l.b16 %v1898
    %v1938 = vunpack.c.l.b16 %v1899
    %v1939 = vunpack.c.l.b16 %v1900
    %v1940 = vunpack.c.l.b16 %v1901
    %v1941 = vunpack.c.l.b16 %v1902
    %v1942 = vunpack.c.l.b16 %v1903
    %v1943 = vpack.c.b16 %v1928, %v1927
    %v1944 = vpack.c.b16 %v1930, %v1929
    %v1945 = vpack.c.b16 %v1932, %v1931
    %v1946 = vpack.c.b16 %v1934, %v1933
    %v1947 = vpack.c.b16 %v1936, %v1935
    %v1948 = vpack.c.b16 %v1938, %v1937
    %v1949 = vpack.c.b16 %v1940, %v1939
    %v1950 = vpack.c.b16 %v1942, %v1941
    %1959 = vmatprep.subr.bf16.mxu0 0
    %1960 = vmatpush1.bf16.msra.mxu0 %v1943
    %1961 = vmatprep.subr.bf16.mxu0 0
    %1962 = vmatpush1.bf16.msra.mxu0 %v1944
    %1963 = vmatprep.subr.bf16.mxu0 0
    %1964 = vmatpush1.bf16.msra.mxu0 %v1945
    %1965 = vmatprep.subr.bf16.mxu0 0
    %1966 = vmatpush1.bf16.msra.mxu0 %v1946
    %1967 = vmatprep.subr.bf16.mxu0 0
    %1968 = vmatpush1.bf16.msra.mxu0 %v1947
    %1969 = vmatprep.subr.bf16.mxu0 0
    %1970 = vmatpush1.bf16.msra.mxu0 %v1948
    %1971 = vmatprep.subr.bf16.mxu0 0
    %1972 = vmatpush1.bf16.msra.mxu0 %v1949
    %1973 = vmatprep.subr.bf16.mxu0 0
    %1974 = vmatpush1.bf16.msra.mxu0 %v1950
    %1975 = vmatprep.subr.bf16.mxu0 0
    %1976 = vmatpush1.bf16.msra.mxu0 0
    %1977 = vmatprep.subr.bf16.mxu0 0
    %1978 = vmatpush1.bf16.msra.mxu0 0
    %1979 = vmatprep.subr.bf16.mxu0 0
    %1980 = vmatpush1.bf16.msra.mxu0 0
    %1981 = vmatprep.subr.bf16.mxu0 0
    %1982 = vmatpush1.bf16.msra.mxu0 0
    %1983 = vmatprep.subr.bf16.mxu0 0
    %1984 = vmatpush1.bf16.msra.mxu0 0
    %1985 = vmatprep.subr.bf16.mxu0 0
    %1986 = vmatpush1.bf16.msra.mxu0 0
    %1987 = vmatprep.subr.bf16.mxu0 0
    %1988 = vmatpush1.bf16.msra.mxu0 0
    %1989 = vmatprep.subr.bf16.mxu0 0
    %1990 = vmatpush1.bf16.msra.mxu0 0
    %1991 = vmatprep.mubr.bf16.mxu0 0
    %1992 = vmatmul.mubr.bf16.gmra.mrb[0].mxu0 %v1695
    %v1993 = vpop.f32.mrb[0].mxu0
    %v1994 = vadd.f32 %v1909, %v1993
    %v1995 = vpop.f32.mrb[0].mxu0
    %v1996 = vpop.f32.mrb[0].mxu0
    %v1997 = vadd.f32 %v1909, %v1996
    %v1998 = vpop.f32.mrb[0].mxu0
    %1999 = vmatprep.mubr.bf16.mxu0 0
    %2000 = vmatmul.mubr.bf16.gmra.mrb[0].mxu0 %v1696
    %v2001 = vpop.f32.mrb[0].mxu0
    %v2002 = vadd.f32 %v1909, %v2001
    %v2003 = vpop.f32.mrb[0].mxu0
    %v2004 = vpop.f32.mrb[0].mxu0
    %v2005 = vadd.f32 %v1909, %v2004
    %v2006 = vpop.f32.mrb[0].mxu0
    %2007 = vmatprep.mubr.bf16.mxu0 0
    %2008 = vmatmul.mubr.bf16.gmra.mrb[0].mxu0 %v1697
    %v2009 = vpop.f32.mrb[0].mxu0
    %v2010 = vadd.f32 %v1909, %v2009
    %v2011 = vpop.f32.mrb[0].mxu0
    %v2012 = vpop.f32.mrb[0].mxu0
    %v2013 = vadd.f32 %v1909, %v2012
    %v2014 = vpop.f32.mrb[0].mxu0
    %2015 = vmatprep.mubr.bf16.mxu0 0
    %2016 = vmatmul.mubr.bf16.gmra.mrb[0].mxu0 %v1698
    %v2017 = vpop.f32.mrb[0].mxu0
    %v2018 = vadd.f32 %v1909, %v2017
    %v2019 = vpop.f32.mrb[0].mxu0
    %v2020 = vpop.f32.mrb[0].mxu0
    %v2021 = vadd.f32 %v1909, %v2020
    %v2022 = vpop.f32.mrb[0].mxu0
    %2023 = vmatprep.mubr.bf16.mxu0 0
    %2024 = vmatmul.mubr.bf16.gmra.mrb[0].mxu0 %v1699
    %v2025 = vpop.f32.mrb[0].mxu0
    %v2026 = vadd.f32 %v1909, %v2025
    %v2027 = vpop.f32.mrb[0].mxu0
    %v2028 = vpop.f32.mrb[0].mxu0
    %v2029 = vadd.f32 %v1909, %v2028
    %v2030 = vpop.f32.mrb[0].mxu0
    %2031 = vmatprep.mubr.bf16.mxu0 0
    %2032 = vmatmul.mubr.bf16.gmra.mrb[0].mxu0 %v1700
    %v2033 = vpop.f32.mrb[0].mxu0
    %v2034 = vadd.f32 %v1909, %v2033
    %v2035 = vpop.f32.mrb[0].mxu0
    %v2036 = vpop.f32.mrb[0].mxu0
    %v2037 = vadd.f32 %v1909, %v2036
    %v2038 = vpop.f32.mrb[0].mxu0
    %2039 = vmatprep.mubr.bf16.mxu0 0
    %2040 = vmatmul.mubr.bf16.gmra.mrb[0].mxu0 %v1701
    %v2041 = vpop.f32.mrb[0].mxu0
    %v2042 = vadd.f32 %v1909, %v2041
    %v2043 = vpop.f32.mrb[0].mxu0
    %v2044 = vpop.f32.mrb[0].mxu0
    %v2045 = vadd.f32 %v1909, %v2044
    %v2046 = vpop.f32.mrb[0].mxu0
    %2047 = vmatprep.mubr.bf16.mxu0 0
    %2048 = vmatmul.mubr.bf16.gmra.mrb[0].mxu0 %v1702
    %v2049 = vpop.f32.mrb[0].mxu0
    %v2050 = vadd.f32 %v1909, %v2049
    %v2051 = vpop.f32.mrb[0].mxu0
    %v2052 = vpop.f32.mrb[0].mxu0
    %v2053 = vadd.f32 %v1909, %v2052
    %v2054 = vpop.f32.mrb[0].mxu0
    %2055 = vdwg.mxu0
    %v2056 = vsub.f32 0.0, %v1994
    %v2057 = vsub.f32 0.0, %v1997
    %v2058 = vsub.f32 0.0, %v2002
    %v2059 = vsub.f32 0.0, %v2005
    %v2060 = vsub.f32 0.0, %v2010
    %v2061 = vsub.f32 0.0, %v2013
    %v2062 = vsub.f32 0.0, %v2018
    %v2063 = vsub.f32 0.0, %v2021
    %v2064 = vsub.f32 0.0, %v2026
    %v2065 = vsub.f32 0.0, %v2029
    %v2066 = vsub.f32 0.0, %v2034
    %v2067 = vsub.f32 0.0, %v2037
    %v2068 = vsub.f32 0.0, %v2042
    %v2069 = vsub.f32 0.0, %v2045
    %v2070 = vsub.f32 0.0, %v2050
    %v2071 = vsub.f32 0.0, %v2053
    %v2072 = vmul.f32 %v2056, 1.442695
    %v2073 = vpow.pop %v2072
    %v2074 = vmul.f32 %v2057, 1.442695
    %v2075 = vpow.pop %v2074
    %v2076 = vmul.f32 %v2058, 1.442695
    %v2077 = vpow.pop %v2076
    %v2078 = vmul.f32 %v2059, 1.442695
    %v2079 = vpow.pop %v2078
    %v2080 = vmul.f32 %v2060, 1.442695
    %v2081 = vpow.pop %v2080
    %v2082 = vmul.f32 %v2061, 1.442695
    %v2083 = vpow.pop %v2082
    %v2084 = vmul.f32 %v2062, 1.442695
    %v2085 = vpow.pop %v2084
    %v2086 = vmul.f32 %v2063, 1.442695
    %v2087 = vpow.pop %v2086
    %v2088 = vmul.f32 %v2064, 1.442695
    %v2089 = vpow.pop %v2088
    %v2090 = vmul.f32 %v2065, 1.442695
    %v2091 = vpow.pop %v2090
    %v2092 = vmul.f32 %v2066, 1.442695
    %v2093 = vpow.pop %v2092
    %v2094 = vmul.f32 %v2067, 1.442695
    %v2095 = vpow.pop %v2094
    %v2096 = vmul.f32 %v2068, 1.442695
    %v2097 = vpow.pop %v2096
    %v2098 = vmul.f32 %v2069, 1.442695
    %v2099 = vpow.pop %v2098
    %v2100 = vmul.f32 %v2070, 1.442695
    %v2101 = vpow.pop %v2100
    %v2102 = vmul.f32 %v2071, 1.442695
    %v2103 = vpow.pop %v2102
    %v2104 = vadd.f32 %v2073, 1.0
    %v2105 = vadd.f32 %v2075, 1.0
    %v2106 = vadd.f32 %v2077, 1.0
    %v2107 = vadd.f32 %v2079, 1.0
    %v2108 = vadd.f32 %v2081, 1.0
    %v2109 = vadd.f32 %v2083, 1.0
    %v2110 = vadd.f32 %v2085, 1.0
    %v2111 = vadd.f32 %v2087, 1.0
    %v2112 = vadd.f32 %v2089, 1.0
    %v2113 = vadd.f32 %v2091, 1.0
    %v2114 = vadd.f32 %v2093, 1.0
    %v2115 = vadd.f32 %v2095, 1.0
    %v2116 = vadd.f32 %v2097, 1.0
    %v2117 = vadd.f32 %v2099, 1.0
    %v2118 = vadd.f32 %v2101, 1.0
    %v2119 = vadd.f32 %v2103, 1.0
    %v2120 = vrcp.pop %v2104
    %v2121 = vrcp.pop %v2105
    %v2122 = vrcp.pop %v2106
    %v2123 = vrcp.pop %v2107
    %v2124 = vrcp.pop %v2108
    %v2125 = vrcp.pop %v2109
    %v2126 = vrcp.pop %v2110
    %v2127 = vrcp.pop %v2111
    %v2128 = vrcp.pop %v2112
    %v2129 = vrcp.pop %v2113
    %v2130 = vrcp.pop %v2114
    %v2131 = vrcp.pop %v2115
    %v2132 = vrcp.pop %v2116
    %v2133 = vrcp.pop %v2117
    %v2134 = vrcp.pop %v2118
    %v2135 = vrcp.pop %v2119
    %v2136 = vpack.c.bf16 %v2121, %v2120
    %v2137 = vpack.c.bf16 %v2123, %v2122
    %v2138 = vpack.c.bf16 %v2125, %v2124
    %v2139 = vpack.c.bf16 %v2127, %v2126
    %v2140 = vpack.c.bf16 %v2129, %v2128
    %v2141 = vpack.c.bf16 %v2131, %v2130
    %v2142 = vpack.c.bf16 %v2133, %v2132
    %v2143 = vpack.c.bf16 %v2135, %v2134
    %2144 = vmatprep.subr.bf16.mxu0 0
    %2145 = vmatpush1.bf16.msra.mxu0 %v1943
    %2146 = vmatprep.subr.bf16.mxu0 0
    %2147 = vmatpush1.bf16.msra.mxu0 %v1944
    %2148 = vmatprep.subr.bf16.mxu0 0
    %2149 = vmatpush1.bf16.msra.mxu0 %v1945
    %2150 = vmatprep.subr.bf16.mxu0 0
    %2151 = vmatpush1.bf16.msra.mxu0 %v1946
    %2152 = vmatprep.subr.bf16.mxu0 0
    %2153 = vmatpush1.bf16.msra.mxu0 %v1947
    %2154 = vmatprep.subr.bf16.mxu0 0
    %2155 = vmatpush1.bf16.msra.mxu0 %v1948
    %2156 = vmatprep.subr.bf16.mxu0 0
    %2157 = vmatpush1.bf16.msra.mxu0 %v1949
    %2158 = vmatprep.subr.bf16.mxu0 0
    %2159 = vmatpush1.bf16.msra.mxu0 %v1950
    %2160 = vmatprep.subr.bf16.mxu0 0
    %2161 = vmatpush1.bf16.msra.mxu0 0
    %2162 = vmatprep.subr.bf16.mxu0 0
    %2163 = vmatpush1.bf16.msra.mxu0 0
    %2164 = vmatprep.subr.bf16.mxu0 0
    %2165 = vmatpush1.bf16.msra.mxu0 0
    %2166 = vmatprep.subr.bf16.mxu0 0
    %2167 = vmatpush1.bf16.msra.mxu0 0
    %2168 = vmatprep.subr.bf16.mxu0 0
    %2169 = vmatpush1.bf16.msra.mxu0 0
    %2170 = vmatprep.subr.bf16.mxu0 0
    %2171 = vmatpush1.bf16.msra.mxu0 0
    %2172 = vmatprep.subr.bf16.mxu0 0
    %2173 = vmatpush1.bf16.msra.mxu0 0
    %2174 = vmatprep.subr.bf16.mxu0 0
    %2175 = vmatpush1.bf16.msra.mxu0 0
    %2176 = vmatprep.mubr.bf16.mxu0 0
    %2177 = vmatmul.mubr.bf16.gmra.mrb[0].mxu0 %v1880
    %v2178 = vpop.f32.mrb[0].mxu0
    %v2179 = vadd.f32 %v1909, %v2178
    %v2180 = vpop.f32.mrb[0].mxu0
    %v2181 = vpop.f32.mrb[0].mxu0
    %v2182 = vadd.f32 %v1909, %v2181
    %v2183 = vpop.f32.mrb[0].mxu0
    %2184 = vmatprep.mubr.bf16.mxu0 0
    %2185 = vmatmul.mubr.bf16.gmra.mrb[0].mxu0 %v1881
    %v2186 = vpop.f32.mrb[0].mxu0
    %v2187 = vadd.f32 %v1909, %v2186
    %v2188 = vpop.f32.mrb[0].mxu0
    %v2189 = vpop.f32.mrb[0].mxu0
    %v2190 = vadd.f32 %v1909, %v2189
    %v2191 = vpop.f32.mrb[0].mxu0
    %2192 = vmatprep.mubr.bf16.mxu0 0
    %2193 = vmatmul.mubr.bf16.gmra.mrb[0].mxu0 %v1882
    %v2194 = vpop.f32.mrb[0].mxu0
    %v2195 = vadd.f32 %v1909, %v2194
    %v2196 = vpop.f32.mrb[0].mxu0
    %v2197 = vpop.f32.mrb[0].mxu0
    %v2198 = vadd.f32 %v1909, %v2197
    %v2199 = vpop.f32.mrb[0].mxu0
    %2200 = vmatprep.mubr.bf16.mxu0 0
    %2201 = vmatmul.mubr.bf16.gmra.mrb[0].mxu0 %v1883
    %v2202 = vpop.f32.mrb[0].mxu0
    %v2203 = vadd.f32 %v1909, %v2202
    %v2204 = vpop.f32.mrb[0].mxu0
    %v2205 = vpop.f32.mrb[0].mxu0
    %v2206 = vadd.f32 %v1909, %v2205
    %v2207 = vpop.f32.mrb[0].mxu0
    %2208 = vmatprep.mubr.bf16.mxu0 0
    %2209 = vmatmul.mubr.bf16.gmra.mrb[0].mxu0 %v1884
    %v2210 = vpop.f32.mrb[0].mxu0
    %v2211 = vadd.f32 %v1909, %v2210
    %v2212 = vpop.f32.mrb[0].mxu0
    %v2213 = vpop.f32.mrb[0].mxu0
    %v2214 = vadd.f32 %v1909, %v2213
    %v2215 = vpop.f32.mrb[0].mxu0
    %2216 = vmatprep.mubr.bf16.mxu0 0
    %2217 = vmatmul.mubr.bf16.gmra.mrb[0].mxu0 %v1885
    %v2218 = vpop.f32.mrb[0].mxu0
    %v2219 = vadd.f32 %v1909, %v2218
    %v2220 = vpop.f32.mrb[0].mxu0
    %v2221 = vpop.f32.mrb[0].mxu0
    %v2222 = vadd.f32 %v1909, %v2221
    %v2223 = vpop.f32.mrb[0].mxu0
    %2224 = vmatprep.mubr.bf16.mxu0 0
    %2225 = vmatmul.mubr.bf16.gmra.mrb[0].mxu0 %v1886
    %v2226 = vpop.f32.mrb[0].mxu0
    %v2227 = vadd.f32 %v1909, %v2226
    %v2228 = vpop.f32.mrb[0].mxu0
    %v2229 = vpop.f32.mrb[0].mxu0
    %v2230 = vadd.f32 %v1909, %v2229
    %v2231 = vpop.f32.mrb[0].mxu0
    %2232 = vmatprep.mubr.bf16.mxu0 0
    %2233 = vmatmul.mubr.bf16.gmra.mrb[0].mxu0 %v1887
    %v2234 = vpop.f32.mrb[0].mxu0
    %v2235 = vadd.f32 %v1909, %v2234
    %v2236 = vpop.f32.mrb[0].mxu0
    %v2237 = vpop.f32.mrb[0].mxu0
    %v2238 = vadd.f32 %v1909, %v2237
    %v2239 = vpop.f32.mrb[0].mxu0
    %2240 = vdwg.mxu0
    %v2241 = vsub.f32 0.0, %v2179
    %v2242 = vsub.f32 0.0, %v2182
    %v2243 = vsub.f32 0.0, %v2187
    %v2244 = vsub.f32 0.0, %v2190
    %v2245 = vsub.f32 0.0, %v2195
    %v2246 = vsub.f32 0.0, %v2198
    %v2247 = vsub.f32 0.0, %v2203
    %v2248 = vsub.f32 0.0, %v2206
    %v2249 = vsub.f32 0.0, %v2211
    %v2250 = vsub.f32 0.0, %v2214
    %v2251 = vsub.f32 0.0, %v2219
    %v2252 = vsub.f32 0.0, %v2222
    %v2253 = vsub.f32 0.0, %v2227
    %v2254 = vsub.f32 0.0, %v2230
    %v2255 = vsub.f32 0.0, %v2235
    %v2256 = vsub.f32 0.0, %v2238
    %v2257 = vmul.f32 %v2241, 1.442695
    %v2258 = vpow.pop %v2257
    %v2259 = vmul.f32 %v2242, 1.442695
    %v2260 = vpow.pop %v2259
    %v2261 = vmul.f32 %v2243, 1.442695
    %v2262 = vpow.pop %v2261
    %v2263 = vmul.f32 %v2244, 1.442695
    %v2264 = vpow.pop %v2263
    %v2265 = vmul.f32 %v2245, 1.442695
    %v2266 = vpow.pop %v2265
    %v2267 = vmul.f32 %v2246, 1.442695
    %v2268 = vpow.pop %v2267
    %v2269 = vmul.f32 %v2247, 1.442695
    %v2270 = vpow.pop %v2269
    %v2271 = vmul.f32 %v2248, 1.442695
    %v2272 = vpow.pop %v2271
    %v2273 = vmul.f32 %v2249, 1.442695
    %v2274 = vpow.pop %v2273
    %v2275 = vmul.f32 %v2250, 1.442695
    %v2276 = vpow.pop %v2275
    %v2277 = vmul.f32 %v2251, 1.442695
    %v2278 = vpow.pop %v2277
    %v2279 = vmul.f32 %v2252, 1.442695
    %v2280 = vpow.pop %v2279
    %v2281 = vmul.f32 %v2253, 1.442695
    %v2282 = vpow.pop %v2281
    %v2283 = vmul.f32 %v2254, 1.442695
    %v2284 = vpow.pop %v2283
    %v2285 = vmul.f32 %v2255, 1.442695
    %v2286 = vpow.pop %v2285
    %v2287 = vmul.f32 %v2256, 1.442695
    %v2288 = vpow.pop %v2287
    %v2289 = vadd.f32 %v2258, 1.0
    %v2290 = vadd.f32 %v2260, 1.0
    %v2291 = vadd.f32 %v2262, 1.0
    %v2292 = vadd.f32 %v2264, 1.0
    %v2293 = vadd.f32 %v2266, 1.0
    %v2294 = vadd.f32 %v2268, 1.0
    %v2295 = vadd.f32 %v2270, 1.0
    %v2296 = vadd.f32 %v2272, 1.0
    %v2297 = vadd.f32 %v2274, 1.0
    %v2298 = vadd.f32 %v2276, 1.0
    %v2299 = vadd.f32 %v2278, 1.0
    %v2300 = vadd.f32 %v2280, 1.0
    %v2301 = vadd.f32 %v2282, 1.0
    %v2302 = vadd.f32 %v2284, 1.0
    %v2303 = vadd.f32 %v2286, 1.0
    %v2304 = vadd.f32 %v2288, 1.0
    %v2305 = vrcp.pop %v2289
    %v2306 = vrcp.pop %v2290
    %v2307 = vrcp.pop %v2291
    %v2308 = vrcp.pop %v2292
    %v2309 = vrcp.pop %v2293
    %v2310 = vrcp.pop %v2294
    %v2311 = vrcp.pop %v2295
    %v2312 = vrcp.pop %v2296
    %v2313 = vrcp.pop %v2297
    %v2314 = vrcp.pop %v2298
    %v2315 = vrcp.pop %v2299
    %v2316 = vrcp.pop %v2300
    %v2317 = vrcp.pop %v2301
    %v2318 = vrcp.pop %v2302
    %v2319 = vrcp.pop %v2303
    %v2320 = vrcp.pop %v2304
    %v2321 = vpack.c.bf16 %v2306, %v2305
    %v2322 = vpack.c.bf16 %v2308, %v2307
    %v2323 = vpack.c.bf16 %v2310, %v2309
    %v2324 = vpack.c.bf16 %v2312, %v2311
    %v2325 = vpack.c.bf16 %v2314, %v2313
    %v2326 = vpack.c.bf16 %v2316, %v2315
    %v2327 = vpack.c.bf16 %v2318, %v2317
    %v2328 = vpack.c.bf16 %v2320, %v2319
    %v2329 = vld [vmem:[%s9] sm:$0xf]
    %v2330 = vld [vmem:[%s9 + $0x4] sm:$0xf]
    %v2331 = vld [vmem:[#allocation11] sm:$0x1]
    %v2333 = vlaneseq
    %v2334 = vshrl.u32 %v2333, 7
    %v2335 = vsub.s32 0, %v2334
    %v2336 = vrot.slane %v2331, %v2335
    %v2340 = vunpack.c.l.b16 %v2329
    %v2341 = vunpack.c.l.b16 %v2330
    %v2342 = vpack.c.b16 %v2341, %v2340
    %vm2344 = vcmask 130048
    %v2346 = vsel %vm2344, %v2136, 0
    %v2349 = vsel %vm2344, %v2137, 0
    %v2352 = vsel %vm2344, %v2138, 0
    %v2355 = vsel %vm2344, %v2139, 0
    %v2358 = vsel %vm2344, %v2140, 0
    %v2361 = vsel %vm2344, %v2141, 0
    %v2364 = vsel %vm2344, %v2142, 0
    %v2367 = vsel %vm2344, %v2143, 0
    %2369 = vmatprep.subr.bf16.mxu0 0
    %2370 = vmatpush1.bf16.msra.mxu0 %v2342
    %2371 = vmatprep.subr.bf16.mxu0 0
    %2372 = vmatpush1.bf16.msra.mxu0 0
    %2373 = vmatprep.subr.bf16.mxu0 0
    %2374 = vmatpush1.bf16.msra.mxu0 0
    %2375 = vmatprep.subr.bf16.mxu0 0
    %2376 = vmatpush1.bf16.msra.mxu0 0
    %2377 = vmatprep.subr.bf16.mxu0 0
    %2378 = vmatpush1.bf16.msra.mxu0 0
    %2379 = vmatprep.subr.bf16.mxu0 0
    %2380 = vmatpush1.bf16.msra.mxu0 0
    %2381 = vmatprep.subr.bf16.mxu0 0
    %2382 = vmatpush1.bf16.msra.mxu0 0
    %2383 = vmatprep.subr.bf16.mxu0 0
    %2384 = vmatpush1.bf16.msra.mxu0 0
    %2385 = vmatprep.subr.bf16.mxu0 0
    %2386 = vmatpush1.bf16.msra.mxu0 0
    %2387 = vmatprep.subr.bf16.mxu0 0
    %2388 = vmatpush1.bf16.msra.mxu0 0
    %2389 = vmatprep.subr.bf16.mxu0 0
    %2390 = vmatpush1.bf16.msra.mxu0 0
    %2391 = vmatprep.subr.bf16.mxu0 0
    %2392 = vmatpush1.bf16.msra.mxu0 0
    %2393 = vmatprep.subr.bf16.mxu0 0
    %2394 = vmatpush1.bf16.msra.mxu0 0
    %2395 = vmatprep.subr.bf16.mxu0 0
    %2396 = vmatpush1.bf16.msra.mxu0 0
    %2397 = vmatprep.subr.bf16.mxu0 0
    %2398 = vmatpush1.bf16.msra.mxu0 0
    %2399 = vmatprep.subr.bf16.mxu0 0
    %2400 = vmatpush1.bf16.msra.mxu0 0
    %2401 = vmatprep.mubr.bf16.mxu0 0
    %2402 = vmatmul.mubr.bf16.gmra.mrb[0].mxu0 %v2346
    %v2403 = vpop.f32.mrb[0].mxu0
    %v2404 = vadd.f32 %v2336, %v2403
    %v2405 = vpop.f32.mrb[0].mxu0
    %v2406 = vpop.f32.mrb[0].mxu0
    %v2407 = vadd.f32 %v2336, %v2406
    %v2408 = vpop.f32.mrb[0].mxu0
    %2409 = vmatprep.mubr.bf16.mxu0 0
    %2410 = vmatmul.mubr.bf16.gmra.mrb[0].mxu0 %v2349
    %v2411 = vpop.f32.mrb[0].mxu0
    %v2412 = vadd.f32 %v2336, %v2411
    %v2413 = vpop.f32.mrb[0].mxu0
    %v2414 = vpop.f32.mrb[0].mxu0
    %v2415 = vadd.f32 %v2336, %v2414
    %v2416 = vpop.f32.mrb[0].mxu0
    %2417 = vmatprep.mubr.bf16.mxu0 0
    %2418 = vmatmul.mubr.bf16.gmra.mrb[0].mxu0 %v2352
    %v2419 = vpop.f32.mrb[0].mxu0
    %v2420 = vadd.f32 %v2336, %v2419
    %v2421 = vpop.f32.mrb[0].mxu0
    %v2422 = vpop.f32.mrb[0].mxu0
    %v2423 = vadd.f32 %v2336, %v2422
    %v2424 = vpop.f32.mrb[0].mxu0
    %2425 = vmatprep.mubr.bf16.mxu0 0
    %2426 = vmatmul.mubr.bf16.gmra.mrb[0].mxu0 %v2355
    %v2427 = vpop.f32.mrb[0].mxu0
    %v2428 = vadd.f32 %v2336, %v2427
    %v2429 = vpop.f32.mrb[0].mxu0
    %v2430 = vpop.f32.mrb[0].mxu0
    %v2431 = vadd.f32 %v2336, %v2430
    %v2432 = vpop.f32.mrb[0].mxu0
    %2433 = vmatprep.mubr.bf16.mxu0 0
    %2434 = vmatmul.mubr.bf16.gmra.mrb[0].mxu0 %v2358
    %v2435 = vpop.f32.mrb[0].mxu0
    %v2436 = vadd.f32 %v2336, %v2435
    %v2437 = vpop.f32.mrb[0].mxu0
    %v2438 = vpop.f32.mrb[0].mxu0
    %v2439 = vadd.f32 %v2336, %v2438
    %v2440 = vpop.f32.mrb[0].mxu0
    %2441 = vmatprep.mubr.bf16.mxu0 0
    %2442 = vmatmul.mubr.bf16.gmra.mrb[0].mxu0 %v2361
    %v2443 = vpop.f32.mrb[0].mxu0
    %v2444 = vadd.f32 %v2336, %v2443
    %v2445 = vpop.f32.mrb[0].mxu0
    %v2446 = vpop.f32.mrb[0].mxu0
    %v2447 = vadd.f32 %v2336, %v2446
    %v2448 = vpop.f32.mrb[0].mxu0
    %2449 = vmatprep.mubr.bf16.mxu0 0
    %2450 = vmatmul.mubr.bf16.gmra.mrb[0].mxu0 %v2364
    %v2451 = vpop.f32.mrb[0].mxu0
    %v2452 = vadd.f32 %v2336, %v2451
    %v2453 = vpop.f32.mrb[0].mxu0
    %v2454 = vpop.f32.mrb[0].mxu0
    %v2455 = vadd.f32 %v2336, %v2454
    %v2456 = vpop.f32.mrb[0].mxu0
    %2457 = vmatprep.mubr.bf16.mxu0 0
    %2458 = vmatmul.mubr.bf16.gmra.mrb[0].mxu0 %v2367
    %v2459 = vpop.f32.mrb[0].mxu0
    %v2460 = vadd.f32 %v2336, %v2459
    %v2461 = vpop.f32.mrb[0].mxu0
    %v2462 = vpop.f32.mrb[0].mxu0
    %v2463 = vadd.f32 %v2336, %v2462
    %v2464 = vpop.f32.mrb[0].mxu0
    %2465 = vdwg.mxu0
    %v2466 = vsub.f32 0.0, %v2404
    %v2467 = vsub.f32 0.0, %v2407
    %v2468 = vsub.f32 0.0, %v2412
    %v2469 = vsub.f32 0.0, %v2415
    %v2470 = vsub.f32 0.0, %v2420
    %v2471 = vsub.f32 0.0, %v2423
    %v2472 = vsub.f32 0.0, %v2428
    %v2473 = vsub.f32 0.0, %v2431
    %v2474 = vsub.f32 0.0, %v2436
    %v2475 = vsub.f32 0.0, %v2439
    %v2476 = vsub.f32 0.0, %v2444
    %v2477 = vsub.f32 0.0, %v2447
    %v2478 = vsub.f32 0.0, %v2452
    %v2479 = vsub.f32 0.0, %v2455
    %v2480 = vsub.f32 0.0, %v2460
    %v2481 = vsub.f32 0.0, %v2463
    %v2482 = vmul.f32 %v2466, 1.442695
    %v2483 = vpow.pop %v2482
    %v2484 = vmul.f32 %v2467, 1.442695
    %v2485 = vpow.pop %v2484
    %v2486 = vmul.f32 %v2468, 1.442695
    %v2487 = vpow.pop %v2486
    %v2488 = vmul.f32 %v2469, 1.442695
    %v2489 = vpow.pop %v2488
    %v2490 = vmul.f32 %v2470, 1.442695
    %v2491 = vpow.pop %v2490
    %v2492 = vmul.f32 %v2471, 1.442695
    %v2493 = vpow.pop %v2492
    %v2494 = vmul.f32 %v2472, 1.442695
    %v2495 = vpow.pop %v2494
    %v2496 = vmul.f32 %v2473, 1.442695
    %v2497 = vpow.pop %v2496
    %v2498 = vmul.f32 %v2474, 1.442695
    %v2499 = vpow.pop %v2498
    %v2500 = vmul.f32 %v2475, 1.442695
    %v2501 = vpow.pop %v2500
    %v2502 = vmul.f32 %v2476, 1.442695
    %v2503 = vpow.pop %v2502
    %v2504 = vmul.f32 %v2477, 1.442695
    %v2505 = vpow.pop %v2504
    %v2506 = vmul.f32 %v2478, 1.442695
    %v2507 = vpow.pop %v2506
    %v2508 = vmul.f32 %v2479, 1.442695
    %v2509 = vpow.pop %v2508
    %v2510 = vmul.f32 %v2480, 1.442695
    %v2511 = vpow.pop %v2510
    %v2512 = vmul.f32 %v2481, 1.442695
    %v2513 = vpow.pop %v2512
    %v2514 = vadd.f32 %v2483, 1.0
    %v2515 = vadd.f32 %v2485, 1.0
    %v2516 = vadd.f32 %v2487, 1.0
    %v2517 = vadd.f32 %v2489, 1.0
    %v2518 = vadd.f32 %v2491, 1.0
    %v2519 = vadd.f32 %v2493, 1.0
    %v2520 = vadd.f32 %v2495, 1.0
    %v2521 = vadd.f32 %v2497, 1.0
    %v2522 = vadd.f32 %v2499, 1.0
    %v2523 = vadd.f32 %v2501, 1.0
    %v2524 = vadd.f32 %v2503, 1.0
    %v2525 = vadd.f32 %v2505, 1.0
    %v2526 = vadd.f32 %v2507, 1.0
    %v2527 = vadd.f32 %v2509, 1.0
    %v2528 = vadd.f32 %v2511, 1.0
    %v2529 = vadd.f32 %v2513, 1.0
    %v2530 = vrcp.pop %v2514
    %v2531 = vrcp.pop %v2515
    %v2532 = vrcp.pop %v2516
    %v2533 = vrcp.pop %v2517
    %v2534 = vrcp.pop %v2518
    %v2535 = vrcp.pop %v2519
    %v2536 = vrcp.pop %v2520
    %v2537 = vrcp.pop %v2521
    %v2538 = vrcp.pop %v2522
    %v2539 = vrcp.pop %v2523
    %v2540 = vrcp.pop %v2524
    %v2541 = vrcp.pop %v2525
    %v2542 = vrcp.pop %v2526
    %v2543 = vrcp.pop %v2527
    %v2544 = vrcp.pop %v2528
    %v2545 = vrcp.pop %v2529
    %v2546 = vpack.c.bf16 %v2531, %v2530
    %v2547 = vpack.c.bf16 %v2533, %v2532
    %v2548 = vpack.c.bf16 %v2535, %v2534
    %v2549 = vpack.c.bf16 %v2537, %v2536
    %v2550 = vpack.c.bf16 %v2539, %v2538
    %v2551 = vpack.c.bf16 %v2541, %v2540
    %v2552 = vpack.c.bf16 %v2543, %v2542
    %v2553 = vpack.c.bf16 %v2545, %v2544
    %v2555 = vsel %vm2344, %v2321, 0
    %v2558 = vsel %vm2344, %v2322, 0
    %v2561 = vsel %vm2344, %v2323, 0
    %v2564 = vsel %vm2344, %v2324, 0
    %v2567 = vsel %vm2344, %v2325, 0
    %v2570 = vsel %vm2344, %v2326, 0
    %v2573 = vsel %vm2344, %v2327, 0
    %v2576 = vsel %vm2344, %v2328, 0
    %2578 = vmatprep.subr.bf16.mxu0 0
    %2579 = vmatpush1.bf16.msra.mxu0 %v2342
    %2580 = vmatprep.subr.bf16.mxu0 0
    %2581 = vmatpush1.bf16.msra.mxu0 0
    %2582 = vmatprep.subr.bf16.mxu0 0
    %2583 = vmatpush1.bf16.msra.mxu0 0
    %2584 = vmatprep.subr.bf16.mxu0 0
    %2585 = vmatpush1.bf16.msra.mxu0 0
    %2586 = vmatprep.subr.bf16.mxu0 0
    %2587 = vmatpush1.bf16.msra.mxu0 0
    %2588 = vmatprep.subr.bf16.mxu0 0
    %2589 = vmatpush1.bf16.msra.mxu0 0
    %2590 = vmatprep.subr.bf16.mxu0 0
    %2591 = vmatpush1.bf16.msra.mxu0 0
    %2592 = vmatprep.subr.bf16.mxu0 0
    %2593 = vmatpush1.bf16.msra.mxu0 0
    %2594 = vmatprep.subr.bf16.mxu0 0
    %2595 = vmatpush1.bf16.msra.mxu0 0
    %2596 = vmatprep.subr.bf16.mxu0 0
    %2597 = vmatpush1.bf16.msra.mxu0 0
    %2598 = vmatprep.subr.bf16.mxu0 0
    %2599 = vmatpush1.bf16.msra.mxu0 0
    %2600 = vmatprep.subr.bf16.mxu0 0
    %2601 = vmatpush1.bf16.msra.mxu0 0
    %2602 = vmatprep.subr.bf16.mxu0 0
    %2603 = vmatpush1.bf16.msra.mxu0 0
    %2604 = vmatprep.subr.bf16.mxu0 0
    %2605 = vmatpush1.bf16.msra.mxu0 0
    %2606 = vmatprep.subr.bf16.mxu0 0
    %2607 = vmatpush1.bf16.msra.mxu0 0
    %2608 = vmatprep.subr.bf16.mxu0 0
    %2609 = vmatpush1.bf16.msra.mxu0 0
    %2610 = vmatprep.mubr.bf16.mxu0 0
    %2611 = vmatmul.mubr.bf16.gmra.mrb[0].mxu0 %v2555
    %v2612 = vpop.f32.mrb[0].mxu0
    %v2613 = vadd.f32 %v2336, %v2612
    %v2614 = vpop.f32.mrb[0].mxu0
    %v2615 = vpop.f32.mrb[0].mxu0
    %v2616 = vadd.f32 %v2336, %v2615
    %v2617 = vpop.f32.mrb[0].mxu0
    %2618 = vmatprep.mubr.bf16.mxu0 0
    %2619 = vmatmul.mubr.bf16.gmra.mrb[0].mxu0 %v2558
    %v2620 = vpop.f32.mrb[0].mxu0
    %v2621 = vadd.f32 %v2336, %v2620
    %v2622 = vpop.f32.mrb[0].mxu0
    %v2623 = vpop.f32.mrb[0].mxu0
    %v2624 = vadd.f32 %v2336, %v2623
    %v2625 = vpop.f32.mrb[0].mxu0
    %2626 = vmatprep.mubr.bf16.mxu0 0
    %2627 = vmatmul.mubr.bf16.gmra.mrb[0].mxu0 %v2561
    %v2628 = vpop.f32.mrb[0].mxu0
    %v2629 = vadd.f32 %v2336, %v2628
    %v2630 = vpop.f32.mrb[0].mxu0
    %v2631 = vpop.f32.mrb[0].mxu0
    %v2632 = vadd.f32 %v2336, %v2631
    %v2633 = vpop.f32.mrb[0].mxu0
    %2634 = vmatprep.mubr.bf16.mxu0 0
    %2635 = vmatmul.mubr.bf16.gmra.mrb[0].mxu0 %v2564
    %v2636 = vpop.f32.mrb[0].mxu0
    %v2637 = vadd.f32 %v2336, %v2636
    %v2638 = vpop.f32.mrb[0].mxu0
    %v2639 = vpop.f32.mrb[0].mxu0
    %v2640 = vadd.f32 %v2336, %v2639
    %v2641 = vpop.f32.mrb[0].mxu0
    %2642 = vmatprep.mubr.bf16.mxu0 0
    %2643 = vmatmul.mubr.bf16.gmra.mrb[0].mxu0 %v2567
    %v2644 = vpop.f32.mrb[0].mxu0
    %v2645 = vadd.f32 %v2336, %v2644
    %v2646 = vpop.f32.mrb[0].mxu0
    %v2647 = vpop.f32.mrb[0].mxu0
    %v2648 = vadd.f32 %v2336, %v2647
    %v2649 = vpop.f32.mrb[0].mxu0
    %2650 = vmatprep.mubr.bf16.mxu0 0
    %2651 = vmatmul.mubr.bf16.gmra.mrb[0].mxu0 %v2570
    %v2652 = vpop.f32.mrb[0].mxu0
    %v2653 = vadd.f32 %v2336, %v2652
    %v2654 = vpop.f32.mrb[0].mxu0
    %v2655 = vpop.f32.mrb[0].mxu0
    %v2656 = vadd.f32 %v2336, %v2655
    %v2657 = vpop.f32.mrb[0].mxu0
    %2658 = vmatprep.mubr.bf16.mxu0 0
    %2659 = vmatmul.mubr.bf16.gmra.mrb[0].mxu0 %v2573
    %v2660 = vpop.f32.mrb[0].mxu0
    %v2661 = vadd.f32 %v2336, %v2660
    %v2662 = vpop.f32.mrb[0].mxu0
    %v2663 = vpop.f32.mrb[0].mxu0
    %v2664 = vadd.f32 %v2336, %v2663
    %v2665 = vpop.f32.mrb[0].mxu0
    %2666 = vmatprep.mubr.bf16.mxu0 0
    %2667 = vmatmul.mubr.bf16.gmra.mrb[0].mxu0 %v2576
    %v2668 = vpop.f32.mrb[0].mxu0
    %v2669 = vadd.f32 %v2336, %v2668
    %v2670 = vpop.f32.mrb[0].mxu0
    %v2671 = vpop.f32.mrb[0].mxu0
    %v2672 = vadd.f32 %v2336, %v2671
    %v2673 = vpop.f32.mrb[0].mxu0
    %2674 = vdwg.mxu0
    %v2675 = vsub.f32 0.0, %v2613
    %v2676 = vsub.f32 0.0, %v2616
    %v2677 = vsub.f32 0.0, %v2621
    %v2678 = vsub.f32 0.0, %v2624
    %v2679 = vsub.f32 0.0, %v2629
    %v2680 = vsub.f32 0.0, %v2632
    %v2681 = vsub.f32 0.0, %v2637
    %v2682 = vsub.f32 0.0, %v2640
    %v2683 = vsub.f32 0.0, %v2645
    %v2684 = vsub.f32 0.0, %v2648
    %v2685 = vsub.f32 0.0, %v2653
    %v2686 = vsub.f32 0.0, %v2656
    %v2687 = vsub.f32 0.0, %v2661
    %v2688 = vsub.f32 0.0, %v2664
    %v2689 = vsub.f32 0.0, %v2669
    %v2690 = vsub.f32 0.0, %v2672
    %v2691 = vmul.f32 %v2675, 1.442695
    %v2692 = vpow.pop %v2691
    %v2693 = vmul.f32 %v2676, 1.442695
    %v2694 = vpow.pop %v2693
    %v2695 = vmul.f32 %v2677, 1.442695
    %v2696 = vpow.pop %v2695
    %v2697 = vmul.f32 %v2678, 1.442695
    %v2698 = vpow.pop %v2697
    %v2699 = vmul.f32 %v2679, 1.442695
    %v2700 = vpow.pop %v2699
    %v2701 = vmul.f32 %v2680, 1.442695
    %v2702 = vpow.pop %v2701
    %v2703 = vmul.f32 %v2681, 1.442695
    %v2704 = vpow.pop %v2703
    %v2705 = vmul.f32 %v2682, 1.442695
    %v2706 = vpow.pop %v2705
    %v2707 = vmul.f32 %v2683, 1.442695
    %v2708 = vpow.pop %v2707
    %v2709 = vmul.f32 %v2684, 1.442695
    %v2710 = vpow.pop %v2709
    %v2711 = vmul.f32 %v2685, 1.442695
    %v2712 = vpow.pop %v2711
    %v2713 = vmul.f32 %v2686, 1.442695
    %v2714 = vpow.pop %v2713
    %v2715 = vmul.f32 %v2687, 1.442695
    %v2716 = vpow.pop %v2715
    %v2717 = vmul.f32 %v2688, 1.442695
    %v2718 = vpow.pop %v2717
    %v2719 = vmul.f32 %v2689, 1.442695
    %v2720 = vpow.pop %v2719
    %v2721 = vmul.f32 %v2690, 1.442695
    %v2722 = vpow.pop %v2721
    %v2723 = vadd.f32 %v2692, 1.0
    %v2724 = vadd.f32 %v2694, 1.0
    %v2725 = vadd.f32 %v2696, 1.0
    %v2726 = vadd.f32 %v2698, 1.0
    %v2727 = vadd.f32 %v2700, 1.0
    %v2728 = vadd.f32 %v2702, 1.0
    %v2729 = vadd.f32 %v2704, 1.0
    %v2730 = vadd.f32 %v2706, 1.0
    %v2731 = vadd.f32 %v2708, 1.0
    %v2732 = vadd.f32 %v2710, 1.0
    %v2733 = vadd.f32 %v2712, 1.0
    %v2734 = vadd.f32 %v2714, 1.0
    %v2735 = vadd.f32 %v2716, 1.0
    %v2736 = vadd.f32 %v2718, 1.0
    %v2737 = vadd.f32 %v2720, 1.0
    %v2738 = vadd.f32 %v2722, 1.0
    %v2739 = vrcp.pop %v2723
    %v2740 = vrcp.pop %v2724
    %v2741 = vrcp.pop %v2725
    %v2742 = vrcp.pop %v2726
    %v2743 = vrcp.pop %v2727
    %v2744 = vrcp.pop %v2728
    %v2745 = vrcp.pop %v2729
    %v2746 = vrcp.pop %v2730
    %v2747 = vrcp.pop %v2731
    %v2748 = vrcp.pop %v2732
    %v2749 = vrcp.pop %v2733
    %v2750 = vrcp.pop %v2734
    %v2751 = vrcp.pop %v2735
    %v2752 = vrcp.pop %v2736
    %v2753 = vrcp.pop %v2737
    %v2754 = vrcp.pop %v2738
    %v2755 = vpack.c.bf16 %v2740, %v2739
    %v2756 = vpack.c.bf16 %v2742, %v2741
    %v2757 = vpack.c.bf16 %v2744, %v2743
    %v2758 = vpack.c.bf16 %v2746, %v2745
    %v2759 = vpack.c.bf16 %v2748, %v2747
    %v2760 = vpack.c.bf16 %v2750, %v2749
    %v2761 = vpack.c.bf16 %v2752, %v2751
    %v2762 = vpack.c.bf16 %v2754, %v2753
    %v2763 = vld [vmem:[%s11] sm:$0xf]
    %v2764 = vld [vmem:[%s11 + $0x4] sm:$0xf]
    %v2765 = vld [vmem:[%s12] sm:$0x1]
    %v2767 = vlaneseq
    %v2768 = vshrl.u32 %v2767, 7
    %v2769 = vsub.s32 0, %v2768
    %v2770 = vrot.slane %v2765, %v2769
    %v2774 = vunpack.c.l.b16 %v2763
    %v2775 = vunpack.c.l.b16 %v2764
    %v2776 = vpack.c.b16 %v2775, %v2774
    %v2779 = vsel %vm2344, %v2546, 0
    %v2782 = vsel %vm2344, %v2547, 0
    %v2785 = vsel %vm2344, %v2548, 0
    %v2788 = vsel %vm2344, %v2549, 0
    %v2791 = vsel %vm2344, %v2550, 0
    %v2794 = vsel %vm2344, %v2551, 0
    %v2797 = vsel %vm2344, %v2552, 0
    %v2800 = vsel %vm2344, %v2553, 0
    %2802 = vmatprep.subr.bf16.mxu0 0
    %2803 = vmatpush1.bf16.msra.mxu0 %v2776
    %2804 = vmatprep.subr.bf16.mxu0 0
    %2805 = vmatpush1.bf16.msra.mxu0 0
    %2806 = vmatprep.subr.bf16.mxu0 0
    %2807 = vmatpush1.bf16.msra.mxu0 0
    %2808 = vmatprep.subr.bf16.mxu0 0
    %2809 = vmatpush1.bf16.msra.mxu0 0
    %2810 = vmatprep.subr.bf16.mxu0 0
    %2811 = vmatpush1.bf16.msra.mxu0 0
    %2812 = vmatprep.subr.bf16.mxu0 0
    %2813 = vmatpush1.bf16.msra.mxu0 0
    %2814 = vmatprep.subr.bf16.mxu0 0
    %2815 = vmatpush1.bf16.msra.mxu0 0
    %2816 = vmatprep.subr.bf16.mxu0 0
    %2817 = vmatpush1.bf16.msra.mxu0 0
    %2818 = vmatprep.subr.bf16.mxu0 0
    %2819 = vmatpush1.bf16.msra.mxu0 0
    %2820 = vmatprep.subr.bf16.mxu0 0
    %2821 = vmatpush1.bf16.msra.mxu0 0
    %2822 = vmatprep.subr.bf16.mxu0 0
    %2823 = vmatpush1.bf16.msra.mxu0 0
    %2824 = vmatprep.subr.bf16.mxu0 0
    %2825 = vmatpush1.bf16.msra.mxu0 0
    %2826 = vmatprep.subr.bf16.mxu0 0
    %2827 = vmatpush1.bf16.msra.mxu0 0
    %2828 = vmatprep.subr.bf16.mxu0 0
    %2829 = vmatpush1.bf16.msra.mxu0 0
    %2830 = vmatprep.subr.bf16.mxu0 0
    %2831 = vmatpush1.bf16.msra.mxu0 0
    %2832 = vmatprep.subr.bf16.mxu0 0
    %2833 = vmatpush1.bf16.msra.mxu0 0
    %2834 = vmatprep.mubr.bf16.mxu0 0
    %2835 = vmatmul.mubr.bf16.gmra.mrb[0].mxu0 %v2779
    %v2836 = vpop.f32.mrb[0].mxu0
    %v2837 = vadd.f32 %v2770, %v2836
    %v2838 = vpop.f32.mrb[0].mxu0
    %v2839 = vpop.f32.mrb[0].mxu0
    %v2840 = vadd.f32 %v2770, %v2839
    %v2841 = vpop.f32.mrb[0].mxu0
    %2842 = vmatprep.mubr.bf16.mxu0 0
    %2843 = vmatmul.mubr.bf16.gmra.mrb[0].mxu0 %v2782
    %v2844 = vpop.f32.mrb[0].mxu0
    %v2845 = vadd.f32 %v2770, %v2844
    %v2846 = vpop.f32.mrb[0].mxu0
    %v2847 = vpop.f32.mrb[0].mxu0
    %v2848 = vadd.f32 %v2770, %v2847
    %v2849 = vpop.f32.mrb[0].mxu0
    %2850 = vmatprep.mubr.bf16.mxu0 0
    %2851 = vmatmul.mubr.bf16.gmra.mrb[0].mxu0 %v2785
    %v2852 = vpop.f32.mrb[0].mxu0
    %v2853 = vadd.f32 %v2770, %v2852
    %v2854 = vpop.f32.mrb[0].mxu0
    %v2855 = vpop.f32.mrb[0].mxu0
    %v2856 = vadd.f32 %v2770, %v2855
    %v2857 = vpop.f32.mrb[0].mxu0
    %2858 = vmatprep.mubr.bf16.mxu0 0
    %2859 = vmatmul.mubr.bf16.gmra.mrb[0].mxu0 %v2788
    %v2860 = vpop.f32.mrb[0].mxu0
    %v2861 = vadd.f32 %v2770, %v2860
    %v2862 = vpop.f32.mrb[0].mxu0
    %v2863 = vpop.f32.mrb[0].mxu0
    %v2864 = vadd.f32 %v2770, %v2863
    %v2865 = vpop.f32.mrb[0].mxu0
    %2866 = vmatprep.mubr.bf16.mxu0 0
    %2867 = vmatmul.mubr.bf16.gmra.mrb[0].mxu0 %v2791
    %v2868 = vpop.f32.mrb[0].mxu0
    %v2869 = vadd.f32 %v2770, %v2868
    %v2870 = vpop.f32.mrb[0].mxu0
    %v2871 = vpop.f32.mrb[0].mxu0
    %v2872 = vadd.f32 %v2770, %v2871
    %v2873 = vpop.f32.mrb[0].mxu0
    %2874 = vmatprep.mubr.bf16.mxu0 0
    %2875 = vmatmul.mubr.bf16.gmra.mrb[0].mxu0 %v2794
    %v2876 = vpop.f32.mrb[0].mxu0
    %v2877 = vadd.f32 %v2770, %v2876
    %v2878 = vpop.f32.mrb[0].mxu0
    %v2879 = vpop.f32.mrb[0].mxu0
    %v2880 = vadd.f32 %v2770, %v2879
    %v2881 = vpop.f32.mrb[0].mxu0
    %2882 = vmatprep.mubr.bf16.mxu0 0
    %2883 = vmatmul.mubr.bf16.gmra.mrb[0].mxu0 %v2797
    %v2884 = vpop.f32.mrb[0].mxu0
    %v2885 = vadd.f32 %v2770, %v2884
    %v2886 = vpop.f32.mrb[0].mxu0
    %v2887 = vpop.f32.mrb[0].mxu0
    %v2888 = vadd.f32 %v2770, %v2887
    %v2889 = vpop.f32.mrb[0].mxu0
    %2890 = vmatprep.mubr.bf16.mxu0 0
    %2891 = vmatmul.mubr.bf16.gmra.mrb[0].mxu0 %v2800
    %v2892 = vpop.f32.mrb[0].mxu0
    %v2893 = vadd.f32 %v2770, %v2892
    %v2894 = vpop.f32.mrb[0].mxu0
    %v2895 = vpop.f32.mrb[0].mxu0
    %v2896 = vadd.f32 %v2770, %v2895
    %v2897 = vpop.f32.mrb[0].mxu0
    %2898 = vdwg.mxu0
    %v2899 = vsub.f32 0.0, %v2837
    %v2900 = vsub.f32 0.0, %v2840
    %v2901 = vsub.f32 0.0, %v2845
    %v2902 = vsub.f32 0.0, %v2848
    %v2903 = vsub.f32 0.0, %v2853
    %v2904 = vsub.f32 0.0, %v2856
    %v2905 = vsub.f32 0.0, %v2861
    %v2906 = vsub.f32 0.0, %v2864
    %v2907 = vsub.f32 0.0, %v2869
    %v2908 = vsub.f32 0.0, %v2872
    %v2909 = vsub.f32 0.0, %v2877
    %v2910 = vsub.f32 0.0, %v2880
    %v2911 = vsub.f32 0.0, %v2885
    %v2912 = vsub.f32 0.0, %v2888
    %v2913 = vsub.f32 0.0, %v2893
    %v2914 = vsub.f32 0.0, %v2896
    %v2915 = vmul.f32 %v2899, 1.442695
    %v2916 = vpow.pop %v2915
    %v2917 = vmul.f32 %v2900, 1.442695
    %v2918 = vpow.pop %v2917
    %v2919 = vmul.f32 %v2901, 1.442695
    %v2920 = vpow.pop %v2919
    %v2921 = vmul.f32 %v2902, 1.442695
    %v2922 = vpow.pop %v2921
    %v2923 = vmul.f32 %v2903, 1.442695
    %v2924 = vpow.pop %v2923
    %v2925 = vmul.f32 %v2904, 1.442695
    %v2926 = vpow.pop %v2925
    %v2927 = vmul.f32 %v2905, 1.442695
    %v2928 = vpow.pop %v2927
    %v2929 = vmul.f32 %v2906, 1.442695
    %v2930 = vpow.pop %v2929
    %v2931 = vmul.f32 %v2907, 1.442695
    %v2932 = vpow.pop %v2931
    %v2933 = vmul.f32 %v2908, 1.442695
    %v2934 = vpow.pop %v2933
    %v2935 = vmul.f32 %v2909, 1.442695
    %v2936 = vpow.pop %v2935
    %v2937 = vmul.f32 %v2910, 1.442695
    %v2938 = vpow.pop %v2937
    %v2939 = vmul.f32 %v2911, 1.442695
    %v2940 = vpow.pop %v2939
    %v2941 = vmul.f32 %v2912, 1.442695
    %v2942 = vpow.pop %v2941
    %v2943 = vmul.f32 %v2913, 1.442695
    %v2944 = vpow.pop %v2943
    %v2945 = vmul.f32 %v2914, 1.442695
    %v2946 = vpow.pop %v2945
    %v2947 = vadd.f32 %v2916, 1.0
    %v2948 = vadd.f32 %v2918, 1.0
    %v2949 = vadd.f32 %v2920, 1.0
    %v2950 = vadd.f32 %v2922, 1.0
    %v2951 = vadd.f32 %v2924, 1.0
    %v2952 = vadd.f32 %v2926, 1.0
    %v2953 = vadd.f32 %v2928, 1.0
    %v2954 = vadd.f32 %v2930, 1.0
    %v2955 = vadd.f32 %v2932, 1.0
    %v2956 = vadd.f32 %v2934, 1.0
    %v2957 = vadd.f32 %v2936, 1.0
    %v2958 = vadd.f32 %v2938, 1.0
    %v2959 = vadd.f32 %v2940, 1.0
    %v2960 = vadd.f32 %v2942, 1.0
    %v2961 = vadd.f32 %v2944, 1.0
    %v2962 = vadd.f32 %v2946, 1.0
    %v2963 = vrcp.pop %v2947
    %v2964 = vrcp.pop %v2948
    %v2965 = vrcp.pop %v2949
    %v2966 = vrcp.pop %v2950
    %v2967 = vrcp.pop %v2951
    %v2968 = vrcp.pop %v2952
    %v2969 = vrcp.pop %v2953
    %v2970 = vrcp.pop %v2954
    %v2971 = vrcp.pop %v2955
    %v2972 = vrcp.pop %v2956
    %v2973 = vrcp.pop %v2957
    %v2974 = vrcp.pop %v2958
    %v2975 = vrcp.pop %v2959
    %v2976 = vrcp.pop %v2960
    %v2977 = vrcp.pop %v2961
    %v2978 = vrcp.pop %v2962
    %v2979 = vpack.c.bf16 %v2964, %v2963
    %v2980 = vpack.c.bf16 %v2966, %v2965
    %v2981 = vpack.c.bf16 %v2968, %v2967
    %v2982 = vpack.c.bf16 %v2970, %v2969
    %v2983 = vpack.c.bf16 %v2972, %v2971
    %v2984 = vpack.c.bf16 %v2974, %v2973
    %v2985 = vpack.c.bf16 %v2976, %v2975
    %v2986 = vpack.c.bf16 %v2978, %v2977
    %v2988 = vsel %vm2344, %v2755, 0
    %v2991 = vsel %vm2344, %v2756, 0
    %v2994 = vsel %vm2344, %v2757, 0
    %v2997 = vsel %vm2344, %v2758, 0
    %v3000 = vsel %vm2344, %v2759, 0
    %v3003 = vsel %vm2344, %v2760, 0
    %v3006 = vsel %vm2344, %v2761, 0
    %v3009 = vsel %vm2344, %v2762, 0
    %3011 = vmatprep.subr.bf16.mxu0 0
    %3012 = vmatpush1.bf16.msra.mxu0 %v2776
    %3013 = vmatprep.subr.bf16.mxu0 0
    %3014 = vmatpush1.bf16.msra.mxu0 0
    %3015 = vmatprep.subr.bf16.mxu0 0
    %3016 = vmatpush1.bf16.msra.mxu0 0
    %3017 = vmatprep.subr.bf16.mxu0 0
    %3018 = vmatpush1.bf16.msra.mxu0 0
    %3019 = vmatprep.subr.bf16.mxu0 0
    %3020 = vmatpush1.bf16.msra.mxu0 0
    %3021 = vmatprep.subr.bf16.mxu0 0
    %3022 = vmatpush1.bf16.msra.mxu0 0
    %3023 = vmatprep.subr.bf16.mxu0 0
    %3024 = vmatpush1.bf16.msra.mxu0 0
    %3025 = vmatprep.subr.bf16.mxu0 0
    %3026 = vmatpush1.bf16.msra.mxu0 0
    %3027 = vmatprep.subr.bf16.mxu0 0
    %3028 = vmatpush1.bf16.msra.mxu0 0
    %3029 = vmatprep.subr.bf16.mxu0 0
    %3030 = vmatpush1.bf16.msra.mxu0 0
    %3031 = vmatprep.subr.bf16.mxu0 0
    %3032 = vmatpush1.bf16.msra.mxu0 0
    %3033 = vmatprep.subr.bf16.mxu0 0
    %3034 = vmatpush1.bf16.msra.mxu0 0
    %3035 = vmatprep.subr.bf16.mxu0 0
    %3036 = vmatpush1.bf16.msra.mxu0 0
    %3037 = vmatprep.subr.bf16.mxu0 0
    %3038 = vmatpush1.bf16.msra.mxu0 0
    %3039 = vmatprep.subr.bf16.mxu0 0
    %3040 = vmatpush1.bf16.msra.mxu0 0
    %3041 = vmatprep.subr.bf16.mxu0 0
    %3042 = vmatpush1.bf16.msra.mxu0 0
    %3043 = vmatprep.mubr.bf16.mxu0 0
    %3044 = vmatmul.mubr.bf16.gmra.mrb[0].mxu0 %v2988
    %v3045 = vpop.f32.mrb[0].mxu0
    %v3046 = vadd.f32 %v2770, %v3045
    %v3047 = vpop.f32.mrb[0].mxu0
    %v3048 = vpop.f32.mrb[0].mxu0
    %v3049 = vadd.f32 %v2770, %v3048
    %v3050 = vpop.f32.mrb[0].mxu0
    %3051 = vmatprep.mubr.bf16.mxu0 0
    %3052 = vmatmul.mubr.bf16.gmra.mrb[0].mxu0 %v2991
    %v3053 = vpop.f32.mrb[0].mxu0
    %v3054 = vadd.f32 %v2770, %v3053
    %v3055 = vpop.f32.mrb[0].mxu0
    %v3056 = vpop.f32.mrb[0].mxu0
    %v3057 = vadd.f32 %v2770, %v3056
    %v3058 = vpop.f32.mrb[0].mxu0
    %3059 = vmatprep.mubr.bf16.mxu0 0
    %3060 = vmatmul.mubr.bf16.gmra.mrb[0].mxu0 %v2994
    %v3061 = vpop.f32.mrb[0].mxu0
    %v3062 = vadd.f32 %v2770, %v3061
    %v3063 = vpop.f32.mrb[0].mxu0
    %v3064 = vpop.f32.mrb[0].mxu0
    %v3065 = vadd.f32 %v2770, %v3064
    %v3066 = vpop.f32.mrb[0].mxu0
    %3067 = vmatprep.mubr.bf16.mxu0 0
    %3068 = vmatmul.mubr.bf16.gmra.mrb[0].mxu0 %v2997
    %v3069 = vpop.f32.mrb[0].mxu0
    %v3070 = vadd.f32 %v2770, %v3069
    %v3071 = vpop.f32.mrb[0].mxu0
    %v3072 = vpop.f32.mrb[0].mxu0
    %v3073 = vadd.f32 %v2770, %v3072
    %v3074 = vpop.f32.mrb[0].mxu0
    %3075 = vmatprep.mubr.bf16.mxu0 0
    %3076 = vmatmul.mubr.bf16.gmra.mrb[0].mxu0 %v3000
    %v3077 = vpop.f32.mrb[0].mxu0
    %v3078 = vadd.f32 %v2770, %v3077
    %v3079 = vpop.f32.mrb[0].mxu0
    %v3080 = vpop.f32.mrb[0].mxu0
    %v3081 = vadd.f32 %v2770, %v3080
    %v3082 = vpop.f32.mrb[0].mxu0
    %3083 = vmatprep.mubr.bf16.mxu0 0
    %3084 = vmatmul.mubr.bf16.gmra.mrb[0].mxu0 %v3003
    %v3085 = vpop.f32.mrb[0].mxu0
    %v3086 = vadd.f32 %v2770, %v3085
    %v3087 = vpop.f32.mrb[0].mxu0
    %v3088 = vpop.f32.mrb[0].mxu0
    %v3089 = vadd.f32 %v2770, %v3088
    %v3090 = vpop.f32.mrb[0].mxu0
    %3091 = vmatprep.mubr.bf16.mxu0 0
    %3092 = vmatmul.mubr.bf16.gmra.mrb[0].mxu0 %v3006
    %v3093 = vpop.f32.mrb[0].mxu0
    %v3094 = vadd.f32 %v2770, %v3093
    %v3095 = vpop.f32.mrb[0].mxu0
    %v3096 = vpop.f32.mrb[0].mxu0
    %v3097 = vadd.f32 %v2770, %v3096
    %v3098 = vpop.f32.mrb[0].mxu0
    %3099 = vmatprep.mubr.bf16.mxu0 0
    %3100 = vmatmul.mubr.bf16.gmra.mrb[0].mxu0 %v3009
    %v3101 = vpop.f32.mrb[0].mxu0
    %v3102 = vadd.f32 %v2770, %v3101
    %v3103 = vpop.f32.mrb[0].mxu0
    %v3104 = vpop.f32.mrb[0].mxu0
    %v3105 = vadd.f32 %v2770, %v3104
    %v3106 = vpop.f32.mrb[0].mxu0
    %3107 = vdwg.mxu0
    %v3108 = vsub.f32 0.0, %v3046
    %v3109 = vsub.f32 0.0, %v3049
    %v3110 = vsub.f32 0.0, %v3054
    %v3111 = vsub.f32 0.0, %v3057
    %v3112 = vsub.f32 0.0, %v3062
    %v3113 = vsub.f32 0.0, %v3065
    %v3114 = vsub.f32 0.0, %v3070
    %v3115 = vsub.f32 0.0, %v3073
    %v3116 = vsub.f32 0.0, %v3078
    %v3117 = vsub.f32 0.0, %v3081
    %v3118 = vsub.f32 0.0, %v3086
    %v3119 = vsub.f32 0.0, %v3089
    %v3120 = vsub.f32 0.0, %v3094
    %v3121 = vsub.f32 0.0, %v3097
    %v3122 = vsub.f32 0.0, %v3102
    %v3123 = vsub.f32 0.0, %v3105
    %v3124 = vmul.f32 %v3108, 1.442695
    %v3125 = vpow.pop %v3124
    %v3126 = vmul.f32 %v3109, 1.442695
    %v3127 = vpow.pop %v3126
    %v3128 = vmul.f32 %v3110, 1.442695
    %v3129 = vpow.pop %v3128
    %v3130 = vmul.f32 %v3111, 1.442695
    %v3131 = vpow.pop %v3130
    %v3132 = vmul.f32 %v3112, 1.442695
    %v3133 = vpow.pop %v3132
    %v3134 = vmul.f32 %v3113, 1.442695
    %v3135 = vpow.pop %v3134
    %v3136 = vmul.f32 %v3114, 1.442695
    %v3137 = vpow.pop %v3136
    %v3138 = vmul.f32 %v3115, 1.442695
    %v3139 = vpow.pop %v3138
    %v3140 = vmul.f32 %v3116, 1.442695
    %v3141 = vpow.pop %v3140
    %v3142 = vmul.f32 %v3117, 1.442695
    %v3143 = vpow.pop %v3142
    %v3144 = vmul.f32 %v3118, 1.442695
    %v3145 = vpow.pop %v3144
    %v3146 = vmul.f32 %v3119, 1.442695
    %v3147 = vpow.pop %v3146
    %v3148 = vmul.f32 %v3120, 1.442695
    %v3149 = vpow.pop %v3148
    %v3150 = vmul.f32 %v3121, 1.442695
    %v3151 = vpow.pop %v3150
    %v3152 = vmul.f32 %v3122, 1.442695
    %v3153 = vpow.pop %v3152
    %v3154 = vmul.f32 %v3123, 1.442695
    %v3155 = vpow.pop %v3154
    %v3156 = vadd.f32 %v3125, 1.0
    %v3157 = vadd.f32 %v3127, 1.0
    %v3158 = vadd.f32 %v3129, 1.0
    %v3159 = vadd.f32 %v3131, 1.0
    %v3160 = vadd.f32 %v3133, 1.0
    %v3161 = vadd.f32 %v3135, 1.0
    %v3162 = vadd.f32 %v3137, 1.0
    %v3163 = vadd.f32 %v3139, 1.0
    %v3164 = vadd.f32 %v3141, 1.0
    %v3165 = vadd.f32 %v3143, 1.0
    %v3166 = vadd.f32 %v3145, 1.0
    %v3167 = vadd.f32 %v3147, 1.0
    %v3168 = vadd.f32 %v3149, 1.0
    %v3169 = vadd.f32 %v3151, 1.0
    %v3170 = vadd.f32 %v3153, 1.0
    %v3171 = vadd.f32 %v3155, 1.0
    %v3172 = vrcp.pop %v3156
    %v3173 = vrcp.pop %v3157
    %v3174 = vrcp.pop %v3158
    %v3175 = vrcp.pop %v3159
    %v3176 = vrcp.pop %v3160
    %v3177 = vrcp.pop %v3161
    %v3178 = vrcp.pop %v3162
    %v3179 = vrcp.pop %v3163
    %v3180 = vrcp.pop %v3164
    %v3181 = vrcp.pop %v3165
    %v3182 = vrcp.pop %v3166
    %v3183 = vrcp.pop %v3167
    %v3184 = vrcp.pop %v3168
    %v3185 = vrcp.pop %v3169
    %v3186 = vrcp.pop %v3170
    %v3187 = vrcp.pop %v3171
    %v3188 = vpack.c.bf16 %v3173, %v3172
    %v3189 = vpack.c.bf16 %v3175, %v3174
    %v3190 = vpack.c.bf16 %v3177, %v3176
    %v3191 = vpack.c.bf16 %v3179, %v3178
    %v3192 = vpack.c.bf16 %v3181, %v3180
    %v3193 = vpack.c.bf16 %v3183, %v3182
    %v3194 = vpack.c.bf16 %v3185, %v3184
    %v3195 = vpack.c.bf16 %v3187, %v3186
    %v3196 = vld [vmem:[%s13] sm:$0xf]
    %v3197 = vld [vmem:[%s13 + $0x4] sm:$0xf]
    %v3198 = vld [vmem:[%s14] sm:$0x1]
    %v3200 = vlaneseq
    %v3201 = vshrl.u32 %v3200, 7
    %v3202 = vsub.s32 0, %v3201
    %v3203 = vrot.slane %v3198, %v3202
    %v3207 = vunpack.c.l.b16 %v3196
    %v3208 = vunpack.c.l.b16 %v3197
    %v3209 = vpack.c.b16 %v3208, %v3207
    %v3212 = vsel %vm2344, %v2979, 0
    %v3215 = vsel %vm2344, %v2980, 0
    %v3218 = vsel %vm2344, %v2981, 0
    %v3221 = vsel %vm2344, %v2982, 0
    %v3224 = vsel %vm2344, %v2983, 0
    %v3227 = vsel %vm2344, %v2984, 0
    %v3230 = vsel %vm2344, %v2985, 0
    %v3233 = vsel %vm2344, %v2986, 0
    %3235 = vmatprep.subr.bf16.mxu0 0
    %3236 = vmatpush1.bf16.msra.mxu0 %v3209
    %3237 = vmatprep.subr.bf16.mxu0 0
    %3238 = vmatpush1.bf16.msra.mxu0 0
    %3239 = vmatprep.subr.bf16.mxu0 0
    %3240 = vmatpush1.bf16.msra.mxu0 0
    %3241 = vmatprep.subr.bf16.mxu0 0
    %3242 = vmatpush1.bf16.msra.mxu0 0
    %3243 = vmatprep.subr.bf16.mxu0 0
    %3244 = vmatpush1.bf16.msra.mxu0 0
    %3245 = vmatprep.subr.bf16.mxu0 0
    %3246 = vmatpush1.bf16.msra.mxu0 0
    %3247 = vmatprep.subr.bf16.mxu0 0
    %3248 = vmatpush1.bf16.msra.mxu0 0
    %3249 = vmatprep.subr.bf16.mxu0 0
    %3250 = vmatpush1.bf16.msra.mxu0 0
    %3251 = vmatprep.subr.bf16.mxu0 0
    %3252 = vmatpush1.bf16.msra.mxu0 0
    %3253 = vmatprep.subr.bf16.mxu0 0
    %3254 = vmatpush1.bf16.msra.mxu0 0
    %3255 = vmatprep.subr.bf16.mxu0 0
    %3256 = vmatpush1.bf16.msra.mxu0 0
    %3257 = vmatprep.subr.bf16.mxu0 0
    %3258 = vmatpush1.bf16.msra.mxu0 0
    %3259 = vmatprep.subr.bf16.mxu0 0
    %3260 = vmatpush1.bf16.msra.mxu0 0
    %3261 = vmatprep.subr.bf16.mxu0 0
    %3262 = vmatpush1.bf16.msra.mxu0 0
    %3263 = vmatprep.subr.bf16.mxu0 0
    %3264 = vmatpush1.bf16.msra.mxu0 0
    %3265 = vmatprep.subr.bf16.mxu0 0
    %3266 = vmatpush1.bf16.msra.mxu0 0
    %3267 = vmatprep.mubr.bf16.mxu0 0
    %3268 = vmatmul.mubr.bf16.gmra.mrb[0].mxu0 %v3212
    %v3269 = vpop.f32.mrb[0].mxu0
    %v3270 = vadd.f32 %v3203, %v3269
    %v3271 = vpop.f32.mrb[0].mxu0
    %v3272 = vpop.f32.mrb[0].mxu0
    %v3273 = vadd.f32 %v3203, %v3272
    %v3274 = vpop.f32.mrb[0].mxu0
    %3275 = vmatprep.mubr.bf16.mxu0 0
    %3276 = vmatmul.mubr.bf16.gmra.mrb[0].mxu0 %v3215
    %v3277 = vpop.f32.mrb[0].mxu0
    %v3278 = vadd.f32 %v3203, %v3277
    %v3279 = vpop.f32.mrb[0].mxu0
    %v3280 = vpop.f32.mrb[0].mxu0
    %v3281 = vadd.f32 %v3203, %v3280
    %v3282 = vpop.f32.mrb[0].mxu0
    %3283 = vmatprep.mubr.bf16.mxu0 0
    %3284 = vmatmul.mubr.bf16.gmra.mrb[0].mxu0 %v3218
    %v3285 = vpop.f32.mrb[0].mxu0
    %v3286 = vadd.f32 %v3203, %v3285
    %v3287 = vpop.f32.mrb[0].mxu0
    %v3288 = vpop.f32.mrb[0].mxu0
    %v3289 = vadd.f32 %v3203, %v3288
    %v3290 = vpop.f32.mrb[0].mxu0
    %3291 = vmatprep.mubr.bf16.mxu0 0
    %3292 = vmatmul.mubr.bf16.gmra.mrb[0].mxu0 %v3221
    %v3293 = vpop.f32.mrb[0].mxu0
    %v3294 = vadd.f32 %v3203, %v3293
    %v3295 = vpop.f32.mrb[0].mxu0
    %v3296 = vpop.f32.mrb[0].mxu0
    %v3297 = vadd.f32 %v3203, %v3296
    %v3298 = vpop.f32.mrb[0].mxu0
    %3299 = vmatprep.mubr.bf16.mxu0 0
    %3300 = vmatmul.mubr.bf16.gmra.mrb[0].mxu0 %v3224
    %v3301 = vpop.f32.mrb[0].mxu0
    %v3302 = vadd.f32 %v3203, %v3301
    %v3303 = vpop.f32.mrb[0].mxu0
    %v3304 = vpop.f32.mrb[0].mxu0
    %v3305 = vadd.f32 %v3203, %v3304
    %v3306 = vpop.f32.mrb[0].mxu0
    %3307 = vmatprep.mubr.bf16.mxu0 0
    %3308 = vmatmul.mubr.bf16.gmra.mrb[0].mxu0 %v3227
    %v3309 = vpop.f32.mrb[0].mxu0
    %v3310 = vadd.f32 %v3203, %v3309
    %v3311 = vpop.f32.mrb[0].mxu0
    %v3312 = vpop.f32.mrb[0].mxu0
    %v3313 = vadd.f32 %v3203, %v3312
    %v3314 = vpop.f32.mrb[0].mxu0
    %3315 = vmatprep.mubr.bf16.mxu0 0
    %3316 = vmatmul.mubr.bf16.gmra.mrb[0].mxu0 %v3230
    %v3317 = vpop.f32.mrb[0].mxu0
    %v3318 = vadd.f32 %v3203, %v3317
    %v3319 = vpop.f32.mrb[0].mxu0
    %v3320 = vpop.f32.mrb[0].mxu0
    %v3321 = vadd.f32 %v3203, %v3320
    %v3322 = vpop.f32.mrb[0].mxu0
    %3323 = vmatprep.mubr.bf16.mxu0 0
    %3324 = vmatmul.mubr.bf16.gmra.mrb[0].mxu0 %v3233
    %v3325 = vpop.f32.mrb[0].mxu0
    %v3326 = vadd.f32 %v3203, %v3325
    %v3327 = vpop.f32.mrb[0].mxu0
    %v3328 = vpop.f32.mrb[0].mxu0
    %v3329 = vadd.f32 %v3203, %v3328
    %v3330 = vpop.f32.mrb[0].mxu0
    %3331 = vdwg.mxu0
    %v3332 = vsub.f32 0.0, %v3270
    %v3333 = vsub.f32 0.0, %v3273
    %v3334 = vsub.f32 0.0, %v3278
    %v3335 = vsub.f32 0.0, %v3281
    %v3336 = vsub.f32 0.0, %v3286
    %v3337 = vsub.f32 0.0, %v3289
    %v3338 = vsub.f32 0.0, %v3294
    %v3339 = vsub.f32 0.0, %v3297
    %v3340 = vsub.f32 0.0, %v3302
    %v3341 = vsub.f32 0.0, %v3305
    %v3342 = vsub.f32 0.0, %v3310
    %v3343 = vsub.f32 0.0, %v3313
    %v3344 = vsub.f32 0.0, %v3318
    %v3345 = vsub.f32 0.0, %v3321
    %v3346 = vsub.f32 0.0, %v3326
    %v3347 = vsub.f32 0.0, %v3329
    %v3348 = vmul.f32 %v3332, 1.442695
    %v3349 = vpow.pop %v3348
    %v3350 = vmul.f32 %v3333, 1.442695
    %v3351 = vpow.pop %v3350
    %v3352 = vmul.f32 %v3334, 1.442695
    %v3353 = vpow.pop %v3352
    %v3354 = vmul.f32 %v3335, 1.442695
    %v3355 = vpow.pop %v3354
    %v3356 = vmul.f32 %v3336, 1.442695
    %v3357 = vpow.pop %v3356
    %v3358 = vmul.f32 %v3337, 1.442695
    %v3359 = vpow.pop %v3358
    %v3360 = vmul.f32 %v3338, 1.442695
    %v3361 = vpow.pop %v3360
    %v3362 = vmul.f32 %v3339, 1.442695
    %v3363 = vpow.pop %v3362
    %v3364 = vmul.f32 %v3340, 1.442695
    %v3365 = vpow.pop %v3364
    %v3366 = vmul.f32 %v3341, 1.442695
    %v3367 = vpow.pop %v3366
    %v3368 = vmul.f32 %v3342, 1.442695
    %v3369 = vpow.pop %v3368
    %v3370 = vmul.f32 %v3343, 1.442695
    %v3371 = vpow.pop %v3370
    %v3372 = vmul.f32 %v3344, 1.442695
    %v3373 = vpow.pop %v3372
    %v3374 = vmul.f32 %v3345, 1.442695
    %v3375 = vpow.pop %v3374
    %v3376 = vmul.f32 %v3346, 1.442695
    %v3377 = vpow.pop %v3376
    %v3378 = vmul.f32 %v3347, 1.442695
    %v3379 = vpow.pop %v3378
    %v3380 = vadd.f32 %v3349, 1.0
    %v3381 = vadd.f32 %v3351, 1.0
    %v3382 = vadd.f32 %v3353, 1.0
    %v3383 = vadd.f32 %v3355, 1.0
    %v3384 = vadd.f32 %v3357, 1.0
    %v3385 = vadd.f32 %v3359, 1.0
    %v3386 = vadd.f32 %v3361, 1.0
    %v3387 = vadd.f32 %v3363, 1.0
    %v3388 = vadd.f32 %v3365, 1.0
    %v3389 = vadd.f32 %v3367, 1.0
    %v3390 = vadd.f32 %v3369, 1.0
    %v3391 = vadd.f32 %v3371, 1.0
    %v3392 = vadd.f32 %v3373, 1.0
    %v3393 = vadd.f32 %v3375, 1.0
    %v3394 = vadd.f32 %v3377, 1.0
    %v3395 = vadd.f32 %v3379, 1.0
    %v3396 = vrcp.pop %v3380
    %v3397 = vrcp.pop %v3381
    %v3398 = vrcp.pop %v3382
    %v3399 = vrcp.pop %v3383
    %v3400 = vrcp.pop %v3384
    %v3401 = vrcp.pop %v3385
    %v3402 = vrcp.pop %v3386
    %v3403 = vrcp.pop %v3387
    %v3404 = vrcp.pop %v3388
    %v3405 = vrcp.pop %v3389
    %v3406 = vrcp.pop %v3390
    %v3407 = vrcp.pop %v3391
    %v3408 = vrcp.pop %v3392
    %v3409 = vrcp.pop %v3393
    %v3410 = vrcp.pop %v3394
    %v3411 = vrcp.pop %v3395
    %v3412 = vpack.c.bf16 %v3397, %v3396
    %v3413 = vpack.c.bf16 %v3399, %v3398
    %v3414 = vpack.c.bf16 %v3401, %v3400
    %v3415 = vpack.c.bf16 %v3403, %v3402
    %v3416 = vpack.c.bf16 %v3405, %v3404
    %v3417 = vpack.c.bf16 %v3407, %v3406
    %v3418 = vpack.c.bf16 %v3409, %v3408
    %v3419 = vpack.c.bf16 %v3411, %v3410
    %v3421 = vsel %vm2344, %v3188, 0
    %v3424 = vsel %vm2344, %v3189, 0
    %v3427 = vsel %vm2344, %v3190, 0
    %v3430 = vsel %vm2344, %v3191, 0
    %v3433 = vsel %vm2344, %v3192, 0
    %v3436 = vsel %vm2344, %v3193, 0
    %v3439 = vsel %vm2344, %v3194, 0
    %v3442 = vsel %vm2344, %v3195, 0
    %3444 = vmatprep.subr.bf16.mxu0 0
    %3445 = vmatpush1.bf16.msra.mxu0 %v3209
    %3446 = vmatprep.subr.bf16.mxu0 0
    %3447 = vmatpush1.bf16.msra.mxu0 0
    %3448 = vmatprep.subr.bf16.mxu0 0
    %3449 = vmatpush1.bf16.msra.mxu0 0
    %3450 = vmatprep.subr.bf16.mxu0 0
    %3451 = vmatpush1.bf16.msra.mxu0 0
    %3452 = vmatprep.subr.bf16.mxu0 0
    %3453 = vmatpush1.bf16.msra.mxu0 0
    %3454 = vmatprep.subr.bf16.mxu0 0
    %3455 = vmatpush1.bf16.msra.mxu0 0
    %3456 = vmatprep.subr.bf16.mxu0 0
    %3457 = vmatpush1.bf16.msra.mxu0 0
    %3458 = vmatprep.subr.bf16.mxu0 0
    %3459 = vmatpush1.bf16.msra.mxu0 0
    %3460 = vmatprep.subr.bf16.mxu0 0
    %3461 = vmatpush1.bf16.msra.mxu0 0
    %3462 = vmatprep.subr.bf16.mxu0 0
    %3463 = vmatpush1.bf16.msra.mxu0 0
    %3464 = vmatprep.subr.bf16.mxu0 0
    %3465 = vmatpush1.bf16.msra.mxu0 0
    %3466 = vmatprep.subr.bf16.mxu0 0
    %3467 = vmatpush1.bf16.msra.mxu0 0
    %3468 = vmatprep.subr.bf16.mxu0 0
    %3469 = vmatpush1.bf16.msra.mxu0 0
    %3470 = vmatprep.subr.bf16.mxu0 0
    %3471 = vmatpush1.bf16.msra.mxu0 0
    %3472 = vmatprep.subr.bf16.mxu0 0
    %3473 = vmatpush1.bf16.msra.mxu0 0
    %3474 = vmatprep.subr.bf16.mxu0 0
    %3475 = vmatpush1.bf16.msra.mxu0 0
    %3476 = vmatprep.mubr.bf16.mxu0 0
    %3477 = vmatmul.mubr.bf16.gmra.mrb[0].mxu0 %v3421
    %v3478 = vpop.f32.mrb[0].mxu0
    %v3479 = vadd.f32 %v3203, %v3478
    %v3480 = vpop.f32.mrb[0].mxu0
    %v3481 = vpop.f32.mrb[0].mxu0
    %v3482 = vadd.f32 %v3203, %v3481
    %v3483 = vpop.f32.mrb[0].mxu0
    %3484 = vmatprep.mubr.bf16.mxu0 0
    %3485 = vmatmul.mubr.bf16.gmra.mrb[0].mxu0 %v3424
    %v3486 = vpop.f32.mrb[0].mxu0
    %v3487 = vadd.f32 %v3203, %v3486
    %v3488 = vpop.f32.mrb[0].mxu0
    %v3489 = vpop.f32.mrb[0].mxu0
    %v3490 = vadd.f32 %v3203, %v3489
    %v3491 = vpop.f32.mrb[0].mxu0
    %3492 = vmatprep.mubr.bf16.mxu0 0
    %3493 = vmatmul.mubr.bf16.gmra.mrb[0].mxu0 %v3427
    %v3494 = vpop.f32.mrb[0].mxu0
    %v3495 = vadd.f32 %v3203, %v3494
    %v3496 = vpop.f32.mrb[0].mxu0
    %v3497 = vpop.f32.mrb[0].mxu0
    %v3498 = vadd.f32 %v3203, %v3497
    %v3499 = vpop.f32.mrb[0].mxu0
    %3500 = vmatprep.mubr.bf16.mxu0 0
    %3501 = vmatmul.mubr.bf16.gmra.mrb[0].mxu0 %v3430
    %v3502 = vpop.f32.mrb[0].mxu0
    %v3503 = vadd.f32 %v3203, %v3502
    %v3504 = vpop.f32.mrb[0].mxu0
    %v3505 = vpop.f32.mrb[0].mxu0
    %v3506 = vadd.f32 %v3203, %v3505
    %v3507 = vpop.f32.mrb[0].mxu0
    %3508 = vmatprep.mubr.bf16.mxu0 0
    %3509 = vmatmul.mubr.bf16.gmra.mrb[0].mxu0 %v3433
    %v3510 = vpop.f32.mrb[0].mxu0
    %v3511 = vadd.f32 %v3203, %v3510
    %v3512 = vpop.f32.mrb[0].mxu0
    %v3513 = vpop.f32.mrb[0].mxu0
    %v3514 = vadd.f32 %v3203, %v3513
    %v3515 = vpop.f32.mrb[0].mxu0
    %3516 = vmatprep.mubr.bf16.mxu0 0
    %3517 = vmatmul.mubr.bf16.gmra.mrb[0].mxu0 %v3436
    %v3518 = vpop.f32.mrb[0].mxu0
    %v3519 = vadd.f32 %v3203, %v3518
    %v3520 = vpop.f32.mrb[0].mxu0
    %v3521 = vpop.f32.mrb[0].mxu0
    %v3522 = vadd.f32 %v3203, %v3521
    %v3523 = vpop.f32.mrb[0].mxu0
    %3524 = vmatprep.mubr.bf16.mxu0 0
    %3525 = vmatmul.mubr.bf16.gmra.mrb[0].mxu0 %v3439
    %v3526 = vpop.f32.mrb[0].mxu0
    %v3527 = vadd.f32 %v3203, %v3526
    %v3528 = vpop.f32.mrb[0].mxu0
    %v3529 = vpop.f32.mrb[0].mxu0
    %v3530 = vadd.f32 %v3203, %v3529
    %v3531 = vpop.f32.mrb[0].mxu0
    %3532 = vmatprep.mubr.bf16.mxu0 0
    %3533 = vmatmul.mubr.bf16.gmra.mrb[0].mxu0 %v3442
    %v3534 = vpop.f32.mrb[0].mxu0
    %v3535 = vadd.f32 %v3203, %v3534
    %v3536 = vpop.f32.mrb[0].mxu0
    %v3537 = vpop.f32.mrb[0].mxu0
    %v3538 = vadd.f32 %v3203, %v3537
    %v3539 = vpop.f32.mrb[0].mxu0
    %3540 = vdwg.mxu0
    %v3541 = vsub.f32 0.0, %v3479
    %v3542 = vsub.f32 0.0, %v3482
    %v3543 = vsub.f32 0.0, %v3487
    %v3544 = vsub.f32 0.0, %v3490
    %v3545 = vsub.f32 0.0, %v3495
    %v3546 = vsub.f32 0.0, %v3498
    %v3547 = vsub.f32 0.0, %v3503
    %v3548 = vsub.f32 0.0, %v3506
    %v3549 = vsub.f32 0.0, %v3511
    %v3550 = vsub.f32 0.0, %v3514
    %v3551 = vsub.f32 0.0, %v3519
    %v3552 = vsub.f32 0.0, %v3522
    %v3553 = vsub.f32 0.0, %v3527
    %v3554 = vsub.f32 0.0, %v3530
    %v3555 = vsub.f32 0.0, %v3535
    %v3556 = vsub.f32 0.0, %v3538
    %v3557 = vmul.f32 %v3541, 1.442695
    %v3558 = vpow.pop %v3557
    %v3559 = vmul.f32 %v3542, 1.442695
    %v3560 = vpow.pop %v3559
    %v3561 = vmul.f32 %v3543, 1.442695
    %v3562 = vpow.pop %v3561
    %v3563 = vmul.f32 %v3544, 1.442695
    %v3564 = vpow.pop %v3563
    %v3565 = vmul.f32 %v3545, 1.442695
    %v3566 = vpow.pop %v3565
    %v3567 = vmul.f32 %v3546, 1.442695
    %v3568 = vpow.pop %v3567
    %v3569 = vmul.f32 %v3547, 1.442695
    %v3570 = vpow.pop %v3569
    %v3571 = vmul.f32 %v3548, 1.442695
    %v3572 = vpow.pop %v3571
    %v3573 = vmul.f32 %v3549, 1.442695
    %v3574 = vpow.pop %v3573
    %v3575 = vmul.f32 %v3550, 1.442695
    %v3576 = vpow.pop %v3575
    %v3577 = vmul.f32 %v3551, 1.442695
    %v3578 = vpow.pop %v3577
    %v3579 = vmul.f32 %v3552, 1.442695
    %v3580 = vpow.pop %v3579
    %v3581 = vmul.f32 %v3553, 1.442695
    %v3582 = vpow.pop %v3581
    %v3583 = vmul.f32 %v3554, 1.442695
    %v3584 = vpow.pop %v3583
    %v3585 = vmul.f32 %v3555, 1.442695
    %v3586 = vpow.pop %v3585
    %v3587 = vmul.f32 %v3556, 1.442695
    %v3588 = vpow.pop %v3587
    %v3589 = vadd.f32 %v3558, 1.0
    %v3590 = vadd.f32 %v3560, 1.0
    %v3591 = vadd.f32 %v3562, 1.0
    %v3592 = vadd.f32 %v3564, 1.0
    %v3593 = vadd.f32 %v3566, 1.0
    %v3594 = vadd.f32 %v3568, 1.0
    %v3595 = vadd.f32 %v3570, 1.0
    %v3596 = vadd.f32 %v3572, 1.0
    %v3597 = vadd.f32 %v3574, 1.0
    %v3598 = vadd.f32 %v3576, 1.0
    %v3599 = vadd.f32 %v3578, 1.0
    %v3600 = vadd.f32 %v3580, 1.0
    %v3601 = vadd.f32 %v3582, 1.0
    %v3602 = vadd.f32 %v3584, 1.0
    %v3603 = vadd.f32 %v3586, 1.0
    %v3604 = vadd.f32 %v3588, 1.0
    %v3605 = vrcp.pop %v3589
    %v3606 = vrcp.pop %v3590
    %v3607 = vrcp.pop %v3591
    %v3608 = vrcp.pop %v3592
    %v3609 = vrcp.pop %v3593
    %v3610 = vrcp.pop %v3594
    %v3611 = vrcp.pop %v3595
    %v3612 = vrcp.pop %v3596
    %v3613 = vrcp.pop %v3597
    %v3614 = vrcp.pop %v3598
    %v3615 = vrcp.pop %v3599
    %v3616 = vrcp.pop %v3600
    %v3617 = vrcp.pop %v3601
    %v3618 = vrcp.pop %v3602
    %v3619 = vrcp.pop %v3603
    %v3620 = vrcp.pop %v3604
    %v3621 = vpack.c.bf16 %v3606, %v3605
    %v3622 = vpack.c.bf16 %v3608, %v3607
    %v3623 = vpack.c.bf16 %v3610, %v3609
    %v3624 = vpack.c.bf16 %v3612, %v3611
    %v3625 = vpack.c.bf16 %v3614, %v3613
    %v3626 = vpack.c.bf16 %v3616, %v3615
    %v3627 = vpack.c.bf16 %v3618, %v3617
    %v3628 = vpack.c.bf16 %v3620, %v3619
    %v3629 = vld [vmem:[%s15] sm:$0xf]
    %v3630 = vld [vmem:[%s16] sm:$0x1]
    %v3632 = vlaneseq
    %v3633 = vshrl.u32 %v3632, 7
    %v3634 = vsub.s32 0, %v3633
    %v3635 = vrot.slane %v3630, %v3634
    %vm3637 = vcmask 64512
    %v3639 = vsel %vm3637, %v3412, 0
    %v3642 = vsel %vm3637, %v3413, 0
    %v3645 = vsel %vm3637, %v3414, 0
    %v3648 = vsel %vm3637, %v3415, 0
    %v3651 = vsel %vm3637, %v3416, 0
    %v3654 = vsel %vm3637, %v3417, 0
    %v3657 = vsel %vm3637, %v3418, 0
    %v3660 = vsel %vm3637, %v3419, 0
    %vm3662 = vcmask 1043456
    %v3664 = vsel %vm3662, %v3629, 0
    %3666 = vmatprep.subr.bf16.mxu0 0
    %3667 = vmatpush1.bf16.msra.mxu0 %v3664
    %3668 = vmatprep.subr.bf16.mxu0 0
    %3669 = vmatpush1.bf16.msra.mxu0 0
    %3670 = vmatprep.subr.bf16.mxu0 0
    %3671 = vmatpush1.bf16.msra.mxu0 0
    %3672 = vmatprep.subr.bf16.mxu0 0
    %3673 = vmatpush1.bf16.msra.mxu0 0
    %3674 = vmatprep.subr.bf16.mxu0 0
    %3675 = vmatpush1.bf16.msra.mxu0 0
    %3676 = vmatprep.subr.bf16.mxu0 0
    %3677 = vmatpush1.bf16.msra.mxu0 0
    %3678 = vmatprep.subr.bf16.mxu0 0
    %3679 = vmatpush1.bf16.msra.mxu0 0
    %3680 = vmatprep.subr.bf16.mxu0 0
    %3681 = vmatpush1.bf16.msra.mxu0 0
    %3682 = vmatprep.subr.bf16.mxu0 0
    %3683 = vmatpush1.bf16.msra.mxu0 0
    %3684 = vmatprep.subr.bf16.mxu0 0
    %3685 = vmatpush1.bf16.msra.mxu0 0
    %3686 = vmatprep.subr.bf16.mxu0 0
    %3687 = vmatpush1.bf16.msra.mxu0 0
    %3688 = vmatprep.subr.bf16.mxu0 0
    %3689 = vmatpush1.bf16.msra.mxu0 0
    %3690 = vmatprep.subr.bf16.mxu0 0
    %3691 = vmatpush1.bf16.msra.mxu0 0
    %3692 = vmatprep.subr.bf16.mxu0 0
    %3693 = vmatpush1.bf16.msra.mxu0 0
    %3694 = vmatprep.subr.bf16.mxu0 0
    %3695 = vmatpush1.bf16.msra.mxu0 0
    %3696 = vmatprep.subr.bf16.mxu0 0
    %3697 = vmatpush1.bf16.msra.mxu0 0
    %3698 = vmatprep.mubr.bf16.mxu0 0
    %3699 = vmatmul.mubr.bf16.gmra.mrb[0].mxu0 %v3639
    %v3700 = vpop.f32.mrb[0].mxu0
    %v3701 = vadd.f32 %v3635, %v3700
    %v3702 = vpop.f32.mrb[0].mxu0
    %v3703 = vpop.f32.mrb[0].mxu0
    %v3704 = vadd.f32 %v3635, %v3703
    %v3705 = vpop.f32.mrb[0].mxu0
    %3706 = vmatprep.mubr.bf16.mxu0 0
    %3707 = vmatmul.mubr.bf16.gmra.mrb[0].mxu0 %v3642
    %v3708 = vpop.f32.mrb[0].mxu0
    %v3709 = vadd.f32 %v3635, %v3708
    %v3710 = vpop.f32.mrb[0].mxu0
    %v3711 = vpop.f32.mrb[0].mxu0
    %v3712 = vadd.f32 %v3635, %v3711
    %v3713 = vpop.f32.mrb[0].mxu0
    %3714 = vmatprep.mubr.bf16.mxu0 0
    %3715 = vmatmul.mubr.bf16.gmra.mrb[0].mxu0 %v3645
    %v3716 = vpop.f32.mrb[0].mxu0
    %v3717 = vadd.f32 %v3635, %v3716
    %v3718 = vpop.f32.mrb[0].mxu0
    %v3719 = vpop.f32.mrb[0].mxu0
    %v3720 = vadd.f32 %v3635, %v3719
    %v3721 = vpop.f32.mrb[0].mxu0
    %3722 = vmatprep.mubr.bf16.mxu0 0
    %3723 = vmatmul.mubr.bf16.gmra.mrb[0].mxu0 %v3648
    %v3724 = vpop.f32.mrb[0].mxu0
    %v3725 = vadd.f32 %v3635, %v3724
    %v3726 = vpop.f32.mrb[0].mxu0
    %v3727 = vpop.f32.mrb[0].mxu0
    %v3728 = vadd.f32 %v3635, %v3727
    %v3729 = vpop.f32.mrb[0].mxu0
    %3730 = vmatprep.mubr.bf16.mxu0 0
    %3731 = vmatmul.mubr.bf16.gmra.mrb[0].mxu0 %v3651
    %v3732 = vpop.f32.mrb[0].mxu0
    %v3733 = vadd.f32 %v3635, %v3732
    %v3734 = vpop.f32.mrb[0].mxu0
    %v3735 = vpop.f32.mrb[0].mxu0
    %v3736 = vadd.f32 %v3635, %v3735
    %v3737 = vpop.f32.mrb[0].mxu0
    %3738 = vmatprep.mubr.bf16.mxu0 0
    %3739 = vmatmul.mubr.bf16.gmra.mrb[0].mxu0 %v3654
    %v3740 = vpop.f32.mrb[0].mxu0
    %v3741 = vadd.f32 %v3635, %v3740
    %v3742 = vpop.f32.mrb[0].mxu0
    %v3743 = vpop.f32.mrb[0].mxu0
    %v3744 = vadd.f32 %v3635, %v3743
    %v3745 = vpop.f32.mrb[0].mxu0
    %3746 = vmatprep.mubr.bf16.mxu0 0
    %3747 = vmatmul.mubr.bf16.gmra.mrb[0].mxu0 %v3657
    %v3748 = vpop.f32.mrb[0].mxu0
    %v3749 = vadd.f32 %v3635, %v3748
    %v3750 = vpop.f32.mrb[0].mxu0
    %v3751 = vpop.f32.mrb[0].mxu0
    %v3752 = vadd.f32 %v3635, %v3751
    %v3753 = vpop.f32.mrb[0].mxu0
    %3754 = vmatprep.mubr.bf16.mxu0 0
    %3755 = vmatmul.mubr.bf16.gmra.mrb[0].mxu0 %v3660
    %v3756 = vpop.f32.mrb[0].mxu0
    %v3757 = vadd.f32 %v3635, %v3756
    %v3758 = vpop.f32.mrb[0].mxu0
    %v3759 = vpop.f32.mrb[0].mxu0
    %v3760 = vadd.f32 %v3635, %v3759
    %v3761 = vpop.f32.mrb[0].mxu0
    %3762 = vdwg.mxu0
    %v3763 = vsub.f32 0.0, %v3701
    %v3764 = vsub.f32 0.0, %v3704
    %v3765 = vsub.f32 0.0, %v3709
    %v3766 = vsub.f32 0.0, %v3712
    %v3767 = vsub.f32 0.0, %v3717
    %v3768 = vsub.f32 0.0, %v3720
    %v3769 = vsub.f32 0.0, %v3725
    %v3770 = vsub.f32 0.0, %v3728
    %v3771 = vsub.f32 0.0, %v3733
    %v3772 = vsub.f32 0.0, %v3736
    %v3773 = vsub.f32 0.0, %v3741
    %v3774 = vsub.f32 0.0, %v3744
    %v3775 = vsub.f32 0.0, %v3749
    %v3776 = vsub.f32 0.0, %v3752
    %v3777 = vsub.f32 0.0, %v3757
    %v3778 = vsub.f32 0.0, %v3760
    %v3779 = vmul.f32 %v3763, 1.442695
    %v3780 = vpow.pop %v3779
    %v3781 = vmul.f32 %v3764, 1.442695
    %v3782 = vpow.pop %v3781
    %v3783 = vmul.f32 %v3765, 1.442695
    %v3784 = vpow.pop %v3783
    %v3785 = vmul.f32 %v3766, 1.442695
    %v3786 = vpow.pop %v3785
    %v3787 = vmul.f32 %v3767, 1.442695
    %v3788 = vpow.pop %v3787
    %v3789 = vmul.f32 %v3768, 1.442695
    %v3790 = vpow.pop %v3789
    %v3791 = vmul.f32 %v3769, 1.442695
    %v3792 = vpow.pop %v3791
    %v3793 = vmul.f32 %v3770, 1.442695
    %v3794 = vpow.pop %v3793
    %v3795 = vmul.f32 %v3771, 1.442695
    %v3796 = vpow.pop %v3795
    %v3797 = vmul.f32 %v3772, 1.442695
    %v3798 = vpow.pop %v3797
    %v3799 = vmul.f32 %v3773, 1.442695
    %v3800 = vpow.pop %v3799
    %v3801 = vmul.f32 %v3774, 1.442695
    %v3802 = vpow.pop %v3801
    %v3803 = vmul.f32 %v3775, 1.442695
    %v3804 = vpow.pop %v3803
    %v3805 = vmul.f32 %v3776, 1.442695
    %v3806 = vpow.pop %v3805
    %v3807 = vmul.f32 %v3777, 1.442695
    %v3808 = vpow.pop %v3807
    %v3809 = vmul.f32 %v3778, 1.442695
    %v3810 = vpow.pop %v3809
    %v3811 = vadd.f32 %v3780, 1.0
    %v3812 = vadd.f32 %v3782, 1.0
    %v3813 = vadd.f32 %v3784, 1.0
    %v3814 = vadd.f32 %v3786, 1.0
    %v3815 = vadd.f32 %v3788, 1.0
    %v3816 = vadd.f32 %v3790, 1.0
    %v3817 = vadd.f32 %v3792, 1.0
    %v3818 = vadd.f32 %v3794, 1.0
    %v3819 = vadd.f32 %v3796, 1.0
    %v3820 = vadd.f32 %v3798, 1.0
    %v3821 = vadd.f32 %v3800, 1.0
    %v3822 = vadd.f32 %v3802, 1.0
    %v3823 = vadd.f32 %v3804, 1.0
    %v3824 = vadd.f32 %v3806, 1.0
    %v3825 = vadd.f32 %v3808, 1.0
    %v3826 = vadd.f32 %v3810, 1.0
    %v3827 = vrcp.pop %v3811
    %v3828 = vrcp.pop %v3812
    %v3829 = vrcp.pop %v3813
    %v3830 = vrcp.pop %v3814
    %v3831 = vrcp.pop %v3815
    %v3832 = vrcp.pop %v3816
    %v3833 = vrcp.pop %v3817
    %v3834 = vrcp.pop %v3818
    %v3835 = vrcp.pop %v3819
    %v3836 = vrcp.pop %v3820
    %v3837 = vrcp.pop %v3821
    %v3838 = vrcp.pop %v3822
    %v3839 = vrcp.pop %v3823
    %v3840 = vrcp.pop %v3824
    %v3841 = vrcp.pop %v3825
    %v3842 = vrcp.pop %v3826
    %v3843 = vpack.c.bf16 %v3828, %v3827
    %v3844 = vpack.c.bf16 %v3830, %v3829
    %v3845 = vpack.c.bf16 %v3832, %v3831
    %v3846 = vpack.c.bf16 %v3834, %v3833
    %v3847 = vpack.c.bf16 %v3836, %v3835
    %v3848 = vpack.c.bf16 %v3838, %v3837
    %v3849 = vpack.c.bf16 %v3840, %v3839
    %v3850 = vpack.c.bf16 %v3842, %v3841
    %v3852 = vsel %vm3637, %v3621, 0
    %v3855 = vsel %vm3637, %v3622, 0
    %v3858 = vsel %vm3637, %v3623, 0
    %v3861 = vsel %vm3637, %v3624, 0
    %v3864 = vsel %vm3637, %v3625, 0
    %v3867 = vsel %vm3637, %v3626, 0
    %v3870 = vsel %vm3637, %v3627, 0
    %v3873 = vsel %vm3637, %v3628, 0
    %3875 = vmatprep.subr.bf16.mxu0 0
    %3876 = vmatpush1.bf16.msra.mxu0 %v3664
    %3877 = vmatprep.subr.bf16.mxu0 0
    %3878 = vmatpush1.bf16.msra.mxu0 0
    %3879 = vmatprep.subr.bf16.mxu0 0
    %3880 = vmatpush1.bf16.msra.mxu0 0
    %3881 = vmatprep.subr.bf16.mxu0 0
    %3882 = vmatpush1.bf16.msra.mxu0 0
    %3883 = vmatprep.subr.bf16.mxu0 0
    %3884 = vmatpush1.bf16.msra.mxu0 0
    %3885 = vmatprep.subr.bf16.mxu0 0
    %3886 = vmatpush1.bf16.msra.mxu0 0
    %3887 = vmatprep.subr.bf16.mxu0 0
    %3888 = vmatpush1.bf16.msra.mxu0 0
    %3889 = vmatprep.subr.bf16.mxu0 0
    %3890 = vmatpush1.bf16.msra.mxu0 0
    %3891 = vmatprep.subr.bf16.mxu0 0
    %3892 = vmatpush1.bf16.msra.mxu0 0
    %3893 = vmatprep.subr.bf16.mxu0 0
    %3894 = vmatpush1.bf16.msra.mxu0 0
    %3895 = vmatprep.subr.bf16.mxu0 0
    %3896 = vmatpush1.bf16.msra.mxu0 0
    %3897 = vmatprep.subr.bf16.mxu0 0
    %3898 = vmatpush1.bf16.msra.mxu0 0
    %3899 = vmatprep.subr.bf16.mxu0 0
    %3900 = vmatpush1.bf16.msra.mxu0 0
    %3901 = vmatprep.subr.bf16.mxu0 0
    %3902 = vmatpush1.bf16.msra.mxu0 0
    %3903 = vmatprep.subr.bf16.mxu0 0
    %3904 = vmatpush1.bf16.msra.mxu0 0
    %3905 = vmatprep.subr.bf16.mxu0 0
    %3906 = vmatpush1.bf16.msra.mxu0 0
    %3907 = vmatprep.mubr.bf16.mxu0 0
    %3908 = vmatmul.mubr.bf16.gmra.mrb[0].mxu0 %v3852
    %v3909 = vpop.f32.mrb[0].mxu0
    %v3910 = vadd.f32 %v3635, %v3909
    %v3911 = vpop.f32.mrb[0].mxu0
    %v3912 = vpop.f32.mrb[0].mxu0
    %v3913 = vadd.f32 %v3635, %v3912
    %v3914 = vpop.f32.mrb[0].mxu0
    %3915 = vmatprep.mubr.bf16.mxu0 0
    %3916 = vmatmul.mubr.bf16.gmra.mrb[0].mxu0 %v3855
    %v3917 = vpop.f32.mrb[0].mxu0
    %v3918 = vadd.f32 %v3635, %v3917
    %v3919 = vpop.f32.mrb[0].mxu0
    %v3920 = vpop.f32.mrb[0].mxu0
    %v3921 = vadd.f32 %v3635, %v3920
    %v3922 = vpop.f32.mrb[0].mxu0
    %3923 = vmatprep.mubr.bf16.mxu0 0
    %3924 = vmatmul.mubr.bf16.gmra.mrb[0].mxu0 %v3858
    %v3925 = vpop.f32.mrb[0].mxu0
    %v3926 = vadd.f32 %v3635, %v3925
    %v3927 = vpop.f32.mrb[0].mxu0
    %v3928 = vpop.f32.mrb[0].mxu0
    %v3929 = vadd.f32 %v3635, %v3928
    %v3930 = vpop.f32.mrb[0].mxu0
    %3931 = vmatprep.mubr.bf16.mxu0 0
    %3932 = vmatmul.mubr.bf16.gmra.mrb[0].mxu0 %v3861
    %v3933 = vpop.f32.mrb[0].mxu0
    %v3934 = vadd.f32 %v3635, %v3933
    %v3935 = vpop.f32.mrb[0].mxu0
    %v3936 = vpop.f32.mrb[0].mxu0
    %v3937 = vadd.f32 %v3635, %v3936
    %v3938 = vpop.f32.mrb[0].mxu0
    %3939 = vmatprep.mubr.bf16.mxu0 0
    %3940 = vmatmul.mubr.bf16.gmra.mrb[0].mxu0 %v3864
    %v3941 = vpop.f32.mrb[0].mxu0
    %v3942 = vadd.f32 %v3635, %v3941
    %v3943 = vpop.f32.mrb[0].mxu0
    %v3944 = vpop.f32.mrb[0].mxu0
    %v3945 = vadd.f32 %v3635, %v3944
    %v3946 = vpop.f32.mrb[0].mxu0
    %3947 = vmatprep.mubr.bf16.mxu0 0
    %3948 = vmatmul.mubr.bf16.gmra.mrb[0].mxu0 %v3867
    %v3949 = vpop.f32.mrb[0].mxu0
    %v3950 = vadd.f32 %v3635, %v3949
    %v3951 = vpop.f32.mrb[0].mxu0
    %v3952 = vpop.f32.mrb[0].mxu0
    %v3953 = vadd.f32 %v3635, %v3952
    %v3954 = vpop.f32.mrb[0].mxu0
    %3955 = vmatprep.mubr.bf16.mxu0 0
    %3956 = vmatmul.mubr.bf16.gmra.mrb[0].mxu0 %v3870
    %v3957 = vpop.f32.mrb[0].mxu0
    %v3958 = vadd.f32 %v3635, %v3957
    %v3959 = vpop.f32.mrb[0].mxu0
    %v3960 = vpop.f32.mrb[0].mxu0
    %v3961 = vadd.f32 %v3635, %v3960
    %v3962 = vpop.f32.mrb[0].mxu0
    %3963 = vmatprep.mubr.bf16.mxu0 0
    %3964 = vmatmul.mubr.bf16.gmra.mrb[0].mxu0 %v3873
    %v3965 = vpop.f32.mrb[0].mxu0
    %v3966 = vadd.f32 %v3635, %v3965
    %v3967 = vpop.f32.mrb[0].mxu0
    %v3968 = vpop.f32.mrb[0].mxu0
    %v3969 = vadd.f32 %v3635, %v3968
    %v3970 = vpop.f32.mrb[0].mxu0
    %3971 = vdwg.mxu0
    %v3972 = vsub.f32 0.0, %v3910
    %v3973 = vsub.f32 0.0, %v3913
    %v3974 = vsub.f32 0.0, %v3918
    %v3975 = vsub.f32 0.0, %v3921
    %v3976 = vsub.f32 0.0, %v3926
    %v3977 = vsub.f32 0.0, %v3929
    %v3978 = vsub.f32 0.0, %v3934
    %v3979 = vsub.f32 0.0, %v3937
    %v3980 = vsub.f32 0.0, %v3942
    %v3981 = vsub.f32 0.0, %v3945
    %v3982 = vsub.f32 0.0, %v3950
    %v3983 = vsub.f32 0.0, %v3953
    %v3984 = vsub.f32 0.0, %v3958
    %v3985 = vsub.f32 0.0, %v3961
    %v3986 = vsub.f32 0.0, %v3966
    %v3987 = vsub.f32 0.0, %v3969
    %v3988 = vmul.f32 %v3972, 1.442695
    %v3989 = vpow.pop %v3988
    %v3990 = vmul.f32 %v3973, 1.442695
    %v3991 = vpow.pop %v3990
    %v3992 = vmul.f32 %v3974, 1.442695
    %v3993 = vpow.pop %v3992
    %v3994 = vmul.f32 %v3975, 1.442695
    %v3995 = vpow.pop %v3994
    %v3996 = vmul.f32 %v3976, 1.442695
    %v3997 = vpow.pop %v3996
    %v3998 = vmul.f32 %v3977, 1.442695
    %v3999 = vpow.pop %v3998
    %v4000 = vmul.f32 %v3978, 1.442695
    %v4001 = vpow.pop %v4000
    %v4002 = vmul.f32 %v3979, 1.442695
    %v4003 = vpow.pop %v4002
    %v4004 = vmul.f32 %v3980, 1.442695
    %v4005 = vpow.pop %v4004
    %v4006 = vmul.f32 %v3981, 1.442695
    %v4007 = vpow.pop %v4006
    %v4008 = vmul.f32 %v3982, 1.442695
    %v4009 = vpow.pop %v4008
    %v4010 = vmul.f32 %v3983, 1.442695
    %v4011 = vpow.pop %v4010
    %v4012 = vmul.f32 %v3984, 1.442695
    %v4013 = vpow.pop %v4012
    %v4014 = vmul.f32 %v3985, 1.442695
    %v4015 = vpow.pop %v4014
    %v4016 = vmul.f32 %v3986, 1.442695
    %v4017 = vpow.pop %v4016
    %v4018 = vmul.f32 %v3987, 1.442695
    %v4019 = vpow.pop %v4018
    %v4020 = vadd.f32 %v3989, 1.0
    %v4021 = vadd.f32 %v3991, 1.0
    %v4022 = vadd.f32 %v3993, 1.0
    %v4023 = vadd.f32 %v3995, 1.0
    %v4024 = vadd.f32 %v3997, 1.0
    %v4025 = vadd.f32 %v3999, 1.0
    %v4026 = vadd.f32 %v4001, 1.0
    %v4027 = vadd.f32 %v4003, 1.0
    %v4028 = vadd.f32 %v4005, 1.0
    %v4029 = vadd.f32 %v4007, 1.0
    %v4030 = vadd.f32 %v4009, 1.0
    %v4031 = vadd.f32 %v4011, 1.0
    %v4032 = vadd.f32 %v4013, 1.0
    %v4033 = vadd.f32 %v4015, 1.0
    %v4034 = vadd.f32 %v4017, 1.0
    %v4035 = vadd.f32 %v4019, 1.0
    %v4036 = vrcp.pop %v4020
    %v4037 = vrcp.pop %v4021
    %v4038 = vrcp.pop %v4022
    %v4039 = vrcp.pop %v4023
    %v4040 = vrcp.pop %v4024
    %v4041 = vrcp.pop %v4025
    %v4042 = vrcp.pop %v4026
    %v4043 = vrcp.pop %v4027
    %v4044 = vrcp.pop %v4028
    %v4045 = vrcp.pop %v4029
    %v4046 = vrcp.pop %v4030
    %v4047 = vrcp.pop %v4031
    %v4048 = vrcp.pop %v4032
    %v4049 = vrcp.pop %v4033
    %v4050 = vrcp.pop %v4034
    %v4051 = vrcp.pop %v4035
    %v4052 = vpack.c.bf16 %v4037, %v4036
    %v4053 = vpack.c.bf16 %v4039, %v4038
    %v4054 = vpack.c.bf16 %v4041, %v4040
    %v4055 = vpack.c.bf16 %v4043, %v4042
    %v4056 = vpack.c.bf16 %v4045, %v4044
    %v4057 = vpack.c.bf16 %v4047, %v4046
    %v4058 = vpack.c.bf16 %v4049, %v4048
    %v4059 = vpack.c.bf16 %v4051, %v4050
    %v4060 = vld [vmem:[%s17] sm:$0xf]
    %v4061 = vld [vmem:[%s18] sm:$0x1]
    %v4063 = vlaneseq
    %v4064 = vshrl.u32 %v4063, 7
    %v4065 = vsub.s32 0, %v4064
    %v4066 = vrot.slane %v4061, %v4065
    %v4069 = vsel %vm3637, %v3843, 0
    %v4072 = vsel %vm3637, %v3844, 0
    %v4075 = vsel %vm3637, %v3845, 0
    %v4078 = vsel %vm3637, %v3846, 0
    %v4081 = vsel %vm3637, %v3847, 0
    %v4084 = vsel %vm3637, %v3848, 0
    %v4087 = vsel %vm3637, %v3849, 0
    %v4090 = vsel %vm3637, %v3850, 0
    %v4093 = vsel %vm3662, %v4060, 0
    %4095 = vmatprep.subr.bf16.mxu0 0
    %4096 = vmatpush1.bf16.msra.mxu0 %v4093
    %4097 = vmatprep.subr.bf16.mxu0 0
    %4098 = vmatpush1.bf16.msra.mxu0 0
    %4099 = vmatprep.subr.bf16.mxu0 0
    %4100 = vmatpush1.bf16.msra.mxu0 0
    %4101 = vmatprep.subr.bf16.mxu0 0
    %4102 = vmatpush1.bf16.msra.mxu0 0
    %4103 = vmatprep.subr.bf16.mxu0 0
    %4104 = vmatpush1.bf16.msra.mxu0 0
    %4105 = vmatprep.subr.bf16.mxu0 0
    %4106 = vmatpush1.bf16.msra.mxu0 0
    %4107 = vmatprep.subr.bf16.mxu0 0
    %4108 = vmatpush1.bf16.msra.mxu0 0
    %4109 = vmatprep.subr.bf16.mxu0 0
    %4110 = vmatpush1.bf16.msra.mxu0 0
    %4111 = vmatprep.subr.bf16.mxu0 0
    %4112 = vmatpush1.bf16.msra.mxu0 0
    %4113 = vmatprep.subr.bf16.mxu0 0
    %4114 = vmatpush1.bf16.msra.mxu0 0
    %4115 = vmatprep.subr.bf16.mxu0 0
    %4116 = vmatpush1.bf16.msra.mxu0 0
    %4117 = vmatprep.subr.bf16.mxu0 0
    %4118 = vmatpush1.bf16.msra.mxu0 0
    %4119 = vmatprep.subr.bf16.mxu0 0
    %4120 = vmatpush1.bf16.msra.mxu0 0
    %4121 = vmatprep.subr.bf16.mxu0 0
    %4122 = vmatpush1.bf16.msra.mxu0 0
    %4123 = vmatprep.subr.bf16.mxu0 0
    %4124 = vmatpush1.bf16.msra.mxu0 0
    %4125 = vmatprep.subr.bf16.mxu0 0
    %4126 = vmatpush1.bf16.msra.mxu0 0
    %4127 = vmatprep.mubr.bf16.mxu0 0
    %4128 = vmatmul.mubr.bf16.gmra.mrb[0].mxu0 %v4069
    %v4129 = vpop.f32.mrb[0].mxu0
    %v4130 = vadd.f32 %v4066, %v4129
    %v4131 = vpop.f32.mrb[0].mxu0
    %v4132 = vpop.f32.mrb[0].mxu0
    %v4133 = vadd.f32 %v4066, %v4132
    %v4134 = vpop.f32.mrb[0].mxu0
    %4135 = vmatprep.mubr.bf16.mxu0 0
    %4136 = vmatmul.mubr.bf16.gmra.mrb[0].mxu0 %v4072
    %v4137 = vpop.f32.mrb[0].mxu0
    %v4138 = vadd.f32 %v4066, %v4137
    %v4139 = vpop.f32.mrb[0].mxu0
    %v4140 = vpop.f32.mrb[0].mxu0
    %v4141 = vadd.f32 %v4066, %v4140
    %v4142 = vpop.f32.mrb[0].mxu0
    %4143 = vmatprep.mubr.bf16.mxu0 0
    %4144 = vmatmul.mubr.bf16.gmra.mrb[0].mxu0 %v4075
    %v4145 = vpop.f32.mrb[0].mxu0
    %v4146 = vadd.f32 %v4066, %v4145
    %v4147 = vpop.f32.mrb[0].mxu0
    %v4148 = vpop.f32.mrb[0].mxu0
    %v4149 = vadd.f32 %v4066, %v4148
    %v4150 = vpop.f32.mrb[0].mxu0
    %4151 = vmatprep.mubr.bf16.mxu0 0
    %4152 = vmatmul.mubr.bf16.gmra.mrb[0].mxu0 %v4078
    %v4153 = vpop.f32.mrb[0].mxu0
    %v4154 = vadd.f32 %v4066, %v4153
    %v4155 = vpop.f32.mrb[0].mxu0
    %v4156 = vpop.f32.mrb[0].mxu0
    %v4157 = vadd.f32 %v4066, %v4156
    %v4158 = vpop.f32.mrb[0].mxu0
    %4159 = vmatprep.mubr.bf16.mxu0 0
    %4160 = vmatmul.mubr.bf16.gmra.mrb[0].mxu0 %v4081
    %v4161 = vpop.f32.mrb[0].mxu0
    %v4162 = vadd.f32 %v4066, %v4161
    %v4163 = vpop.f32.mrb[0].mxu0
    %v4164 = vpop.f32.mrb[0].mxu0
    %v4165 = vadd.f32 %v4066, %v4164
    %v4166 = vpop.f32.mrb[0].mxu0
    %4167 = vmatprep.mubr.bf16.mxu0 0
    %4168 = vmatmul.mubr.bf16.gmra.mrb[0].mxu0 %v4084
    %v4169 = vpop.f32.mrb[0].mxu0
    %v4170 = vadd.f32 %v4066, %v4169
    %v4171 = vpop.f32.mrb[0].mxu0
    %v4172 = vpop.f32.mrb[0].mxu0
    %v4173 = vadd.f32 %v4066, %v4172
    %v4174 = vpop.f32.mrb[0].mxu0
    %4175 = vmatprep.mubr.bf16.mxu0 0
    %4176 = vmatmul.mubr.bf16.gmra.mrb[0].mxu0 %v4087
    %v4177 = vpop.f32.mrb[0].mxu0
    %v4178 = vadd.f32 %v4066, %v4177
    %v4179 = vpop.f32.mrb[0].mxu0
    %v4180 = vpop.f32.mrb[0].mxu0
    %v4181 = vadd.f32 %v4066, %v4180
    %v4182 = vpop.f32.mrb[0].mxu0
    %4183 = vmatprep.mubr.bf16.mxu0 0
    %4184 = vmatmul.mubr.bf16.gmra.mrb[0].mxu0 %v4090
    %v4185 = vpop.f32.mrb[0].mxu0
    %v4186 = vadd.f32 %v4066, %v4185
    %v4187 = vpop.f32.mrb[0].mxu0
    %v4188 = vpop.f32.mrb[0].mxu0
    %v4189 = vadd.f32 %v4066, %v4188
    %v4190 = vpop.f32.mrb[0].mxu0
    %4191 = vdwg.mxu0
    %v4192 = vsub.f32 0.0, %v4130
    %v4193 = vsub.f32 0.0, %v4133
    %v4194 = vsub.f32 0.0, %v4138
    %v4195 = vsub.f32 0.0, %v4141
    %v4196 = vsub.f32 0.0, %v4146
    %v4197 = vsub.f32 0.0, %v4149
    %v4198 = vsub.f32 0.0, %v4154
    %v4199 = vsub.f32 0.0, %v4157
    %v4200 = vsub.f32 0.0, %v4162
    %v4201 = vsub.f32 0.0, %v4165
    %v4202 = vsub.f32 0.0, %v4170
    %v4203 = vsub.f32 0.0, %v4173
    %v4204 = vsub.f32 0.0, %v4178
    %v4205 = vsub.f32 0.0, %v4181
    %v4206 = vsub.f32 0.0, %v4186
    %v4207 = vsub.f32 0.0, %v4189
    %v4208 = vmul.f32 %v4192, 1.442695
    %v4209 = vpow.pop %v4208
    %v4210 = vmul.f32 %v4193, 1.442695
    %v4211 = vpow.pop %v4210
    %v4212 = vmul.f32 %v4194, 1.442695
    %v4213 = vpow.pop %v4212
    %v4214 = vmul.f32 %v4195, 1.442695
    %v4215 = vpow.pop %v4214
    %v4216 = vmul.f32 %v4196, 1.442695
    %v4217 = vpow.pop %v4216
    %v4218 = vmul.f32 %v4197, 1.442695
    %v4219 = vpow.pop %v4218
    %v4220 = vmul.f32 %v4198, 1.442695
    %v4221 = vpow.pop %v4220
    %v4222 = vmul.f32 %v4199, 1.442695
    %v4223 = vpow.pop %v4222
    %v4224 = vmul.f32 %v4200, 1.442695
    %v4225 = vpow.pop %v4224
    %v4226 = vmul.f32 %v4201, 1.442695
    %v4227 = vpow.pop %v4226
    %v4228 = vmul.f32 %v4202, 1.442695
    %v4229 = vpow.pop %v4228
    %v4230 = vmul.f32 %v4203, 1.442695
    %v4231 = vpow.pop %v4230
    %v4232 = vmul.f32 %v4204, 1.442695
    %v4233 = vpow.pop %v4232
    %v4234 = vmul.f32 %v4205, 1.442695
    %v4235 = vpow.pop %v4234
    %v4236 = vmul.f32 %v4206, 1.442695
    %v4237 = vpow.pop %v4236
    %v4238 = vmul.f32 %v4207, 1.442695
    %v4239 = vpow.pop %v4238
    %v4240 = vadd.f32 %v4209, 1.0
    %v4241 = vadd.f32 %v4211, 1.0
    %v4242 = vadd.f32 %v4213, 1.0
    %v4243 = vadd.f32 %v4215, 1.0
    %v4244 = vadd.f32 %v4217, 1.0
    %v4245 = vadd.f32 %v4219, 1.0
    %v4246 = vadd.f32 %v4221, 1.0
    %v4247 = vadd.f32 %v4223, 1.0
    %v4248 = vadd.f32 %v4225, 1.0
    %v4249 = vadd.f32 %v4227, 1.0
    %v4250 = vadd.f32 %v4229, 1.0
    %v4251 = vadd.f32 %v4231, 1.0
    %v4252 = vadd.f32 %v4233, 1.0
    %v4253 = vadd.f32 %v4235, 1.0
    %v4254 = vadd.f32 %v4237, 1.0
    %v4255 = vadd.f32 %v4239, 1.0
    %v4256 = vrcp.pop %v4240
    %v4257 = vrcp.pop %v4241
    %v4258 = vrcp.pop %v4242
    %v4259 = vrcp.pop %v4243
    %v4260 = vrcp.pop %v4244
    %v4261 = vrcp.pop %v4245
    %v4262 = vrcp.pop %v4246
    %v4263 = vrcp.pop %v4247
    %v4264 = vrcp.pop %v4248
    %v4265 = vrcp.pop %v4249
    %v4266 = vrcp.pop %v4250
    %v4267 = vrcp.pop %v4251
    %v4268 = vrcp.pop %v4252
    %v4269 = vrcp.pop %v4253
    %v4270 = vrcp.pop %v4254
    %v4271 = vrcp.pop %v4255
    %v4272 = vpack.c.bf16 %v4257, %v4256
    %v4273 = vpack.c.bf16 %v4259, %v4258
    %v4274 = vpack.c.bf16 %v4261, %v4260
    %v4275 = vpack.c.bf16 %v4263, %v4262
    %v4276 = vpack.c.bf16 %v4265, %v4264
    %v4277 = vpack.c.bf16 %v4267, %v4266
    %v4278 = vpack.c.bf16 %v4269, %v4268
    %v4279 = vpack.c.bf16 %v4271, %v4270
    %v4281 = vsel %vm3637, %v4052, 0
    %v4284 = vsel %vm3637, %v4053, 0
    %v4287 = vsel %vm3637, %v4054, 0
    %v4290 = vsel %vm3637, %v4055, 0
    %v4293 = vsel %vm3637, %v4056, 0
    %v4296 = vsel %vm3637, %v4057, 0
    %v4299 = vsel %vm3637, %v4058, 0
    %v4302 = vsel %vm3637, %v4059, 0
    %4304 = vmatprep.subr.bf16.mxu0 0
    %4305 = vmatpush1.bf16.msra.mxu0 %v4093
    %4306 = vmatprep.subr.bf16.mxu0 0
    %4307 = vmatpush1.bf16.msra.mxu0 0
    %4308 = vmatprep.subr.bf16.mxu0 0
    %4309 = vmatpush1.bf16.msra.mxu0 0
    %4310 = vmatprep.subr.bf16.mxu0 0
    %4311 = vmatpush1.bf16.msra.mxu0 0
    %4312 = vmatprep.subr.bf16.mxu0 0
    %4313 = vmatpush1.bf16.msra.mxu0 0
    %4314 = vmatprep.subr.bf16.mxu0 0
    %4315 = vmatpush1.bf16.msra.mxu0 0
    %4316 = vmatprep.subr.bf16.mxu0 0
    %4317 = vmatpush1.bf16.msra.mxu0 0
    %4318 = vmatprep.subr.bf16.mxu0 0
    %4319 = vmatpush1.bf16.msra.mxu0 0
    %4320 = vmatprep.subr.bf16.mxu0 0
    %4321 = vmatpush1.bf16.msra.mxu0 0
    %4322 = vmatprep.subr.bf16.mxu0 0
    %4323 = vmatpush1.bf16.msra.mxu0 0
    %4324 = vmatprep.subr.bf16.mxu0 0
    %4325 = vmatpush1.bf16.msra.mxu0 0
    %4326 = vmatprep.subr.bf16.mxu0 0
    %4327 = vmatpush1.bf16.msra.mxu0 0
    %4328 = vmatprep.subr.bf16.mxu0 0
    %4329 = vmatpush1.bf16.msra.mxu0 0
    %4330 = vmatprep.subr.bf16.mxu0 0
    %4331 = vmatpush1.bf16.msra.mxu0 0
    %4332 = vmatprep.subr.bf16.mxu0 0
    %4333 = vmatpush1.bf16.msra.mxu0 0
    %4334 = vmatprep.subr.bf16.mxu0 0
    %4335 = vmatpush1.bf16.msra.mxu0 0
    %4336 = vmatprep.mubr.bf16.mxu0 0
    %4337 = vmatmul.mubr.bf16.gmra.mrb[0].mxu0 %v4281
    %v4338 = vpop.f32.mrb[0].mxu0
    %v4339 = vadd.f32 %v4066, %v4338
    %v4340 = vpop.f32.mrb[0].mxu0
    %v4341 = vpop.f32.mrb[0].mxu0
    %v4342 = vadd.f32 %v4066, %v4341
    %v4343 = vpop.f32.mrb[0].mxu0
    %4344 = vmatprep.mubr.bf16.mxu0 0
    %4345 = vmatmul.mubr.bf16.gmra.mrb[0].mxu0 %v4284
    %v4346 = vpop.f32.mrb[0].mxu0
    %v4347 = vadd.f32 %v4066, %v4346
    %v4348 = vpop.f32.mrb[0].mxu0
    %v4349 = vpop.f32.mrb[0].mxu0
    %v4350 = vadd.f32 %v4066, %v4349
    %v4351 = vpop.f32.mrb[0].mxu0
    %4352 = vmatprep.mubr.bf16.mxu0 0
    %4353 = vmatmul.mubr.bf16.gmra.mrb[0].mxu0 %v4287
    %v4354 = vpop.f32.mrb[0].mxu0
    %v4355 = vadd.f32 %v4066, %v4354
    %v4356 = vpop.f32.mrb[0].mxu0
    %v4357 = vpop.f32.mrb[0].mxu0
    %v4358 = vadd.f32 %v4066, %v4357
    %v4359 = vpop.f32.mrb[0].mxu0
    %4360 = vmatprep.mubr.bf16.mxu0 0
    %4361 = vmatmul.mubr.bf16.gmra.mrb[0].mxu0 %v4290
    %v4362 = vpop.f32.mrb[0].mxu0
    %v4363 = vadd.f32 %v4066, %v4362
    %v4364 = vpop.f32.mrb[0].mxu0
    %v4365 = vpop.f32.mrb[0].mxu0
    %v4366 = vadd.f32 %v4066, %v4365
    %v4367 = vpop.f32.mrb[0].mxu0
    %4368 = vmatprep.mubr.bf16.mxu0 0
    %4369 = vmatmul.mubr.bf16.gmra.mrb[0].mxu0 %v4293
    %v4370 = vpop.f32.mrb[0].mxu0
    %v4371 = vadd.f32 %v4066, %v4370
    %v4372 = vpop.f32.mrb[0].mxu0
    %v4373 = vpop.f32.mrb[0].mxu0
    %v4374 = vadd.f32 %v4066, %v4373
    %v4375 = vpop.f32.mrb[0].mxu0
    %4376 = vmatprep.mubr.bf16.mxu0 0
    %4377 = vmatmul.mubr.bf16.gmra.mrb[0].mxu0 %v4296
    %v4378 = vpop.f32.mrb[0].mxu0
    %v4379 = vadd.f32 %v4066, %v4378
    %v4380 = vpop.f32.mrb[0].mxu0
    %v4381 = vpop.f32.mrb[0].mxu0
    %v4382 = vadd.f32 %v4066, %v4381
    %v4383 = vpop.f32.mrb[0].mxu0
    %4384 = vmatprep.mubr.bf16.mxu0 0
    %4385 = vmatmul.mubr.bf16.gmra.mrb[0].mxu0 %v4299
    %v4386 = vpop.f32.mrb[0].mxu0
    %v4387 = vadd.f32 %v4066, %v4386
    %v4388 = vpop.f32.mrb[0].mxu0
    %v4389 = vpop.f32.mrb[0].mxu0
    %v4390 = vadd.f32 %v4066, %v4389
    %v4391 = vpop.f32.mrb[0].mxu0
    %4392 = vmatprep.mubr.bf16.mxu0 0
    %4393 = vmatmul.mubr.bf16.gmra.mrb[0].mxu0 %v4302
    %v4394 = vpop.f32.mrb[0].mxu0
    %v4395 = vadd.f32 %v4066, %v4394
    %v4396 = vpop.f32.mrb[0].mxu0
    %v4397 = vpop.f32.mrb[0].mxu0
    %v4398 = vadd.f32 %v4066, %v4397
    %v4399 = vpop.f32.mrb[0].mxu0
    %4400 = vdwg.mxu0
    %v4401 = vsub.f32 0.0, %v4339
    %v4402 = vsub.f32 0.0, %v4342
    %v4403 = vsub.f32 0.0, %v4347
    %v4404 = vsub.f32 0.0, %v4350
    %v4405 = vsub.f32 0.0, %v4355
    %v4406 = vsub.f32 0.0, %v4358
    %v4407 = vsub.f32 0.0, %v4363
    %v4408 = vsub.f32 0.0, %v4366
    %v4409 = vsub.f32 0.0, %v4371
    %v4410 = vsub.f32 0.0, %v4374
    %v4411 = vsub.f32 0.0, %v4379
    %v4412 = vsub.f32 0.0, %v4382
    %v4413 = vsub.f32 0.0, %v4387
    %v4414 = vsub.f32 0.0, %v4390
    %v4415 = vsub.f32 0.0, %v4395
    %v4416 = vsub.f32 0.0, %v4398
    %v4417 = vmul.f32 %v4401, 1.442695
    %v4418 = vpow.pop %v4417
    %v4419 = vmul.f32 %v4402, 1.442695
    %v4420 = vpow.pop %v4419
    %v4421 = vmul.f32 %v4403, 1.442695
    %v4422 = vpow.pop %v4421
    %v4423 = vmul.f32 %v4404, 1.442695
    %v4424 = vpow.pop %v4423
    %v4425 = vmul.f32 %v4405, 1.442695
    %v4426 = vpow.pop %v4425
    %v4427 = vmul.f32 %v4406, 1.442695
    %v4428 = vpow.pop %v4427
    %v4429 = vmul.f32 %v4407, 1.442695
    %v4430 = vpow.pop %v4429
    %v4431 = vmul.f32 %v4408, 1.442695
    %v4432 = vpow.pop %v4431
    %v4433 = vmul.f32 %v4409, 1.442695
    %v4434 = vpow.pop %v4433
    %v4435 = vmul.f32 %v4410, 1.442695
    %v4436 = vpow.pop %v4435
    %v4437 = vmul.f32 %v4411, 1.442695
    %v4438 = vpow.pop %v4437
    %v4439 = vmul.f32 %v4412, 1.442695
    %v4440 = vpow.pop %v4439
    %v4441 = vmul.f32 %v4413, 1.442695
    %v4442 = vpow.pop %v4441
    %v4443 = vmul.f32 %v4414, 1.442695
    %v4444 = vpow.pop %v4443
    %v4445 = vmul.f32 %v4415, 1.442695
    %v4446 = vpow.pop %v4445
    %v4447 = vmul.f32 %v4416, 1.442695
    %v4448 = vpow.pop %v4447
    %v4449 = vadd.f32 %v4418, 1.0
    %v4450 = vadd.f32 %v4420, 1.0
    %v4451 = vadd.f32 %v4422, 1.0
    %v4452 = vadd.f32 %v4424, 1.0
    %v4453 = vadd.f32 %v4426, 1.0
    %v4454 = vadd.f32 %v4428, 1.0
    %v4455 = vadd.f32 %v4430, 1.0
    %v4456 = vadd.f32 %v4432, 1.0
    %v4457 = vadd.f32 %v4434, 1.0
    %v4458 = vadd.f32 %v4436, 1.0
    %v4459 = vadd.f32 %v4438, 1.0
    %v4460 = vadd.f32 %v4440, 1.0
    %v4461 = vadd.f32 %v4442, 1.0
    %v4462 = vadd.f32 %v4444, 1.0
    %v4463 = vadd.f32 %v4446, 1.0
    %v4464 = vadd.f32 %v4448, 1.0
    %v4465 = vrcp.pop %v4449
    %v4466 = vrcp.pop %v4450
    %v4467 = vrcp.pop %v4451
    %v4468 = vrcp.pop %v4452
    %v4469 = vrcp.pop %v4453
    %v4470 = vrcp.pop %v4454
    %v4471 = vrcp.pop %v4455
    %v4472 = vrcp.pop %v4456
    %v4473 = vrcp.pop %v4457
    %v4474 = vrcp.pop %v4458
    %v4475 = vrcp.pop %v4459
    %v4476 = vrcp.pop %v4460
    %v4477 = vrcp.pop %v4461
    %v4478 = vrcp.pop %v4462
    %v4479 = vrcp.pop %v4463
    %v4480 = vrcp.pop %v4464
    %v4481 = vpack.c.bf16 %v4466, %v4465
    %v4482 = vpack.c.bf16 %v4468, %v4467
    %v4483 = vpack.c.bf16 %v4470, %v4469
    %v4484 = vpack.c.bf16 %v4472, %v4471
    %v4485 = vpack.c.bf16 %v4474, %v4473
    %v4486 = vpack.c.bf16 %v4476, %v4475
    %v4487 = vpack.c.bf16 %v4478, %v4477
    %v4488 = vpack.c.bf16 %v4480, %v4479
    %v4489 = vld [vmem:[%s19] sm:$0x3]
    %v4491 = vsel %vm3637, %v4489, 0
    %v4494 = vsel %vm3637, %v4272, 0
    %v4497 = vsel %vm3637, %v4273, 0
    %v4500 = vsel %vm3637, %v4274, 0
    %v4503 = vsel %vm3637, %v4275, 0
    %v4506 = vsel %vm3637, %v4276, 0
    %v4509 = vsel %vm3637, %v4277, 0
    %v4512 = vsel %vm3637, %v4278, 0
    %v4515 = vsel %vm3637, %v4279, 0
    %4517 = vmatprep.subr.bf16.mxu0 0
    %4518 = vmatpush1.bf16.xpose.msra.mxu0 %v4494
    %4519 = vmatprep.subr.bf16.mxu0 0
    %4520 = vmatpush1.bf16.xpose.msra.mxu0 %v4497
    %4521 = vmatprep.subr.bf16.mxu0 0
    %4522 = vmatpush1.bf16.xpose.msra.mxu0 %v4500
    %4523 = vmatprep.subr.bf16.mxu0 0
    %4524 = vmatpush1.bf16.xpose.msra.mxu0 %v4503
    %4525 = vmatprep.subr.bf16.mxu0 0
    %4526 = vmatpush1.bf16.xpose.msra.mxu0 %v4506
    %4527 = vmatprep.subr.bf16.mxu0 0
    %4528 = vmatpush1.bf16.xpose.msra.mxu0 %v4509
    %4529 = vmatprep.subr.bf16.mxu0 0
    %4530 = vmatpush1.bf16.xpose.msra.mxu0 %v4512
    %4531 = vmatprep.subr.bf16.mxu0 0
    %4532 = vmatpush1.bf16.xpose.msra.mxu0 %v4515
    %4533 = vmatprep.subr.bf16.mxu0 0
    %4534 = vmatpush1.bf16.xpose.msra.mxu0 0
    %4535 = vmatprep.subr.bf16.mxu0 0
    %4536 = vmatpush1.bf16.xpose.msra.mxu0 0
    %4537 = vmatprep.subr.bf16.mxu0 0
    %4538 = vmatpush1.bf16.xpose.msra.mxu0 0
    %4539 = vmatprep.subr.bf16.mxu0 0
    %4540 = vmatpush1.bf16.xpose.msra.mxu0 0
    %4541 = vmatprep.subr.bf16.mxu0 0
    %4542 = vmatpush1.bf16.xpose.msra.mxu0 0
    %4543 = vmatprep.subr.bf16.mxu0 0
    %4544 = vmatpush1.bf16.xpose.msra.mxu0 0
    %4545 = vmatprep.subr.bf16.mxu0 0
    %4546 = vmatpush1.bf16.xpose.msra.mxu0 0
    %4547 = vmatprep.subr.bf16.mxu0 0
    %4548 = vmatpush1.bf16.xpose.msra.mxu0 0
    %4549 = vmatprep.mubr.bf16.mxu0 0
    %4550 = vmatmul.mubr.bf16.gmra.mrb[0].mxu0 %v4491
    %v4551 = vpop.f32.mrb[0].mxu0
    %v4552 = vadd.f32 0.0, %v4551
    %v4553 = vpop.f32.mrb[0].mxu0
    %v4554 = vpop.f32.mrb[0].mxu0
    %v4555 = vpop.f32.mrb[0].mxu0
    %4556 = vdwg.mxu0
    %s4557 = sld [smem:[#allocation12]]
    %v4558 = vstv %s4557
    %v4559 = vadd.f32 %v4552, %v4558
    %s4560 = sld [smem:[#allocation12 + $0x1]]
    %v4561 = vstv %s4560
    %v4562 = vadd.f32 %v4552, %v4561
    %s4563 = sld [smem:[#allocation12 + $0x2]]
    %v4564 = vstv %s4563
    %v4565 = vadd.f32 %v4552, %v4564
    %v4567 = vrot.slane %v4562, 1
    %v4569 = vmax.f32 %v4559, %v4567
    %v4571 = vrot.slane %v4565, 2
    %v4573 = vmax.f32 %v4569, %v4571
    %v4574 = vsub.f32 %v4559, %v4573
    %v4575 = vmul.f32 %v4574, 1.442695
    %v4576 = vpow.pop %v4575
    %v4578 = vrot.slane %v4573, 7
    %v4580 = vsub.f32 %v4562, %v4578
    %v4581 = vmul.f32 %v4580, 1.442695
    %v4582 = vpow.pop %v4581
    %v4583 = vrot.slane %v4573, 6
    %v4585 = vsub.f32 %v4565, %v4583
    %v4586 = vmul.f32 %v4585, 1.442695
    %v4587 = vpow.pop %v4586
    %v4589 = vrot.slane %v4582, 1
    %v4591 = vadd.f32 %v4576, %v4589
    %v4593 = vrot.slane %v4587, 2
    %v4595 = vadd.f32 %v4591, %v4593
    %v4596 = vrcp.pop %v4595
    %v4598 = vrot.slane %v4596, 6
    %v4600 = vmul.f32 %v4587, %v4598
    %v4603 = vunpack.c.l.s4 1966171168
    %v4604 = vunpack.c.0.s8 %v4603
    %v4605 = vlaneseq
    %v4606 = vshrl.u32 %v4605, 7
    %v4607 = vsub.s32 %v4604, %v4606
    %v4608 = vrot.slane %v4600, %v4607
    %v4610 = vunpack.c.l.s4 1966171168
    %v4611 = vunpack.c.0.s8 %v4610
    %v4612 = vlaneseq
    %v4613 = vshrl.u32 %v4612, 7
    %v4614 = vsub.s32 %v4611, %v4613
    %v4615 = vrot.slane %v4608, %v4614
    %v4616 = vcombine.high %v4615, %v4615
    %v4618 = vlaneseq
    %vm4619 = vcmp.ge.s32.totalorder %v4618, 0
    %vm4620 = vcmp.lt.s32.totalorder %v4618, 128
    %vm4621 = vmand %vm4619, %vm4620
    %4622 = vst.msk [vmem:[#allocation13] sm:$0x1] %vm4621, %v4616
    %v4623 = vld [vmem:[%s19] sm:$0x3]
    %v4625 = vsel %vm3637, %v4623, 0
    %v4628 = vsel %vm3637, %v4481, 0
    %v4631 = vsel %vm3637, %v4482, 0
    %v4634 = vsel %vm3637, %v4483, 0
    %v4637 = vsel %vm3637, %v4484, 0
    %v4640 = vsel %vm3637, %v4485, 0
    %v4643 = vsel %vm3637, %v4486, 0
    %v4646 = vsel %vm3637, %v4487, 0
    %v4649 = vsel %vm3637, %v4488, 0
    %4651 = vmatprep.subr.bf16.mxu0 0
    %4652 = vmatpush1.bf16.xpose.msra.mxu0 %v4628
    %4653 = vmatprep.subr.bf16.mxu0 0
    %4654 = vmatpush1.bf16.xpose.msra.mxu0 %v4631
    %4655 = vmatprep.subr.bf16.mxu0 0
    %4656 = vmatpush1.bf16.xpose.msra.mxu0 %v4634
    %4657 = vmatprep.subr.bf16.mxu0 0
    %4658 = vmatpush1.bf16.xpose.msra.mxu0 %v4637
    %4659 = vmatprep.subr.bf16.mxu0 0
    %4660 = vmatpush1.bf16.xpose.msra.mxu0 %v4640
    %4661 = vmatprep.subr.bf16.mxu0 0
    %4662 = vmatpush1.bf16.xpose.msra.mxu0 %v4643
    %4663 = vmatprep.subr.bf16.mxu0 0
    %4664 = vmatpush1.bf16.xpose.msra.mxu0 %v4646
    %4665 = vmatprep.subr.bf16.mxu0 0
    %4666 = vmatpush1.bf16.xpose.msra.mxu0 %v4649
    %4667 = vmatprep.subr.bf16.mxu0 0
    %4668 = vmatpush1.bf16.xpose.msra.mxu0 0
    %4669 = vmatprep.subr.bf16.mxu0 0
    %4670 = vmatpush1.bf16.xpose.msra.mxu0 0
    %4671 = vmatprep.subr.bf16.mxu0 0
    %4672 = vmatpush1.bf16.xpose.msra.mxu0 0
    %4673 = vmatprep.subr.bf16.mxu0 0
    %4674 = vmatpush1.bf16.xpose.msra.mxu0 0
    %4675 = vmatprep.subr.bf16.mxu0 0
    %4676 = vmatpush1.bf16.xpose.msra.mxu0 0
    %4677 = vmatprep.subr.bf16.mxu0 0
    %4678 = vmatpush1.bf16.xpose.msra.mxu0 0
    %4679 = vmatprep.subr.bf16.mxu0 0
    %4680 = vmatpush1.bf16.xpose.msra.mxu0 0
    %4681 = vmatprep.subr.bf16.mxu0 0
    %4682 = vmatpush1.bf16.xpose.msra.mxu0 0
    %4683 = vmatprep.mubr.bf16.mxu0 0
    %4684 = vmatmul.mubr.bf16.gmra.mrb[0].mxu0 %v4625
    %v4685 = vpop.f32.mrb[0].mxu0
    %v4686 = vadd.f32 0.0, %v4685
    %v4687 = vpop.f32.mrb[0].mxu0
    %v4688 = vpop.f32.mrb[0].mxu0
    %v4689 = vpop.f32.mrb[0].mxu0
    %4690 = vdwg.mxu0
    %s4691 = sld [smem:[#allocation12]]
    %v4692 = vstv %s4691
    %v4693 = vadd.f32 %v4686, %v4692
    %s4694 = sld [smem:[#allocation12 + $0x1]]
    %v4695 = vstv %s4694
    %v4696 = vadd.f32 %v4686, %v4695
    %s4697 = sld [smem:[#allocation12 + $0x2]]
    %v4698 = vstv %s4697
    %v4699 = vadd.f32 %v4686, %v4698
    %v4701 = vrot.slane %v4696, 1
    %v4703 = vmax.f32 %v4693, %v4701
    %v4705 = vrot.slane %v4699, 2
    %v4707 = vmax.f32 %v4703, %v4705
    %v4708 = vsub.f32 %v4693, %v4707
    %v4709 = vmul.f32 %v4708, 1.442695
    %v4710 = vpow.pop %v4709
    %v4712 = vrot.slane %v4707, 7
    %v4714 = vsub.f32 %v4696, %v4712
    %v4715 = vmul.f32 %v4714, 1.442695
    %v4716 = vpow.pop %v4715
    %v4717 = vrot.slane %v4707, 6
    %v4719 = vsub.f32 %v4699, %v4717
    %v4720 = vmul.f32 %v4719, 1.442695
    %v4721 = vpow.pop %v4720
    %v4723 = vrot.slane %v4716, 1
    %v4725 = vadd.f32 %v4710, %v4723
    %v4727 = vrot.slane %v4721, 2
    %v4729 = vadd.f32 %v4725, %v4727
    %v4730 = vrcp.pop %v4729
    %v4732 = vrot.slane %v4730, 6
    %v4734 = vmul.f32 %v4721, %v4732
    %v4737 = vunpack.c.l.s4 1966171168
    %v4738 = vunpack.c.0.s8 %v4737
    %v4739 = vlaneseq
    %v4740 = vshrl.u32 %v4739, 7
    %v4741 = vsub.s32 %v4738, %v4740
    %v4742 = vrot.slane %v4734, %v4741
    %v4744 = vunpack.c.l.s4 1966171168
    %v4745 = vunpack.c.0.s8 %v4744
    %v4746 = vlaneseq
    %v4747 = vshrl.u32 %v4746, 7
    %v4748 = vsub.s32 %v4745, %v4747
    %v4749 = vrot.slane %v4742, %v4748
    %v4750 = vcombine.high %v4749, %v4749
    %4752 = vst.msk [vmem:[#allocation13 + $0x1] sm:$0x1] %vm4621, %v4750
    // Predicated region
    $region110: #{tpu_custom_call.1} parent=1 // pred_check
      _
    $region111: #{tpu_custom_call.1} parent=1 // pred_check_branch
      %4754 = sbr.rel (0) target = $region113
    $region112: #{tpu_custom_call.1} parent=1 // pred_region
      %s4756 = ssub.s32 32, 32
      %4757 = vsyncadd [#allocation4], %s4756
      %s4759 = sshll.u32 [#allocation13], 4
      %s4760 = int_to_ptr.vmem [resolvable:$true] %s4759
      %4762 = dma.vmem_to_hbm [thread:$0]  %s4760, 32, %s21, [#allocation4]
    $region113: #{tpu_custom_call.1} parent=1 // pred_fallthru
      _
    // Predicated region
    $region114: #{tpu_custom_call.1} parent=1 // pred_check
      _
    $region115: #{tpu_custom_call.1} parent=1 // pred_check_branch
      %4764 = sbr.rel (0) target = $region117
    $region116: #{tpu_custom_call.1} parent=1 // pred_region
      %4765 = dma.done [#allocation4], 32
    $region117: #{tpu_custom_call.1} parent=1 // pred_fallthru
      _
    %4766 = vsyncpa [#allocation3], 1
    %4767 = vsyncpa [#allocation7], 1
    %4768 = vsyncpa [#allocation10], 1
    %4769 = vsyncpa [#allocation4], 1
    %4770 = vsyncpa [#allocation5], 1

// kernel: tpu_custom_call.1
$region0: #{tpu_custom_call.1}
  #allocation0 [shape = 'u32[]', space=smem, size = 0x4, offset = 0x4, fixed_abs, tag = 'smem constant byte address 0x4 - core index']
  #allocation1 [shape = 'u32[144,128]{1,0:T(1,128)}', space=vmem, size = 0x12000, scoped, tag = 'internal scratch']
  %s0 = inlined_call_operand.vmem [shape: bf16[256,32], index: 0, kind: input, shape index: {}]
  %s1 = inlined_call_operand.hbm [shape: bf16[32,128], index: 1, kind: input, shape index: {}]
  %s2 = inlined_call_operand.vmem [shape: f32[1,128], index: 2, kind: input, shape index: {}]
  %s3 = inlined_call_operand.vmem [shape: bf16[128,256], index: 3, kind: input, shape index: {}]
  %s4 = inlined_call_operand.hbm [shape: f32[1,256], index: 4, kind: input, shape index: {}]
  %s5 = inlined_call_operand.vmem [shape: bf16[256,128], index: 5, kind: input, shape index: {}]
  %s6 = inlined_call_operand.hbm [shape: f32[1,128], index: 6, kind: input, shape index: {}]
  %s7 = inlined_call_operand.vmem [shape: bf16[128,16], index: 7, kind: input, shape index: {}]
  %s8 = inlined_call_operand.hbm [shape: f32[1,16], index: 8, kind: input, shape index: {}]
  %s9 = inlined_call_operand.vmem [shape: bf16[16,16], index: 9, kind: input, shape index: {}]
  %s10 = inlined_call_operand.hbm [shape: f32[1,16], index: 10, kind: input, shape index: {}]
  %s11 = inlined_call_operand.vmem [shape: bf16[16,16], index: 11, kind: input, shape index: {}]
  %s12 = inlined_call_operand.vmem [shape: f32[1,16], index: 12, kind: input, shape index: {}]
  %s13 = inlined_call_operand.vmem [shape: bf16[16,8], index: 13, kind: input, shape index: {}]
  %s14 = inlined_call_operand.vmem [shape: f32[1,8], index: 14, kind: input, shape index: {}]
  %s15 = inlined_call_operand.vmem [shape: bf16[8,8], index: 15, kind: input, shape index: {}]
  %s16 = inlined_call_operand.vmem [shape: f32[1,8], index: 16, kind: input, shape index: {}]
  %s17 = inlined_call_operand.vmem [shape: bf16[8,8], index: 17, kind: input, shape index: {}]
  %s18 = inlined_call_operand.vmem [shape: f32[1,8], index: 18, kind: input, shape index: {}]
  %s19 = inlined_call_operand.vmem [shape: bf16[3,8], index: 19, kind: input, shape index: {}]
  %s20 = inlined_call_operand.vmem [shape: f32[3], index: 20, kind: input, shape index: {}]
  %s21 = inlined_call_operand.hbm [shape: f32[1,1,256], index: 21, kind: output, shape index: {}]
  %s22 = sld [smem:[#allocation0]]
  $region118: #{tpu_custom_call.1} parent=0
    _
  %s24 = ssub.s32 1, %s22
  %s25 = scalar_select 0, %s24, %s22
  $region1: #{tpu_custom_call.1} parent=0
    #allocation2 [shape = 'u8[8192]{0}', space=vmem, size = 0x2000, scoped, tag = 'input window, operand 1, single buffered']
    #allocation3 [shape = 's32[1]{0}', space=sflag, size = 0x4, scoped, tag = 'scoped memory for tpu_custom_call.1']
    #allocation4 [shape = 's32[1]{0}', space=sflag, size = 0x4, scoped, tag = 'scoped memory for tpu_custom_call.1']
    #allocation5 [shape = 's32[1]{0}', space=sflag, size = 0x4, scoped, tag = 'scoped memory for tpu_custom_call.1']
    #allocation6 [shape = 'u8[1024]{0}', space=vmem, size = 0x400, scoped, tag = 'input window, operand 4, single buffered']
    #allocation7 [shape = 's32[1]{0}', space=sflag, size = 0x4, scoped, tag = 'scoped memory for tpu_custom_call.1']
    #allocation8 [shape = 'u8[512]{0}', space=vmem, size = 0x400, scoped, tag = 'input window, operand 6, single buffered']
    #allocation9 [shape = 'u8[512]{0}', space=vmem, size = 0x400, scoped, tag = 'input window, operand 8, single buffered']
    #allocation10 [shape = 's32[1]{0}', space=sflag, size = 0x4, scoped, tag = 'scoped memory for tpu_custom_call.1']
    #allocation11 [shape = 'u8[512]{0}', space=vmem, size = 0x400, scoped, tag = 'input window, operand 10, single buffered']
    #allocation12 [shape = 'u8[512]{0}', space=smem, size = 0x200, scoped, tag = 'input window, operand 20, single buffered']
    #allocation13 [shape = 'u8[1024]{0}', space=vmem, size = 0x400, scoped, tag = 'output window, operand 0, single buffered']
    %26 = vsyncpa [#allocation3], 0
    %27 = vsyncpa [#allocation7], 0
    %28 = vsyncpa [#allocation10], 0
    %29 = vsyncpa [#allocation5], 0
    %30 = vsyncpa [#allocation4], 0
    // Predicated region
    $region2: #{tpu_custom_call.1} parent=1 // pred_check
      _
    $region3: #{tpu_custom_call.1} parent=1 // pred_check_branch
      %32 = sbr.rel (0) target = $region5
    $region4: #{tpu_custom_call.1} parent=1 // pred_region
      _
    $region5: #{tpu_custom_call.1} parent=1 // pred_fallthru
      _
    // Predicated region
    $region6: #{tpu_custom_call.1} parent=1 // pred_check
      _
    $region7: #{tpu_custom_call.1} parent=1 // pred_check_branch
      %34 = sbr.rel (0) target = $region9
    $region8: #{tpu_custom_call.1} parent=1 // pred_region
      %s36 = ssub.s32 256, 256
      %37 = vsyncadd [#allocation3], %s36
      %s38 = sshll.u32 [#allocation2], 4
      %s39 = int_to_ptr.vmem [resolvable:$true] %s38
      %44 = dma.hbm_to_vmem [thread:$0]  %s1, 256, %s39, [#allocation3], 64, 64, 4
    $region9: #{tpu_custom_call.1} parent=1 // pred_fallthru
      _
    // Predicated region
    $region10: #{tpu_custom_call.1} parent=1 // pred_check
      _
    $region11: #{tpu_custom_call.1} parent=1 // pred_check_branch
      %46 = sbr.rel (0) target = $region13
    $region12: #{tpu_custom_call.1} parent=1 // pred_region
      _
    $region13: #{tpu_custom_call.1} parent=1 // pred_fallthru
      _
    // Predicated region
    $region14: #{tpu_custom_call.1} parent=1 // pred_check
      _
    $region15: #{tpu_custom_call.1} parent=1 // pred_check_branch
      %48 = sbr.rel (0) target = $region17
    $region16: #{tpu_custom_call.1} parent=1 // pred_region
      _
    $region17: #{tpu_custom_call.1} parent=1 // pred_fallthru
      _
    // Predicated region
    $region18: #{tpu_custom_call.1} parent=1 // pred_check
      _
    $region19: #{tpu_custom_call.1} parent=1 // pred_check_branch
      %50 = sbr.rel (0) target = $region21
    $region20: #{tpu_custom_call.1} parent=1 // pred_region
      %s52 = ssub.s32 32, 32
      %53 = vsyncadd [#allocation7], %s52
      %s55 = sshll.u32 [#allocation6], 4
      %s56 = int_to_ptr.vmem [resolvable:$true] %s55
      %58 = dma.hbm_to_vmem [thread:$0]  %s4, 32, %s56, [#allocation7]
    $region21: #{tpu_custom_call.1} parent=1 // pred_fallthru
      _
    // Predicated region
    $region22: #{tpu_custom_call.1} parent=1 // pred_check
      _
    $region23: #{tpu_custom_call.1} parent=1 // pred_check_branch
      %60 = sbr.rel (0) target = $region25
    $region24: #{tpu_custom_call.1} parent=1 // pred_region
      _
    $region25: #{tpu_custom_call.1} parent=1 // pred_fallthru
      _
    // Predicated region
    $region26: #{tpu_custom_call.1} parent=1 // pred_check
      _
    $region27: #{tpu_custom_call.1} parent=1 // pred_check_branch
      %62 = sbr.rel (0) target = $region29
    $region28: #{tpu_custom_call.1} parent=1 // pred_region
      %s64 = ssub.s32 16, 16
      %65 = vsyncadd [#allocation7], %s64
      %s67 = sshll.u32 [#allocation8], 4
      %s68 = int_to_ptr.vmem [resolvable:$true] %s67
      %70 = dma.hbm_to_vmem [thread:$0]  %s6, 16, %s68, [#allocation7]
    $region29: #{tpu_custom_call.1} parent=1 // pred_fallthru
      _
    // Predicated region
    $region30: #{tpu_custom_call.1} parent=1 // pred_check
      _
    $region31: #{tpu_custom_call.1} parent=1 // pred_check_branch
      %72 = sbr.rel (0) target = $region33
    $region32: #{tpu_custom_call.1} parent=1 // pred_region
      _
    $region33: #{tpu_custom_call.1} parent=1 // pred_fallthru
      _
    // Predicated region
    $region34: #{tpu_custom_call.1} parent=1 // pred_check
      _
    $region35: #{tpu_custom_call.1} parent=1 // pred_check_branch
      %74 = sbr.rel (0) target = $region37
    $region36: #{tpu_custom_call.1} parent=1 // pred_region
      %s76 = ssub.s32 16, 16
      %77 = vsyncadd [#allocation10], %s76
      %s79 = sshll.u32 [#allocation9], 4
      %s80 = int_to_ptr.vmem [resolvable:$true] %s79
      %82 = dma.hbm_to_vmem [thread:$0]  %s8, 16, %s80, [#allocation10]
    $region37: #{tpu_custom_call.1} parent=1 // pred_fallthru
      _
    // Predicated region
    $region38: #{tpu_custom_call.1} parent=1 // pred_check
      _
    $region39: #{tpu_custom_call.1} parent=1 // pred_check_branch
      %84 = sbr.rel (0) target = $region41
    $region40: #{tpu_custom_call.1} parent=1 // pred_region
      _
    $region41: #{tpu_custom_call.1} parent=1 // pred_fallthru
      _
    // Predicated region
    $region42: #{tpu_custom_call.1} parent=1 // pred_check
      _
    $region43: #{tpu_custom_call.1} parent=1 // pred_check_branch
      %86 = sbr.rel (0) target = $region45
    $region44: #{tpu_custom_call.1} parent=1 // pred_region
      %s88 = ssub.s32 16, 16
      %89 = vsyncadd [#allocation10], %s88
      %s91 = sshll.u32 [#allocation11], 4
      %s92 = int_to_ptr.vmem [resolvable:$true] %s91
      %94 = dma.hbm_to_vmem [thread:$0]  %s10, 16, %s92, [#allocation10]
    $region45: #{tpu_custom_call.1} parent=1 // pred_fallthru
      _
    // Predicated region
    $region46: #{tpu_custom_call.1} parent=1 // pred_check
      _
    $region47: #{tpu_custom_call.1} parent=1 // pred_check_branch
      %96 = sbr.rel (0) target = $region49
    $region48: #{tpu_custom_call.1} parent=1 // pred_region
      _
    $region49: #{tpu_custom_call.1} parent=1 // pred_fallthru
      _
    // Predicated region
    $region50: #{tpu_custom_call.1} parent=1 // pred_check
      _
    $region51: #{tpu_custom_call.1} parent=1 // pred_check_branch
      %98 = sbr.rel (0) target = $region53
    $region52: #{tpu_custom_call.1} parent=1 // pred_region
      _
    $region53: #{tpu_custom_call.1} parent=1 // pred_fallthru
      _
    // Predicated region
    $region54: #{tpu_custom_call.1} parent=1 // pred_check
      _
    $region55: #{tpu_custom_call.1} parent=1 // pred_check_branch
      %100 = sbr.rel (0) target = $region57
    $region56: #{tpu_custom_call.1} parent=1 // pred_region
      _
    $region57: #{tpu_custom_call.1} parent=1 // pred_fallthru
      _
    // Predicated region
    $region58: #{tpu_custom_call.1} parent=1 // pred_check
      _
    $region59: #{tpu_custom_call.1} parent=1 // pred_check_branch
      %102 = sbr.rel (0) target = $region61
    $region60: #{tpu_custom_call.1} parent=1 // pred_region
      _
    $region61: #{tpu_custom_call.1} parent=1 // pred_fallthru
      _
    // Predicated region
    $region62: #{tpu_custom_call.1} parent=1 // pred_check
      _
    $region63: #{tpu_custom_call.1} parent=1 // pred_check_branch
      %104 = sbr.rel (0) target = $region65
    $region64: #{tpu_custom_call.1} parent=1 // pred_region
      _
    $region65: #{tpu_custom_call.1} parent=1 // pred_fallthru
      _
    // Predicated region
    $region66: #{tpu_custom_call.1} parent=1 // pred_check
      _
    $region67: #{tpu_custom_call.1} parent=1 // pred_check_branch
      %106 = sbr.rel (0) target = $region69
    $region68: #{tpu_custom_call.1} parent=1 // pred_region
      _
    $region69: #{tpu_custom_call.1} parent=1 // pred_fallthru
      _
    // Predicated region
    $region70: #{tpu_custom_call.1} parent=1 // pred_check
      _
    $region71: #{tpu_custom_call.1} parent=1 // pred_check_branch
      %108 = sbr.rel (0) target = $region73
    $region72: #{tpu_custom_call.1} parent=1 // pred_region
      _
    $region73: #{tpu_custom_call.1} parent=1 // pred_fallthru
      _
    // Predicated region
    $region74: #{tpu_custom_call.1} parent=1 // pred_check
      _
    $region75: #{tpu_custom_call.1} parent=1 // pred_check_branch
      %110 = sbr.rel (0) target = $region77
    $region76: #{tpu_custom_call.1} parent=1 // pred_region
      _
    $region77: #{tpu_custom_call.1} parent=1 // pred_fallthru
      _
    // Predicated region
    $region78: #{tpu_custom_call.1} parent=1 // pred_check
      _
    $region79: #{tpu_custom_call.1} parent=1 // pred_check_branch
      %112 = sbr.rel (0) target = $region81
    $region80: #{tpu_custom_call.1} parent=1 // pred_region
      _
    $region81: #{tpu_custom_call.1} parent=1 // pred_fallthru
      _
    // Predicated region
    $region82: #{tpu_custom_call.1} parent=1 // pred_check
      _
    $region83: #{tpu_custom_call.1} parent=1 // pred_check_branch
      %114 = sbr.rel (0) target = $region85
    $region84: #{tpu_custom_call.1} parent=1 // pred_region
      %s116 = ssub.s32 16, 16
      %117 = vsyncadd [#allocation5], %s116
      %s119 = sshll.u32 %s20, 4
      %s120 = int_to_ptr.vmem [resolvable:$true] %s119
      %122 = dma.vmem_to_smem %s120, 16, [#allocation12], [#allocation5]
    $region85: #{tpu_custom_call.1} parent=1 // pred_fallthru
      _
    // Predicated region
    $region86: #{tpu_custom_call.1} parent=1 // pred_check
      _
    $region87: #{tpu_custom_call.1} parent=1 // pred_check_branch
      %124 = sbr.rel (0) target = $region89
    $region88: #{tpu_custom_call.1} parent=1 // pred_region
      %125 = dma.done [#allocation3], 256
    $region89: #{tpu_custom_call.1} parent=1 // pred_fallthru
      _
    // Predicated region
    $region90: #{tpu_custom_call.1} parent=1 // pred_check
      _
    $region91: #{tpu_custom_call.1} parent=1 // pred_check_branch
      %127 = sbr.rel (0) target = $region93
    $region92: #{tpu_custom_call.1} parent=1 // pred_region
      %128 = dma.done [#allocation7], 32
    $region93: #{tpu_custom_call.1} parent=1 // pred_fallthru
      _
    // Predicated region
    $region94: #{tpu_custom_call.1} parent=1 // pred_check
      _
    $region95: #{tpu_custom_call.1} parent=1 // pred_check_branch
      %130 = sbr.rel (0) target = $region97
    $region96: #{tpu_custom_call.1} parent=1 // pred_region
      %131 = dma.done [#allocation7], 16
    $region97: #{tpu_custom_call.1} parent=1 // pred_fallthru
      _
    // Predicated region
    $region98: #{tpu_custom_call.1} parent=1 // pred_check
      _
    $region99: #{tpu_custom_call.1} parent=1 // pred_check_branch
      %133 = sbr.rel (0) target = $region101
    $region100: #{tpu_custom_call.1} parent=1 // pred_region
      %134 = dma.done [#allocation10], 16
    $region101: #{tpu_custom_call.1} parent=1 // pred_fallthru
      _
    // Predicated region
    $region102: #{tpu_custom_call.1} parent=1 // pred_check
      _
    $region103: #{tpu_custom_call.1} parent=1 // pred_check_branch
      %136 = sbr.rel (0) target = $region105
    $region104: #{tpu_custom_call.1} parent=1 // pred_region
      %137 = dma.done [#allocation10], 16
    $region105: #{tpu_custom_call.1} parent=1 // pred_fallthru
      _
    // Predicated region
    $region106: #{tpu_custom_call.1} parent=1 // pred_check
      _
    $region107: #{tpu_custom_call.1} parent=1 // pred_check_branch
      %139 = sbr.rel (0) target = $region109
    $region108: #{tpu_custom_call.1} parent=1 // pred_region
      %140 = dma.done [#allocation5], 16
    $region109: #{tpu_custom_call.1} parent=1 // pred_fallthru
      _
    %141 = sfence
    %v143 = vld [vmem:[%s0] sm:$0xf]
    %v144 = vld [vmem:[%s0 + $0x4] sm:$0xf]
    %v145 = vld [vmem:[%s0 + $0x8] sm:$0xf]
    %v146 = vld [vmem:[%s0 + $0xc] sm:$0xf]
    %v147 = vld [vmem:[%s0 + $0x10] sm:$0xf]
    %v148 = vld [vmem:[%s0 + $0x14] sm:$0xf]
    %v149 = vld [vmem:[%s0 + $0x18] sm:$0xf]
    %v150 = vld [vmem:[%s0 + $0x1c] sm:$0xf]
    %v151 = vld [vmem:[%s0 + $0x20] sm:$0xf]
    %v152 = vld [vmem:[%s0 + $0x24] sm:$0xf]
    %v153 = vld [vmem:[%s0 + $0x28] sm:$0xf]
    %v154 = vld [vmem:[%s0 + $0x2c] sm:$0xf]
    %v155 = vld [vmem:[%s0 + $0x30] sm:$0xf]
    %v156 = vld [vmem:[%s0 + $0x34] sm:$0xf]
    %v157 = vld [vmem:[%s0 + $0x38] sm:$0xf]
    %v158 = vld [vmem:[%s0 + $0x3c] sm:$0xf]
    %v159 = vld [vmem:[%s0 + $0x40] sm:$0xf]
    %v160 = vld [vmem:[%s0 + $0x44] sm:$0xf]
    %v161 = vld [vmem:[%s0 + $0x48] sm:$0xf]
    %v162 = vld [vmem:[%s0 + $0x4c] sm:$0xf]
    %v163 = vld [vmem:[%s0 + $0x50] sm:$0xf]
    %v164 = vld [vmem:[%s0 + $0x54] sm:$0xf]
    %v165 = vld [vmem:[%s0 + $0x58] sm:$0xf]
    %v166 = vld [vmem:[%s0 + $0x5c] sm:$0xf]
    %v167 = vld [vmem:[%s0 + $0x60] sm:$0xf]
    %v168 = vld [vmem:[%s0 + $0x64] sm:$0xf]
    %v169 = vld [vmem:[%s0 + $0x68] sm:$0xf]
    %v170 = vld [vmem:[%s0 + $0x6c] sm:$0xf]
    %v171 = vld [vmem:[%s0 + $0x70] sm:$0xf]
    %v172 = vld [vmem:[%s0 + $0x74] sm:$0xf]
    %v173 = vld [vmem:[%s0 + $0x78] sm:$0xf]
    %v174 = vld [vmem:[%s0 + $0x7c] sm:$0xf]
    %v175 = vld [vmem:[#allocation2] sm:$0xf]
    %v176 = vld [vmem:[#allocation2 + $0x4] sm:$0xf]
    %v177 = vld [vmem:[#allocation2 + $0x8] sm:$0xf]
    %v178 = vld [vmem:[#allocation2 + $0xc] sm:$0xf]
    %v179 = vld [vmem:[%s2] sm:$0x1]
    %v181 = vlaneseq
    %v182 = vshrl.u32 %v181, 7
    %v183 = vsub.s32 0, %v182
    %v184 = vrot.slane %v179, %v183
    %v202 = vunpack.c.l.b16 %v143
    %v203 = vunpack.c.l.b16 %v144
    %v204 = vunpack.c.l.b16 %v145
    %v205 = vunpack.c.l.b16 %v146
    %v206 = vunpack.c.l.b16 %v147
    %v207 = vunpack.c.l.b16 %v148
    %v208 = vunpack.c.l.b16 %v149
    %v209 = vunpack.c.l.b16 %v150
    %v210 = vunpack.c.l.b16 %v151
    %v211 = vunpack.c.l.b16 %v152
    %v212 = vunpack.c.l.b16 %v153
    %v213 = vunpack.c.l.b16 %v154
    %v214 = vunpack.c.l.b16 %v155
    %v215 = vunpack.c.l.b16 %v156
    %v216 = vunpack.c.l.b16 %v157
    %v217 = vunpack.c.l.b16 %v158
    %v218 = vpack.c.b16 %v203, %v202
    %v219 = vpack.c.b16 %v205, %v204
    %v220 = vpack.c.b16 %v207, %v206
    %v221 = vpack.c.b16 %v209, %v208
    %v222 = vpack.c.b16 %v211, %v210
    %v223 = vpack.c.b16 %v213, %v212
    %v224 = vpack.c.b16 %v215, %v214
    %v225 = vpack.c.b16 %v217, %v216
    %v230 = vunpack.c.l.b16 %v175
    %v231 = vunpack.c.l.b16 %v176
    %v232 = vunpack.c.l.b16 %v177
    %v233 = vunpack.c.l.b16 %v178
    %v234 = vpack.c.b16 %v231, %v230
    %v235 = vpack.c.b16 %v233, %v232
    %vm238 = vcmask 261120
    %v240 = vsel %vm238, %v218, 0
    %v243 = vsel %vm238, %v219, 0
    %v246 = vsel %vm238, %v220, 0
    %v249 = vsel %vm238, %v221, 0
    %v252 = vsel %vm238, %v222, 0
    %v255 = vsel %vm238, %v223, 0
    %v258 = vsel %vm238, %v224, 0
    %v261 = vsel %vm238, %v225, 0
    %263 = vmatprep.subr.bf16.mxu0 0
    %264 = vmatpush1.bf16.msra.mxu0 %v234
    %265 = vmatprep.subr.bf16.mxu0 0
    %266 = vmatpush1.bf16.msra.mxu0 %v235
    %267 = vmatprep.subr.bf16.mxu0 0
    %268 = vmatpush1.bf16.msra.mxu0 0
    %269 = vmatprep.subr.bf16.mxu0 0
    %270 = vmatpush1.bf16.msra.mxu0 0
    %271 = vmatprep.subr.bf16.mxu0 0
    %272 = vmatpush1.bf16.msra.mxu0 0
    %273 = vmatprep.subr.bf16.mxu0 0
    %274 = vmatpush1.bf16.msra.mxu0 0
    %275 = vmatprep.subr.bf16.mxu0 0
    %276 = vmatpush1.bf16.msra.mxu0 0
    %277 = vmatprep.subr.bf16.mxu0 0
    %278 = vmatpush1.bf16.msra.mxu0 0
    %279 = vmatprep.subr.bf16.mxu0 0
    %280 = vmatpush1.bf16.msra.mxu0 0
    %281 = vmatprep.subr.bf16.mxu0 0
    %282 = vmatpush1.bf16.msra.mxu0 0
    %283 = vmatprep.subr.bf16.mxu0 0
    %284 = vmatpush1.bf16.msra.mxu0 0
    %285 = vmatprep.subr.bf16.mxu0 0
    %286 = vmatpush1.bf16.msra.mxu0 0
    %287 = vmatprep.subr.bf16.mxu0 0
    %288 = vmatpush1.bf16.msra.mxu0 0
    %289 = vmatprep.subr.bf16.mxu0 0
    %290 = vmatpush1.bf16.msra.mxu0 0
    %291 = vmatprep.subr.bf16.mxu0 0
    %292 = vmatpush1.bf16.msra.mxu0 0
    %293 = vmatprep.subr.bf16.mxu0 0
    %294 = vmatpush1.bf16.msra.mxu0 0
    %295 = vmatprep.mubr.bf16.mxu0 0
    %296 = vmatmul.mubr.bf16.gmra.mrb[0].mxu0 %v240
    %v297 = vpop.f32.mrb[0].mxu0
    %v298 = vadd.f32 %v184, %v297
    %v299 = vpop.f32.mrb[0].mxu0
    %v300 = vpop.f32.mrb[0].mxu0
    %v301 = vadd.f32 %v184, %v300
    %v302 = vpop.f32.mrb[0].mxu0
    %303 = vmatprep.mubr.bf16.mxu0 0
    %304 = vmatmul.mubr.bf16.gmra.mrb[0].mxu0 %v243
    %v305 = vpop.f32.mrb[0].mxu0
    %v306 = vadd.f32 %v184, %v305
    %v307 = vpop.f32.mrb[0].mxu0
    %v308 = vpop.f32.mrb[0].mxu0
    %v309 = vadd.f32 %v184, %v308
    %v310 = vpop.f32.mrb[0].mxu0
    %311 = vmatprep.mubr.bf16.mxu0 0
    %312 = vmatmul.mubr.bf16.gmra.mrb[0].mxu0 %v246
    %v313 = vpop.f32.mrb[0].mxu0
    %v314 = vadd.f32 %v184, %v313
    %v315 = vpop.f32.mrb[0].mxu0
    %v316 = vpop.f32.mrb[0].mxu0
    %v317 = vadd.f32 %v184, %v316
    %v318 = vpop.f32.mrb[0].mxu0
    %319 = vmatprep.mubr.bf16.mxu0 0
    %320 = vmatmul.mubr.bf16.gmra.mrb[0].mxu0 %v249
    %v321 = vpop.f32.mrb[0].mxu0
    %v322 = vadd.f32 %v184, %v321
    %v323 = vpop.f32.mrb[0].mxu0
    %v324 = vpop.f32.mrb[0].mxu0
    %v325 = vadd.f32 %v184, %v324
    %v326 = vpop.f32.mrb[0].mxu0
    %327 = vmatprep.mubr.bf16.mxu0 0
    %328 = vmatmul.mubr.bf16.gmra.mrb[0].mxu0 %v252
    %v329 = vpop.f32.mrb[0].mxu0
    %v330 = vadd.f32 %v184, %v329
    %v331 = vpop.f32.mrb[0].mxu0
    %v332 = vpop.f32.mrb[0].mxu0
    %v333 = vadd.f32 %v184, %v332
    %v334 = vpop.f32.mrb[0].mxu0
    %335 = vmatprep.mubr.bf16.mxu0 0
    %336 = vmatmul.mubr.bf16.gmra.mrb[0].mxu0 %v255
    %v337 = vpop.f32.mrb[0].mxu0
    %v338 = vadd.f32 %v184, %v337
    %v339 = vpop.f32.mrb[0].mxu0
    %v340 = vpop.f32.mrb[0].mxu0
    %v341 = vadd.f32 %v184, %v340
    %v342 = vpop.f32.mrb[0].mxu0
    %343 = vmatprep.mubr.bf16.mxu0 0
    %344 = vmatmul.mubr.bf16.gmra.mrb[0].mxu0 %v258
    %v345 = vpop.f32.mrb[0].mxu0
    %v346 = vadd.f32 %v184, %v345
    %v347 = vpop.f32.mrb[0].mxu0
    %v348 = vpop.f32.mrb[0].mxu0
    %v349 = vadd.f32 %v184, %v348
    %v350 = vpop.f32.mrb[0].mxu0
    %351 = vmatprep.mubr.bf16.mxu0 0
    %352 = vmatmul.mubr.bf16.gmra.mrb[0].mxu0 %v261
    %v353 = vpop.f32.mrb[0].mxu0
    %v354 = vadd.f32 %v184, %v353
    %v355 = vpop.f32.mrb[0].mxu0
    %v356 = vpop.f32.mrb[0].mxu0
    %v357 = vadd.f32 %v184, %v356
    %v358 = vpop.f32.mrb[0].mxu0
    %359 = vdwg.mxu0
    %v360 = vsub.f32 0.0, %v298
    %v361 = vsub.f32 0.0, %v301
    %v362 = vsub.f32 0.0, %v306
    %v363 = vsub.f32 0.0, %v309
    %v364 = vsub.f32 0.0, %v314
    %v365 = vsub.f32 0.0, %v317
    %v366 = vsub.f32 0.0, %v322
    %v367 = vsub.f32 0.0, %v325
    %v368 = vsub.f32 0.0, %v330
    %v369 = vsub.f32 0.0, %v333
    %v370 = vsub.f32 0.0, %v338
    %v371 = vsub.f32 0.0, %v341
    %v372 = vsub.f32 0.0, %v346
    %v373 = vsub.f32 0.0, %v349
    %v374 = vsub.f32 0.0, %v354
    %v375 = vsub.f32 0.0, %v357
    %v376 = vmul.f32 %v360, 1.442695
    %v377 = vpow.pop %v376
    %v378 = vmul.f32 %v361, 1.442695
    %v379 = vpow.pop %v378
    %v380 = vmul.f32 %v362, 1.442695
    %v381 = vpow.pop %v380
    %v382 = vmul.f32 %v363, 1.442695
    %v383 = vpow.pop %v382
    %v384 = vmul.f32 %v364, 1.442695
    %v385 = vpow.pop %v384
    %v386 = vmul.f32 %v365, 1.442695
    %v387 = vpow.pop %v386
    %v388 = vmul.f32 %v366, 1.442695
    %v389 = vpow.pop %v388
    %v390 = vmul.f32 %v367, 1.442695
    %v391 = vpow.pop %v390
    %v392 = vmul.f32 %v368, 1.442695
    %v393 = vpow.pop %v392
    %v394 = vmul.f32 %v369, 1.442695
    %v395 = vpow.pop %v394
    %v396 = vmul.f32 %v370, 1.442695
    %v397 = vpow.pop %v396
    %v398 = vmul.f32 %v371, 1.442695
    %v399 = vpow.pop %v398
    %v400 = vmul.f32 %v372, 1.442695
    %v401 = vpow.pop %v400
    %v402 = vmul.f32 %v373, 1.442695
    %v403 = vpow.pop %v402
    %v404 = vmul.f32 %v374, 1.442695
    %v405 = vpow.pop %v404
    %v406 = vmul.f32 %v375, 1.442695
    %v407 = vpow.pop %v406
    %v408 = vadd.f32 %v377, 1.0
    %v409 = vadd.f32 %v379, 1.0
    %v410 = vadd.f32 %v381, 1.0
    %v411 = vadd.f32 %v383, 1.0
    %v412 = vadd.f32 %v385, 1.0
    %v413 = vadd.f32 %v387, 1.0
    %v414 = vadd.f32 %v389, 1.0
    %v415 = vadd.f32 %v391, 1.0
    %v416 = vadd.f32 %v393, 1.0
    %v417 = vadd.f32 %v395, 1.0
    %v418 = vadd.f32 %v397, 1.0
    %v419 = vadd.f32 %v399, 1.0
    %v420 = vadd.f32 %v401, 1.0
    %v421 = vadd.f32 %v403, 1.0
    %v422 = vadd.f32 %v405, 1.0
    %v423 = vadd.f32 %v407, 1.0
    %v424 = vrcp.pop %v408
    %v425 = vrcp.pop %v409
    %v426 = vrcp.pop %v410
    %v427 = vrcp.pop %v411
    %v428 = vrcp.pop %v412
    %v429 = vrcp.pop %v413
    %v430 = vrcp.pop %v414
    %v431 = vrcp.pop %v415
    %v432 = vrcp.pop %v416
    %v433 = vrcp.pop %v417
    %v434 = vrcp.pop %v418
    %v435 = vrcp.pop %v419
    %v436 = vrcp.pop %v420
    %v437 = vrcp.pop %v421
    %v438 = vrcp.pop %v422
    %v439 = vrcp.pop %v423
    %v440 = vpack.c.bf16 %v425, %v424
    %v441 = vpack.c.bf16 %v427, %v426
    %v442 = vpack.c.bf16 %v429, %v428
    %v443 = vpack.c.bf16 %v431, %v430
    %v444 = vpack.c.bf16 %v433, %v432
    %v445 = vpack.c.bf16 %v435, %v434
    %v446 = vpack.c.bf16 %v437, %v436
    %v447 = vpack.c.bf16 %v439, %v438
    %v464 = vunpack.c.l.b16 %v159
    %v465 = vunpack.c.l.b16 %v160
    %v466 = vunpack.c.l.b16 %v161
    %v467 = vunpack.c.l.b16 %v162
    %v468 = vunpack.c.l.b16 %v163
    %v469 = vunpack.c.l.b16 %v164
    %v470 = vunpack.c.l.b16 %v165
    %v471 = vunpack.c.l.b16 %v166
    %v472 = vunpack.c.l.b16 %v167
    %v473 = vunpack.c.l.b16 %v168
    %v474 = vunpack.c.l.b16 %v169
    %v475 = vunpack.c.l.b16 %v170
    %v476 = vunpack.c.l.b16 %v171
    %v477 = vunpack.c.l.b16 %v172
    %v478 = vunpack.c.l.b16 %v173
    %v479 = vunpack.c.l.b16 %v174
    %v480 = vpack.c.b16 %v465, %v464
    %v481 = vpack.c.b16 %v467, %v466
    %v482 = vpack.c.b16 %v469, %v468
    %v483 = vpack.c.b16 %v471, %v470
    %v484 = vpack.c.b16 %v473, %v472
    %v485 = vpack.c.b16 %v475, %v474
    %v486 = vpack.c.b16 %v477, %v476
    %v487 = vpack.c.b16 %v479, %v478
    %v489 = vsel %vm238, %v480, 0
    %v492 = vsel %vm238, %v481, 0
    %v495 = vsel %vm238, %v482, 0
    %v498 = vsel %vm238, %v483, 0
    %v501 = vsel %vm238, %v484, 0
    %v504 = vsel %vm238, %v485, 0
    %v507 = vsel %vm238, %v486, 0
    %v510 = vsel %vm238, %v487, 0
    %512 = vmatprep.subr.bf16.mxu0 0
    %513 = vmatpush1.bf16.msra.mxu0 %v234
    %514 = vmatprep.subr.bf16.mxu0 0
    %515 = vmatpush1.bf16.msra.mxu0 %v235
    %516 = vmatprep.subr.bf16.mxu0 0
    %517 = vmatpush1.bf16.msra.mxu0 0
    %518 = vmatprep.subr.bf16.mxu0 0
    %519 = vmatpush1.bf16.msra.mxu0 0
    %520 = vmatprep.subr.bf16.mxu0 0
    %521 = vmatpush1.bf16.msra.mxu0 0
    %522 = vmatprep.subr.bf16.mxu0 0
    %523 = vmatpush1.bf16.msra.mxu0 0
    %524 = vmatprep.subr.bf16.mxu0 0
    %525 = vmatpush1.bf16.msra.mxu0 0
    %526 = vmatprep.subr.bf16.mxu0 0
    %527 = vmatpush1.bf16.msra.mxu0 0
    %528 = vmatprep.subr.bf16.mxu0 0
    %529 = vmatpush1.bf16.msra.mxu0 0
    %530 = vmatprep.subr.bf16.mxu0 0
    %531 = vmatpush1.bf16.msra.mxu0 0
    %532 = vmatprep.subr.bf16.mxu0 0
    %533 = vmatpush1.bf16.msra.mxu0 0
    %534 = vmatprep.subr.bf16.mxu0 0
    %535 = vmatpush1.bf16.msra.mxu0 0
    %536 = vmatprep.subr.bf16.mxu0 0
    %537 = vmatpush1.bf16.msra.mxu0 0
    %538 = vmatprep.subr.bf16.mxu0 0
    %539 = vmatpush1.bf16.msra.mxu0 0
    %540 = vmatprep.subr.bf16.mxu0 0
    %541 = vmatpush1.bf16.msra.mxu0 0
    %542 = vmatprep.subr.bf16.mxu0 0
    %543 = vmatpush1.bf16.msra.mxu0 0
    %544 = vmatprep.mubr.bf16.mxu0 0
    %545 = vmatmul.mubr.bf16.gmra.mrb[0].mxu0 %v489
    %v546 = vpop.f32.mrb[0].mxu0
    %v547 = vadd.f32 %v184, %v546
    %v548 = vpop.f32.mrb[0].mxu0
    %v549 = vpop.f32.mrb[0].mxu0
    %v550 = vadd.f32 %v184, %v549
    %v551 = vpop.f32.mrb[0].mxu0
    %552 = vmatprep.mubr.bf16.mxu0 0
    %553 = vmatmul.mubr.bf16.gmra.mrb[0].mxu0 %v492
    %v554 = vpop.f32.mrb[0].mxu0
    %v555 = vadd.f32 %v184, %v554
    %v556 = vpop.f32.mrb[0].mxu0
    %v557 = vpop.f32.mrb[0].mxu0
    %v558 = vadd.f32 %v184, %v557
    %v559 = vpop.f32.mrb[0].mxu0
    %560 = vmatprep.mubr.bf16.mxu0 0
    %561 = vmatmul.mubr.bf16.gmra.mrb[0].mxu0 %v495
    %v562 = vpop.f32.mrb[0].mxu0
    %v563 = vadd.f32 %v184, %v562
    %v564 = vpop.f32.mrb[0].mxu0
    %v565 = vpop.f32.mrb[0].mxu0
    %v566 = vadd.f32 %v184, %v565
    %v567 = vpop.f32.mrb[0].mxu0
    %568 = vmatprep.mubr.bf16.mxu0 0
    %569 = vmatmul.mubr.bf16.gmra.mrb[0].mxu0 %v498
    %v570 = vpop.f32.mrb[0].mxu0
    %v571 = vadd.f32 %v184, %v570
    %v572 = vpop.f32.mrb[0].mxu0
    %v573 = vpop.f32.mrb[0].mxu0
    %v574 = vadd.f32 %v184, %v573
    %v575 = vpop.f32.mrb[0].mxu0
    %576 = vmatprep.mubr.bf16.mxu0 0
    %577 = vmatmul.mubr.bf16.gmra.mrb[0].mxu0 %v501
    %v578 = vpop.f32.mrb[0].mxu0
    %v579 = vadd.f32 %v184, %v578
    %v580 = vpop.f32.mrb[0].mxu0
    %v581 = vpop.f32.mrb[0].mxu0
    %v582 = vadd.f32 %v184, %v581
    %v583 = vpop.f32.mrb[0].mxu0
    %584 = vmatprep.mubr.bf16.mxu0 0
    %585 = vmatmul.mubr.bf16.gmra.mrb[0].mxu0 %v504
    %v586 = vpop.f32.mrb[0].mxu0
    %v587 = vadd.f32 %v184, %v586
    %v588 = vpop.f32.mrb[0].mxu0
    %v589 = vpop.f32.mrb[0].mxu0
    %v590 = vadd.f32 %v184, %v589
    %v591 = vpop.f32.mrb[0].mxu0
    %592 = vmatprep.mubr.bf16.mxu0 0
    %593 = vmatmul.mubr.bf16.gmra.mrb[0].mxu0 %v507
    %v594 = vpop.f32.mrb[0].mxu0
    %v595 = vadd.f32 %v184, %v594
    %v596 = vpop.f32.mrb[0].mxu0
    %v597 = vpop.f32.mrb[0].mxu0
    %v598 = vadd.f32 %v184, %v597
    %v599 = vpop.f32.mrb[0].mxu0
    %600 = vmatprep.mubr.bf16.mxu0 0
    %601 = vmatmul.mubr.bf16.gmra.mrb[0].mxu0 %v510
    %v602 = vpop.f32.mrb[0].mxu0
    %v603 = vadd.f32 %v184, %v602
    %v604 = vpop.f32.mrb[0].mxu0
    %v605 = vpop.f32.mrb[0].mxu0
    %v606 = vadd.f32 %v184, %v605
    %v607 = vpop.f32.mrb[0].mxu0
    %608 = vdwg.mxu0
    %v609 = vsub.f32 0.0, %v547
    %v610 = vsub.f32 0.0, %v550
    %v611 = vsub.f32 0.0, %v555
    %v612 = vsub.f32 0.0, %v558
    %v613 = vsub.f32 0.0, %v563
    %v614 = vsub.f32 0.0, %v566
    %v615 = vsub.f32 0.0, %v571
    %v616 = vsub.f32 0.0, %v574
    %v617 = vsub.f32 0.0, %v579
    %v618 = vsub.f32 0.0, %v582
    %v619 = vsub.f32 0.0, %v587
    %v620 = vsub.f32 0.0, %v590
    %v621 = vsub.f32 0.0, %v595
    %v622 = vsub.f32 0.0, %v598
    %v623 = vsub.f32 0.0, %v603
    %v624 = vsub.f32 0.0, %v606
    %v625 = vmul.f32 %v609, 1.442695
    %v626 = vpow.pop %v625
    %v627 = vmul.f32 %v610, 1.442695
    %v628 = vpow.pop %v627
    %v629 = vmul.f32 %v611, 1.442695
    %v630 = vpow.pop %v629
    %v631 = vmul.f32 %v612, 1.442695
    %v632 = vpow.pop %v631
    %v633 = vmul.f32 %v613, 1.442695
    %v634 = vpow.pop %v633
    %v635 = vmul.f32 %v614, 1.442695
    %v636 = vpow.pop %v635
    %v637 = vmul.f32 %v615, 1.442695
    %v638 = vpow.pop %v637
    %v639 = vmul.f32 %v616, 1.442695
    %v640 = vpow.pop %v639
    %v641 = vmul.f32 %v617, 1.442695
    %v642 = vpow.pop %v641
    %v643 = vmul.f32 %v618, 1.442695
    %v644 = vpow.pop %v643
    %v645 = vmul.f32 %v619, 1.442695
    %v646 = vpow.pop %v645
    %v647 = vmul.f32 %v620, 1.442695
    %v648 = vpow.pop %v647
    %v649 = vmul.f32 %v621, 1.442695
    %v650 = vpow.pop %v649
    %v651 = vmul.f32 %v622, 1.442695
    %v652 = vpow.pop %v651
    %v653 = vmul.f32 %v623, 1.442695
    %v654 = vpow.pop %v653
    %v655 = vmul.f32 %v624, 1.442695
    %v656 = vpow.pop %v655
    %v657 = vadd.f32 %v626, 1.0
    %v658 = vadd.f32 %v628, 1.0
    %v659 = vadd.f32 %v630, 1.0
    %v660 = vadd.f32 %v632, 1.0
    %v661 = vadd.f32 %v634, 1.0
    %v662 = vadd.f32 %v636, 1.0
    %v663 = vadd.f32 %v638, 1.0
    %v664 = vadd.f32 %v640, 1.0
    %v665 = vadd.f32 %v642, 1.0
    %v666 = vadd.f32 %v644, 1.0
    %v667 = vadd.f32 %v646, 1.0
    %v668 = vadd.f32 %v648, 1.0
    %v669 = vadd.f32 %v650, 1.0
    %v670 = vadd.f32 %v652, 1.0
    %v671 = vadd.f32 %v654, 1.0
    %v672 = vadd.f32 %v656, 1.0
    %v673 = vrcp.pop %v657
    %v674 = vrcp.pop %v658
    %v675 = vrcp.pop %v659
    %v676 = vrcp.pop %v660
    %v677 = vrcp.pop %v661
    %v678 = vrcp.pop %v662
    %v679 = vrcp.pop %v663
    %v680 = vrcp.pop %v664
    %v681 = vrcp.pop %v665
    %v682 = vrcp.pop %v666
    %v683 = vrcp.pop %v667
    %v684 = vrcp.pop %v668
    %v685 = vrcp.pop %v669
    %v686 = vrcp.pop %v670
    %v687 = vrcp.pop %v671
    %v688 = vrcp.pop %v672
    %v689 = vpack.c.bf16 %v674, %v673
    %v690 = vpack.c.bf16 %v676, %v675
    %v691 = vpack.c.bf16 %v678, %v677
    %v692 = vpack.c.bf16 %v680, %v679
    %v693 = vpack.c.bf16 %v682, %v681
    %v694 = vpack.c.bf16 %v684, %v683
    %v695 = vpack.c.bf16 %v686, %v685
    %v696 = vpack.c.bf16 %v688, %v687
    %v697 = vld [vmem:[%s3] sm:$0xff]
    %v698 = vld [vmem:[%s3 + $0x8] sm:$0xff]
    %v699 = vld [vmem:[%s3 + $0x10] sm:$0xff]
    %v700 = vld [vmem:[%s3 + $0x18] sm:$0xff]
    %v701 = vld [vmem:[%s3 + $0x20] sm:$0xff]
    %v702 = vld [vmem:[%s3 + $0x28] sm:$0xff]
    %v703 = vld [vmem:[%s3 + $0x30] sm:$0xff]
    %v704 = vld [vmem:[%s3 + $0x38] sm:$0xff]
    %v705 = vld [vmem:[%s3 + $0x40] sm:$0xff]
    %v706 = vld [vmem:[%s3 + $0x48] sm:$0xff]
    %v707 = vld [vmem:[%s3 + $0x50] sm:$0xff]
    %v708 = vld [vmem:[%s3 + $0x58] sm:$0xff]
    %v709 = vld [vmem:[%s3 + $0x60] sm:$0xff]
    %v710 = vld [vmem:[%s3 + $0x68] sm:$0xff]
    %v711 = vld [vmem:[%s3 + $0x70] sm:$0xff]
    %v712 = vld [vmem:[%s3 + $0x78] sm:$0xff]
    %v713 = vld [vmem:[#allocation6] sm:$0x3]
    %v715 = vlaneseq
    %v716 = vshrl.u32 %v715, 7
    %v717 = vsub.s32 0, %v716
    %v718 = vrot.slane %v713, %v717
    %v719 = vlaneseq
    %v720 = vshrl.u32 %v719, 7
    %v721 = vsub.s32 1, %v720
    %v722 = vrot.slane %v713, %v721
    %v741 = vunpack.c.l.b16 %v697
    %v742 = vunpack.c.h.b16 %v697
    %v743 = vunpack.c.l.b16 %v698
    %v744 = vunpack.c.h.b16 %v698
    %v745 = vunpack.c.l.b16 %v699
    %v746 = vunpack.c.h.b16 %v699
    %v747 = vunpack.c.l.b16 %v700
    %v748 = vunpack.c.h.b16 %v700
    %v749 = vunpack.c.l.b16 %v701
    %v750 = vunpack.c.h.b16 %v701
    %v751 = vunpack.c.l.b16 %v702
    %v752 = vunpack.c.h.b16 %v702
    %v753 = vunpack.c.l.b16 %v703
    %v754 = vunpack.c.h.b16 %v703
    %v755 = vunpack.c.l.b16 %v704
    %v756 = vunpack.c.h.b16 %v704
    %v757 = vunpack.c.l.b16 %v705
    %v758 = vunpack.c.h.b16 %v705
    %v759 = vunpack.c.l.b16 %v706
    %v760 = vunpack.c.h.b16 %v706
    %v761 = vunpack.c.l.b16 %v707
    %v762 = vunpack.c.h.b16 %v707
    %v763 = vunpack.c.l.b16 %v708
    %v764 = vunpack.c.h.b16 %v708
    %v765 = vunpack.c.l.b16 %v709
    %v766 = vunpack.c.h.b16 %v709
    %v767 = vunpack.c.l.b16 %v710
    %v768 = vunpack.c.h.b16 %v710
    %v769 = vunpack.c.l.b16 %v711
    %v770 = vunpack.c.h.b16 %v711
    %v771 = vunpack.c.l.b16 %v712
    %v772 = vunpack.c.h.b16 %v712
    %v773 = vpack.c.b16 %v743, %v741
    %v774 = vpack.c.b16 %v744, %v742
    %v775 = vpack.c.b16 %v747, %v745
    %v776 = vpack.c.b16 %v748, %v746
    %v777 = vpack.c.b16 %v751, %v749
    %v778 = vpack.c.b16 %v752, %v750
    %v779 = vpack.c.b16 %v755, %v753
    %v780 = vpack.c.b16 %v756, %v754
    %v781 = vpack.c.b16 %v759, %v757
    %v782 = vpack.c.b16 %v760, %v758
    %v783 = vpack.c.b16 %v763, %v761
    %v784 = vpack.c.b16 %v764, %v762
    %v785 = vpack.c.b16 %v767, %v765
    %v786 = vpack.c.b16 %v768, %v766
    %v787 = vpack.c.b16 %v771, %v769
    %v788 = vpack.c.b16 %v772, %v770
    %805 = vmatprep.subr.bf16.mxu0 %v774
    %806 = vmatpush1.bf16.msra.mxu0 %v773
    %807 = vmatprep.subr.bf16.mxu0 %v776
    %808 = vmatpush1.bf16.msra.mxu0 %v775
    %809 = vmatprep.subr.bf16.mxu0 %v778
    %810 = vmatpush1.bf16.msra.mxu0 %v777
    %811 = vmatprep.subr.bf16.mxu0 %v780
    %812 = vmatpush1.bf16.msra.mxu0 %v779
    %813 = vmatprep.subr.bf16.mxu0 %v782
    %814 = vmatpush1.bf16.msra.mxu0 %v781
    %815 = vmatprep.subr.bf16.mxu0 %v784
    %816 = vmatpush1.bf16.msra.mxu0 %v783
    %817 = vmatprep.subr.bf16.mxu0 %v786
    %818 = vmatpush1.bf16.msra.mxu0 %v785
    %819 = vmatprep.subr.bf16.mxu0 %v788
    %820 = vmatpush1.bf16.msra.mxu0 %v787
    %821 = vmatprep.subr.bf16.mxu0 0
    %822 = vmatpush1.bf16.msra.mxu0 0
    %823 = vmatprep.subr.bf16.mxu0 0
    %824 = vmatpush1.bf16.msra.mxu0 0
    %825 = vmatprep.subr.bf16.mxu0 0
    %826 = vmatpush1.bf16.msra.mxu0 0
    %827 = vmatprep.subr.bf16.mxu0 0
    %828 = vmatpush1.bf16.msra.mxu0 0
    %829 = vmatprep.subr.bf16.mxu0 0
    %830 = vmatpush1.bf16.msra.mxu0 0
    %831 = vmatprep.subr.bf16.mxu0 0
    %832 = vmatpush1.bf16.msra.mxu0 0
    %833 = vmatprep.subr.bf16.mxu0 0
    %834 = vmatpush1.bf16.msra.mxu0 0
    %835 = vmatprep.subr.bf16.mxu0 0
    %836 = vmatpush1.bf16.msra.mxu0 0
    %837 = vmatprep.mubr.bf16.mxu0 0
    %838 = vmatmul.mubr.bf16.gmra.mrb[0].mxu0 %v440
    %v839 = vpop.f32.mrb[0].mxu0
    %v840 = vadd.f32 %v718, %v839
    %v841 = vpop.f32.mrb[0].mxu0
    %v842 = vadd.f32 %v722, %v841
    %v843 = vpop.f32.mrb[0].mxu0
    %v844 = vadd.f32 %v718, %v843
    %v845 = vpop.f32.mrb[0].mxu0
    %v846 = vadd.f32 %v722, %v845
    %847 = vmatprep.mubr.bf16.mxu0 0
    %848 = vmatmul.mubr.bf16.gmra.mrb[0].mxu0 %v441
    %v849 = vpop.f32.mrb[0].mxu0
    %v850 = vadd.f32 %v718, %v849
    %v851 = vpop.f32.mrb[0].mxu0
    %v852 = vadd.f32 %v722, %v851
    %v853 = vpop.f32.mrb[0].mxu0
    %v854 = vadd.f32 %v718, %v853
    %v855 = vpop.f32.mrb[0].mxu0
    %v856 = vadd.f32 %v722, %v855
    %857 = vmatprep.mubr.bf16.mxu0 0
    %858 = vmatmul.mubr.bf16.gmra.mrb[0].mxu0 %v442
    %v859 = vpop.f32.mrb[0].mxu0
    %v860 = vadd.f32 %v718, %v859
    %v861 = vpop.f32.mrb[0].mxu0
    %v862 = vadd.f32 %v722, %v861
    %v863 = vpop.f32.mrb[0].mxu0
    %v864 = vadd.f32 %v718, %v863
    %v865 = vpop.f32.mrb[0].mxu0
    %v866 = vadd.f32 %v722, %v865
    %867 = vmatprep.mubr.bf16.mxu0 0
    %868 = vmatmul.mubr.bf16.gmra.mrb[0].mxu0 %v443
    %v869 = vpop.f32.mrb[0].mxu0
    %v870 = vadd.f32 %v718, %v869
    %v871 = vpop.f32.mrb[0].mxu0
    %v872 = vadd.f32 %v722, %v871
    %v873 = vpop.f32.mrb[0].mxu0
    %v874 = vadd.f32 %v718, %v873
    %v875 = vpop.f32.mrb[0].mxu0
    %v876 = vadd.f32 %v722, %v875
    %877 = vmatprep.mubr.bf16.mxu0 0
    %878 = vmatmul.mubr.bf16.gmra.mrb[0].mxu0 %v444
    %v879 = vpop.f32.mrb[0].mxu0
    %v880 = vadd.f32 %v718, %v879
    %v881 = vpop.f32.mrb[0].mxu0
    %v882 = vadd.f32 %v722, %v881
    %v883 = vpop.f32.mrb[0].mxu0
    %v884 = vadd.f32 %v718, %v883
    %v885 = vpop.f32.mrb[0].mxu0
    %v886 = vadd.f32 %v722, %v885
    %887 = vmatprep.mubr.bf16.mxu0 0
    %888 = vmatmul.mubr.bf16.gmra.mrb[0].mxu0 %v445
    %v889 = vpop.f32.mrb[0].mxu0
    %v890 = vadd.f32 %v718, %v889
    %v891 = vpop.f32.mrb[0].mxu0
    %v892 = vadd.f32 %v722, %v891
    %v893 = vpop.f32.mrb[0].mxu0
    %v894 = vadd.f32 %v718, %v893
    %v895 = vpop.f32.mrb[0].mxu0
    %v896 = vadd.f32 %v722, %v895
    %897 = vmatprep.mubr.bf16.mxu0 0
    %898 = vmatmul.mubr.bf16.gmra.mrb[0].mxu0 %v446
    %v899 = vpop.f32.mrb[0].mxu0
    %v900 = vadd.f32 %v718, %v899
    %v901 = vpop.f32.mrb[0].mxu0
    %v902 = vadd.f32 %v722, %v901
    %v903 = vpop.f32.mrb[0].mxu0
    %v904 = vadd.f32 %v718, %v903
    %v905 = vpop.f32.mrb[0].mxu0
    %v906 = vadd.f32 %v722, %v905
    %907 = vmatprep.mubr.bf16.mxu0 0
    %908 = vmatmul.mubr.bf16.gmra.mrb[0].mxu0 %v447
    %v909 = vpop.f32.mrb[0].mxu0
    %v910 = vadd.f32 %v718, %v909
    %v911 = vpop.f32.mrb[0].mxu0
    %v912 = vadd.f32 %v722, %v911
    %v913 = vpop.f32.mrb[0].mxu0
    %v914 = vadd.f32 %v718, %v913
    %v915 = vpop.f32.mrb[0].mxu0
    %v916 = vadd.f32 %v722, %v915
    %917 = vdwg.mxu0
    %v918 = vsub.f32 0.0, %v840
    %v919 = vsub.f32 0.0, %v842
    %v920 = vsub.f32 0.0, %v844
    %v921 = vsub.f32 0.0, %v846
    %v922 = vsub.f32 0.0, %v850
    %v923 = vsub.f32 0.0, %v852
    %v924 = vsub.f32 0.0, %v854
    %v925 = vsub.f32 0.0, %v856
    %v926 = vsub.f32 0.0, %v860
    %v927 = vsub.f32 0.0, %v862
    %v928 = vsub.f32 0.0, %v864
    %v929 = vsub.f32 0.0, %v866
    %v930 = vsub.f32 0.0, %v870
    %v931 = vsub.f32 0.0, %v872
    %v932 = vsub.f32 0.0, %v874
    %v933 = vsub.f32 0.0, %v876
    %v934 = vsub.f32 0.0, %v880
    %v935 = vsub.f32 0.0, %v882
    %v936 = vsub.f32 0.0, %v884
    %v937 = vsub.f32 0.0, %v886
    %v938 = vsub.f32 0.0, %v890
    %v939 = vsub.f32 0.0, %v892
    %v940 = vsub.f32 0.0, %v894
    %v941 = vsub.f32 0.0, %v896
    %v942 = vsub.f32 0.0, %v900
    %v943 = vsub.f32 0.0, %v902
    %v944 = vsub.f32 0.0, %v904
    %v945 = vsub.f32 0.0, %v906
    %v946 = vsub.f32 0.0, %v910
    %v947 = vsub.f32 0.0, %v912
    %v948 = vsub.f32 0.0, %v914
    %v949 = vsub.f32 0.0, %v916
    %v950 = vmul.f32 %v918, 1.442695
    %v951 = vpow.pop %v950
    %v952 = vmul.f32 %v919, 1.442695
    %v953 = vpow.pop %v952
    %v954 = vmul.f32 %v920, 1.442695
    %v955 = vpow.pop %v954
    %v956 = vmul.f32 %v921, 1.442695
    %v957 = vpow.pop %v956
    %v958 = vmul.f32 %v922, 1.442695
    %v959 = vpow.pop %v958
    %v960 = vmul.f32 %v923, 1.442695
    %v961 = vpow.pop %v960
    %v962 = vmul.f32 %v924, 1.442695
    %v963 = vpow.pop %v962
    %v964 = vmul.f32 %v925, 1.442695
    %v965 = vpow.pop %v964
    %v966 = vmul.f32 %v926, 1.442695
    %v967 = vpow.pop %v966
    %v968 = vmul.f32 %v927, 1.442695
    %v969 = vpow.pop %v968
    %v970 = vmul.f32 %v928, 1.442695
    %v971 = vpow.pop %v970
    %v972 = vmul.f32 %v929, 1.442695
    %v973 = vpow.pop %v972
    %v974 = vmul.f32 %v930, 1.442695
    %v975 = vpow.pop %v974
    %v976 = vmul.f32 %v931, 1.442695
    %v977 = vpow.pop %v976
    %v978 = vmul.f32 %v932, 1.442695
    %v979 = vpow.pop %v978
    %v980 = vmul.f32 %v933, 1.442695
    %v981 = vpow.pop %v980
    %v982 = vmul.f32 %v934, 1.442695
    %v983 = vpow.pop %v982
    %v984 = vmul.f32 %v935, 1.442695
    %v985 = vpow.pop %v984
    %v986 = vmul.f32 %v936, 1.442695
    %v987 = vpow.pop %v986
    %v988 = vmul.f32 %v937, 1.442695
    %v989 = vpow.pop %v988
    %v990 = vmul.f32 %v938, 1.442695
    %v991 = vpow.pop %v990
    %v992 = vmul.f32 %v939, 1.442695
    %v993 = vpow.pop %v992
    %v994 = vmul.f32 %v940, 1.442695
    %v995 = vpow.pop %v994
    %v996 = vmul.f32 %v941, 1.442695
    %v997 = vpow.pop %v996
    %v998 = vmul.f32 %v942, 1.442695
    %v999 = vpow.pop %v998
    %v1000 = vmul.f32 %v943, 1.442695
    %v1001 = vpow.pop %v1000
    %v1002 = vmul.f32 %v944, 1.442695
    %v1003 = vpow.pop %v1002
    %v1004 = vmul.f32 %v945, 1.442695
    %v1005 = vpow.pop %v1004
    %v1006 = vmul.f32 %v946, 1.442695
    %v1007 = vpow.pop %v1006
    %v1008 = vmul.f32 %v947, 1.442695
    %v1009 = vpow.pop %v1008
    %v1010 = vmul.f32 %v948, 1.442695
    %v1011 = vpow.pop %v1010
    %v1012 = vmul.f32 %v949, 1.442695
    %v1013 = vpow.pop %v1012
    %v1014 = vadd.f32 %v951, 1.0
    %v1015 = vadd.f32 %v953, 1.0
    %v1016 = vadd.f32 %v955, 1.0
    %v1017 = vadd.f32 %v957, 1.0
    %v1018 = vadd.f32 %v959, 1.0
    %v1019 = vadd.f32 %v961, 1.0
    %v1020 = vadd.f32 %v963, 1.0
    %v1021 = vadd.f32 %v965, 1.0
    %v1022 = vadd.f32 %v967, 1.0
    %v1023 = vadd.f32 %v969, 1.0
    %v1024 = vadd.f32 %v971, 1.0
    %v1025 = vadd.f32 %v973, 1.0
    %v1026 = vadd.f32 %v975, 1.0
    %v1027 = vadd.f32 %v977, 1.0
    %v1028 = vadd.f32 %v979, 1.0
    %v1029 = vadd.f32 %v981, 1.0
    %v1030 = vadd.f32 %v983, 1.0
    %v1031 = vadd.f32 %v985, 1.0
    %v1032 = vadd.f32 %v987, 1.0
    %v1033 = vadd.f32 %v989, 1.0
    %v1034 = vadd.f32 %v991, 1.0
    %v1035 = vadd.f32 %v993, 1.0
    %v1036 = vadd.f32 %v995, 1.0
    %v1037 = vadd.f32 %v997, 1.0
    %v1038 = vadd.f32 %v999, 1.0
    %v1039 = vadd.f32 %v1001, 1.0
    %v1040 = vadd.f32 %v1003, 1.0
    %v1041 = vadd.f32 %v1005, 1.0
    %v1042 = vadd.f32 %v1007, 1.0
    %v1043 = vadd.f32 %v1009, 1.0
    %v1044 = vadd.f32 %v1011, 1.0
    %v1045 = vadd.f32 %v1013, 1.0
    %v1046 = vrcp.pop %v1014
    %v1047 = vrcp.pop %v1015
    %v1048 = vrcp.pop %v1016
    %v1049 = vrcp.pop %v1017
    %v1050 = vrcp.pop %v1018
    %v1051 = vrcp.pop %v1019
    %v1052 = vrcp.pop %v1020
    %v1053 = vrcp.pop %v1021
    %v1054 = vrcp.pop %v1022
    %v1055 = vrcp.pop %v1023
    %v1056 = vrcp.pop %v1024
    %v1057 = vrcp.pop %v1025
    %v1058 = vrcp.pop %v1026
    %v1059 = vrcp.pop %v1027
    %v1060 = vrcp.pop %v1028
    %v1061 = vrcp.pop %v1029
    %v1062 = vrcp.pop %v1030
    %v1063 = vrcp.pop %v1031
    %v1064 = vrcp.pop %v1032
    %v1065 = vrcp.pop %v1033
    %v1066 = vrcp.pop %v1034
    %v1067 = vrcp.pop %v1035
    %v1068 = vrcp.pop %v1036
    %v1069 = vrcp.pop %v1037
    %v1070 = vrcp.pop %v1038
    %v1071 = vrcp.pop %v1039
    %v1072 = vrcp.pop %v1040
    %v1073 = vrcp.pop %v1041
    %v1074 = vrcp.pop %v1042
    %v1075 = vrcp.pop %v1043
    %v1076 = vrcp.pop %v1044
    %v1077 = vrcp.pop %v1045
    %v1078 = vpack.c.bf16 %v1048, %v1046
    %v1079 = vpack.c.bf16 %v1049, %v1047
    %v1080 = vpack.c.bf16 %v1052, %v1050
    %v1081 = vpack.c.bf16 %v1053, %v1051
    %v1082 = vpack.c.bf16 %v1056, %v1054
    %v1083 = vpack.c.bf16 %v1057, %v1055
    %v1084 = vpack.c.bf16 %v1060, %v1058
    %v1085 = vpack.c.bf16 %v1061, %v1059
    %v1086 = vpack.c.bf16 %v1064, %v1062
    %v1087 = vpack.c.bf16 %v1065, %v1063
    %v1088 = vpack.c.bf16 %v1068, %v1066
    %v1089 = vpack.c.bf16 %v1069, %v1067
    %v1090 = vpack.c.bf16 %v1072, %v1070
    %v1091 = vpack.c.bf16 %v1073, %v1071
    %v1092 = vpack.c.bf16 %v1076, %v1074
    %v1093 = vpack.c.bf16 %v1077, %v1075
    %1094 = vmatprep.subr.bf16.mxu0 %v774
    %1095 = vmatpush1.bf16.msra.mxu0 %v773
    %1096 = vmatprep.subr.bf16.mxu0 %v776
    %1097 = vmatpush1.bf16.msra.mxu0 %v775
    %1098 = vmatprep.subr.bf16.mxu0 %v778
    %1099 = vmatpush1.bf16.msra.mxu0 %v777
    %1100 = vmatprep.subr.bf16.mxu0 %v780
    %1101 = vmatpush1.bf16.msra.mxu0 %v779
    %1102 = vmatprep.subr.bf16.mxu0 %v782
    %1103 = vmatpush1.bf16.msra.mxu0 %v781
    %1104 = vmatprep.subr.bf16.mxu0 %v784
    %1105 = vmatpush1.bf16.msra.mxu0 %v783
    %1106 = vmatprep.subr.bf16.mxu0 %v786
    %1107 = vmatpush1.bf16.msra.mxu0 %v785
    %1108 = vmatprep.subr.bf16.mxu0 %v788
    %1109 = vmatpush1.bf16.msra.mxu0 %v787
    %1110 = vmatprep.subr.bf16.mxu0 0
    %1111 = vmatpush1.bf16.msra.mxu0 0
    %1112 = vmatprep.subr.bf16.mxu0 0
    %1113 = vmatpush1.bf16.msra.mxu0 0
    %1114 = vmatprep.subr.bf16.mxu0 0
    %1115 = vmatpush1.bf16.msra.mxu0 0
    %1116 = vmatprep.subr.bf16.mxu0 0
    %1117 = vmatpush1.bf16.msra.mxu0 0
    %1118 = vmatprep.subr.bf16.mxu0 0
    %1119 = vmatpush1.bf16.msra.mxu0 0
    %1120 = vmatprep.subr.bf16.mxu0 0
    %1121 = vmatpush1.bf16.msra.mxu0 0
    %1122 = vmatprep.subr.bf16.mxu0 0
    %1123 = vmatpush1.bf16.msra.mxu0 0
    %1124 = vmatprep.subr.bf16.mxu0 0
    %1125 = vmatpush1.bf16.msra.mxu0 0
    %1126 = vmatprep.mubr.bf16.mxu0 0
    %1127 = vmatmul.mubr.bf16.gmra.mrb[0].mxu0 %v689
    %v1128 = vpop.f32.mrb[0].mxu0
    %v1129 = vadd.f32 %v718, %v1128
    %v1130 = vpop.f32.mrb[0].mxu0
    %v1131 = vadd.f32 %v722, %v1130
    %v1132 = vpop.f32.mrb[0].mxu0
    %v1133 = vadd.f32 %v718, %v1132
    %v1134 = vpop.f32.mrb[0].mxu0
    %v1135 = vadd.f32 %v722, %v1134
    %1136 = vmatprep.mubr.bf16.mxu0 0
    %1137 = vmatmul.mubr.bf16.gmra.mrb[0].mxu0 %v690
    %v1138 = vpop.f32.mrb[0].mxu0
    %v1139 = vadd.f32 %v718, %v1138
    %v1140 = vpop.f32.mrb[0].mxu0
    %v1141 = vadd.f32 %v722, %v1140
    %v1142 = vpop.f32.mrb[0].mxu0
    %v1143 = vadd.f32 %v718, %v1142
    %v1144 = vpop.f32.mrb[0].mxu0
    %v1145 = vadd.f32 %v722, %v1144
    %1146 = vmatprep.mubr.bf16.mxu0 0
    %1147 = vmatmul.mubr.bf16.gmra.mrb[0].mxu0 %v691
    %v1148 = vpop.f32.mrb[0].mxu0
    %v1149 = vadd.f32 %v718, %v1148
    %v1150 = vpop.f32.mrb[0].mxu0
    %v1151 = vadd.f32 %v722, %v1150
    %v1152 = vpop.f32.mrb[0].mxu0
    %v1153 = vadd.f32 %v718, %v1152
    %v1154 = vpop.f32.mrb[0].mxu0
    %v1155 = vadd.f32 %v722, %v1154
    %1156 = vmatprep.mubr.bf16.mxu0 0
    %1157 = vmatmul.mubr.bf16.gmra.mrb[0].mxu0 %v692
    %v1158 = vpop.f32.mrb[0].mxu0
    %v1159 = vadd.f32 %v718, %v1158
    %v1160 = vpop.f32.mrb[0].mxu0
    %v1161 = vadd.f32 %v722, %v1160
    %v1162 = vpop.f32.mrb[0].mxu0
    %v1163 = vadd.f32 %v718, %v1162
    %v1164 = vpop.f32.mrb[0].mxu0
    %v1165 = vadd.f32 %v722, %v1164
    %1166 = vmatprep.mubr.bf16.mxu0 0
    %1167 = vmatmul.mubr.bf16.gmra.mrb[0].mxu0 %v693
    %v1168 = vpop.f32.mrb[0].mxu0
    %v1169 = vadd.f32 %v718, %v1168
    %v1170 = vpop.f32.mrb[0].mxu0
    %v1171 = vadd.f32 %v722, %v1170
    %v1172 = vpop.f32.mrb[0].mxu0
    %v1173 = vadd.f32 %v718, %v1172
    %v1174 = vpop.f32.mrb[0].mxu0
    %v1175 = vadd.f32 %v722, %v1174
    %1176 = vmatprep.mubr.bf16.mxu0 0
    %1177 = vmatmul.mubr.bf16.gmra.mrb[0].mxu0 %v694
    %v1178 = vpop.f32.mrb[0].mxu0
    %v1179 = vadd.f32 %v718, %v1178
    %v1180 = vpop.f32.mrb[0].mxu0
    %v1181 = vadd.f32 %v722, %v1180
    %v1182 = vpop.f32.mrb[0].mxu0
    %v1183 = vadd.f32 %v718, %v1182
    %v1184 = vpop.f32.mrb[0].mxu0
    %v1185 = vadd.f32 %v722, %v1184
    %1186 = vmatprep.mubr.bf16.mxu0 0
    %1187 = vmatmul.mubr.bf16.gmra.mrb[0].mxu0 %v695
    %v1188 = vpop.f32.mrb[0].mxu0
    %v1189 = vadd.f32 %v718, %v1188
    %v1190 = vpop.f32.mrb[0].mxu0
    %v1191 = vadd.f32 %v722, %v1190
    %v1192 = vpop.f32.mrb[0].mxu0
    %v1193 = vadd.f32 %v718, %v1192
    %v1194 = vpop.f32.mrb[0].mxu0
    %v1195 = vadd.f32 %v722, %v1194
    %1196 = vmatprep.mubr.bf16.mxu0 0
    %1197 = vmatmul.mubr.bf16.gmra.mrb[0].mxu0 %v696
    %v1198 = vpop.f32.mrb[0].mxu0
    %v1199 = vadd.f32 %v718, %v1198
    %v1200 = vpop.f32.mrb[0].mxu0
    %v1201 = vadd.f32 %v722, %v1200
    %v1202 = vpop.f32.mrb[0].mxu0
    %v1203 = vadd.f32 %v718, %v1202
    %v1204 = vpop.f32.mrb[0].mxu0
    %v1205 = vadd.f32 %v722, %v1204
    %1206 = vdwg.mxu0
    %v1207 = vsub.f32 0.0, %v1129
    %v1208 = vsub.f32 0.0, %v1131
    %v1209 = vsub.f32 0.0, %v1133
    %v1210 = vsub.f32 0.0, %v1135
    %v1211 = vsub.f32 0.0, %v1139
    %v1212 = vsub.f32 0.0, %v1141
    %v1213 = vsub.f32 0.0, %v1143
    %v1214 = vsub.f32 0.0, %v1145
    %v1215 = vsub.f32 0.0, %v1149
    %v1216 = vsub.f32 0.0, %v1151
    %v1217 = vsub.f32 0.0, %v1153
    %v1218 = vsub.f32 0.0, %v1155
    %v1219 = vsub.f32 0.0, %v1159
    %v1220 = vsub.f32 0.0, %v1161
    %v1221 = vsub.f32 0.0, %v1163
    %v1222 = vsub.f32 0.0, %v1165
    %v1223 = vsub.f32 0.0, %v1169
    %v1224 = vsub.f32 0.0, %v1171
    %v1225 = vsub.f32 0.0, %v1173
    %v1226 = vsub.f32 0.0, %v1175
    %v1227 = vsub.f32 0.0, %v1179
    %v1228 = vsub.f32 0.0, %v1181
    %v1229 = vsub.f32 0.0, %v1183
    %v1230 = vsub.f32 0.0, %v1185
    %v1231 = vsub.f32 0.0, %v1189
    %v1232 = vsub.f32 0.0, %v1191
    %v1233 = vsub.f32 0.0, %v1193
    %v1234 = vsub.f32 0.0, %v1195
    %v1235 = vsub.f32 0.0, %v1199
    %v1236 = vsub.f32 0.0, %v1201
    %v1237 = vsub.f32 0.0, %v1203
    %v1238 = vsub.f32 0.0, %v1205
    %v1239 = vmul.f32 %v1207, 1.442695
    %v1240 = vpow.pop %v1239
    %v1241 = vmul.f32 %v1208, 1.442695
    %v1242 = vpow.pop %v1241
    %v1243 = vmul.f32 %v1209, 1.442695
    %v1244 = vpow.pop %v1243
    %v1245 = vmul.f32 %v1210, 1.442695
    %v1246 = vpow.pop %v1245
    %v1247 = vmul.f32 %v1211, 1.442695
    %v1248 = vpow.pop %v1247
    %v1249 = vmul.f32 %v1212, 1.442695
    %v1250 = vpow.pop %v1249
    %v1251 = vmul.f32 %v1213, 1.442695
    %v1252 = vpow.pop %v1251
    %v1253 = vmul.f32 %v1214, 1.442695
    %v1254 = vpow.pop %v1253
    %v1255 = vmul.f32 %v1215, 1.442695
    %v1256 = vpow.pop %v1255
    %v1257 = vmul.f32 %v1216, 1.442695
    %v1258 = vpow.pop %v1257
    %v1259 = vmul.f32 %v1217, 1.442695
    %v1260 = vpow.pop %v1259
    %v1261 = vmul.f32 %v1218, 1.442695
    %v1262 = vpow.pop %v1261
    %v1263 = vmul.f32 %v1219, 1.442695
    %v1264 = vpow.pop %v1263
    %v1265 = vmul.f32 %v1220, 1.442695
    %v1266 = vpow.pop %v1265
    %v1267 = vmul.f32 %v1221, 1.442695
    %v1268 = vpow.pop %v1267
    %v1269 = vmul.f32 %v1222, 1.442695
    %v1270 = vpow.pop %v1269
    %v1271 = vmul.f32 %v1223, 1.442695
    %v1272 = vpow.pop %v1271
    %v1273 = vmul.f32 %v1224, 1.442695
    %v1274 = vpow.pop %v1273
    %v1275 = vmul.f32 %v1225, 1.442695
    %v1276 = vpow.pop %v1275
    %v1277 = vmul.f32 %v1226, 1.442695
    %v1278 = vpow.pop %v1277
    %v1279 = vmul.f32 %v1227, 1.442695
    %v1280 = vpow.pop %v1279
    %v1281 = vmul.f32 %v1228, 1.442695
    %v1282 = vpow.pop %v1281
    %v1283 = vmul.f32 %v1229, 1.442695
    %v1284 = vpow.pop %v1283
    %v1285 = vmul.f32 %v1230, 1.442695
    %v1286 = vpow.pop %v1285
    %v1287 = vmul.f32 %v1231, 1.442695
    %v1288 = vpow.pop %v1287
    %v1289 = vmul.f32 %v1232, 1.442695
    %v1290 = vpow.pop %v1289
    %v1291 = vmul.f32 %v1233, 1.442695
    %v1292 = vpow.pop %v1291
    %v1293 = vmul.f32 %v1234, 1.442695
    %v1294 = vpow.pop %v1293
    %v1295 = vmul.f32 %v1235, 1.442695
    %v1296 = vpow.pop %v1295
    %v1297 = vmul.f32 %v1236, 1.442695
    %v1298 = vpow.pop %v1297
    %v1299 = vmul.f32 %v1237, 1.442695
    %v1300 = vpow.pop %v1299
    %v1301 = vmul.f32 %v1238, 1.442695
    %v1302 = vpow.pop %v1301
    %v1303 = vadd.f32 %v1240, 1.0
    %v1304 = vadd.f32 %v1242, 1.0
    %v1305 = vadd.f32 %v1244, 1.0
    %v1306 = vadd.f32 %v1246, 1.0
    %v1307 = vadd.f32 %v1248, 1.0
    %v1308 = vadd.f32 %v1250, 1.0
    %v1309 = vadd.f32 %v1252, 1.0
    %v1310 = vadd.f32 %v1254, 1.0
    %v1311 = vadd.f32 %v1256, 1.0
    %v1312 = vadd.f32 %v1258, 1.0
    %v1313 = vadd.f32 %v1260, 1.0
    %v1314 = vadd.f32 %v1262, 1.0
    %v1315 = vadd.f32 %v1264, 1.0
    %v1316 = vadd.f32 %v1266, 1.0
    %v1317 = vadd.f32 %v1268, 1.0
    %v1318 = vadd.f32 %v1270, 1.0
    %v1319 = vadd.f32 %v1272, 1.0
    %v1320 = vadd.f32 %v1274, 1.0
    %v1321 = vadd.f32 %v1276, 1.0
    %v1322 = vadd.f32 %v1278, 1.0
    %v1323 = vadd.f32 %v1280, 1.0
    %v1324 = vadd.f32 %v1282, 1.0
    %v1325 = vadd.f32 %v1284, 1.0
    %v1326 = vadd.f32 %v1286, 1.0
    %v1327 = vadd.f32 %v1288, 1.0
    %v1328 = vadd.f32 %v1290, 1.0
    %v1329 = vadd.f32 %v1292, 1.0
    %v1330 = vadd.f32 %v1294, 1.0
    %v1331 = vadd.f32 %v1296, 1.0
    %v1332 = vadd.f32 %v1298, 1.0
    %v1333 = vadd.f32 %v1300, 1.0
    %v1334 = vadd.f32 %v1302, 1.0
    %v1335 = vrcp.pop %v1303
    %v1336 = vrcp.pop %v1304
    %v1337 = vrcp.pop %v1305
    %v1338 = vrcp.pop %v1306
    %v1339 = vrcp.pop %v1307
    %v1340 = vrcp.pop %v1308
    %v1341 = vrcp.pop %v1309
    %v1342 = vrcp.pop %v1310
    %v1343 = vrcp.pop %v1311
    %v1344 = vrcp.pop %v1312
    %v1345 = vrcp.pop %v1313
    %v1346 = vrcp.pop %v1314
    %v1347 = vrcp.pop %v1315
    %v1348 = vrcp.pop %v1316
    %v1349 = vrcp.pop %v1317
    %v1350 = vrcp.pop %v1318
    %v1351 = vrcp.pop %v1319
    %v1352 = vrcp.pop %v1320
    %v1353 = vrcp.pop %v1321
    %v1354 = vrcp.pop %v1322
    %v1355 = vrcp.pop %v1323
    %v1356 = vrcp.pop %v1324
    %v1357 = vrcp.pop %v1325
    %v1358 = vrcp.pop %v1326
    %v1359 = vrcp.pop %v1327
    %v1360 = vrcp.pop %v1328
    %v1361 = vrcp.pop %v1329
    %v1362 = vrcp.pop %v1330
    %v1363 = vrcp.pop %v1331
    %v1364 = vrcp.pop %v1332
    %v1365 = vrcp.pop %v1333
    %v1366 = vrcp.pop %v1334
    %v1367 = vpack.c.bf16 %v1337, %v1335
    %v1368 = vpack.c.bf16 %v1338, %v1336
    %v1369 = vpack.c.bf16 %v1341, %v1339
    %v1370 = vpack.c.bf16 %v1342, %v1340
    %v1371 = vpack.c.bf16 %v1345, %v1343
    %v1372 = vpack.c.bf16 %v1346, %v1344
    %v1373 = vpack.c.bf16 %v1349, %v1347
    %v1374 = vpack.c.bf16 %v1350, %v1348
    %v1375 = vpack.c.bf16 %v1353, %v1351
    %v1376 = vpack.c.bf16 %v1354, %v1352
    %v1377 = vpack.c.bf16 %v1357, %v1355
    %v1378 = vpack.c.bf16 %v1358, %v1356
    %v1379 = vpack.c.bf16 %v1361, %v1359
    %v1380 = vpack.c.bf16 %v1362, %v1360
    %v1381 = vpack.c.bf16 %v1365, %v1363
    %v1382 = vpack.c.bf16 %v1366, %v1364
    %v1383 = vld [vmem:[%s5] sm:$0xf]
    %v1384 = vld [vmem:[%s5 + $0x4] sm:$0xf]
    %v1385 = vld [vmem:[%s5 + $0x8] sm:$0xf]
    %v1386 = vld [vmem:[%s5 + $0xc] sm:$0xf]
    %v1387 = vld [vmem:[%s5 + $0x10] sm:$0xf]
    %v1388 = vld [vmem:[%s5 + $0x14] sm:$0xf]
    %v1389 = vld [vmem:[%s5 + $0x18] sm:$0xf]
    %v1390 = vld [vmem:[%s5 + $0x1c] sm:$0xf]
    %v1391 = vld [vmem:[%s5 + $0x20] sm:$0xf]
    %v1392 = vld [vmem:[%s5 + $0x24] sm:$0xf]
    %v1393 = vld [vmem:[%s5 + $0x28] sm:$0xf]
    %v1394 = vld [vmem:[%s5 + $0x2c] sm:$0xf]
    %v1395 = vld [vmem:[%s5 + $0x30] sm:$0xf]
    %v1396 = vld [vmem:[%s5 + $0x34] sm:$0xf]
    %v1397 = vld [vmem:[%s5 + $0x38] sm:$0xf]
    %v1398 = vld [vmem:[%s5 + $0x3c] sm:$0xf]
    %v1399 = vld [vmem:[%s5 + $0x40] sm:$0xf]
    %v1400 = vld [vmem:[%s5 + $0x44] sm:$0xf]
    %v1401 = vld [vmem:[%s5 + $0x48] sm:$0xf]
    %v1402 = vld [vmem:[%s5 + $0x4c] sm:$0xf]
    %v1403 = vld [vmem:[%s5 + $0x50] sm:$0xf]
    %v1404 = vld [vmem:[%s5 + $0x54] sm:$0xf]
    %v1405 = vld [vmem:[%s5 + $0x58] sm:$0xf]
    %v1406 = vld [vmem:[%s5 + $0x5c] sm:$0xf]
    %v1407 = vld [vmem:[%s5 + $0x60] sm:$0xf]
    %v1408 = vld [vmem:[%s5 + $0x64] sm:$0xf]
    %v1409 = vld [vmem:[%s5 + $0x68] sm:$0xf]
    %v1410 = vld [vmem:[%s5 + $0x6c] sm:$0xf]
    %v1411 = vld [vmem:[%s5 + $0x70] sm:$0xf]
    %v1412 = vld [vmem:[%s5 + $0x74] sm:$0xf]
    %v1413 = vld [vmem:[%s5 + $0x78] sm:$0xf]
    %v1414 = vld [vmem:[%s5 + $0x7c] sm:$0xf]
    %v1415 = vld [vmem:[#allocation8] sm:$0x1]
    %v1417 = vlaneseq
    %v1418 = vshrl.u32 %v1417, 7
    %v1419 = vsub.s32 0, %v1418
    %v1420 = vrot.slane %v1415, %v1419
    %v1454 = vunpack.c.l.b16 %v1383
    %v1455 = vunpack.c.l.b16 %v1384
    %v1456 = vunpack.c.l.b16 %v1385
    %v1457 = vunpack.c.l.b16 %v1386
    %v1458 = vunpack.c.l.b16 %v1387
    %v1459 = vunpack.c.l.b16 %v1388
    %v1460 = vunpack.c.l.b16 %v1389
    %v1461 = vunpack.c.l.b16 %v1390
    %v1462 = vunpack.c.l.b16 %v1391
    %v1463 = vunpack.c.l.b16 %v1392
    %v1464 = vunpack.c.l.b16 %v1393
    %v1465 = vunpack.c.l.b16 %v1394
    %v1466 = vunpack.c.l.b16 %v1395
    %v1467 = vunpack.c.l.b16 %v1396
    %v1468 = vunpack.c.l.b16 %v1397
    %v1469 = vunpack.c.l.b16 %v1398
    %v1470 = vunpack.c.l.b16 %v1399
    %v1471 = vunpack.c.l.b16 %v1400
    %v1472 = vunpack.c.l.b16 %v1401
    %v1473 = vunpack.c.l.b16 %v1402
    %v1474 = vunpack.c.l.b16 %v1403
    %v1475 = vunpack.c.l.b16 %v1404
    %v1476 = vunpack.c.l.b16 %v1405
    %v1477 = vunpack.c.l.b16 %v1406
    %v1478 = vunpack.c.l.b16 %v1407
    %v1479 = vunpack.c.l.b16 %v1408
    %v1480 = vunpack.c.l.b16 %v1409
    %v1481 = vunpack.c.l.b16 %v1410
    %v1482 = vunpack.c.l.b16 %v1411
    %v1483 = vunpack.c.l.b16 %v1412
    %v1484 = vunpack.c.l.b16 %v1413
    %v1485 = vunpack.c.l.b16 %v1414
    %v1486 = vpack.c.b16 %v1455, %v1454
    %v1487 = vpack.c.b16 %v1457, %v1456
    %v1488 = vpack.c.b16 %v1459, %v1458
    %v1489 = vpack.c.b16 %v1461, %v1460
    %v1490 = vpack.c.b16 %v1463, %v1462
    %v1491 = vpack.c.b16 %v1465, %v1464
    %v1492 = vpack.c.b16 %v1467, %v1466
    %v1493 = vpack.c.b16 %v1469, %v1468
    %v1494 = vpack.c.b16 %v1471, %v1470
    %v1495 = vpack.c.b16 %v1473, %v1472
    %v1496 = vpack.c.b16 %v1475, %v1474
    %v1497 = vpack.c.b16 %v1477, %v1476
    %v1498 = vpack.c.b16 %v1479, %v1478
    %v1499 = vpack.c.b16 %v1481, %v1480
    %v1500 = vpack.c.b16 %v1483, %v1482
    %v1501 = vpack.c.b16 %v1485, %v1484
    %1518 = vmatprep.subr.bf16.mxu0 0
    %1519 = vmatpush1.bf16.msra.mxu0 %v1486
    %1520 = vmatprep.subr.bf16.mxu0 0
    %1521 = vmatpush1.bf16.msra.mxu0 %v1487
    %1522 = vmatprep.subr.bf16.mxu0 0
    %1523 = vmatpush1.bf16.msra.mxu0 %v1488
    %1524 = vmatprep.subr.bf16.mxu0 0
    %1525 = vmatpush1.bf16.msra.mxu0 %v1489
    %1526 = vmatprep.subr.bf16.mxu0 0
    %1527 = vmatpush1.bf16.msra.mxu0 %v1490
    %1528 = vmatprep.subr.bf16.mxu0 0
    %1529 = vmatpush1.bf16.msra.mxu0 %v1491
    %1530 = vmatprep.subr.bf16.mxu0 0
    %1531 = vmatpush1.bf16.msra.mxu0 %v1492
    %1532 = vmatprep.subr.bf16.mxu0 0
    %1533 = vmatpush1.bf16.msra.mxu0 %v1493
    %1534 = vmatprep.subr.bf16.mxu0 0
    %1535 = vmatpush1.bf16.msra.mxu0 %v1494
    %1536 = vmatprep.subr.bf16.mxu0 0
    %1537 = vmatpush1.bf16.msra.mxu0 %v1495
    %1538 = vmatprep.subr.bf16.mxu0 0
    %1539 = vmatpush1.bf16.msra.mxu0 %v1496
    %1540 = vmatprep.subr.bf16.mxu0 0
    %1541 = vmatpush1.bf16.msra.mxu0 %v1497
    %1542 = vmatprep.subr.bf16.mxu0 0
    %1543 = vmatpush1.bf16.msra.mxu0 %v1498
    %1544 = vmatprep.subr.bf16.mxu0 0
    %1545 = vmatpush1.bf16.msra.mxu0 %v1499
    %1546 = vmatprep.subr.bf16.mxu0 0
    %1547 = vmatpush1.bf16.msra.mxu0 %v1500
    %1548 = vmatprep.subr.bf16.mxu0 0
    %1549 = vmatpush1.bf16.msra.mxu0 %v1501
    %1550 = vmatprep.mubr.bf16.mxu0 %v1079
    %1551 = vmatmul.mubr.bf16.gmra.mrb[0].mxu0 %v1078
    %v1552 = vpop.f32.mrb[0].mxu0
    %v1553 = vadd.f32 %v1420, %v1552
    %v1554 = vpop.f32.mrb[0].mxu0
    %v1555 = vpop.f32.mrb[0].mxu0
    %v1556 = vadd.f32 %v1420, %v1555
    %v1557 = vpop.f32.mrb[0].mxu0
    %1558 = vmatprep.mubr.bf16.mxu0 %v1081
    %1559 = vmatmul.mubr.bf16.gmra.mrb[0].mxu0 %v1080
    %v1560 = vpop.f32.mrb[0].mxu0
    %v1561 = vadd.f32 %v1420, %v1560
    %v1562 = vpop.f32.mrb[0].mxu0
    %v1563 = vpop.f32.mrb[0].mxu0
    %v1564 = vadd.f32 %v1420, %v1563
    %v1565 = vpop.f32.mrb[0].mxu0
    %1566 = vmatprep.mubr.bf16.mxu0 %v1083
    %1567 = vmatmul.mubr.bf16.gmra.mrb[0].mxu0 %v1082
    %v1568 = vpop.f32.mrb[0].mxu0
    %v1569 = vadd.f32 %v1420, %v1568
    %v1570 = vpop.f32.mrb[0].mxu0
    %v1571 = vpop.f32.mrb[0].mxu0
    %v1572 = vadd.f32 %v1420, %v1571
    %v1573 = vpop.f32.mrb[0].mxu0
    %1574 = vmatprep.mubr.bf16.mxu0 %v1085
    %1575 = vmatmul.mubr.bf16.gmra.mrb[0].mxu0 %v1084
    %v1576 = vpop.f32.mrb[0].mxu0
    %v1577 = vadd.f32 %v1420, %v1576
    %v1578 = vpop.f32.mrb[0].mxu0
    %v1579 = vpop.f32.mrb[0].mxu0
    %v1580 = vadd.f32 %v1420, %v1579
    %v1581 = vpop.f32.mrb[0].mxu0
    %1582 = vmatprep.mubr.bf16.mxu0 %v1087
    %1583 = vmatmul.mubr.bf16.gmra.mrb[0].mxu0 %v1086
    %v1584 = vpop.f32.mrb[0].mxu0
    %v1585 = vadd.f32 %v1420, %v1584
    %v1586 = vpop.f32.mrb[0].mxu0
    %v1587 = vpop.f32.mrb[0].mxu0
    %v1588 = vadd.f32 %v1420, %v1587
    %v1589 = vpop.f32.mrb[0].mxu0
    %1590 = vmatprep.mubr.bf16.mxu0 %v1089
    %1591 = vmatmul.mubr.bf16.gmra.mrb[0].mxu0 %v1088
    %v1592 = vpop.f32.mrb[0].mxu0
    %v1593 = vadd.f32 %v1420, %v1592
    %v1594 = vpop.f32.mrb[0].mxu0
    %v1595 = vpop.f32.mrb[0].mxu0
    %v1596 = vadd.f32 %v1420, %v1595
    %v1597 = vpop.f32.mrb[0].mxu0
    %1598 = vmatprep.mubr.bf16.mxu0 %v1091
    %1599 = vmatmul.mubr.bf16.gmra.mrb[0].mxu0 %v1090
    %v1600 = vpop.f32.mrb[0].mxu0
    %v1601 = vadd.f32 %v1420, %v1600
    %v1602 = vpop.f32.mrb[0].mxu0
    %v1603 = vpop.f32.mrb[0].mxu0
    %v1604 = vadd.f32 %v1420, %v1603
    %v1605 = vpop.f32.mrb[0].mxu0
    %1606 = vmatprep.mubr.bf16.mxu0 %v1093
    %1607 = vmatmul.mubr.bf16.gmra.mrb[0].mxu0 %v1092
    %v1608 = vpop.f32.mrb[0].mxu0
    %v1609 = vadd.f32 %v1420, %v1608
    %v1610 = vpop.f32.mrb[0].mxu0
    %v1611 = vpop.f32.mrb[0].mxu0
    %v1612 = vadd.f32 %v1420, %v1611
    %v1613 = vpop.f32.mrb[0].mxu0
    %1614 = vdwg.mxu0
    %v1615 = vsub.f32 0.0, %v1553
    %v1616 = vsub.f32 0.0, %v1556
    %v1617 = vsub.f32 0.0, %v1561
    %v1618 = vsub.f32 0.0, %v1564
    %v1619 = vsub.f32 0.0, %v1569
    %v1620 = vsub.f32 0.0, %v1572
    %v1621 = vsub.f32 0.0, %v1577
    %v1622 = vsub.f32 0.0, %v1580
    %v1623 = vsub.f32 0.0, %v1585
    %v1624 = vsub.f32 0.0, %v1588
    %v1625 = vsub.f32 0.0, %v1593
    %v1626 = vsub.f32 0.0, %v1596
    %v1627 = vsub.f32 0.0, %v1601
    %v1628 = vsub.f32 0.0, %v1604
    %v1629 = vsub.f32 0.0, %v1609
    %v1630 = vsub.f32 0.0, %v1612
    %v1631 = vmul.f32 %v1615, 1.442695
    %v1632 = vpow.pop %v1631
    %v1633 = vmul.f32 %v1616, 1.442695
    %v1634 = vpow.pop %v1633
    %v1635 = vmul.f32 %v1617, 1.442695
    %v1636 = vpow.pop %v1635
    %v1637 = vmul.f32 %v1618, 1.442695
    %v1638 = vpow.pop %v1637
    %v1639 = vmul.f32 %v1619, 1.442695
    %v1640 = vpow.pop %v1639
    %v1641 = vmul.f32 %v1620, 1.442695
    %v1642 = vpow.pop %v1641
    %v1643 = vmul.f32 %v1621, 1.442695
    %v1644 = vpow.pop %v1643
    %v1645 = vmul.f32 %v1622, 1.442695
    %v1646 = vpow.pop %v1645
    %v1647 = vmul.f32 %v1623, 1.442695
    %v1648 = vpow.pop %v1647
    %v1649 = vmul.f32 %v1624, 1.442695
    %v1650 = vpow.pop %v1649
    %v1651 = vmul.f32 %v1625, 1.442695
    %v1652 = vpow.pop %v1651
    %v1653 = vmul.f32 %v1626, 1.442695
    %v1654 = vpow.pop %v1653
    %v1655 = vmul.f32 %v1627, 1.442695
    %v1656 = vpow.pop %v1655
    %v1657 = vmul.f32 %v1628, 1.442695
    %v1658 = vpow.pop %v1657
    %v1659 = vmul.f32 %v1629, 1.442695
    %v1660 = vpow.pop %v1659
    %v1661 = vmul.f32 %v1630, 1.442695
    %v1662 = vpow.pop %v1661
    %v1663 = vadd.f32 %v1632, 1.0
    %v1664 = vadd.f32 %v1634, 1.0
    %v1665 = vadd.f32 %v1636, 1.0
    %v1666 = vadd.f32 %v1638, 1.0
    %v1667 = vadd.f32 %v1640, 1.0
    %v1668 = vadd.f32 %v1642, 1.0
    %v1669 = vadd.f32 %v1644, 1.0
    %v1670 = vadd.f32 %v1646, 1.0
    %v1671 = vadd.f32 %v1648, 1.0
    %v1672 = vadd.f32 %v1650, 1.0
    %v1673 = vadd.f32 %v1652, 1.0
    %v1674 = vadd.f32 %v1654, 1.0
    %v1675 = vadd.f32 %v1656, 1.0
    %v1676 = vadd.f32 %v1658, 1.0
    %v1677 = vadd.f32 %v1660, 1.0
    %v1678 = vadd.f32 %v1662, 1.0
    %v1679 = vrcp.pop %v1663
    %v1680 = vrcp.pop %v1664
    %v1681 = vrcp.pop %v1665
    %v1682 = vrcp.pop %v1666
    %v1683 = vrcp.pop %v1667
    %v1684 = vrcp.pop %v1668
    %v1685 = vrcp.pop %v1669
    %v1686 = vrcp.pop %v1670
    %v1687 = vrcp.pop %v1671
    %v1688 = vrcp.pop %v1672
    %v1689 = vrcp.pop %v1673
    %v1690 = vrcp.pop %v1674
    %v1691 = vrcp.pop %v1675
    %v1692 = vrcp.pop %v1676
    %v1693 = vrcp.pop %v1677
    %v1694 = vrcp.pop %v1678
    %v1695 = vpack.c.bf16 %v1680, %v1679
    %v1696 = vpack.c.bf16 %v1682, %v1681
    %v1697 = vpack.c.bf16 %v1684, %v1683
    %v1698 = vpack.c.bf16 %v1686, %v1685
    %v1699 = vpack.c.bf16 %v1688, %v1687
    %v1700 = vpack.c.bf16 %v1690, %v1689
    %v1701 = vpack.c.bf16 %v1692, %v1691
    %v1702 = vpack.c.bf16 %v1694, %v1693
    %1703 = vmatprep.subr.bf16.mxu0 0
    %1704 = vmatpush1.bf16.msra.mxu0 %v1486
    %1705 = vmatprep.subr.bf16.mxu0 0
    %1706 = vmatpush1.bf16.msra.mxu0 %v1487
    %1707 = vmatprep.subr.bf16.mxu0 0
    %1708 = vmatpush1.bf16.msra.mxu0 %v1488
    %1709 = vmatprep.subr.bf16.mxu0 0
    %1710 = vmatpush1.bf16.msra.mxu0 %v1489
    %1711 = vmatprep.subr.bf16.mxu0 0
    %1712 = vmatpush1.bf16.msra.mxu0 %v1490
    %1713 = vmatprep.subr.bf16.mxu0 0
    %1714 = vmatpush1.bf16.msra.mxu0 %v1491
    %1715 = vmatprep.subr.bf16.mxu0 0
    %1716 = vmatpush1.bf16.msra.mxu0 %v1492
    %1717 = vmatprep.subr.bf16.mxu0 0
    %1718 = vmatpush1.bf16.msra.mxu0 %v1493
    %1719 = vmatprep.subr.bf16.mxu0 0
    %1720 = vmatpush1.bf16.msra.mxu0 %v1494
    %1721 = vmatprep.subr.bf16.mxu0 0
    %1722 = vmatpush1.bf16.msra.mxu0 %v1495
    %1723 = vmatprep.subr.bf16.mxu0 0
    %1724 = vmatpush1.bf16.msra.mxu0 %v1496
    %1725 = vmatprep.subr.bf16.mxu0 0
    %1726 = vmatpush1.bf16.msra.mxu0 %v1497
    %1727 = vmatprep.subr.bf16.mxu0 0
    %1728 = vmatpush1.bf16.msra.mxu0 %v1498
    %1729 = vmatprep.subr.bf16.mxu0 0
    %1730 = vmatpush1.bf16.msra.mxu0 %v1499
    %1731 = vmatprep.subr.bf16.mxu0 0
    %1732 = vmatpush1.bf16.msra.mxu0 %v1500
    %1733 = vmatprep.subr.bf16.mxu0 0
    %1734 = vmatpush1.bf16.msra.mxu0 %v1501
    %1735 = vmatprep.mubr.bf16.mxu0 %v1368
    %1736 = vmatmul.mubr.bf16.gmra.mrb[0].mxu0 %v1367
    %v1737 = vpop.f32.mrb[0].mxu0
    %v1738 = vadd.f32 %v1420, %v1737
    %v1739 = vpop.f32.mrb[0].mxu0
    %v1740 = vpop.f32.mrb[0].mxu0
    %v1741 = vadd.f32 %v1420, %v1740
    %v1742 = vpop.f32.mrb[0].mxu0
    %1743 = vmatprep.mubr.bf16.mxu0 %v1370
    %1744 = vmatmul.mubr.bf16.gmra.mrb[0].mxu0 %v1369
    %v1745 = vpop.f32.mrb[0].mxu0
    %v1746 = vadd.f32 %v1420, %v1745
    %v1747 = vpop.f32.mrb[0].mxu0
    %v1748 = vpop.f32.mrb[0].mxu0
    %v1749 = vadd.f32 %v1420, %v1748
    %v1750 = vpop.f32.mrb[0].mxu0
    %1751 = vmatprep.mubr.bf16.mxu0 %v1372
    %1752 = vmatmul.mubr.bf16.gmra.mrb[0].mxu0 %v1371
    %v1753 = vpop.f32.mrb[0].mxu0
    %v1754 = vadd.f32 %v1420, %v1753
    %v1755 = vpop.f32.mrb[0].mxu0
    %v1756 = vpop.f32.mrb[0].mxu0
    %v1757 = vadd.f32 %v1420, %v1756
    %v1758 = vpop.f32.mrb[0].mxu0
    %1759 = vmatprep.mubr.bf16.mxu0 %v1374
    %1760 = vmatmul.mubr.bf16.gmra.mrb[0].mxu0 %v1373
    %v1761 = vpop.f32.mrb[0].mxu0
    %v1762 = vadd.f32 %v1420, %v1761
    %v1763 = vpop.f32.mrb[0].mxu0
    %v1764 = vpop.f32.mrb[0].mxu0
    %v1765 = vadd.f32 %v1420, %v1764
    %v1766 = vpop.f32.mrb[0].mxu0
    %1767 = vmatprep.mubr.bf16.mxu0 %v1376
    %1768 = vmatmul.mubr.bf16.gmra.mrb[0].mxu0 %v1375
    %v1769 = vpop.f32.mrb[0].mxu0
    %v1770 = vadd.f32 %v1420, %v1769
    %v1771 = vpop.f32.mrb[0].mxu0
    %v1772 = vpop.f32.mrb[0].mxu0
    %v1773 = vadd.f32 %v1420, %v1772
    %v1774 = vpop.f32.mrb[0].mxu0
    %1775 = vmatprep.mubr.bf16.mxu0 %v1378
    %1776 = vmatmul.mubr.bf16.gmra.mrb[0].mxu0 %v1377
    %v1777 = vpop.f32.mrb[0].mxu0
    %v1778 = vadd.f32 %v1420, %v1777
    %v1779 = vpop.f32.mrb[0].mxu0
    %v1780 = vpop.f32.mrb[0].mxu0
    %v1781 = vadd.f32 %v1420, %v1780
    %v1782 = vpop.f32.mrb[0].mxu0
    %1783 = vmatprep.mubr.bf16.mxu0 %v1380
    %1784 = vmatmul.mubr.bf16.gmra.mrb[0].mxu0 %v1379
    %v1785 = vpop.f32.mrb[0].mxu0
    %v1786 = vadd.f32 %v1420, %v1785
    %v1787 = vpop.f32.mrb[0].mxu0
    %v1788 = vpop.f32.mrb[0].mxu0
    %v1789 = vadd.f32 %v1420, %v1788
    %v1790 = vpop.f32.mrb[0].mxu0
    %1791 = vmatprep.mubr.bf16.mxu0 %v1382
    %1792 = vmatmul.mubr.bf16.gmra.mrb[0].mxu0 %v1381
    %v1793 = vpop.f32.mrb[0].mxu0
    %v1794 = vadd.f32 %v1420, %v1793
    %v1795 = vpop.f32.mrb[0].mxu0
    %v1796 = vpop.f32.mrb[0].mxu0
    %v1797 = vadd.f32 %v1420, %v1796
    %v1798 = vpop.f32.mrb[0].mxu0
    %1799 = vdwg.mxu0
    %v1800 = vsub.f32 0.0, %v1738
    %v1801 = vsub.f32 0.0, %v1741
    %v1802 = vsub.f32 0.0, %v1746
    %v1803 = vsub.f32 0.0, %v1749
    %v1804 = vsub.f32 0.0, %v1754
    %v1805 = vsub.f32 0.0, %v1757
    %v1806 = vsub.f32 0.0, %v1762
    %v1807 = vsub.f32 0.0, %v1765
    %v1808 = vsub.f32 0.0, %v1770
    %v1809 = vsub.f32 0.0, %v1773
    %v1810 = vsub.f32 0.0, %v1778
    %v1811 = vsub.f32 0.0, %v1781
    %v1812 = vsub.f32 0.0, %v1786
    %v1813 = vsub.f32 0.0, %v1789
    %v1814 = vsub.f32 0.0, %v1794
    %v1815 = vsub.f32 0.0, %v1797
    %v1816 = vmul.f32 %v1800, 1.442695
    %v1817 = vpow.pop %v1816
    %v1818 = vmul.f32 %v1801, 1.442695
    %v1819 = vpow.pop %v1818
    %v1820 = vmul.f32 %v1802, 1.442695
    %v1821 = vpow.pop %v1820
    %v1822 = vmul.f32 %v1803, 1.442695
    %v1823 = vpow.pop %v1822
    %v1824 = vmul.f32 %v1804, 1.442695
    %v1825 = vpow.pop %v1824
    %v1826 = vmul.f32 %v1805, 1.442695
    %v1827 = vpow.pop %v1826
    %v1828 = vmul.f32 %v1806, 1.442695
    %v1829 = vpow.pop %v1828
    %v1830 = vmul.f32 %v1807, 1.442695
    %v1831 = vpow.pop %v1830
    %v1832 = vmul.f32 %v1808, 1.442695
    %v1833 = vpow.pop %v1832
    %v1834 = vmul.f32 %v1809, 1.442695
    %v1835 = vpow.pop %v1834
    %v1836 = vmul.f32 %v1810, 1.442695
    %v1837 = vpow.pop %v1836
    %v1838 = vmul.f32 %v1811, 1.442695
    %v1839 = vpow.pop %v1838
    %v1840 = vmul.f32 %v1812, 1.442695
    %v1841 = vpow.pop %v1840
    %v1842 = vmul.f32 %v1813, 1.442695
    %v1843 = vpow.pop %v1842
    %v1844 = vmul.f32 %v1814, 1.442695
    %v1845 = vpow.pop %v1844
    %v1846 = vmul.f32 %v1815, 1.442695
    %v1847 = vpow.pop %v1846
    %v1848 = vadd.f32 %v1817, 1.0
    %v1849 = vadd.f32 %v1819, 1.0
    %v1850 = vadd.f32 %v1821, 1.0
    %v1851 = vadd.f32 %v1823, 1.0
    %v1852 = vadd.f32 %v1825, 1.0
    %v1853 = vadd.f32 %v1827, 1.0
    %v1854 = vadd.f32 %v1829, 1.0
    %v1855 = vadd.f32 %v1831, 1.0
    %v1856 = vadd.f32 %v1833, 1.0
    %v1857 = vadd.f32 %v1835, 1.0
    %v1858 = vadd.f32 %v1837, 1.0
    %v1859 = vadd.f32 %v1839, 1.0
    %v1860 = vadd.f32 %v1841, 1.0
    %v1861 = vadd.f32 %v1843, 1.0
    %v1862 = vadd.f32 %v1845, 1.0
    %v1863 = vadd.f32 %v1847, 1.0
    %v1864 = vrcp.pop %v1848
    %v1865 = vrcp.pop %v1849
    %v1866 = vrcp.pop %v1850
    %v1867 = vrcp.pop %v1851
    %v1868 = vrcp.pop %v1852
    %v1869 = vrcp.pop %v1853
    %v1870 = vrcp.pop %v1854
    %v1871 = vrcp.pop %v1855
    %v1872 = vrcp.pop %v1856
    %v1873 = vrcp.pop %v1857
    %v1874 = vrcp.pop %v1858
    %v1875 = vrcp.pop %v1859
    %v1876 = vrcp.pop %v1860
    %v1877 = vrcp.pop %v1861
    %v1878 = vrcp.pop %v1862
    %v1879 = vrcp.pop %v1863
    %v1880 = vpack.c.bf16 %v1865, %v1864
    %v1881 = vpack.c.bf16 %v1867, %v1866
    %v1882 = vpack.c.bf16 %v1869, %v1868
    %v1883 = vpack.c.bf16 %v1871, %v1870
    %v1884 = vpack.c.bf16 %v1873, %v1872
    %v1885 = vpack.c.bf16 %v1875, %v1874
    %v1886 = vpack.c.bf16 %v1877, %v1876
    %v1887 = vpack.c.bf16 %v1879, %v1878
    %v1888 = vld [vmem:[%s7] sm:$0xf]
    %v1889 = vld [vmem:[%s7 + $0x4] sm:$0xf]
    %v1890 = vld [vmem:[%s7 + $0x8] sm:$0xf]
    %v1891 = vld [vmem:[%s7 + $0xc] sm:$0xf]
    %v1892 = vld [vmem:[%s7 + $0x10] sm:$0xf]
    %v1893 = vld [vmem:[%s7 + $0x14] sm:$0xf]
    %v1894 = vld [vmem:[%s7 + $0x18] sm:$0xf]
    %v1895 = vld [vmem:[%s7 + $0x1c] sm:$0xf]
    %v1896 = vld [vmem:[%s7 + $0x20] sm:$0xf]
    %v1897 = vld [vmem:[%s7 + $0x24] sm:$0xf]
    %v1898 = vld [vmem:[%s7 + $0x28] sm:$0xf]
    %v1899 = vld [vmem:[%s7 + $0x2c] sm:$0xf]
    %v1900 = vld [vmem:[%s7 + $0x30] sm:$0xf]
    %v1901 = vld [vmem:[%s7 + $0x34] sm:$0xf]
    %v1902 = vld [vmem:[%s7 + $0x38] sm:$0xf]
    %v1903 = vld [vmem:[%s7 + $0x3c] sm:$0xf]
    %v1904 = vld [vmem:[#allocation9] sm:$0x1]
    %v1906 = vlaneseq
    %v1907 = vshrl.u32 %v1906, 7
    %v1908 = vsub.s32 0, %v1907
    %v1909 = vrot.slane %v1904, %v1908
    %v1927 = vunpack.c.l.b16 %v1888
    %v1928 = vunpack.c.l.b16 %v1889
    %v1929 = vunpack.c.l.b16 %v1890
    %v1930 = vunpack.c.l.b16 %v1891
    %v1931 = vunpack.c.l.b16 %v1892
    %v1932 = vunpack.c.l.b16 %v1893
    %v1933 = vunpack.c.l.b16 %v1894
    %v1934 = vunpack.c.l.b16 %v1895
    %v1935 = vunpack.c.l.b16 %v1896
    %v1936 = vunpack.c.l.b16 %v1897
    %v1937 = vunpack.c.l.b16 %v1898
    %v1938 = vunpack.c.l.b16 %v1899
    %v1939 = vunpack.c.l.b16 %v1900
    %v1940 = vunpack.c.l.b16 %v1901
    %v1941 = vunpack.c.l.b16 %v1902
    %v1942 = vunpack.c.l.b16 %v1903
    %v1943 = vpack.c.b16 %v1928, %v1927
    %v1944 = vpack.c.b16 %v1930, %v1929
    %v1945 = vpack.c.b16 %v1932, %v1931
    %v1946 = vpack.c.b16 %v1934, %v1933
    %v1947 = vpack.c.b16 %v1936, %v1935
    %v1948 = vpack.c.b16 %v1938, %v1937
    %v1949 = vpack.c.b16 %v1940, %v1939
    %v1950 = vpack.c.b16 %v1942, %v1941
    %1959 = vmatprep.subr.bf16.mxu0 0
    %1960 = vmatpush1.bf16.msra.mxu0 %v1943
    %1961 = vmatprep.subr.bf16.mxu0 0
    %1962 = vmatpush1.bf16.msra.mxu0 %v1944
    %1963 = vmatprep.subr.bf16.mxu0 0
    %1964 = vmatpush1.bf16.msra.mxu0 %v1945
    %1965 = vmatprep.subr.bf16.mxu0 0
    %1966 = vmatpush1.bf16.msra.mxu0 %v1946
    %1967 = vmatprep.subr.bf16.mxu0 0
    %1968 = vmatpush1.bf16.msra.mxu0 %v1947
    %1969 = vmatprep.subr.bf16.mxu0 0
    %1970 = vmatpush1.bf16.msra.mxu0 %v1948
    %1971 = vmatprep.subr.bf16.mxu0 0
    %1972 = vmatpush1.bf16.msra.mxu0 %v1949
    %1973 = vmatprep.subr.bf16.mxu0 0
    %1974 = vmatpush1.bf16.msra.mxu0 %v1950
    %1975 = vmatprep.subr.bf16.mxu0 0
    %1976 = vmatpush1.bf16.msra.mxu0 0
    %1977 = vmatprep.subr.bf16.mxu0 0
    %1978 = vmatpush1.bf16.msra.mxu0 0
    %1979 = vmatprep.subr.bf16.mxu0 0
    %1980 = vmatpush1.bf16.msra.mxu0 0
    %1981 = vmatprep.subr.bf16.mxu0 0
    %1982 = vmatpush1.bf16.msra.mxu0 0
    %1983 = vmatprep.subr.bf16.mxu0 0
    %1984 = vmatpush1.bf16.msra.mxu0 0
    %1985 = vmatprep.subr.bf16.mxu0 0
    %1986 = vmatpush1.bf16.msra.mxu0 0
    %1987 = vmatprep.subr.bf16.mxu0 0
    %1988 = vmatpush1.bf16.msra.mxu0 0
    %1989 = vmatprep.subr.bf16.mxu0 0
    %1990 = vmatpush1.bf16.msra.mxu0 0
    %1991 = vmatprep.mubr.bf16.mxu0 0
    %1992 = vmatmul.mubr.bf16.gmra.mrb[0].mxu0 %v1695
    %v1993 = vpop.f32.mrb[0].mxu0
    %v1994 = vadd.f32 %v1909, %v1993
    %v1995 = vpop.f32.mrb[0].mxu0
    %v1996 = vpop.f32.mrb[0].mxu0
    %v1997 = vadd.f32 %v1909, %v1996
    %v1998 = vpop.f32.mrb[0].mxu0
    %1999 = vmatprep.mubr.bf16.mxu0 0
    %2000 = vmatmul.mubr.bf16.gmra.mrb[0].mxu0 %v1696
    %v2001 = vpop.f32.mrb[0].mxu0
    %v2002 = vadd.f32 %v1909, %v2001
    %v2003 = vpop.f32.mrb[0].mxu0
    %v2004 = vpop.f32.mrb[0].mxu0
    %v2005 = vadd.f32 %v1909, %v2004
    %v2006 = vpop.f32.mrb[0].mxu0
    %2007 = vmatprep.mubr.bf16.mxu0 0
    %2008 = vmatmul.mubr.bf16.gmra.mrb[0].mxu0 %v1697
    %v2009 = vpop.f32.mrb[0].mxu0
    %v2010 = vadd.f32 %v1909, %v2009
    %v2011 = vpop.f32.mrb[0].mxu0
    %v2012 = vpop.f32.mrb[0].mxu0
    %v2013 = vadd.f32 %v1909, %v2012
    %v2014 = vpop.f32.mrb[0].mxu0
    %2015 = vmatprep.mubr.bf16.mxu0 0
    %2016 = vmatmul.mubr.bf16.gmra.mrb[0].mxu0 %v1698
    %v2017 = vpop.f32.mrb[0].mxu0
    %v2018 = vadd.f32 %v1909, %v2017
    %v2019 = vpop.f32.mrb[0].mxu0
    %v2020 = vpop.f32.mrb[0].mxu0
    %v2021 = vadd.f32 %v1909, %v2020
    %v2022 = vpop.f32.mrb[0].mxu0
    %2023 = vmatprep.mubr.bf16.mxu0 0
    %2024 = vmatmul.mubr.bf16.gmra.mrb[0].mxu0 %v1699
    %v2025 = vpop.f32.mrb[0].mxu0
    %v2026 = vadd.f32 %v1909, %v2025
    %v2027 = vpop.f32.mrb[0].mxu0
    %v2028 = vpop.f32.mrb[0].mxu0
    %v2029 = vadd.f32 %v1909, %v2028
    %v2030 = vpop.f32.mrb[0].mxu0
    %2031 = vmatprep.mubr.bf16.mxu0 0
    %2032 = vmatmul.mubr.bf16.gmra.mrb[0].mxu0 %v1700
    %v2033 = vpop.f32.mrb[0].mxu0
    %v2034 = vadd.f32 %v1909, %v2033
    %v2035 = vpop.f32.mrb[0].mxu0
    %v2036 = vpop.f32.mrb[0].mxu0
    %v2037 = vadd.f32 %v1909, %v2036
    %v2038 = vpop.f32.mrb[0].mxu0
    %2039 = vmatprep.mubr.bf16.mxu0 0
    %2040 = vmatmul.mubr.bf16.gmra.mrb[0].mxu0 %v1701
    %v2041 = vpop.f32.mrb[0].mxu0
    %v2042 = vadd.f32 %v1909, %v2041
    %v2043 = vpop.f32.mrb[0].mxu0
    %v2044 = vpop.f32.mrb[0].mxu0
    %v2045 = vadd.f32 %v1909, %v2044
    %v2046 = vpop.f32.mrb[0].mxu0
    %2047 = vmatprep.mubr.bf16.mxu0 0
    %2048 = vmatmul.mubr.bf16.gmra.mrb[0].mxu0 %v1702
    %v2049 = vpop.f32.mrb[0].mxu0
    %v2050 = vadd.f32 %v1909, %v2049
    %v2051 = vpop.f32.mrb[0].mxu0
    %v2052 = vpop.f32.mrb[0].mxu0
    %v2053 = vadd.f32 %v1909, %v2052
    %v2054 = vpop.f32.mrb[0].mxu0
    %2055 = vdwg.mxu0
    %v2056 = vsub.f32 0.0, %v1994
    %v2057 = vsub.f32 0.0, %v1997
    %v2058 = vsub.f32 0.0, %v2002
    %v2059 = vsub.f32 0.0, %v2005
    %v2060 = vsub.f32 0.0, %v2010
    %v2061 = vsub.f32 0.0, %v2013
    %v2062 = vsub.f32 0.0, %v2018
    %v2063 = vsub.f32 0.0, %v2021
    %v2064 = vsub.f32 0.0, %v2026
    %v2065 = vsub.f32 0.0, %v2029
    %v2066 = vsub.f32 0.0, %v2034
    %v2067 = vsub.f32 0.0, %v2037
    %v2068 = vsub.f32 0.0, %v2042
    %v2069 = vsub.f32 0.0, %v2045
    %v2070 = vsub.f32 0.0, %v2050
    %v2071 = vsub.f32 0.0, %v2053
    %v2072 = vmul.f32 %v2056, 1.442695
    %v2073 = vpow.pop %v2072
    %v2074 = vmul.f32 %v2057, 1.442695
    %v2075 = vpow.pop %v2074
    %v2076 = vmul.f32 %v2058, 1.442695
    %v2077 = vpow.pop %v2076
    %v2078 = vmul.f32 %v2059, 1.442695
    %v2079 = vpow.pop %v2078
    %v2080 = vmul.f32 %v2060, 1.442695
    %v2081 = vpow.pop %v2080
    %v2082 = vmul.f32 %v2061, 1.442695
    %v2083 = vpow.pop %v2082
    %v2084 = vmul.f32 %v2062, 1.442695
    %v2085 = vpow.pop %v2084
    %v2086 = vmul.f32 %v2063, 1.442695
    %v2087 = vpow.pop %v2086
    %v2088 = vmul.f32 %v2064, 1.442695
    %v2089 = vpow.pop %v2088
    %v2090 = vmul.f32 %v2065, 1.442695
    %v2091 = vpow.pop %v2090
    %v2092 = vmul.f32 %v2066, 1.442695
    %v2093 = vpow.pop %v2092
    %v2094 = vmul.f32 %v2067, 1.442695
    %v2095 = vpow.pop %v2094
    %v2096 = vmul.f32 %v2068, 1.442695
    %v2097 = vpow.pop %v2096
    %v2098 = vmul.f32 %v2069, 1.442695
    %v2099 = vpow.pop %v2098
    %v2100 = vmul.f32 %v2070, 1.442695
    %v2101 = vpow.pop %v2100
    %v2102 = vmul.f32 %v2071, 1.442695
    %v2103 = vpow.pop %v2102
    %v2104 = vadd.f32 %v2073, 1.0
    %v2105 = vadd.f32 %v2075, 1.0
    %v2106 = vadd.f32 %v2077, 1.0
    %v2107 = vadd.f32 %v2079, 1.0
    %v2108 = vadd.f32 %v2081, 1.0
    %v2109 = vadd.f32 %v2083, 1.0
    %v2110 = vadd.f32 %v2085, 1.0
    %v2111 = vadd.f32 %v2087, 1.0
    %v2112 = vadd.f32 %v2089, 1.0
    %v2113 = vadd.f32 %v2091, 1.0
    %v2114 = vadd.f32 %v2093, 1.0
    %v2115 = vadd.f32 %v2095, 1.0
    %v2116 = vadd.f32 %v2097, 1.0
    %v2117 = vadd.f32 %v2099, 1.0
    %v2118 = vadd.f32 %v2101, 1.0
    %v2119 = vadd.f32 %v2103, 1.0
    %v2120 = vrcp.pop %v2104
    %v2121 = vrcp.pop %v2105
    %v2122 = vrcp.pop %v2106
    %v2123 = vrcp.pop %v2107
    %v2124 = vrcp.pop %v2108
    %v2125 = vrcp.pop %v2109
    %v2126 = vrcp.pop %v2110
    %v2127 = vrcp.pop %v2111
    %v2128 = vrcp.pop %v2112
    %v2129 = vrcp.pop %v2113
    %v2130 = vrcp.pop %v2114
    %v2131 = vrcp.pop %v2115
    %v2132 = vrcp.pop %v2116
    %v2133 = vrcp.pop %v2117
    %v2134 = vrcp.pop %v2118
    %v2135 = vrcp.pop %v2119
    %v2136 = vpack.c.bf16 %v2121, %v2120
    %v2137 = vpack.c.bf16 %v2123, %v2122
    %v2138 = vpack.c.bf16 %v2125, %v2124
    %v2139 = vpack.c.bf16 %v2127, %v2126
    %v2140 = vpack.c.bf16 %v2129, %v2128
    %v2141 = vpack.c.bf16 %v2131, %v2130
    %v2142 = vpack.c.bf16 %v2133, %v2132
    %v2143 = vpack.c.bf16 %v2135, %v2134
    %2144 = vmatprep.subr.bf16.mxu0 0
    %2145 = vmatpush1.bf16.msra.mxu0 %v1943
    %2146 = vmatprep.subr.bf16.mxu0 0
    %2147 = vmatpush1.bf16.msra.mxu0 %v1944
    %2148 = vmatprep.subr.bf16.mxu0 0
    %2149 = vmatpush1.bf16.msra.mxu0 %v1945
    %2150 = vmatprep.subr.bf16.mxu0 0
    %2151 = vmatpush1.bf16.msra.mxu0 %v1946
    %2152 = vmatprep.subr.bf16.mxu0 0
    %2153 = vmatpush1.bf16.msra.mxu0 %v1947
    %2154 = vmatprep.subr.bf16.mxu0 0
    %2155 = vmatpush1.bf16.msra.mxu0 %v1948
    %2156 = vmatprep.subr.bf16.mxu0 0
    %2157 = vmatpush1.bf16.msra.mxu0 %v1949
    %2158 = vmatprep.subr.bf16.mxu0 0
    %2159 = vmatpush1.bf16.msra.mxu0 %v1950
    %2160 = vmatprep.subr.bf16.mxu0 0
    %2161 = vmatpush1.bf16.msra.mxu0 0
    %2162 = vmatprep.subr.bf16.mxu0 0
    %2163 = vmatpush1.bf16.msra.mxu0 0
    %2164 = vmatprep.subr.bf16.mxu0 0
    %2165 = vmatpush1.bf16.msra.mxu0 0
    %2166 = vmatprep.subr.bf16.mxu0 0
    %2167 = vmatpush1.bf16.msra.mxu0 0
    %2168 = vmatprep.subr.bf16.mxu0 0
    %2169 = vmatpush1.bf16.msra.mxu0 0
    %2170 = vmatprep.subr.bf16.mxu0 0
    %2171 = vmatpush1.bf16.msra.mxu0 0
    %2172 = vmatprep.subr.bf16.mxu0 0
    %2173 = vmatpush1.bf16.msra.mxu0 0
    %2174 = vmatprep.subr.bf16.mxu0 0
    %2175 = vmatpush1.bf16.msra.mxu0 0
    %2176 = vmatprep.mubr.bf16.mxu0 0
    %2177 = vmatmul.mubr.bf16.gmra.mrb[0].mxu0 %v1880
    %v2178 = vpop.f32.mrb[0].mxu0
    %v2179 = vadd.f32 %v1909, %v2178
    %v2180 = vpop.f32.mrb[0].mxu0
    %v2181 = vpop.f32.mrb[0].mxu0
    %v2182 = vadd.f32 %v1909, %v2181
    %v2183 = vpop.f32.mrb[0].mxu0
    %2184 = vmatprep.mubr.bf16.mxu0 0
    %2185 = vmatmul.mubr.bf16.gmra.mrb[0].mxu0 %v1881
    %v2186 = vpop.f32.mrb[0].mxu0
    %v2187 = vadd.f32 %v1909, %v2186
    %v2188 = vpop.f32.mrb[0].mxu0
    %v2189 = vpop.f32.mrb[0].mxu0
    %v2190 = vadd.f32 %v1909, %v2189
    %v2191 = vpop.f32.mrb[0].mxu0
    %2192 = vmatprep.mubr.bf16.mxu0 0
    %2193 = vmatmul.mubr.bf16.gmra.mrb[0].mxu0 %v1882
    %v2194 = vpop.f32.mrb[0].mxu0
    %v2195 = vadd.f32 %v1909, %v2194
    %v2196 = vpop.f32.mrb[0].mxu0
    %v2197 = vpop.f32.mrb[0].mxu0
    %v2198 = vadd.f32 %v1909, %v2197
    %v2199 = vpop.f32.mrb[0].mxu0
    %2200 = vmatprep.mubr.bf16.mxu0 0
    %2201 = vmatmul.mubr.bf16.gmra.mrb[0].mxu0 %v1883
    %v2202 = vpop.f32.mrb[0].mxu0
    %v2203 = vadd.f32 %v1909, %v2202
    %v2204 = vpop.f32.mrb[0].mxu0
    %v2205 = vpop.f32.mrb[0].mxu0
    %v2206 = vadd.f32 %v1909, %v2205
    %v2207 = vpop.f32.mrb[0].mxu0
    %2208 = vmatprep.mubr.bf16.mxu0 0
    %2209 = vmatmul.mubr.bf16.gmra.mrb[0].mxu0 %v1884
    %v2210 = vpop.f32.mrb[0].mxu0
    %v2211 = vadd.f32 %v1909, %v2210
    %v2212 = vpop.f32.mrb[0].mxu0
    %v2213 = vpop.f32.mrb[0].mxu0
    %v2214 = vadd.f32 %v1909, %v2213
    %v2215 = vpop.f32.mrb[0].mxu0
    %2216 = vmatprep.mubr.bf16.mxu0 0
    %2217 = vmatmul.mubr.bf16.gmra.mrb[0].mxu0 %v1885
    %v2218 = vpop.f32.mrb[0].mxu0
    %v2219 = vadd.f32 %v1909, %v2218
    %v2220 = vpop.f32.mrb[0].mxu0
    %v2221 = vpop.f32.mrb[0].mxu0
    %v2222 = vadd.f32 %v1909, %v2221
    %v2223 = vpop.f32.mrb[0].mxu0
    %2224 = vmatprep.mubr.bf16.mxu0 0
    %2225 = vmatmul.mubr.bf16.gmra.mrb[0].mxu0 %v1886
    %v2226 = vpop.f32.mrb[0].mxu0
    %v2227 = vadd.f32 %v1909, %v2226
    %v2228 = vpop.f32.mrb[0].mxu0
    %v2229 = vpop.f32.mrb[0].mxu0
    %v2230 = vadd.f32 %v1909, %v2229
    %v2231 = vpop.f32.mrb[0].mxu0
    %2232 = vmatprep.mubr.bf16.mxu0 0
    %2233 = vmatmul.mubr.bf16.gmra.mrb[0].mxu0 %v1887
    %v2234 = vpop.f32.mrb[0].mxu0
    %v2235 = vadd.f32 %v1909, %v2234
    %v2236 = vpop.f32.mrb[0].mxu0
    %v2237 = vpop.f32.mrb[0].mxu0
    %v2238 = vadd.f32 %v1909, %v2237
    %v2239 = vpop.f32.mrb[0].mxu0
    %2240 = vdwg.mxu0
    %v2241 = vsub.f32 0.0, %v2179
    %v2242 = vsub.f32 0.0, %v2182
    %v2243 = vsub.f32 0.0, %v2187
    %v2244 = vsub.f32 0.0, %v2190
    %v2245 = vsub.f32 0.0, %v2195
    %v2246 = vsub.f32 0.0, %v2198
    %v2247 = vsub.f32 0.0, %v2203
    %v2248 = vsub.f32 0.0, %v2206
    %v2249 = vsub.f32 0.0, %v2211
    %v2250 = vsub.f32 0.0, %v2214
    %v2251 = vsub.f32 0.0, %v2219
    %v2252 = vsub.f32 0.0, %v2222
    %v2253 = vsub.f32 0.0, %v2227
    %v2254 = vsub.f32 0.0, %v2230
    %v2255 = vsub.f32 0.0, %v2235
    %v2256 = vsub.f32 0.0, %v2238
    %v2257 = vmul.f32 %v2241, 1.442695
    %v2258 = vpow.pop %v2257
    %v2259 = vmul.f32 %v2242, 1.442695
    %v2260 = vpow.pop %v2259
    %v2261 = vmul.f32 %v2243, 1.442695
    %v2262 = vpow.pop %v2261
    %v2263 = vmul.f32 %v2244, 1.442695
    %v2264 = vpow.pop %v2263
    %v2265 = vmul.f32 %v2245, 1.442695
    %v2266 = vpow.pop %v2265
    %v2267 = vmul.f32 %v2246, 1.442695
    %v2268 = vpow.pop %v2267
    %v2269 = vmul.f32 %v2247, 1.442695
    %v2270 = vpow.pop %v2269
    %v2271 = vmul.f32 %v2248, 1.442695
    %v2272 = vpow.pop %v2271
    %v2273 = vmul.f32 %v2249, 1.442695
    %v2274 = vpow.pop %v2273
    %v2275 = vmul.f32 %v2250, 1.442695
    %v2276 = vpow.pop %v2275
    %v2277 = vmul.f32 %v2251, 1.442695
    %v2278 = vpow.pop %v2277
    %v2279 = vmul.f32 %v2252, 1.442695
    %v2280 = vpow.pop %v2279
    %v2281 = vmul.f32 %v2253, 1.442695
    %v2282 = vpow.pop %v2281
    %v2283 = vmul.f32 %v2254, 1.442695
    %v2284 = vpow.pop %v2283
    %v2285 = vmul.f32 %v2255, 1.442695
    %v2286 = vpow.pop %v2285
    %v2287 = vmul.f32 %v2256, 1.442695
    %v2288 = vpow.pop %v2287
    %v2289 = vadd.f32 %v2258, 1.0
    %v2290 = vadd.f32 %v2260, 1.0
    %v2291 = vadd.f32 %v2262, 1.0
    %v2292 = vadd.f32 %v2264, 1.0
    %v2293 = vadd.f32 %v2266, 1.0
    %v2294 = vadd.f32 %v2268, 1.0
    %v2295 = vadd.f32 %v2270, 1.0
    %v2296 = vadd.f32 %v2272, 1.0
    %v2297 = vadd.f32 %v2274, 1.0
    %v2298 = vadd.f32 %v2276, 1.0
    %v2299 = vadd.f32 %v2278, 1.0
    %v2300 = vadd.f32 %v2280, 1.0
    %v2301 = vadd.f32 %v2282, 1.0
    %v2302 = vadd.f32 %v2284, 1.0
    %v2303 = vadd.f32 %v2286, 1.0
    %v2304 = vadd.f32 %v2288, 1.0
    %v2305 = vrcp.pop %v2289
    %v2306 = vrcp.pop %v2290
    %v2307 = vrcp.pop %v2291
    %v2308 = vrcp.pop %v2292
    %v2309 = vrcp.pop %v2293
    %v2310 = vrcp.pop %v2294
    %v2311 = vrcp.pop %v2295
    %v2312 = vrcp.pop %v2296
    %v2313 = vrcp.pop %v2297
    %v2314 = vrcp.pop %v2298
    %v2315 = vrcp.pop %v2299
    %v2316 = vrcp.pop %v2300
    %v2317 = vrcp.pop %v2301
    %v2318 = vrcp.pop %v2302
    %v2319 = vrcp.pop %v2303
    %v2320 = vrcp.pop %v2304
    %v2321 = vpack.c.bf16 %v2306, %v2305
    %v2322 = vpack.c.bf16 %v2308, %v2307
    %v2323 = vpack.c.bf16 %v2310, %v2309
    %v2324 = vpack.c.bf16 %v2312, %v2311
    %v2325 = vpack.c.bf16 %v2314, %v2313
    %v2326 = vpack.c.bf16 %v2316, %v2315
    %v2327 = vpack.c.bf16 %v2318, %v2317
    %v2328 = vpack.c.bf16 %v2320, %v2319
    %v2329 = vld [vmem:[%s9] sm:$0xf]
    %v2330 = vld [vmem:[%s9 + $0x4] sm:$0xf]
    %v2331 = vld [vmem:[#allocation11] sm:$0x1]
    %v2333 = vlaneseq
    %v2334 = vshrl.u32 %v2333, 7
    %v2335 = vsub.s32 0, %v2334
    %v2336 = vrot.slane %v2331, %v2335
    %v2340 = vunpack.c.l.b16 %v2329
    %v2341 = vunpack.c.l.b16 %v2330
    %v2342 = vpack.c.b16 %v2341, %v2340
    %vm2344 = vcmask 130048
    %v2346 = vsel %vm2344, %v2136, 0
    %v2349 = vsel %vm2344, %v2137, 0
    %v2352 = vsel %vm2344, %v2138, 0
    %v2355 = vsel %vm2344, %v2139, 0
    %v2358 = vsel %vm2344, %v2140, 0
    %v2361 = vsel %vm2344, %v2141, 0
    %v2364 = vsel %vm2344, %v2142, 0
    %v2367 = vsel %vm2344, %v2143, 0
    %2369 = vmatprep.subr.bf16.mxu0 0
    %2370 = vmatpush1.bf16.msra.mxu0 %v2342
    %2371 = vmatprep.subr.bf16.mxu0 0
    %2372 = vmatpush1.bf16.msra.mxu0 0
    %2373 = vmatprep.subr.bf16.mxu0 0
    %2374 = vmatpush1.bf16.msra.mxu0 0
    %2375 = vmatprep.subr.bf16.mxu0 0
    %2376 = vmatpush1.bf16.msra.mxu0 0
    %2377 = vmatprep.subr.bf16.mxu0 0
    %2378 = vmatpush1.bf16.msra.mxu0 0
    %2379 = vmatprep.subr.bf16.mxu0 0
    %2380 = vmatpush1.bf16.msra.mxu0 0
    %2381 = vmatprep.subr.bf16.mxu0 0
    %2382 = vmatpush1.bf16.msra.mxu0 0
    %2383 = vmatprep.subr.bf16.mxu0 0
    %2384 = vmatpush1.bf16.msra.mxu0 0
    %2385 = vmatprep.subr.bf16.mxu0 0
    %2386 = vmatpush1.bf16.msra.mxu0 0
    %2387 = vmatprep.subr.bf16.mxu0 0
    %2388 = vmatpush1.bf16.msra.mxu0 0
    %2389 = vmatprep.subr.bf16.mxu0 0
    %2390 = vmatpush1.bf16.msra.mxu0 0
    %2391 = vmatprep.subr.bf16.mxu0 0
    %2392 = vmatpush1.bf16.msra.mxu0 0
    %2393 = vmatprep.subr.bf16.mxu0 0
    %2394 = vmatpush1.bf16.msra.mxu0 0
    %2395 = vmatprep.subr.bf16.mxu0 0
    %2396 = vmatpush1.bf16.msra.mxu0 0
    %2397 = vmatprep.subr.bf16.mxu0 0
    %2398 = vmatpush1.bf16.msra.mxu0 0
    %2399 = vmatprep.subr.bf16.mxu0 0
    %2400 = vmatpush1.bf16.msra.mxu0 0
    %2401 = vmatprep.mubr.bf16.mxu0 0
    %2402 = vmatmul.mubr.bf16.gmra.mrb[0].mxu0 %v2346
    %v2403 = vpop.f32.mrb[0].mxu0
    %v2404 = vadd.f32 %v2336, %v2403
    %v2405 = vpop.f32.mrb[0].mxu0
    %v2406 = vpop.f32.mrb[0].mxu0
    %v2407 = vadd.f32 %v2336, %v2406
    %v2408 = vpop.f32.mrb[0].mxu0
    %2409 = vmatprep.mubr.bf16.mxu0 0
    %2410 = vmatmul.mubr.bf16.gmra.mrb[0].mxu0 %v2349
    %v2411 = vpop.f32.mrb[0].mxu0
    %v2412 = vadd.f32 %v2336, %v2411
    %v2413 = vpop.f32.mrb[0].mxu0
    %v2414 = vpop.f32.mrb[0].mxu0
    %v2415 = vadd.f32 %v2336, %v2414
    %v2416 = vpop.f32.mrb[0].mxu0
    %2417 = vmatprep.mubr.bf16.mxu0 0
    %2418 = vmatmul.mubr.bf16.gmra.mrb[0].mxu0 %v2352
    %v2419 = vpop.f32.mrb[0].mxu0
    %v2420 = vadd.f32 %v2336, %v2419
    %v2421 = vpop.f32.mrb[0].mxu0
    %v2422 = vpop.f32.mrb[0].mxu0
    %v2423 = vadd.f32 %v2336, %v2422
    %v2424 = vpop.f32.mrb[0].mxu0
    %2425 = vmatprep.mubr.bf16.mxu0 0
    %2426 = vmatmul.mubr.bf16.gmra.mrb[0].mxu0 %v2355
    %v2427 = vpop.f32.mrb[0].mxu0
    %v2428 = vadd.f32 %v2336, %v2427
    %v2429 = vpop.f32.mrb[0].mxu0
    %v2430 = vpop.f32.mrb[0].mxu0
    %v2431 = vadd.f32 %v2336, %v2430
    %v2432 = vpop.f32.mrb[0].mxu0
    %2433 = vmatprep.mubr.bf16.mxu0 0
    %2434 = vmatmul.mubr.bf16.gmra.mrb[0].mxu0 %v2358
    %v2435 = vpop.f32.mrb[0].mxu0
    %v2436 = vadd.f32 %v2336, %v2435
    %v2437 = vpop.f32.mrb[0].mxu0
    %v2438 = vpop.f32.mrb[0].mxu0
    %v2439 = vadd.f32 %v2336, %v2438
    %v2440 = vpop.f32.mrb[0].mxu0
    %2441 = vmatprep.mubr.bf16.mxu0 0
    %2442 = vmatmul.mubr.bf16.gmra.mrb[0].mxu0 %v2361
    %v2443 = vpop.f32.mrb[0].mxu0
    %v2444 = vadd.f32 %v2336, %v2443
    %v2445 = vpop.f32.mrb[0].mxu0
    %v2446 = vpop.f32.mrb[0].mxu0
    %v2447 = vadd.f32 %v2336, %v2446
    %v2448 = vpop.f32.mrb[0].mxu0
    %2449 = vmatprep.mubr.bf16.mxu0 0
    %2450 = vmatmul.mubr.bf16.gmra.mrb[0].mxu0 %v2364
    %v2451 = vpop.f32.mrb[0].mxu0
    %v2452 = vadd.f32 %v2336, %v2451
    %v2453 = vpop.f32.mrb[0].mxu0
    %v2454 = vpop.f32.mrb[0].mxu0
    %v2455 = vadd.f32 %v2336, %v2454
    %v2456 = vpop.f32.mrb[0].mxu0
    %2457 = vmatprep.mubr.bf16.mxu0 0
    %2458 = vmatmul.mubr.bf16.gmra.mrb[0].mxu0 %v2367
    %v2459 = vpop.f32.mrb[0].mxu0
    %v2460 = vadd.f32 %v2336, %v2459
    %v2461 = vpop.f32.mrb[0].mxu0
    %v2462 = vpop.f32.mrb[0].mxu0
    %v2463 = vadd.f32 %v2336, %v2462
    %v2464 = vpop.f32.mrb[0].mxu0
    %2465 = vdwg.mxu0
    %v2466 = vsub.f32 0.0, %v2404
    %v2467 = vsub.f32 0.0, %v2407
    %v2468 = vsub.f32 0.0, %v2412
    %v2469 = vsub.f32 0.0, %v2415
    %v2470 = vsub.f32 0.0, %v2420
    %v2471 = vsub.f32 0.0, %v2423
    %v2472 = vsub.f32 0.0, %v2428
    %v2473 = vsub.f32 0.0, %v2431
    %v2474 = vsub.f32 0.0, %v2436
    %v2475 = vsub.f32 0.0, %v2439
    %v2476 = vsub.f32 0.0, %v2444
    %v2477 = vsub.f32 0.0, %v2447
    %v2478 = vsub.f32 0.0, %v2452
    %v2479 = vsub.f32 0.0, %v2455
    %v2480 = vsub.f32 0.0, %v2460
    %v2481 = vsub.f32 0.0, %v2463
    %v2482 = vmul.f32 %v2466, 1.442695
    %v2483 = vpow.pop %v2482
    %v2484 = vmul.f32 %v2467, 1.442695
    %v2485 = vpow.pop %v2484
    %v2486 = vmul.f32 %v2468, 1.442695
    %v2487 = vpow.pop %v2486
    %v2488 = vmul.f32 %v2469, 1.442695
    %v2489 = vpow.pop %v2488
    %v2490 = vmul.f32 %v2470, 1.442695
    %v2491 = vpow.pop %v2490
    %v2492 = vmul.f32 %v2471, 1.442695
    %v2493 = vpow.pop %v2492
    %v2494 = vmul.f32 %v2472, 1.442695
    %v2495 = vpow.pop %v2494
    %v2496 = vmul.f32 %v2473, 1.442695
    %v2497 = vpow.pop %v2496
    %v2498 = vmul.f32 %v2474, 1.442695
    %v2499 = vpow.pop %v2498
    %v2500 = vmul.f32 %v2475, 1.442695
    %v2501 = vpow.pop %v2500
    %v2502 = vmul.f32 %v2476, 1.442695
    %v2503 = vpow.pop %v2502
    %v2504 = vmul.f32 %v2477, 1.442695
    %v2505 = vpow.pop %v2504
    %v2506 = vmul.f32 %v2478, 1.442695
    %v2507 = vpow.pop %v2506
    %v2508 = vmul.f32 %v2479, 1.442695
    %v2509 = vpow.pop %v2508
    %v2510 = vmul.f32 %v2480, 1.442695
    %v2511 = vpow.pop %v2510
    %v2512 = vmul.f32 %v2481, 1.442695
    %v2513 = vpow.pop %v2512
    %v2514 = vadd.f32 %v2483, 1.0
    %v2515 = vadd.f32 %v2485, 1.0
    %v2516 = vadd.f32 %v2487, 1.0
    %v2517 = vadd.f32 %v2489, 1.0
    %v2518 = vadd.f32 %v2491, 1.0
    %v2519 = vadd.f32 %v2493, 1.0
    %v2520 = vadd.f32 %v2495, 1.0
    %v2521 = vadd.f32 %v2497, 1.0
    %v2522 = vadd.f32 %v2499, 1.0
    %v2523 = vadd.f32 %v2501, 1.0
    %v2524 = vadd.f32 %v2503, 1.0
    %v2525 = vadd.f32 %v2505, 1.0
    %v2526 = vadd.f32 %v2507, 1.0
    %v2527 = vadd.f32 %v2509, 1.0
    %v2528 = vadd.f32 %v2511, 1.0
    %v2529 = vadd.f32 %v2513, 1.0
    %v2530 = vrcp.pop %v2514
    %v2531 = vrcp.pop %v2515
    %v2532 = vrcp.pop %v2516
    %v2533 = vrcp.pop %v2517
    %v2534 = vrcp.pop %v2518
    %v2535 = vrcp.pop %v2519
    %v2536 = vrcp.pop %v2520
    %v2537 = vrcp.pop %v2521
    %v2538 = vrcp.pop %v2522
    %v2539 = vrcp.pop %v2523
    %v2540 = vrcp.pop %v2524
    %v2541 = vrcp.pop %v2525
    %v2542 = vrcp.pop %v2526
    %v2543 = vrcp.pop %v2527
    %v2544 = vrcp.pop %v2528
    %v2545 = vrcp.pop %v2529
    %v2546 = vpack.c.bf16 %v2531, %v2530
    %v2547 = vpack.c.bf16 %v2533, %v2532
    %v2548 = vpack.c.bf16 %v2535, %v2534
    %v2549 = vpack.c.bf16 %v2537, %v2536
    %v2550 = vpack.c.bf16 %v2539, %v2538
    %v2551 = vpack.c.bf16 %v2541, %v2540
    %v2552 = vpack.c.bf16 %v2543, %v2542
    %v2553 = vpack.c.bf16 %v2545, %v2544
    %v2555 = vsel %vm2344, %v2321, 0
    %v2558 = vsel %vm2344, %v2322, 0
    %v2561 = vsel %vm2344, %v2323, 0
    %v2564 = vsel %vm2344, %v2324, 0
    %v2567 = vsel %vm2344, %v2325, 0
    %v2570 = vsel %vm2344, %v2326, 0
    %v2573 = vsel %vm2344, %v2327, 0
    %v2576 = vsel %vm2344, %v2328, 0
    %2578 = vmatprep.subr.bf16.mxu0 0
    %2579 = vmatpush1.bf16.msra.mxu0 %v2342
    %2580 = vmatprep.subr.bf16.mxu0 0
    %2581 = vmatpush1.bf16.msra.mxu0 0
    %2582 = vmatprep.subr.bf16.mxu0 0
    %2583 = vmatpush1.bf16.msra.mxu0 0
    %2584 = vmatprep.subr.bf16.mxu0 0
    %2585 = vmatpush1.bf16.msra.mxu0 0
    %2586 = vmatprep.subr.bf16.mxu0 0
    %2587 = vmatpush1.bf16.msra.mxu0 0
    %2588 = vmatprep.subr.bf16.mxu0 0
    %2589 = vmatpush1.bf16.msra.mxu0 0
    %2590 = vmatprep.subr.bf16.mxu0 0
    %2591 = vmatpush1.bf16.msra.mxu0 0
    %2592 = vmatprep.subr.bf16.mxu0 0
    %2593 = vmatpush1.bf16.msra.mxu0 0
    %2594 = vmatprep.subr.bf16.mxu0 0
    %2595 = vmatpush1.bf16.msra.mxu0 0
    %2596 = vmatprep.subr.bf16.mxu0 0
    %2597 = vmatpush1.bf16.msra.mxu0 0
    %2598 = vmatprep.subr.bf16.mxu0 0
    %2599 = vmatpush1.bf16.msra.mxu0 0
    %2600 = vmatprep.subr.bf16.mxu0 0
    %2601 = vmatpush1.bf16.msra.mxu0 0
    %2602 = vmatprep.subr.bf16.mxu0 0
    %2603 = vmatpush1.bf16.msra.mxu0 0
    %2604 = vmatprep.subr.bf16.mxu0 0
    %2605 = vmatpush1.bf16.msra.mxu0 0
    %2606 = vmatprep.subr.bf16.mxu0 0
    %2607 = vmatpush1.bf16.msra.mxu0 0
    %2608 = vmatprep.subr.bf16.mxu0 0
    %2609 = vmatpush1.bf16.msra.mxu0 0
    %2610 = vmatprep.mubr.bf16.mxu0 0
    %2611 = vmatmul.mubr.bf16.gmra.mrb[0].mxu0 %v2555
    %v2612 = vpop.f32.mrb[0].mxu0
    %v2613 = vadd.f32 %v2336, %v2612
    %v2614 = vpop.f32.mrb[0].mxu0
    %v2615 = vpop.f32.mrb[0].mxu0
    %v2616 = vadd.f32 %v2336, %v2615
    %v2617 = vpop.f32.mrb[0].mxu0
    %2618 = vmatprep.mubr.bf16.mxu0 0
    %2619 = vmatmul.mubr.bf16.gmra.mrb[0].mxu0 %v2558
    %v2620 = vpop.f32.mrb[0].mxu0
    %v2621 = vadd.f32 %v2336, %v2620
    %v2622 = vpop.f32.mrb[0].mxu0
    %v2623 = vpop.f32.mrb[0].mxu0
    %v2624 = vadd.f32 %v2336, %v2623
    %v2625 = vpop.f32.mrb[0].mxu0
    %2626 = vmatprep.mubr.bf16.mxu0 0
    %2627 = vmatmul.mubr.bf16.gmra.mrb[0].mxu0 %v2561
    %v2628 = vpop.f32.mrb[0].mxu0
    %v2629 = vadd.f32 %v2336, %v2628
    %v2630 = vpop.f32.mrb[0].mxu0
    %v2631 = vpop.f32.mrb[0].mxu0
    %v2632 = vadd.f32 %v2336, %v2631
    %v2633 = vpop.f32.mrb[0].mxu0
    %2634 = vmatprep.mubr.bf16.mxu0 0
    %2635 = vmatmul.mubr.bf16.gmra.mrb[0].mxu0 %v2564
    %v2636 = vpop.f32.mrb[0].mxu0
    %v2637 = vadd.f32 %v2336, %v2636
    %v2638 = vpop.f32.mrb[0].mxu0
    %v2639 = vpop.f32.mrb[0].mxu0
    %v2640 = vadd.f32 %v2336, %v2639
    %v2641 = vpop.f32.mrb[0].mxu0
    %2642 = vmatprep.mubr.bf16.mxu0 0
    %2643 = vmatmul.mubr.bf16.gmra.mrb[0].mxu0 %v2567
    %v2644 = vpop.f32.mrb[0].mxu0
    %v2645 = vadd.f32 %v2336, %v2644
    %v2646 = vpop.f32.mrb[0].mxu0
    %v2647 = vpop.f32.mrb[0].mxu0
    %v2648 = vadd.f32 %v2336, %v2647
    %v2649 = vpop.f32.mrb[0].mxu0
    %2650 = vmatprep.mubr.bf16.mxu0 0
    %2651 = vmatmul.mubr.bf16.gmra.mrb[0].mxu0 %v2570
    %v2652 = vpop.f32.mrb[0].mxu0
    %v2653 = vadd.f32 %v2336, %v2652
    %v2654 = vpop.f32.mrb[0].mxu0
    %v2655 = vpop.f32.mrb[0].mxu0
    %v2656 = vadd.f32 %v2336, %v2655
    %v2657 = vpop.f32.mrb[0].mxu0
    %2658 = vmatprep.mubr.bf16.mxu0 0
    %2659 = vmatmul.mubr.bf16.gmra.mrb[0].mxu0 %v2573
    %v2660 = vpop.f32.mrb[0].mxu0
    %v2661 = vadd.f32 %v2336, %v2660
    %v2662 = vpop.f32.mrb[0].mxu0
    %v2663 = vpop.f32.mrb[0].mxu0
    %v2664 = vadd.f32 %v2336, %v2663
    %v2665 = vpop.f32.mrb[0].mxu0
    %2666 = vmatprep.mubr.bf16.mxu0 0
    %2667 = vmatmul.mubr.bf16.gmra.mrb[0].mxu0 %v2576
    %v2668 = vpop.f32.mrb[0].mxu0
    %v2669 = vadd.f32 %v2336, %v2668
    %v2670 = vpop.f32.mrb[0].mxu0
    %v2671 = vpop.f32.mrb[0].mxu0
    %v2672 = vadd.f32 %v2336, %v2671
    %v2673 = vpop.f32.mrb[0].mxu0
    %2674 = vdwg.mxu0
    %v2675 = vsub.f32 0.0, %v2613
    %v2676 = vsub.f32 0.0, %v2616
    %v2677 = vsub.f32 0.0, %v2621
    %v2678 = vsub.f32 0.0, %v2624
    %v2679 = vsub.f32 0.0, %v2629
    %v2680 = vsub.f32 0.0, %v2632
    %v2681 = vsub.f32 0.0, %v2637
    %v2682 = vsub.f32 0.0, %v2640
    %v2683 = vsub.f32 0.0, %v2645
    %v2684 = vsub.f32 0.0, %v2648
    %v2685 = vsub.f32 0.0, %v2653
    %v2686 = vsub.f32 0.0, %v2656
    %v2687 = vsub.f32 0.0, %v2661
    %v2688 = vsub.f32 0.0, %v2664
    %v2689 = vsub.f32 0.0, %v2669
    %v2690 = vsub.f32 0.0, %v2672
    %v2691 = vmul.f32 %v2675, 1.442695
    %v2692 = vpow.pop %v2691
    %v2693 = vmul.f32 %v2676, 1.442695
    %v2694 = vpow.pop %v2693
    %v2695 = vmul.f32 %v2677, 1.442695
    %v2696 = vpow.pop %v2695
    %v2697 = vmul.f32 %v2678, 1.442695
    %v2698 = vpow.pop %v2697
    %v2699 = vmul.f32 %v2679, 1.442695
    %v2700 = vpow.pop %v2699
    %v2701 = vmul.f32 %v2680, 1.442695
    %v2702 = vpow.pop %v2701
    %v2703 = vmul.f32 %v2681, 1.442695
    %v2704 = vpow.pop %v2703
    %v2705 = vmul.f32 %v2682, 1.442695
    %v2706 = vpow.pop %v2705
    %v2707 = vmul.f32 %v2683, 1.442695
    %v2708 = vpow.pop %v2707
    %v2709 = vmul.f32 %v2684, 1.442695
    %v2710 = vpow.pop %v2709
    %v2711 = vmul.f32 %v2685, 1.442695
    %v2712 = vpow.pop %v2711
    %v2713 = vmul.f32 %v2686, 1.442695
    %v2714 = vpow.pop %v2713
    %v2715 = vmul.f32 %v2687, 1.442695
    %v2716 = vpow.pop %v2715
    %v2717 = vmul.f32 %v2688, 1.442695
    %v2718 = vpow.pop %v2717
    %v2719 = vmul.f32 %v2689, 1.442695
    %v2720 = vpow.pop %v2719
    %v2721 = vmul.f32 %v2690, 1.442695
    %v2722 = vpow.pop %v2721
    %v2723 = vadd.f32 %v2692, 1.0
    %v2724 = vadd.f32 %v2694, 1.0
    %v2725 = vadd.f32 %v2696, 1.0
    %v2726 = vadd.f32 %v2698, 1.0
    %v2727 = vadd.f32 %v2700, 1.0
    %v2728 = vadd.f32 %v2702, 1.0
    %v2729 = vadd.f32 %v2704, 1.0
    %v2730 = vadd.f32 %v2706, 1.0
    %v2731 = vadd.f32 %v2708, 1.0
    %v2732 = vadd.f32 %v2710, 1.0
    %v2733 = vadd.f32 %v2712, 1.0
    %v2734 = vadd.f32 %v2714, 1.0
    %v2735 = vadd.f32 %v2716, 1.0
    %v2736 = vadd.f32 %v2718, 1.0
    %v2737 = vadd.f32 %v2720, 1.0
    %v2738 = vadd.f32 %v2722, 1.0
    %v2739 = vrcp.pop %v2723
    %v2740 = vrcp.pop %v2724
    %v2741 = vrcp.pop %v2725
    %v2742 = vrcp.pop %v2726
    %v2743 = vrcp.pop %v2727
    %v2744 = vrcp.pop %v2728
    %v2745 = vrcp.pop %v2729
    %v2746 = vrcp.pop %v2730
    %v2747 = vrcp.pop %v2731
    %v2748 = vrcp.pop %v2732
    %v2749 = vrcp.pop %v2733
    %v2750 = vrcp.pop %v2734
    %v2751 = vrcp.pop %v2735
    %v2752 = vrcp.pop %v2736
    %v2753 = vrcp.pop %v2737
    %v2754 = vrcp.pop %v2738
    %v2755 = vpack.c.bf16 %v2740, %v2739
    %v2756 = vpack.c.bf16 %v2742, %v2741
    %v2757 = vpack.c.bf16 %v2744, %v2743
    %v2758 = vpack.c.bf16 %v2746, %v2745
    %v2759 = vpack.c.bf16 %v2748, %v2747
    %v2760 = vpack.c.bf16 %v2750, %v2749
    %v2761 = vpack.c.bf16 %v2752, %v2751
    %v2762 = vpack.c.bf16 %v2754, %v2753
    %v2763 = vld [vmem:[%s11] sm:$0xf]
    %v2764 = vld [vmem:[%s11 + $0x4] sm:$0xf]
    %v2765 = vld [vmem:[%s12] sm:$0x1]
    %v2767 = vlaneseq
    %v2768 = vshrl.u32 %v2767, 7
    %v2769 = vsub.s32 0, %v2768
    %v2770 = vrot.slane %v2765, %v2769
    %v2774 = vunpack.c.l.b16 %v2763
    %v2775 = vunpack.c.l.b16 %v2764
    %v2776 = vpack.c.b16 %v2775, %v2774
    %v2779 = vsel %vm2344, %v2546, 0
    %v2782 = vsel %vm2344, %v2547, 0
    %v2785 = vsel %vm2344, %v2548, 0
    %v2788 = vsel %vm2344, %v2549, 0
    %v2791 = vsel %vm2344, %v2550, 0
    %v2794 = vsel %vm2344, %v2551, 0
    %v2797 = vsel %vm2344, %v2552, 0
    %v2800 = vsel %vm2344, %v2553, 0
    %2802 = vmatprep.subr.bf16.mxu0 0
    %2803 = vmatpush1.bf16.msra.mxu0 %v2776
    %2804 = vmatprep.subr.bf16.mxu0 0
    %2805 = vmatpush1.bf16.msra.mxu0 0
    %2806 = vmatprep.subr.bf16.mxu0 0
    %2807 = vmatpush1.bf16.msra.mxu0 0
    %2808 = vmatprep.subr.bf16.mxu0 0
    %2809 = vmatpush1.bf16.msra.mxu0 0
    %2810 = vmatprep.subr.bf16.mxu0 0
    %2811 = vmatpush1.bf16.msra.mxu0 0
    %2812 = vmatprep.subr.bf16.mxu0 0
    %2813 = vmatpush1.bf16.msra.mxu0 0
    %2814 = vmatprep.subr.bf16.mxu0 0
    %2815 = vmatpush1.bf16.msra.mxu0 0
    %2816 = vmatprep.subr.bf16.mxu0 0
    %2817 = vmatpush1.bf16.msra.mxu0 0
    %2818 = vmatprep.subr.bf16.mxu0 0
    %2819 = vmatpush1.bf16.msra.mxu0 0
    %2820 = vmatprep.subr.bf16.mxu0 0
    %2821 = vmatpush1.bf16.msra.mxu0 0
    %2822 = vmatprep.subr.bf16.mxu0 0
    %2823 = vmatpush1.bf16.msra.mxu0 0
    %2824 = vmatprep.subr.bf16.mxu0 0
    %2825 = vmatpush1.bf16.msra.mxu0 0
    %2826 = vmatprep.subr.bf16.mxu0 0
    %2827 = vmatpush1.bf16.msra.mxu0 0
    %2828 = vmatprep.subr.bf16.mxu0 0
    %2829 = vmatpush1.bf16.msra.mxu0 0
    %2830 = vmatprep.subr.bf16.mxu0 0
    %2831 = vmatpush1.bf16.msra.mxu0 0
    %2832 = vmatprep.subr.bf16.mxu0 0
    %2833 = vmatpush1.bf16.msra.mxu0 0
    %2834 = vmatprep.mubr.bf16.mxu0 0
    %2835 = vmatmul.mubr.bf16.gmra.mrb[0].mxu0 %v2779
    %v2836 = vpop.f32.mrb[0].mxu0
    %v2837 = vadd.f32 %v2770, %v2836
    %v2838 = vpop.f32.mrb[0].mxu0
    %v2839 = vpop.f32.mrb[0].mxu0
    %v2840 = vadd.f32 %v2770, %v2839
    %v2841 = vpop.f32.mrb[0].mxu0
    %2842 = vmatprep.mubr.bf16.mxu0 0
    %2843 = vmatmul.mubr.bf16.gmra.mrb[0].mxu0 %v2782
    %v2844 = vpop.f32.mrb[0].mxu0
    %v2845 = vadd.f32 %v2770, %v2844
    %v2846 = vpop.f32.mrb[0].mxu0
    %v2847 = vpop.f32.mrb[0].mxu0
    %v2848 = vadd.f32 %v2770, %v2847
    %v2849 = vpop.f32.mrb[0].mxu0
    %2850 = vmatprep.mubr.bf16.mxu0 0
    %2851 = vmatmul.mubr.bf16.gmra.mrb[0].mxu0 %v2785
    %v2852 = vpop.f32.mrb[0].mxu0
    %v2853 = vadd.f32 %v2770, %v2852
    %v2854 = vpop.f32.mrb[0].mxu0
    %v2855 = vpop.f32.mrb[0].mxu0
    %v2856 = vadd.f32 %v2770, %v2855
    %v2857 = vpop.f32.mrb[0].mxu0
    %2858 = vmatprep.mubr.bf16.mxu0 0
    %2859 = vmatmul.mubr.bf16.gmra.mrb[0].mxu0 %v2788
    %v2860 = vpop.f32.mrb[0].mxu0
    %v2861 = vadd.f32 %v2770, %v2860
    %v2862 = vpop.f32.mrb[0].mxu0
    %v2863 = vpop.f32.mrb[0].mxu0
    %v2864 = vadd.f32 %v2770, %v2863
    %v2865 = vpop.f32.mrb[0].mxu0
    %2866 = vmatprep.mubr.bf16.mxu0 0
    %2867 = vmatmul.mubr.bf16.gmra.mrb[0].mxu0 %v2791
    %v2868 = vpop.f32.mrb[0].mxu0
    %v2869 = vadd.f32 %v2770, %v2868
    %v2870 = vpop.f32.mrb[0].mxu0
    %v2871 = vpop.f32.mrb[0].mxu0
    %v2872 = vadd.f32 %v2770, %v2871
    %v2873 = vpop.f32.mrb[0].mxu0
    %2874 = vmatprep.mubr.bf16.mxu0 0
    %2875 = vmatmul.mubr.bf16.gmra.mrb[0].mxu0 %v2794
    %v2876 = vpop.f32.mrb[0].mxu0
    %v2877 = vadd.f32 %v2770, %v2876
    %v2878 = vpop.f32.mrb[0].mxu0
    %v2879 = vpop.f32.mrb[0].mxu0
    %v2880 = vadd.f32 %v2770, %v2879
    %v2881 = vpop.f32.mrb[0].mxu0
    %2882 = vmatprep.mubr.bf16.mxu0 0
    %2883 = vmatmul.mubr.bf16.gmra.mrb[0].mxu0 %v2797
    %v2884 = vpop.f32.mrb[0].mxu0
    %v2885 = vadd.f32 %v2770, %v2884
    %v2886 = vpop.f32.mrb[0].mxu0
    %v2887 = vpop.f32.mrb[0].mxu0
    %v2888 = vadd.f32 %v2770, %v2887
    %v2889 = vpop.f32.mrb[0].mxu0
    %2890 = vmatprep.mubr.bf16.mxu0 0
    %2891 = vmatmul.mubr.bf16.gmra.mrb[0].mxu0 %v2800
    %v2892 = vpop.f32.mrb[0].mxu0
    %v2893 = vadd.f32 %v2770, %v2892
    %v2894 = vpop.f32.mrb[0].mxu0
    %v2895 = vpop.f32.mrb[0].mxu0
    %v2896 = vadd.f32 %v2770, %v2895
    %v2897 = vpop.f32.mrb[0].mxu0
    %2898 = vdwg.mxu0
    %v2899 = vsub.f32 0.0, %v2837
    %v2900 = vsub.f32 0.0, %v2840
    %v2901 = vsub.f32 0.0, %v2845
    %v2902 = vsub.f32 0.0, %v2848
    %v2903 = vsub.f32 0.0, %v2853
    %v2904 = vsub.f32 0.0, %v2856
    %v2905 = vsub.f32 0.0, %v2861
    %v2906 = vsub.f32 0.0, %v2864
    %v2907 = vsub.f32 0.0, %v2869
    %v2908 = vsub.f32 0.0, %v2872
    %v2909 = vsub.f32 0.0, %v2877
    %v2910 = vsub.f32 0.0, %v2880
    %v2911 = vsub.f32 0.0, %v2885
    %v2912 = vsub.f32 0.0, %v2888
    %v2913 = vsub.f32 0.0, %v2893
    %v2914 = vsub.f32 0.0, %v2896
    %v2915 = vmul.f32 %v2899, 1.442695
    %v2916 = vpow.pop %v2915
    %v2917 = vmul.f32 %v2900, 1.442695
    %v2918 = vpow.pop %v2917
    %v2919 = vmul.f32 %v2901, 1.442695
    %v2920 = vpow.pop %v2919
    %v2921 = vmul.f32 %v2902, 1.442695
    %v2922 = vpow.pop %v2921
    %v2923 = vmul.f32 %v2903, 1.442695
    %v2924 = vpow.pop %v2923
    %v2925 = vmul.f32 %v2904, 1.442695
    %v2926 = vpow.pop %v2925
    %v2927 = vmul.f32 %v2905, 1.442695
    %v2928 = vpow.pop %v2927
    %v2929 = vmul.f32 %v2906, 1.442695
    %v2930 = vpow.pop %v2929
    %v2931 = vmul.f32 %v2907, 1.442695
    %v2932 = vpow.pop %v2931
    %v2933 = vmul.f32 %v2908, 1.442695
    %v2934 = vpow.pop %v2933
    %v2935 = vmul.f32 %v2909, 1.442695
    %v2936 = vpow.pop %v2935
    %v2937 = vmul.f32 %v2910, 1.442695
    %v2938 = vpow.pop %v2937
    %v2939 = vmul.f32 %v2911, 1.442695
    %v2940 = vpow.pop %v2939
    %v2941 = vmul.f32 %v2912, 1.442695
    %v2942 = vpow.pop %v2941
    %v2943 = vmul.f32 %v2913, 1.442695
    %v2944 = vpow.pop %v2943
    %v2945 = vmul.f32 %v2914, 1.442695
    %v2946 = vpow.pop %v2945
    %v2947 = vadd.f32 %v2916, 1.0
    %v2948 = vadd.f32 %v2918, 1.0
    %v2949 = vadd.f32 %v2920, 1.0
    %v2950 = vadd.f32 %v2922, 1.0
    %v2951 = vadd.f32 %v2924, 1.0
    %v2952 = vadd.f32 %v2926, 1.0
    %v2953 = vadd.f32 %v2928, 1.0
    %v2954 = vadd.f32 %v2930, 1.0
    %v2955 = vadd.f32 %v2932, 1.0
    %v2956 = vadd.f32 %v2934, 1.0
    %v2957 = vadd.f32 %v2936, 1.0
    %v2958 = vadd.f32 %v2938, 1.0
    %v2959 = vadd.f32 %v2940, 1.0
    %v2960 = vadd.f32 %v2942, 1.0
    %v2961 = vadd.f32 %v2944, 1.0
    %v2962 = vadd.f32 %v2946, 1.0
    %v2963 = vrcp.pop %v2947
    %v2964 = vrcp.pop %v2948
    %v2965 = vrcp.pop %v2949
    %v2966 = vrcp.pop %v2950
    %v2967 = vrcp.pop %v2951
    %v2968 = vrcp.pop %v2952
    %v2969 = vrcp.pop %v2953
    %v2970 = vrcp.pop %v2954
    %v2971 = vrcp.pop %v2955
    %v2972 = vrcp.pop %v2956
    %v2973 = vrcp.pop %v2957
    %v2974 = vrcp.pop %v2958
    %v2975 = vrcp.pop %v2959
    %v2976 = vrcp.pop %v2960
    %v2977 = vrcp.pop %v2961
    %v2978 = vrcp.pop %v2962
    %v2979 = vpack.c.bf16 %v2964, %v2963
    %v2980 = vpack.c.bf16 %v2966, %v2965
    %v2981 = vpack.c.bf16 %v2968, %v2967
    %v2982 = vpack.c.bf16 %v2970, %v2969
    %v2983 = vpack.c.bf16 %v2972, %v2971
    %v2984 = vpack.c.bf16 %v2974, %v2973
    %v2985 = vpack.c.bf16 %v2976, %v2975
    %v2986 = vpack.c.bf16 %v2978, %v2977
    %v2988 = vsel %vm2344, %v2755, 0
    %v2991 = vsel %vm2344, %v2756, 0
    %v2994 = vsel %vm2344, %v2757, 0
    %v2997 = vsel %vm2344, %v2758, 0
    %v3000 = vsel %vm2344, %v2759, 0
    %v3003 = vsel %vm2344, %v2760, 0
    %v3006 = vsel %vm2344, %v2761, 0
    %v3009 = vsel %vm2344, %v2762, 0
    %3011 = vmatprep.subr.bf16.mxu0 0
    %3012 = vmatpush1.bf16.msra.mxu0 %v2776
    %3013 = vmatprep.subr.bf16.mxu0 0
    %3014 = vmatpush1.bf16.msra.mxu0 0
    %3015 = vmatprep.subr.bf16.mxu0 0
    %3016 = vmatpush1.bf16.msra.mxu0 0
    %3017 = vmatprep.subr.bf16.mxu0 0
    %3018 = vmatpush1.bf16.msra.mxu0 0
    %3019 = vmatprep.subr.bf16.mxu0 0
    %3020 = vmatpush1.bf16.msra.mxu0 0
    %3021 = vmatprep.subr.bf16.mxu0 0
    %3022 = vmatpush1.bf16.msra.mxu0 0
    %3023 = vmatprep.subr.bf16.mxu0 0
    %3024 = vmatpush1.bf16.msra.mxu0 0
    %3025 = vmatprep.subr.bf16.mxu0 0
    %3026 = vmatpush1.bf16.msra.mxu0 0
    %3027 = vmatprep.subr.bf16.mxu0 0
    %3028 = vmatpush1.bf16.msra.mxu0 0
    %3029 = vmatprep.subr.bf16.mxu0 0
    %3030 = vmatpush1.bf16.msra.mxu0 0
    %3031 = vmatprep.subr.bf16.mxu0 0
    %3032 = vmatpush1.bf16.msra.mxu0 0
    %3033 = vmatprep.subr.bf16.mxu0 0
    %3034 = vmatpush1.bf16.msra.mxu0 0
    %3035 = vmatprep.subr.bf16.mxu0 0
    %3036 = vmatpush1.bf16.msra.mxu0 0
    %3037 = vmatprep.subr.bf16.mxu0 0
    %3038 = vmatpush1.bf16.msra.mxu0 0
    %3039 = vmatprep.subr.bf16.mxu0 0
    %3040 = vmatpush1.bf16.msra.mxu0 0
    %3041 = vmatprep.subr.bf16.mxu0 0
    %3042 = vmatpush1.bf16.msra.mxu0 0
    %3043 = vmatprep.mubr.bf16.mxu0 0
    %3044 = vmatmul.mubr.bf16.gmra.mrb[0].mxu0 %v2988
    %v3045 = vpop.f32.mrb[0].mxu0
    %v3046 = vadd.f32 %v2770, %v3045
    %v3047 = vpop.f32.mrb[0].mxu0
    %v3048 = vpop.f32.mrb[0].mxu0
    %v3049 = vadd.f32 %v2770, %v3048
    %v3050 = vpop.f32.mrb[0].mxu0
    %3051 = vmatprep.mubr.bf16.mxu0 0
    %3052 = vmatmul.mubr.bf16.gmra.mrb[0].mxu0 %v2991
    %v3053 = vpop.f32.mrb[0].mxu0
    %v3054 = vadd.f32 %v2770, %v3053
    %v3055 = vpop.f32.mrb[0].mxu0
    %v3056 = vpop.f32.mrb[0].mxu0
    %v3057 = vadd.f32 %v2770, %v3056
    %v3058 = vpop.f32.mrb[0].mxu0
    %3059 = vmatprep.mubr.bf16.mxu0 0
    %3060 = vmatmul.mubr.bf16.gmra.mrb[0].mxu0 %v2994
    %v3061 = vpop.f32.mrb[0].mxu0
    %v3062 = vadd.f32 %v2770, %v3061
    %v3063 = vpop.f32.mrb[0].mxu0
    %v3064 = vpop.f32.mrb[0].mxu0
    %v3065 = vadd.f32 %v2770, %v3064
    %v3066 = vpop.f32.mrb[0].mxu0
    %3067 = vmatprep.mubr.bf16.mxu0 0
    %3068 = vmatmul.mubr.bf16.gmra.mrb[0].mxu0 %v2997
    %v3069 = vpop.f32.mrb[0].mxu0
    %v3070 = vadd.f32 %v2770, %v3069
    %v3071 = vpop.f32.mrb[0].mxu0
    %v3072 = vpop.f32.mrb[0].mxu0
    %v3073 = vadd.f32 %v2770, %v3072
    %v3074 = vpop.f32.mrb[0].mxu0
    %3075 = vmatprep.mubr.bf16.mxu0 0
    %3076 = vmatmul.mubr.bf16.gmra.mrb[0].mxu0 %v3000
    %v3077 = vpop.f32.mrb[0].mxu0
    %v3078 = vadd.f32 %v2770, %v3077
    %v3079 = vpop.f32.mrb[0].mxu0
    %v3080 = vpop.f32.mrb[0].mxu0
    %v3081 = vadd.f32 %v2770, %v3080
    %v3082 = vpop.f32.mrb[0].mxu0
    %3083 = vmatprep.mubr.bf16.mxu0 0
    %3084 = vmatmul.mubr.bf16.gmra.mrb[0].mxu0 %v3003
    %v3085 = vpop.f32.mrb[0].mxu0
    %v3086 = vadd.f32 %v2770, %v3085
    %v3087 = vpop.f32.mrb[0].mxu0
    %v3088 = vpop.f32.mrb[0].mxu0
    %v3089 = vadd.f32 %v2770, %v3088
    %v3090 = vpop.f32.mrb[0].mxu0
    %3091 = vmatprep.mubr.bf16.mxu0 0
    %3092 = vmatmul.mubr.bf16.gmra.mrb[0].mxu0 %v3006
    %v3093 = vpop.f32.mrb[0].mxu0
    %v3094 = vadd.f32 %v2770, %v3093
    %v3095 = vpop.f32.mrb[0].mxu0
    %v3096 = vpop.f32.mrb[0].mxu0
    %v3097 = vadd.f32 %v2770, %v3096
    %v3098 = vpop.f32.mrb[0].mxu0
    %3099 = vmatprep.mubr.bf16.mxu0 0
    %3100 = vmatmul.mubr.bf16.gmra.mrb[0].mxu0 %v3009
    %v3101 = vpop.f32.mrb[0].mxu0
    %v3102 = vadd.f32 %v2770, %v3101
    %v3103 = vpop.f32.mrb[0].mxu0
    %v3104 = vpop.f32.mrb[0].mxu0
    %v3105 = vadd.f32 %v2770, %v3104
    %v3106 = vpop.f32.mrb[0].mxu0
    %3107 = vdwg.mxu0
    %v3108 = vsub.f32 0.0, %v3046
    %v3109 = vsub.f32 0.0, %v3049
    %v3110 = vsub.f32 0.0, %v3054
    %v3111 = vsub.f32 0.0, %v3057
    %v3112 = vsub.f32 0.0, %v3062
    %v3113 = vsub.f32 0.0, %v3065
    %v3114 = vsub.f32 0.0, %v3070
    %v3115 = vsub.f32 0.0, %v3073
    %v3116 = vsub.f32 0.0, %v3078
    %v3117 = vsub.f32 0.0, %v3081
    %v3118 = vsub.f32 0.0, %v3086
    %v3119 = vsub.f32 0.0, %v3089
    %v3120 = vsub.f32 0.0, %v3094
    %v3121 = vsub.f32 0.0, %v3097
    %v3122 = vsub.f32 0.0, %v3102
    %v3123 = vsub.f32 0.0, %v3105
    %v3124 = vmul.f32 %v3108, 1.442695
    %v3125 = vpow.pop %v3124
    %v3126 = vmul.f32 %v3109, 1.442695
    %v3127 = vpow.pop %v3126
    %v3128 = vmul.f32 %v3110, 1.442695
    %v3129 = vpow.pop %v3128
    %v3130 = vmul.f32 %v3111, 1.442695
    %v3131 = vpow.pop %v3130
    %v3132 = vmul.f32 %v3112, 1.442695
    %v3133 = vpow.pop %v3132
    %v3134 = vmul.f32 %v3113, 1.442695
    %v3135 = vpow.pop %v3134
    %v3136 = vmul.f32 %v3114, 1.442695
    %v3137 = vpow.pop %v3136
    %v3138 = vmul.f32 %v3115, 1.442695
    %v3139 = vpow.pop %v3138
    %v3140 = vmul.f32 %v3116, 1.442695
    %v3141 = vpow.pop %v3140
    %v3142 = vmul.f32 %v3117, 1.442695
    %v3143 = vpow.pop %v3142
    %v3144 = vmul.f32 %v3118, 1.442695
    %v3145 = vpow.pop %v3144
    %v3146 = vmul.f32 %v3119, 1.442695
    %v3147 = vpow.pop %v3146
    %v3148 = vmul.f32 %v3120, 1.442695
    %v3149 = vpow.pop %v3148
    %v3150 = vmul.f32 %v3121, 1.442695
    %v3151 = vpow.pop %v3150
    %v3152 = vmul.f32 %v3122, 1.442695
    %v3153 = vpow.pop %v3152
    %v3154 = vmul.f32 %v3123, 1.442695
    %v3155 = vpow.pop %v3154
    %v3156 = vadd.f32 %v3125, 1.0
    %v3157 = vadd.f32 %v3127, 1.0
    %v3158 = vadd.f32 %v3129, 1.0
    %v3159 = vadd.f32 %v3131, 1.0
    %v3160 = vadd.f32 %v3133, 1.0
    %v3161 = vadd.f32 %v3135, 1.0
    %v3162 = vadd.f32 %v3137, 1.0
    %v3163 = vadd.f32 %v3139, 1.0
    %v3164 = vadd.f32 %v3141, 1.0
    %v3165 = vadd.f32 %v3143, 1.0
    %v3166 = vadd.f32 %v3145, 1.0
    %v3167 = vadd.f32 %v3147, 1.0
    %v3168 = vadd.f32 %v3149, 1.0
    %v3169 = vadd.f32 %v3151, 1.0
    %v3170 = vadd.f32 %v3153, 1.0
    %v3171 = vadd.f32 %v3155, 1.0
    %v3172 = vrcp.pop %v3156
    %v3173 = vrcp.pop %v3157
    %v3174 = vrcp.pop %v3158
    %v3175 = vrcp.pop %v3159
    %v3176 = vrcp.pop %v3160
    %v3177 = vrcp.pop %v3161
    %v3178 = vrcp.pop %v3162
    %v3179 = vrcp.pop %v3163
    %v3180 = vrcp.pop %v3164
    %v3181 = vrcp.pop %v3165
    %v3182 = vrcp.pop %v3166
    %v3183 = vrcp.pop %v3167
    %v3184 = vrcp.pop %v3168
    %v3185 = vrcp.pop %v3169
    %v3186 = vrcp.pop %v3170
    %v3187 = vrcp.pop %v3171
    %v3188 = vpack.c.bf16 %v3173, %v3172
    %v3189 = vpack.c.bf16 %v3175, %v3174
    %v3190 = vpack.c.bf16 %v3177, %v3176
    %v3191 = vpack.c.bf16 %v3179, %v3178
    %v3192 = vpack.c.bf16 %v3181, %v3180
    %v3193 = vpack.c.bf16 %v3183, %v3182
    %v3194 = vpack.c.bf16 %v3185, %v3184
    %v3195 = vpack.c.bf16 %v3187, %v3186
    %v3196 = vld [vmem:[%s13] sm:$0xf]
    %v3197 = vld [vmem:[%s13 + $0x4] sm:$0xf]
    %v3198 = vld [vmem:[%s14] sm:$0x1]
    %v3200 = vlaneseq
    %v3201 = vshrl.u32 %v3200, 7
    %v3202 = vsub.s32 0, %v3201
    %v3203 = vrot.slane %v3198, %v3202
    %v3207 = vunpack.c.l.b16 %v3196
    %v3208 = vunpack.c.l.b16 %v3197
    %v3209 = vpack.c.b16 %v3208, %v3207
    %v3212 = vsel %vm2344, %v2979, 0
    %v3215 = vsel %vm2344, %v2980, 0
    %v3218 = vsel %vm2344, %v2981, 0
    %v3221 = vsel %vm2344, %v2982, 0
    %v3224 = vsel %vm2344, %v2983, 0
    %v3227 = vsel %vm2344, %v2984, 0
    %v3230 = vsel %vm2344, %v2985, 0
    %v3233 = vsel %vm2344, %v2986, 0
    %3235 = vmatprep.subr.bf16.mxu0 0
    %3236 = vmatpush1.bf16.msra.mxu0 %v3209
    %3237 = vmatprep.subr.bf16.mxu0 0
    %3238 = vmatpush1.bf16.msra.mxu0 0
    %3239 = vmatprep.subr.bf16.mxu0 0
    %3240 = vmatpush1.bf16.msra.mxu0 0
    %3241 = vmatprep.subr.bf16.mxu0 0
    %3242 = vmatpush1.bf16.msra.mxu0 0
    %3243 = vmatprep.subr.bf16.mxu0 0
    %3244 = vmatpush1.bf16.msra.mxu0 0
    %3245 = vmatprep.subr.bf16.mxu0 0
    %3246 = vmatpush1.bf16.msra.mxu0 0
    %3247 = vmatprep.subr.bf16.mxu0 0
    %3248 = vmatpush1.bf16.msra.mxu0 0
    %3249 = vmatprep.subr.bf16.mxu0 0
    %3250 = vmatpush1.bf16.msra.mxu0 0
    %3251 = vmatprep.subr.bf16.mxu0 0
    %3252 = vmatpush1.bf16.msra.mxu0 0
    %3253 = vmatprep.subr.bf16.mxu0 0
    %3254 = vmatpush1.bf16.msra.mxu0 0
    %3255 = vmatprep.subr.bf16.mxu0 0
    %3256 = vmatpush1.bf16.msra.mxu0 0
    %3257 = vmatprep.subr.bf16.mxu0 0
    %3258 = vmatpush1.bf16.msra.mxu0 0
    %3259 = vmatprep.subr.bf16.mxu0 0
    %3260 = vmatpush1.bf16.msra.mxu0 0
    %3261 = vmatprep.subr.bf16.mxu0 0
    %3262 = vmatpush1.bf16.msra.mxu0 0
    %3263 = vmatprep.subr.bf16.mxu0 0
    %3264 = vmatpush1.bf16.msra.mxu0 0
    %3265 = vmatprep.subr.bf16.mxu0 0
    %3266 = vmatpush1.bf16.msra.mxu0 0
    %3267 = vmatprep.mubr.bf16.mxu0 0
    %3268 = vmatmul.mubr.bf16.gmra.mrb[0].mxu0 %v3212
    %v3269 = vpop.f32.mrb[0].mxu0
    %v3270 = vadd.f32 %v3203, %v3269
    %v3271 = vpop.f32.mrb[0].mxu0
    %v3272 = vpop.f32.mrb[0].mxu0
    %v3273 = vadd.f32 %v3203, %v3272
    %v3274 = vpop.f32.mrb[0].mxu0
    %3275 = vmatprep.mubr.bf16.mxu0 0
    %3276 = vmatmul.mubr.bf16.gmra.mrb[0].mxu0 %v3215
    %v3277 = vpop.f32.mrb[0].mxu0
    %v3278 = vadd.f32 %v3203, %v3277
    %v3279 = vpop.f32.mrb[0].mxu0
    %v3280 = vpop.f32.mrb[0].mxu0
    %v3281 = vadd.f32 %v3203, %v3280
    %v3282 = vpop.f32.mrb[0].mxu0
    %3283 = vmatprep.mubr.bf16.mxu0 0
    %3284 = vmatmul.mubr.bf16.gmra.mrb[0].mxu0 %v3218
    %v3285 = vpop.f32.mrb[0].mxu0
    %v3286 = vadd.f32 %v3203, %v3285
    %v3287 = vpop.f32.mrb[0].mxu0
    %v3288 = vpop.f32.mrb[0].mxu0
    %v3289 = vadd.f32 %v3203, %v3288
    %v3290 = vpop.f32.mrb[0].mxu0
    %3291 = vmatprep.mubr.bf16.mxu0 0
    %3292 = vmatmul.mubr.bf16.gmra.mrb[0].mxu0 %v3221
    %v3293 = vpop.f32.mrb[0].mxu0
    %v3294 = vadd.f32 %v3203, %v3293
    %v3295 = vpop.f32.mrb[0].mxu0
    %v3296 = vpop.f32.mrb[0].mxu0
    %v3297 = vadd.f32 %v3203, %v3296
    %v3298 = vpop.f32.mrb[0].mxu0
    %3299 = vmatprep.mubr.bf16.mxu0 0
    %3300 = vmatmul.mubr.bf16.gmra.mrb[0].mxu0 %v3224
    %v3301 = vpop.f32.mrb[0].mxu0
    %v3302 = vadd.f32 %v3203, %v3301
    %v3303 = vpop.f32.mrb[0].mxu0
    %v3304 = vpop.f32.mrb[0].mxu0
    %v3305 = vadd.f32 %v3203, %v3304
    %v3306 = vpop.f32.mrb[0].mxu0
    %3307 = vmatprep.mubr.bf16.mxu0 0
    %3308 = vmatmul.mubr.bf16.gmra.mrb[0].mxu0 %v3227
    %v3309 = vpop.f32.mrb[0].mxu0
    %v3310 = vadd.f32 %v3203, %v3309
    %v3311 = vpop.f32.mrb[0].mxu0
    %v3312 = vpop.f32.mrb[0].mxu0
    %v3313 = vadd.f32 %v3203, %v3312
    %v3314 = vpop.f32.mrb[0].mxu0
    %3315 = vmatprep.mubr.bf16.mxu0 0
    %3316 = vmatmul.mubr.bf16.gmra.mrb[0].mxu0 %v3230
    %v3317 = vpop.f32.mrb[0].mxu0
    %v3318 = vadd.f32 %v3203, %v3317
    %v3319 = vpop.f32.mrb[0].mxu0
    %v3320 = vpop.f32.mrb[0].mxu0
    %v3321 = vadd.f32 %v3203, %v3320
    %v3322 = vpop.f32.mrb[0].mxu0
    %3323 = vmatprep.mubr.bf16.mxu0 0
    %3324 = vmatmul.mubr.bf16.gmra.mrb[0].mxu0 %v3233
    %v3325 = vpop.f32.mrb[0].mxu0
    %v3326 = vadd.f32 %v3203, %v3325
    %v3327 = vpop.f32.mrb[0].mxu0
    %v3328 = vpop.f32.mrb[0].mxu0
    %v3329 = vadd.f32 %v3203, %v3328
    %v3330 = vpop.f32.mrb[0].mxu0
    %3331 = vdwg.mxu0
    %v3332 = vsub.f32 0.0, %v3270
    %v3333 = vsub.f32 0.0, %v3273
    %v3334 = vsub.f32 0.0, %v3278
    %v3335 = vsub.f32 0.0, %v3281
    %v3336 = vsub.f32 0.0, %v3286
    %v3337 = vsub.f32 0.0, %v3289
    %v3338 = vsub.f32 0.0, %v3294
    %v3339 = vsub.f32 0.0, %v3297
    %v3340 = vsub.f32 0.0, %v3302
    %v3341 = vsub.f32 0.0, %v3305
    %v3342 = vsub.f32 0.0, %v3310
    %v3343 = vsub.f32 0.0, %v3313
    %v3344 = vsub.f32 0.0, %v3318
    %v3345 = vsub.f32 0.0, %v3321
    %v3346 = vsub.f32 0.0, %v3326
    %v3347 = vsub.f32 0.0, %v3329
    %v3348 = vmul.f32 %v3332, 1.442695
    %v3349 = vpow.pop %v3348
    %v3350 = vmul.f32 %v3333, 1.442695
    %v3351 = vpow.pop %v3350
    %v3352 = vmul.f32 %v3334, 1.442695
    %v3353 = vpow.pop %v3352
    %v3354 = vmul.f32 %v3335, 1.442695
    %v3355 = vpow.pop %v3354
    %v3356 = vmul.f32 %v3336, 1.442695
    %v3357 = vpow.pop %v3356
    %v3358 = vmul.f32 %v3337, 1.442695
    %v3359 = vpow.pop %v3358
    %v3360 = vmul.f32 %v3338, 1.442695
    %v3361 = vpow.pop %v3360
    %v3362 = vmul.f32 %v3339, 1.442695
    %v3363 = vpow.pop %v3362
    %v3364 = vmul.f32 %v3340, 1.442695
    %v3365 = vpow.pop %v3364
    %v3366 = vmul.f32 %v3341, 1.442695
    %v3367 = vpow.pop %v3366
    %v3368 = vmul.f32 %v3342, 1.442695
    %v3369 = vpow.pop %v3368
    %v3370 = vmul.f32 %v3343, 1.442695
    %v3371 = vpow.pop %v3370
    %v3372 = vmul.f32 %v3344, 1.442695
    %v3373 = vpow.pop %v3372
    %v3374 = vmul.f32 %v3345, 1.442695
    %v3375 = vpow.pop %v3374
    %v3376 = vmul.f32 %v3346, 1.442695
    %v3377 = vpow.pop %v3376
    %v3378 = vmul.f32 %v3347, 1.442695
    %v3379 = vpow.pop %v3378
    %v3380 = vadd.f32 %v3349, 1.0
    %v3381 = vadd.f32 %v3351, 1.0
    %v3382 = vadd.f32 %v3353, 1.0
    %v3383 = vadd.f32 %v3355, 1.0
    %v3384 = vadd.f32 %v3357, 1.0
    %v3385 = vadd.f32 %v3359, 1.0
    %v3386 = vadd.f32 %v3361, 1.0
    %v3387 = vadd.f32 %v3363, 1.0
    %v3388 = vadd.f32 %v3365, 1.0
    %v3389 = vadd.f32 %v3367, 1.0
    %v3390 = vadd.f32 %v3369, 1.0
    %v3391 = vadd.f32 %v3371, 1.0
    %v3392 = vadd.f32 %v3373, 1.0
    %v3393 = vadd.f32 %v3375, 1.0
    %v3394 = vadd.f32 %v3377, 1.0
    %v3395 = vadd.f32 %v3379, 1.0
    %v3396 = vrcp.pop %v3380
    %v3397 = vrcp.pop %v3381
    %v3398 = vrcp.pop %v3382
    %v3399 = vrcp.pop %v3383
    %v3400 = vrcp.pop %v3384
    %v3401 = vrcp.pop %v3385
    %v3402 = vrcp.pop %v3386
    %v3403 = vrcp.pop %v3387
    %v3404 = vrcp.pop %v3388
    %v3405 = vrcp.pop %v3389
    %v3406 = vrcp.pop %v3390
    %v3407 = vrcp.pop %v3391
    %v3408 = vrcp.pop %v3392
    %v3409 = vrcp.pop %v3393
    %v3410 = vrcp.pop %v3394
    %v3411 = vrcp.pop %v3395
    %v3412 = vpack.c.bf16 %v3397, %v3396
    %v3413 = vpack.c.bf16 %v3399, %v3398
    %v3414 = vpack.c.bf16 %v3401, %v3400
    %v3415 = vpack.c.bf16 %v3403, %v3402
    %v3416 = vpack.c.bf16 %v3405, %v3404
    %v3417 = vpack.c.bf16 %v3407, %v3406
    %v3418 = vpack.c.bf16 %v3409, %v3408
    %v3419 = vpack.c.bf16 %v3411, %v3410
    %v3421 = vsel %vm2344, %v3188, 0
    %v3424 = vsel %vm2344, %v3189, 0
    %v3427 = vsel %vm2344, %v3190, 0
    %v3430 = vsel %vm2344, %v3191, 0
    %v3433 = vsel %vm2344, %v3192, 0
    %v3436 = vsel %vm2344, %v3193, 0
    %v3439 = vsel %vm2344, %v3194, 0
    %v3442 = vsel %vm2344, %v3195, 0
    %3444 = vmatprep.subr.bf16.mxu0 0
    %3445 = vmatpush1.bf16.msra.mxu0 %v3209
    %3446 = vmatprep.subr.bf16.mxu0 0
    %3447 = vmatpush1.bf16.msra.mxu0 0
    %3448 = vmatprep.subr.bf16.mxu0 0
    %3449 = vmatpush1.bf16.msra.mxu0 0
    %3450 = vmatprep.subr.bf16.mxu0 0
    %3451 = vmatpush1.bf16.msra.mxu0 0
    %3452 = vmatprep.subr.bf16.mxu0 0
    %3453 = vmatpush1.bf16.msra.mxu0 0
    %3454 = vmatprep.subr.bf16.mxu0 0
    %3455 = vmatpush1.bf16.msra.mxu0 0
    %3456 = vmatprep.subr.bf16.mxu0 0
    %3457 = vmatpush1.bf16.msra.mxu0 0
    %3458 = vmatprep.subr.bf16.mxu0 0
    %3459 = vmatpush1.bf16.msra.mxu0 0
    %3460 = vmatprep.subr.bf16.mxu0 0
    %3461 = vmatpush1.bf16.msra.mxu0 0
    %3462 = vmatprep.subr.bf16.mxu0 0
    %3463 = vmatpush1.bf16.msra.mxu0 0
    %3464 = vmatprep.subr.bf16.mxu0 0
    %3465 = vmatpush1.bf16.msra.mxu0 0
    %3466 = vmatprep.subr.bf16.mxu0 0
    %3467 = vmatpush1.bf16.msra.mxu0 0
    %3468 = vmatprep.subr.bf16.mxu0 0
    %3469 = vmatpush1.bf16.msra.mxu0 0
    %3470 = vmatprep.subr.bf16.mxu0 0
    %3471 = vmatpush1.bf16.msra.mxu0 0
    %3472 = vmatprep.subr.bf16.mxu0 0
    %3473 = vmatpush1.bf16.msra.mxu0 0
    %3474 = vmatprep.subr.bf16.mxu0 0
    %3475 = vmatpush1.bf16.msra.mxu0 0
    %3476 = vmatprep.mubr.bf16.mxu0 0
    %3477 = vmatmul.mubr.bf16.gmra.mrb[0].mxu0 %v3421
    %v3478 = vpop.f32.mrb[0].mxu0
    %v3479 = vadd.f32 %v3203, %v3478
    %v3480 = vpop.f32.mrb[0].mxu0
    %v3481 = vpop.f32.mrb[0].mxu0
    %v3482 = vadd.f32 %v3203, %v3481
    %v3483 = vpop.f32.mrb[0].mxu0
    %3484 = vmatprep.mubr.bf16.mxu0 0
    %3485 = vmatmul.mubr.bf16.gmra.mrb[0].mxu0 %v3424
    %v3486 = vpop.f32.mrb[0].mxu0
    %v3487 = vadd.f32 %v3203, %v3486
    %v3488 = vpop.f32.mrb[0].mxu0
    %v3489 = vpop.f32.mrb[0].mxu0
    %v3490 = vadd.f32 %v3203, %v3489
    %v3491 = vpop.f32.mrb[0].mxu0
    %3492 = vmatprep.mubr.bf16.mxu0 0
    %3493 = vmatmul.mubr.bf16.gmra.mrb[0].mxu0 %v3427
    %v3494 = vpop.f32.mrb[0].mxu0
    %v3495 = vadd.f32 %v3203, %v3494
    %v3496 = vpop.f32.mrb[0].mxu0
    %v3497 = vpop.f32.mrb[0].mxu0
    %v3498 = vadd.f32 %v3203, %v3497
    %v3499 = vpop.f32.mrb[0].mxu0
    %3500 = vmatprep.mubr.bf16.mxu0 0
    %3501 = vmatmul.mubr.bf16.gmra.mrb[0].mxu0 %v3430
    %v3502 = vpop.f32.mrb[0].mxu0
    %v3503 = vadd.f32 %v3203, %v3502
    %v3504 = vpop.f32.mrb[0].mxu0
    %v3505 = vpop.f32.mrb[0].mxu0
    %v3506 = vadd.f32 %v3203, %v3505
    %v3507 = vpop.f32.mrb[0].mxu0
    %3508 = vmatprep.mubr.bf16.mxu0 0
    %3509 = vmatmul.mubr.bf16.gmra.mrb[0].mxu0 %v3433
    %v3510 = vpop.f32.mrb[0].mxu0
    %v3511 = vadd.f32 %v3203, %v3510
    %v3512 = vpop.f32.mrb[0].mxu0
    %v3513 = vpop.f32.mrb[0].mxu0
    %v3514 = vadd.f32 %v3203, %v3513
    %v3515 = vpop.f32.mrb[0].mxu0
    %3516 = vmatprep.mubr.bf16.mxu0 0
    %3517 = vmatmul.mubr.bf16.gmra.mrb[0].mxu0 %v3436
    %v3518 = vpop.f32.mrb[0].mxu0
    %v3519 = vadd.f32 %v3203, %v3518
    %v3520 = vpop.f32.mrb[0].mxu0
    %v3521 = vpop.f32.mrb[0].mxu0
    %v3522 = vadd.f32 %v3203, %v3521
    %v3523 = vpop.f32.mrb[0].mxu0
    %3524 = vmatprep.mubr.bf16.mxu0 0
    %3525 = vmatmul.mubr.bf16.gmra.mrb[0].mxu0 %v3439
    %v3526 = vpop.f32.mrb[0].mxu0
    %v3527 = vadd.f32 %v3203, %v3526
    %v3528 = vpop.f32.mrb[0].mxu0
    %v3529 = vpop.f32.mrb[0].mxu0
    %v3530 = vadd.f32 %v3203, %v3529
    %v3531 = vpop.f32.mrb[0].mxu0
    %3532 = vmatprep.mubr.bf16.mxu0 0
    %3533 = vmatmul.mubr.bf16.gmra.mrb[0].mxu0 %v3442
    %v3534 = vpop.f32.mrb[0].mxu0
    %v3535 = vadd.f32 %v3203, %v3534
    %v3536 = vpop.f32.mrb[0].mxu0
    %v3537 = vpop.f32.mrb[0].mxu0
    %v3538 = vadd.f32 %v3203, %v3537
    %v3539 = vpop.f32.mrb[0].mxu0
    %3540 = vdwg.mxu0
    %v3541 = vsub.f32 0.0, %v3479
    %v3542 = vsub.f32 0.0, %v3482
    %v3543 = vsub.f32 0.0, %v3487
    %v3544 = vsub.f32 0.0, %v3490
    %v3545 = vsub.f32 0.0, %v3495
    %v3546 = vsub.f32 0.0, %v3498
    %v3547 = vsub.f32 0.0, %v3503
    %v3548 = vsub.f32 0.0, %v3506
    %v3549 = vsub.f32 0.0, %v3511
    %v3550 = vsub.f32 0.0, %v3514
    %v3551 = vsub.f32 0.0, %v3519
    %v3552 = vsub.f32 0.0, %v3522
    %v3553 = vsub.f32 0.0, %v3527
    %v3554 = vsub.f32 0.0, %v3530
    %v3555 = vsub.f32 0.0, %v3535
    %v3556 = vsub.f32 0.0, %v3538
    %v3557 = vmul.f32 %v3541, 1.442695
    %v3558 = vpow.pop %v3557
    %v3559 = vmul.f32 %v3542, 1.442695
    %v3560 = vpow.pop %v3559
    %v3561 = vmul.f32 %v3543, 1.442695
    %v3562 = vpow.pop %v3561
    %v3563 = vmul.f32 %v3544, 1.442695
    %v3564 = vpow.pop %v3563
    %v3565 = vmul.f32 %v3545, 1.442695
    %v3566 = vpow.pop %v3565
    %v3567 = vmul.f32 %v3546, 1.442695
    %v3568 = vpow.pop %v3567
    %v3569 = vmul.f32 %v3547, 1.442695
    %v3570 = vpow.pop %v3569
    %v3571 = vmul.f32 %v3548, 1.442695
    %v3572 = vpow.pop %v3571
    %v3573 = vmul.f32 %v3549, 1.442695
    %v3574 = vpow.pop %v3573
    %v3575 = vmul.f32 %v3550, 1.442695
    %v3576 = vpow.pop %v3575
    %v3577 = vmul.f32 %v3551, 1.442695
    %v3578 = vpow.pop %v3577
    %v3579 = vmul.f32 %v3552, 1.442695
    %v3580 = vpow.pop %v3579
    %v3581 = vmul.f32 %v3553, 1.442695
    %v3582 = vpow.pop %v3581
    %v3583 = vmul.f32 %v3554, 1.442695
    %v3584 = vpow.pop %v3583
    %v3585 = vmul.f32 %v3555, 1.442695
    %v3586 = vpow.pop %v3585
    %v3587 = vmul.f32 %v3556, 1.442695
    %v3588 = vpow.pop %v3587
    %v3589 = vadd.f32 %v3558, 1.0
    %v3590 = vadd.f32 %v3560, 1.0
    %v3591 = vadd.f32 %v3562, 1.0
    %v3592 = vadd.f32 %v3564, 1.0
    %v3593 = vadd.f32 %v3566, 1.0
    %v3594 = vadd.f32 %v3568, 1.0
    %v3595 = vadd.f32 %v3570, 1.0
    %v3596 = vadd.f32 %v3572, 1.0
    %v3597 = vadd.f32 %v3574, 1.0
    %v3598 = vadd.f32 %v3576, 1.0
    %v3599 = vadd.f32 %v3578, 1.0
    %v3600 = vadd.f32 %v3580, 1.0
    %v3601 = vadd.f32 %v3582, 1.0
    %v3602 = vadd.f32 %v3584, 1.0
    %v3603 = vadd.f32 %v3586, 1.0
    %v3604 = vadd.f32 %v3588, 1.0
    %v3605 = vrcp.pop %v3589
    %v3606 = vrcp.pop %v3590
    %v3607 = vrcp.pop %v3591
    %v3608 = vrcp.pop %v3592
    %v3609 = vrcp.pop %v3593
    %v3610 = vrcp.pop %v3594
    %v3611 = vrcp.pop %v3595
    %v3612 = vrcp.pop %v3596
    %v3613 = vrcp.pop %v3597
    %v3614 = vrcp.pop %v3598
    %v3615 = vrcp.pop %v3599
    %v3616 = vrcp.pop %v3600
    %v3617 = vrcp.pop %v3601
    %v3618 = vrcp.pop %v3602
    %v3619 = vrcp.pop %v3603
    %v3620 = vrcp.pop %v3604
    %v3621 = vpack.c.bf16 %v3606, %v3605
    %v3622 = vpack.c.bf16 %v3608, %v3607
    %v3623 = vpack.c.bf16 %v3610, %v3609
    %v3624 = vpack.c.bf16 %v3612, %v3611
    %v3625 = vpack.c.bf16 %v3614, %v3613
    %v3626 = vpack.c.bf16 %v3616, %v3615
    %v3627 = vpack.c.bf16 %v3618, %v3617
    %v3628 = vpack.c.bf16 %v3620, %v3619
    %v3629 = vld [vmem:[%s15] sm:$0xf]
    %v3630 = vld [vmem:[%s16] sm:$0x1]
    %v3632 = vlaneseq
    %v3633 = vshrl.u32 %v3632, 7
    %v3634 = vsub.s32 0, %v3633
    %v3635 = vrot.slane %v3630, %v3634
    %vm3637 = vcmask 64512
    %v3639 = vsel %vm3637, %v3412, 0
    %v3642 = vsel %vm3637, %v3413, 0
    %v3645 = vsel %vm3637, %v3414, 0
    %v3648 = vsel %vm3637, %v3415, 0
    %v3651 = vsel %vm3637, %v3416, 0
    %v3654 = vsel %vm3637, %v3417, 0
    %v3657 = vsel %vm3637, %v3418, 0
    %v3660 = vsel %vm3637, %v3419, 0
    %vm3662 = vcmask 1043456
    %v3664 = vsel %vm3662, %v3629, 0
    %3666 = vmatprep.subr.bf16.mxu0 0
    %3667 = vmatpush1.bf16.msra.mxu0 %v3664
    %3668 = vmatprep.subr.bf16.mxu0 0
    %3669 = vmatpush1.bf16.msra.mxu0 0
    %3670 = vmatprep.subr.bf16.mxu0 0
    %3671 = vmatpush1.bf16.msra.mxu0 0
    %3672 = vmatprep.subr.bf16.mxu0 0
    %3673 = vmatpush1.bf16.msra.mxu0 0
    %3674 = vmatprep.subr.bf16.mxu0 0
    %3675 = vmatpush1.bf16.msra.mxu0 0
    %3676 = vmatprep.subr.bf16.mxu0 0
    %3677 = vmatpush1.bf16.msra.mxu0 0
    %3678 = vmatprep.subr.bf16.mxu0 0
    %3679 = vmatpush1.bf16.msra.mxu0 0
    %3680 = vmatprep.subr.bf16.mxu0 0
    %3681 = vmatpush1.bf16.msra.mxu0 0
    %3682 = vmatprep.subr.bf16.mxu0 0
    %3683 = vmatpush1.bf16.msra.mxu0 0
    %3684 = vmatprep.subr.bf16.mxu0 0
    %3685 = vmatpush1.bf16.msra.mxu0 0
    %3686 = vmatprep.subr.bf16.mxu0 0
    %3687 = vmatpush1.bf16.msra.mxu0 0
    %3688 = vmatprep.subr.bf16.mxu0 0
    %3689 = vmatpush1.bf16.msra.mxu0 0
    %3690 = vmatprep.subr.bf16.mxu0 0
    %3691 = vmatpush1.bf16.msra.mxu0 0
    %3692 = vmatprep.subr.bf16.mxu0 0
    %3693 = vmatpush1.bf16.msra.mxu0 0
    %3694 = vmatprep.subr.bf16.mxu0 0
    %3695 = vmatpush1.bf16.msra.mxu0 0
    %3696 = vmatprep.subr.bf16.mxu0 0
    %3697 = vmatpush1.bf16.msra.mxu0 0
    %3698 = vmatprep.mubr.bf16.mxu0 0
    %3699 = vmatmul.mubr.bf16.gmra.mrb[0].mxu0 %v3639
    %v3700 = vpop.f32.mrb[0].mxu0
    %v3701 = vadd.f32 %v3635, %v3700
    %v3702 = vpop.f32.mrb[0].mxu0
    %v3703 = vpop.f32.mrb[0].mxu0
    %v3704 = vadd.f32 %v3635, %v3703
    %v3705 = vpop.f32.mrb[0].mxu0
    %3706 = vmatprep.mubr.bf16.mxu0 0
    %3707 = vmatmul.mubr.bf16.gmra.mrb[0].mxu0 %v3642
    %v3708 = vpop.f32.mrb[0].mxu0
    %v3709 = vadd.f32 %v3635, %v3708
    %v3710 = vpop.f32.mrb[0].mxu0
    %v3711 = vpop.f32.mrb[0].mxu0
    %v3712 = vadd.f32 %v3635, %v3711
    %v3713 = vpop.f32.mrb[0].mxu0
    %3714 = vmatprep.mubr.bf16.mxu0 0
    %3715 = vmatmul.mubr.bf16.gmra.mrb[0].mxu0 %v3645
    %v3716 = vpop.f32.mrb[0].mxu0
    %v3717 = vadd.f32 %v3635, %v3716
    %v3718 = vpop.f32.mrb[0].mxu0
    %v3719 = vpop.f32.mrb[0].mxu0
    %v3720 = vadd.f32 %v3635, %v3719
    %v3721 = vpop.f32.mrb[0].mxu0
    %3722 = vmatprep.mubr.bf16.mxu0 0
    %3723 = vmatmul.mubr.bf16.gmra.mrb[0].mxu0 %v3648
    %v3724 = vpop.f32.mrb[0].mxu0
    %v3725 = vadd.f32 %v3635, %v3724
    %v3726 = vpop.f32.mrb[0].mxu0
    %v3727 = vpop.f32.mrb[0].mxu0
    %v3728 = vadd.f32 %v3635, %v3727
    %v3729 = vpop.f32.mrb[0].mxu0
    %3730 = vmatprep.mubr.bf16.mxu0 0
    %3731 = vmatmul.mubr.bf16.gmra.mrb[0].mxu0 %v3651
    %v3732 = vpop.f32.mrb[0].mxu0
    %v3733 = vadd.f32 %v3635, %v3732
    %v3734 = vpop.f32.mrb[0].mxu0
    %v3735 = vpop.f32.mrb[0].mxu0
    %v3736 = vadd.f32 %v3635, %v3735
    %v3737 = vpop.f32.mrb[0].mxu0
    %3738 = vmatprep.mubr.bf16.mxu0 0
    %3739 = vmatmul.mubr.bf16.gmra.mrb[0].mxu0 %v3654
    %v3740 = vpop.f32.mrb[0].mxu0
    %v3741 = vadd.f32 %v3635, %v3740
    %v3742 = vpop.f32.mrb[0].mxu0
    %v3743 = vpop.f32.mrb[0].mxu0
    %v3744 = vadd.f32 %v3635, %v3743
    %v3745 = vpop.f32.mrb[0].mxu0
    %3746 = vmatprep.mubr.bf16.mxu0 0
    %3747 = vmatmul.mubr.bf16.gmra.mrb[0].mxu0 %v3657
    %v3748 = vpop.f32.mrb[0].mxu0
    %v3749 = vadd.f32 %v3635, %v3748
    %v3750 = vpop.f32.mrb[0].mxu0
    %v3751 = vpop.f32.mrb[0].mxu0
    %v3752 = vadd.f32 %v3635, %v3751
    %v3753 = vpop.f32.mrb[0].mxu0
    %3754 = vmatprep.mubr.bf16.mxu0 0
    %3755 = vmatmul.mubr.bf16.gmra.mrb[0].mxu0 %v3660
    %v3756 = vpop.f32.mrb[0].mxu0
    %v3757 = vadd.f32 %v3635, %v3756
    %v3758 = vpop.f32.mrb[0].mxu0
    %v3759 = vpop.f32.mrb[0].mxu0
    %v3760 = vadd.f32 %v3635, %v3759
    %v3761 = vpop.f32.mrb[0].mxu0
    %3762 = vdwg.mxu0
    %v3763 = vsub.f32 0.0, %v3701
    %v3764 = vsub.f32 0.0, %v3704
    %v3765 = vsub.f32 0.0, %v3709
    %v3766 = vsub.f32 0.0, %v3712
    %v3767 = vsub.f32 0.0, %v3717
    %v3768 = vsub.f32 0.0, %v3720
    %v3769 = vsub.f32 0.0, %v3725
    %v3770 = vsub.f32 0.0, %v3728
    %v3771 = vsub.f32 0.0, %v3733
    %v3772 = vsub.f32 0.0, %v3736
    %v3773 = vsub.f32 0.0, %v3741
    %v3774 = vsub.f32 0.0, %v3744
    %v3775 = vsub.f32 0.0, %v3749
    %v3776 = vsub.f32 0.0, %v3752
    %v3777 = vsub.f32 0.0, %v3757
    %v3778 = vsub.f32 0.0, %v3760
    %v3779 = vmul.f32 %v3763, 1.442695
    %v3780 = vpow.pop %v3779
    %v3781 = vmul.f32 %v3764, 1.442695
    %v3782 = vpow.pop %v3781
    %v3783 = vmul.f32 %v3765, 1.442695
    %v3784 = vpow.pop %v3783
    %v3785 = vmul.f32 %v3766, 1.442695
    %v3786 = vpow.pop %v3785
    %v3787 = vmul.f32 %v3767, 1.442695
    %v3788 = vpow.pop %v3787
    %v3789 = vmul.f32 %v3768, 1.442695
    %v3790 = vpow.pop %v3789
    %v3791 = vmul.f32 %v3769, 1.442695
    %v3792 = vpow.pop %v3791
    %v3793 = vmul.f32 %v3770, 1.442695
    %v3794 = vpow.pop %v3793
    %v3795 = vmul.f32 %v3771, 1.442695
    %v3796 = vpow.pop %v3795
    %v3797 = vmul.f32 %v3772, 1.442695
    %v3798 = vpow.pop %v3797
    %v3799 = vmul.f32 %v3773, 1.442695
    %v3800 = vpow.pop %v3799
    %v3801 = vmul.f32 %v3774, 1.442695
    %v3802 = vpow.pop %v3801
    %v3803 = vmul.f32 %v3775, 1.442695
    %v3804 = vpow.pop %v3803
    %v3805 = vmul.f32 %v3776, 1.442695
    %v3806 = vpow.pop %v3805
    %v3807 = vmul.f32 %v3777, 1.442695
    %v3808 = vpow.pop %v3807
    %v3809 = vmul.f32 %v3778, 1.442695
    %v3810 = vpow.pop %v3809
    %v3811 = vadd.f32 %v3780, 1.0
    %v3812 = vadd.f32 %v3782, 1.0
    %v3813 = vadd.f32 %v3784, 1.0
    %v3814 = vadd.f32 %v3786, 1.0
    %v3815 = vadd.f32 %v3788, 1.0
    %v3816 = vadd.f32 %v3790, 1.0
    %v3817 = vadd.f32 %v3792, 1.0
    %v3818 = vadd.f32 %v3794, 1.0
    %v3819 = vadd.f32 %v3796, 1.0
    %v3820 = vadd.f32 %v3798, 1.0
    %v3821 = vadd.f32 %v3800, 1.0
    %v3822 = vadd.f32 %v3802, 1.0
    %v3823 = vadd.f32 %v3804, 1.0
    %v3824 = vadd.f32 %v3806, 1.0
    %v3825 = vadd.f32 %v3808, 1.0
    %v3826 = vadd.f32 %v3810, 1.0
    %v3827 = vrcp.pop %v3811
    %v3828 = vrcp.pop %v3812
    %v3829 = vrcp.pop %v3813
    %v3830 = vrcp.pop %v3814
    %v3831 = vrcp.pop %v3815
    %v3832 = vrcp.pop %v3816
    %v3833 = vrcp.pop %v3817
    %v3834 = vrcp.pop %v3818
    %v3835 = vrcp.pop %v3819
    %v3836 = vrcp.pop %v3820
    %v3837 = vrcp.pop %v3821
    %v3838 = vrcp.pop %v3822
    %v3839 = vrcp.pop %v3823
    %v3840 = vrcp.pop %v3824
    %v3841 = vrcp.pop %v3825
    %v3842 = vrcp.pop %v3826
    %v3843 = vpack.c.bf16 %v3828, %v3827
    %v3844 = vpack.c.bf16 %v3830, %v3829
    %v3845 = vpack.c.bf16 %v3832, %v3831
    %v3846 = vpack.c.bf16 %v3834, %v3833
    %v3847 = vpack.c.bf16 %v3836, %v3835
    %v3848 = vpack.c.bf16 %v3838, %v3837
    %v3849 = vpack.c.bf16 %v3840, %v3839
    %v3850 = vpack.c.bf16 %v3842, %v3841
    %v3852 = vsel %vm3637, %v3621, 0
    %v3855 = vsel %vm3637, %v3622, 0
    %v3858 = vsel %vm3637, %v3623, 0
    %v3861 = vsel %vm3637, %v3624, 0
    %v3864 = vsel %vm3637, %v3625, 0
    %v3867 = vsel %vm3637, %v3626, 0
    %v3870 = vsel %vm3637, %v3627, 0
    %v3873 = vsel %vm3637, %v3628, 0
    %3875 = vmatprep.subr.bf16.mxu0 0
    %3876 = vmatpush1.bf16.msra.mxu0 %v3664
    %3877 = vmatprep.subr.bf16.mxu0 0
    %3878 = vmatpush1.bf16.msra.mxu0 0
    %3879 = vmatprep.subr.bf16.mxu0 0
    %3880 = vmatpush1.bf16.msra.mxu0 0
    %3881 = vmatprep.subr.bf16.mxu0 0
    %3882 = vmatpush1.bf16.msra.mxu0 0
    %3883 = vmatprep.subr.bf16.mxu0 0
    %3884 = vmatpush1.bf16.msra.mxu0 0
    %3885 = vmatprep.subr.bf16.mxu0 0
    %3886 = vmatpush1.bf16.msra.mxu0 0
    %3887 = vmatprep.subr.bf16.mxu0 0
    %3888 = vmatpush1.bf16.msra.mxu0 0
    %3889 = vmatprep.subr.bf16.mxu0 0
    %3890 = vmatpush1.bf16.msra.mxu0 0
    %3891 = vmatprep.subr.bf16.mxu0 0
    %3892 = vmatpush1.bf16.msra.mxu0 0
    %3893 = vmatprep.subr.bf16.mxu0 0
    %3894 = vmatpush1.bf16.msra.mxu0 0
    %3895 = vmatprep.subr.bf16.mxu0 0
    %3896 = vmatpush1.bf16.msra.mxu0 0
    %3897 = vmatprep.subr.bf16.mxu0 0
    %3898 = vmatpush1.bf16.msra.mxu0 0
    %3899 = vmatprep.subr.bf16.mxu0 0
    %3900 = vmatpush1.bf16.msra.mxu0 0
    %3901 = vmatprep.subr.bf16.mxu0 0
    %3902 = vmatpush1.bf16.msra.mxu0 0
    %3903 = vmatprep.subr.bf16.mxu0 0
    %3904 = vmatpush1.bf16.msra.mxu0 0
    %3905 = vmatprep.subr.bf16.mxu0 0
    %3906 = vmatpush1.bf16.msra.mxu0 0
    %3907 = vmatprep.mubr.bf16.mxu0 0
    %3908 = vmatmul.mubr.bf16.gmra.mrb[0].mxu0 %v3852
    %v3909 = vpop.f32.mrb[0].mxu0
    %v3910 = vadd.f32 %v3635, %v3909
    %v3911 = vpop.f32.mrb[0].mxu0
    %v3912 = vpop.f32.mrb[0].mxu0
    %v3913 = vadd.f32 %v3635, %v3912
    %v3914 = vpop.f32.mrb[0].mxu0
    %3915 = vmatprep.mubr.bf16.mxu0 0
    %3916 = vmatmul.mubr.bf16.gmra.mrb[0].mxu0 %v3855
    %v3917 = vpop.f32.mrb[0].mxu0
    %v3918 = vadd.f32 %v3635, %v3917
    %v3919 = vpop.f32.mrb[0].mxu0
    %v3920 = vpop.f32.mrb[0].mxu0
    %v3921 = vadd.f32 %v3635, %v3920
    %v3922 = vpop.f32.mrb[0].mxu0
    %3923 = vmatprep.mubr.bf16.mxu0 0
    %3924 = vmatmul.mubr.bf16.gmra.mrb[0].mxu0 %v3858
    %v3925 = vpop.f32.mrb[0].mxu0
    %v3926 = vadd.f32 %v3635, %v3925
    %v3927 = vpop.f32.mrb[0].mxu0
    %v3928 = vpop.f32.mrb[0].mxu0
    %v3929 = vadd.f32 %v3635, %v3928
    %v3930 = vpop.f32.mrb[0].mxu0
    %3931 = vmatprep.mubr.bf16.mxu0 0
    %3932 = vmatmul.mubr.bf16.gmra.mrb[0].mxu0 %v3861
    %v3933 = vpop.f32.mrb[0].mxu0
    %v3934 = vadd.f32 %v3635, %v3933
    %v3935 = vpop.f32.mrb[0].mxu0
    %v3936 = vpop.f32.mrb[0].mxu0
    %v3937 = vadd.f32 %v3635, %v3936
    %v3938 = vpop.f32.mrb[0].mxu0
    %3939 = vmatprep.mubr.bf16.mxu0 0
    %3940 = vmatmul.mubr.bf16.gmra.mrb[0].mxu0 %v3864
    %v3941 = vpop.f32.mrb[0].mxu0
    %v3942 = vadd.f32 %v3635, %v3941
    %v3943 = vpop.f32.mrb[0].mxu0
    %v3944 = vpop.f32.mrb[0].mxu0
    %v3945 = vadd.f32 %v3635, %v3944
    %v3946 = vpop.f32.mrb[0].mxu0
    %3947 = vmatprep.mubr.bf16.mxu0 0
    %3948 = vmatmul.mubr.bf16.gmra.mrb[0].mxu0 %v3867
    %v3949 = vpop.f32.mrb[0].mxu0
    %v3950 = vadd.f32 %v3635, %v3949
    %v3951 = vpop.f32.mrb[0].mxu0
    %v3952 = vpop.f32.mrb[0].mxu0
    %v3953 = vadd.f32 %v3635, %v3952
    %v3954 = vpop.f32.mrb[0].mxu0
    %3955 = vmatprep.mubr.bf16.mxu0 0
    %3956 = vmatmul.mubr.bf16.gmra.mrb[0].mxu0 %v3870
    %v3957 = vpop.f32.mrb[0].mxu0
    %v3958 = vadd.f32 %v3635, %v3957
    %v3959 = vpop.f32.mrb[0].mxu0
    %v3960 = vpop.f32.mrb[0].mxu0
    %v3961 = vadd.f32 %v3635, %v3960
    %v3962 = vpop.f32.mrb[0].mxu0
    %3963 = vmatprep.mubr.bf16.mxu0 0
    %3964 = vmatmul.mubr.bf16.gmra.mrb[0].mxu0 %v3873
    %v3965 = vpop.f32.mrb[0].mxu0
    %v3966 = vadd.f32 %v3635, %v3965
    %v3967 = vpop.f32.mrb[0].mxu0
    %v3968 = vpop.f32.mrb[0].mxu0
    %v3969 = vadd.f32 %v3635, %v3968
    %v3970 = vpop.f32.mrb[0].mxu0
    %3971 = vdwg.mxu0
    %v3972 = vsub.f32 0.0, %v3910
    %v3973 = vsub.f32 0.0, %v3913
    %v3974 = vsub.f32 0.0, %v3918
    %v3975 = vsub.f32 0.0, %v3921
    %v3976 = vsub.f32 0.0, %v3926
    %v3977 = vsub.f32 0.0, %v3929
    %v3978 = vsub.f32 0.0, %v3934
    %v3979 = vsub.f32 0.0, %v3937
    %v3980 = vsub.f32 0.0, %v3942
    %v3981 = vsub.f32 0.0, %v3945
    %v3982 = vsub.f32 0.0, %v3950
    %v3983 = vsub.f32 0.0, %v3953
    %v3984 = vsub.f32 0.0, %v3958
    %v3985 = vsub.f32 0.0, %v3961
    %v3986 = vsub.f32 0.0, %v3966
    %v3987 = vsub.f32 0.0, %v3969
    %v3988 = vmul.f32 %v3972, 1.442695
    %v3989 = vpow.pop %v3988
    %v3990 = vmul.f32 %v3973, 1.442695
    %v3991 = vpow.pop %v3990
    %v3992 = vmul.f32 %v3974, 1.442695
    %v3993 = vpow.pop %v3992
    %v3994 = vmul.f32 %v3975, 1.442695
    %v3995 = vpow.pop %v3994
    %v3996 = vmul.f32 %v3976, 1.442695
    %v3997 = vpow.pop %v3996
    %v3998 = vmul.f32 %v3977, 1.442695
    %v3999 = vpow.pop %v3998
    %v4000 = vmul.f32 %v3978, 1.442695
    %v4001 = vpow.pop %v4000
    %v4002 = vmul.f32 %v3979, 1.442695
    %v4003 = vpow.pop %v4002
    %v4004 = vmul.f32 %v3980, 1.442695
    %v4005 = vpow.pop %v4004
    %v4006 = vmul.f32 %v3981, 1.442695
    %v4007 = vpow.pop %v4006
    %v4008 = vmul.f32 %v3982, 1.442695
    %v4009 = vpow.pop %v4008
    %v4010 = vmul.f32 %v3983, 1.442695
    %v4011 = vpow.pop %v4010
    %v4012 = vmul.f32 %v3984, 1.442695
    %v4013 = vpow.pop %v4012
    %v4014 = vmul.f32 %v3985, 1.442695
    %v4015 = vpow.pop %v4014
    %v4016 = vmul.f32 %v3986, 1.442695
    %v4017 = vpow.pop %v4016
    %v4018 = vmul.f32 %v3987, 1.442695
    %v4019 = vpow.pop %v4018
    %v4020 = vadd.f32 %v3989, 1.0
    %v4021 = vadd.f32 %v3991, 1.0
    %v4022 = vadd.f32 %v3993, 1.0
    %v4023 = vadd.f32 %v3995, 1.0
    %v4024 = vadd.f32 %v3997, 1.0
    %v4025 = vadd.f32 %v3999, 1.0
    %v4026 = vadd.f32 %v4001, 1.0
    %v4027 = vadd.f32 %v4003, 1.0
    %v4028 = vadd.f32 %v4005, 1.0
    %v4029 = vadd.f32 %v4007, 1.0
    %v4030 = vadd.f32 %v4009, 1.0
    %v4031 = vadd.f32 %v4011, 1.0
    %v4032 = vadd.f32 %v4013, 1.0
    %v4033 = vadd.f32 %v4015, 1.0
    %v4034 = vadd.f32 %v4017, 1.0
    %v4035 = vadd.f32 %v4019, 1.0
    %v4036 = vrcp.pop %v4020
    %v4037 = vrcp.pop %v4021
    %v4038 = vrcp.pop %v4022
    %v4039 = vrcp.pop %v4023
    %v4040 = vrcp.pop %v4024
    %v4041 = vrcp.pop %v4025
    %v4042 = vrcp.pop %v4026
    %v4043 = vrcp.pop %v4027
    %v4044 = vrcp.pop %v4028
    %v4045 = vrcp.pop %v4029
    %v4046 = vrcp.pop %v4030
    %v4047 = vrcp.pop %v4031
    %v4048 = vrcp.pop %v4032
    %v4049 = vrcp.pop %v4033
    %v4050 = vrcp.pop %v4034
    %v4051 = vrcp.pop %v4035
    %v4052 = vpack.c.bf16 %v4037, %v4036
    %v4053 = vpack.c.bf16 %v4039, %v4038
    %v4054 = vpack.c.bf16 %v4041, %v4040
    %v4055 = vpack.c.bf16 %v4043, %v4042
    %v4056 = vpack.c.bf16 %v4045, %v4044
    %v4057 = vpack.c.bf16 %v4047, %v4046
    %v4058 = vpack.c.bf16 %v4049, %v4048
    %v4059 = vpack.c.bf16 %v4051, %v4050
    %v4060 = vld [vmem:[%s17] sm:$0xf]
    %v4061 = vld [vmem:[%s18] sm:$0x1]
    %v4063 = vlaneseq
    %v4064 = vshrl.u32 %v4063, 7
    %v4065 = vsub.s32 0, %v4064
    %v4066 = vrot.slane %v4061, %v4065
    %v4069 = vsel %vm3637, %v3843, 0
    %v4072 = vsel %vm3637, %v3844, 0
    %v4075 = vsel %vm3637, %v3845, 0
    %v4078 = vsel %vm3637, %v3846, 0
    %v4081 = vsel %vm3637, %v3847, 0
    %v4084 = vsel %vm3637, %v3848, 0
    %v4087 = vsel %vm3637, %v3849, 0
    %v4090 = vsel %vm3637, %v3850, 0
    %v4093 = vsel %vm3662, %v4060, 0
    %4095 = vmatprep.subr.bf16.mxu0 0
    %4096 = vmatpush1.bf16.msra.mxu0 %v4093
    %4097 = vmatprep.subr.bf16.mxu0 0
    %4098 = vmatpush1.bf16.msra.mxu0 0
    %4099 = vmatprep.subr.bf16.mxu0 0
    %4100 = vmatpush1.bf16.msra.mxu0 0
    %4101 = vmatprep.subr.bf16.mxu0 0
    %4102 = vmatpush1.bf16.msra.mxu0 0
    %4103 = vmatprep.subr.bf16.mxu0 0
    %4104 = vmatpush1.bf16.msra.mxu0 0
    %4105 = vmatprep.subr.bf16.mxu0 0
    %4106 = vmatpush1.bf16.msra.mxu0 0
    %4107 = vmatprep.subr.bf16.mxu0 0
    %4108 = vmatpush1.bf16.msra.mxu0 0
    %4109 = vmatprep.subr.bf16.mxu0 0
    %4110 = vmatpush1.bf16.msra.mxu0 0
    %4111 = vmatprep.subr.bf16.mxu0 0
    %4112 = vmatpush1.bf16.msra.mxu0 0
    %4113 = vmatprep.subr.bf16.mxu0 0
    %4114 = vmatpush1.bf16.msra.mxu0 0
    %4115 = vmatprep.subr.bf16.mxu0 0
    %4116 = vmatpush1.bf16.msra.mxu0 0
    %4117 = vmatprep.subr.bf16.mxu0 0
    %4118 = vmatpush1.bf16.msra.mxu0 0
    %4119 = vmatprep.subr.bf16.mxu0 0
    %4120 = vmatpush1.bf16.msra.mxu0 0
    %4121 = vmatprep.subr.bf16.mxu0 0
    %4122 = vmatpush1.bf16.msra.mxu0 0
    %4123 = vmatprep.subr.bf16.mxu0 0
    %4124 = vmatpush1.bf16.msra.mxu0 0
    %4125 = vmatprep.subr.bf16.mxu0 0
    %4126 = vmatpush1.bf16.msra.mxu0 0
    %4127 = vmatprep.mubr.bf16.mxu0 0
    %4128 = vmatmul.mubr.bf16.gmra.mrb[0].mxu0 %v4069
    %v4129 = vpop.f32.mrb[0].mxu0
    %v4130 = vadd.f32 %v4066, %v4129
    %v4131 = vpop.f32.mrb[0].mxu0
    %v4132 = vpop.f32.mrb[0].mxu0
    %v4133 = vadd.f32 %v4066, %v4132
    %v4134 = vpop.f32.mrb[0].mxu0
    %4135 = vmatprep.mubr.bf16.mxu0 0
    %4136 = vmatmul.mubr.bf16.gmra.mrb[0].mxu0 %v4072
    %v4137 = vpop.f32.mrb[0].mxu0
    %v4138 = vadd.f32 %v4066, %v4137
    %v4139 = vpop.f32.mrb[0].mxu0
    %v4140 = vpop.f32.mrb[0].mxu0
    %v4141 = vadd.f32 %v4066, %v4140
    %v4142 = vpop.f32.mrb[0].mxu0
    %4143 = vmatprep.mubr.bf16.mxu0 0
    %4144 = vmatmul.mubr.bf16.gmra.mrb[0].mxu0 %v4075
    %v4145 = vpop.f32.mrb[0].mxu0
    %v4146 = vadd.f32 %v4066, %v4145
    %v4147 = vpop.f32.mrb[0].mxu0
    %v4148 = vpop.f32.mrb[0].mxu0
    %v4149 = vadd.f32 %v4066, %v4148
    %v4150 = vpop.f32.mrb[0].mxu0
    %4151 = vmatprep.mubr.bf16.mxu0 0
    %4152 = vmatmul.mubr.bf16.gmra.mrb[0].mxu0 %v4078
    %v4153 = vpop.f32.mrb[0].mxu0
    %v4154 = vadd.f32 %v4066, %v4153
    %v4155 = vpop.f32.mrb[0].mxu0
    %v4156 = vpop.f32.mrb[0].mxu0
    %v4157 = vadd.f32 %v4066, %v4156
    %v4158 = vpop.f32.mrb[0].mxu0
    %4159 = vmatprep.mubr.bf16.mxu0 0
    %4160 = vmatmul.mubr.bf16.gmra.mrb[0].mxu0 %v4081
    %v4161 = vpop.f32.mrb[0].mxu0
    %v4162 = vadd.f32 %v4066, %v4161
    %v4163 = vpop.f32.mrb[0].mxu0
    %v4164 = vpop.f32.mrb[0].mxu0
    %v4165 = vadd.f32 %v4066, %v4164
    %v4166 = vpop.f32.mrb[0].mxu0
    %4167 = vmatprep.mubr.bf16.mxu0 0
    %4168 = vmatmul.mubr.bf16.gmra.mrb[0].mxu0 %v4084
    %v4169 = vpop.f32.mrb[0].mxu0
    %v4170 = vadd.f32 %v4066, %v4169
    %v4171 = vpop.f32.mrb[0].mxu0
    %v4172 = vpop.f32.mrb[0].mxu0
    %v4173 = vadd.f32 %v4066, %v4172
    %v4174 = vpop.f32.mrb[0].mxu0
    %4175 = vmatprep.mubr.bf16.mxu0 0
    %4176 = vmatmul.mubr.bf16.gmra.mrb[0].mxu0 %v4087
    %v4177 = vpop.f32.mrb[0].mxu0
    %v4178 = vadd.f32 %v4066, %v4177
    %v4179 = vpop.f32.mrb[0].mxu0
    %v4180 = vpop.f32.mrb[0].mxu0
    %v4181 = vadd.f32 %v4066, %v4180
    %v4182 = vpop.f32.mrb[0].mxu0
    %4183 = vmatprep.mubr.bf16.mxu0 0
    %4184 = vmatmul.mubr.bf16.gmra.mrb[0].mxu0 %v4090
    %v4185 = vpop.f32.mrb[0].mxu0
    %v4186 = vadd.f32 %v4066, %v4185
    %v4187 = vpop.f32.mrb[0].mxu0
    %v4188 = vpop.f32.mrb[0].mxu0
    %v4189 = vadd.f32 %v4066, %v4188
    %v4190 = vpop.f32.mrb[0].mxu0
    %4191 = vdwg.mxu0
    %v4192 = vsub.f32 0.0, %v4130
    %v4193 = vsub.f32 0.0, %v4133
    %v4194 = vsub.f32 0.0, %v4138
    %v4195 = vsub.f32 0.0, %v4141
    %v4196 = vsub.f32 0.0, %v4146
    %v4197 = vsub.f32 0.0, %v4149
    %v4198 = vsub.f32 0.0, %v4154
    %v4199 = vsub.f32 0.0, %v4157
    %v4200 = vsub.f32 0.0, %v4162
    %v4201 = vsub.f32 0.0, %v4165
    %v4202 = vsub.f32 0.0, %v4170
    %v4203 = vsub.f32 0.0, %v4173
    %v4204 = vsub.f32 0.0, %v4178
    %v4205 = vsub.f32 0.0, %v4181
    %v4206 = vsub.f32 0.0, %v4186
    %v4207 = vsub.f32 0.0, %v4189
    %v4208 = vmul.f32 %v4192, 1.442695
    %v4209 = vpow.pop %v4208
    %v4210 = vmul.f32 %v4193, 1.442695
    %v4211 = vpow.pop %v4210
    %v4212 = vmul.f32 %v4194, 1.442695
    %v4213 = vpow.pop %v4212
    %v4214 = vmul.f32 %v4195, 1.442695
    %v4215 = vpow.pop %v4214
    %v4216 = vmul.f32 %v4196, 1.442695
    %v4217 = vpow.pop %v4216
    %v4218 = vmul.f32 %v4197, 1.442695
    %v4219 = vpow.pop %v4218
    %v4220 = vmul.f32 %v4198, 1.442695
    %v4221 = vpow.pop %v4220
    %v4222 = vmul.f32 %v4199, 1.442695
    %v4223 = vpow.pop %v4222
    %v4224 = vmul.f32 %v4200, 1.442695
    %v4225 = vpow.pop %v4224
    %v4226 = vmul.f32 %v4201, 1.442695
    %v4227 = vpow.pop %v4226
    %v4228 = vmul.f32 %v4202, 1.442695
    %v4229 = vpow.pop %v4228
    %v4230 = vmul.f32 %v4203, 1.442695
    %v4231 = vpow.pop %v4230
    %v4232 = vmul.f32 %v4204, 1.442695
    %v4233 = vpow.pop %v4232
    %v4234 = vmul.f32 %v4205, 1.442695
    %v4235 = vpow.pop %v4234
    %v4236 = vmul.f32 %v4206, 1.442695
    %v4237 = vpow.pop %v4236
    %v4238 = vmul.f32 %v4207, 1.442695
    %v4239 = vpow.pop %v4238
    %v4240 = vadd.f32 %v4209, 1.0
    %v4241 = vadd.f32 %v4211, 1.0
    %v4242 = vadd.f32 %v4213, 1.0
    %v4243 = vadd.f32 %v4215, 1.0
    %v4244 = vadd.f32 %v4217, 1.0
    %v4245 = vadd.f32 %v4219, 1.0
    %v4246 = vadd.f32 %v4221, 1.0
    %v4247 = vadd.f32 %v4223, 1.0
    %v4248 = vadd.f32 %v4225, 1.0
    %v4249 = vadd.f32 %v4227, 1.0
    %v4250 = vadd.f32 %v4229, 1.0
    %v4251 = vadd.f32 %v4231, 1.0
    %v4252 = vadd.f32 %v4233, 1.0
    %v4253 = vadd.f32 %v4235, 1.0
    %v4254 = vadd.f32 %v4237, 1.0
    %v4255 = vadd.f32 %v4239, 1.0
    %v4256 = vrcp.pop %v4240
    %v4257 = vrcp.pop %v4241
    %v4258 = vrcp.pop %v4242
    %v4259 = vrcp.pop %v4243
    %v4260 = vrcp.pop %v4244
    %v4261 = vrcp.pop %v4245
    %v4262 = vrcp.pop %v4246
    %v4263 = vrcp.pop %v4247
    %v4264 = vrcp.pop %v4248
    %v4265 = vrcp.pop %v4249
    %v4266 = vrcp.pop %v4250
    %v4267 = vrcp.pop %v4251
    %v4268 = vrcp.pop %v4252
    %v4269 = vrcp.pop %v4253
    %v4270 = vrcp.pop %v4254
    %v4271 = vrcp.pop %v4255
    %v4272 = vpack.c.bf16 %v4257, %v4256
    %v4273 = vpack.c.bf16 %v4259, %v4258
    %v4274 = vpack.c.bf16 %v4261, %v4260
    %v4275 = vpack.c.bf16 %v4263, %v4262
    %v4276 = vpack.c.bf16 %v4265, %v4264
    %v4277 = vpack.c.bf16 %v4267, %v4266
    %v4278 = vpack.c.bf16 %v4269, %v4268
    %v4279 = vpack.c.bf16 %v4271, %v4270
    %v4281 = vsel %vm3637, %v4052, 0
    %v4284 = vsel %vm3637, %v4053, 0
    %v4287 = vsel %vm3637, %v4054, 0
    %v4290 = vsel %vm3637, %v4055, 0
    %v4293 = vsel %vm3637, %v4056, 0
    %v4296 = vsel %vm3637, %v4057, 0
    %v4299 = vsel %vm3637, %v4058, 0
    %v4302 = vsel %vm3637, %v4059, 0
    %4304 = vmatprep.subr.bf16.mxu0 0
    %4305 = vmatpush1.bf16.msra.mxu0 %v4093
    %4306 = vmatprep.subr.bf16.mxu0 0
    %4307 = vmatpush1.bf16.msra.mxu0 0
    %4308 = vmatprep.subr.bf16.mxu0 0
    %4309 = vmatpush1.bf16.msra.mxu0 0
    %4310 = vmatprep.subr.bf16.mxu0 0
    %4311 = vmatpush1.bf16.msra.mxu0 0
    %4312 = vmatprep.subr.bf16.mxu0 0
    %4313 = vmatpush1.bf16.msra.mxu0 0
    %4314 = vmatprep.subr.bf16.mxu0 0
    %4315 = vmatpush1.bf16.msra.mxu0 0
    %4316 = vmatprep.subr.bf16.mxu0 0
    %4317 = vmatpush1.bf16.msra.mxu0 0
    %4318 = vmatprep.subr.bf16.mxu0 0
    %4319 = vmatpush1.bf16.msra.mxu0 0
    %4320 = vmatprep.subr.bf16.mxu0 0
    %4321 = vmatpush1.bf16.msra.mxu0 0
    %4322 = vmatprep.subr.bf16.mxu0 0
    %4323 = vmatpush1.bf16.msra.mxu0 0
    %4324 = vmatprep.subr.bf16.mxu0 0
    %4325 = vmatpush1.bf16.msra.mxu0 0
    %4326 = vmatprep.subr.bf16.mxu0 0
    %4327 = vmatpush1.bf16.msra.mxu0 0
    %4328 = vmatprep.subr.bf16.mxu0 0
    %4329 = vmatpush1.bf16.msra.mxu0 0
    %4330 = vmatprep.subr.bf16.mxu0 0
    %4331 = vmatpush1.bf16.msra.mxu0 0
    %4332 = vmatprep.subr.bf16.mxu0 0
    %4333 = vmatpush1.bf16.msra.mxu0 0
    %4334 = vmatprep.subr.bf16.mxu0 0
    %4335 = vmatpush1.bf16.msra.mxu0 0
    %4336 = vmatprep.mubr.bf16.mxu0 0
    %4337 = vmatmul.mubr.bf16.gmra.mrb[0].mxu0 %v4281
    %v4338 = vpop.f32.mrb[0].mxu0
    %v4339 = vadd.f32 %v4066, %v4338
    %v4340 = vpop.f32.mrb[0].mxu0
    %v4341 = vpop.f32.mrb[0].mxu0
    %v4342 = vadd.f32 %v4066, %v4341
    %v4343 = vpop.f32.mrb[0].mxu0
    %4344 = vmatprep.mubr.bf16.mxu0 0
    %4345 = vmatmul.mubr.bf16.gmra.mrb[0].mxu0 %v4284
    %v4346 = vpop.f32.mrb[0].mxu0
    %v4347 = vadd.f32 %v4066, %v4346
    %v4348 = vpop.f32.mrb[0].mxu0
    %v4349 = vpop.f32.mrb[0].mxu0
    %v4350 = vadd.f32 %v4066, %v4349
    %v4351 = vpop.f32.mrb[0].mxu0
    %4352 = vmatprep.mubr.bf16.mxu0 0
    %4353 = vmatmul.mubr.bf16.gmra.mrb[0].mxu0 %v4287
    %v4354 = vpop.f32.mrb[0].mxu0
    %v4355 = vadd.f32 %v4066, %v4354
    %v4356 = vpop.f32.mrb[0].mxu0
    %v4357 = vpop.f32.mrb[0].mxu0
    %v4358 = vadd.f32 %v4066, %v4357
    %v4359 = vpop.f32.mrb[0].mxu0
    %4360 = vmatprep.mubr.bf16.mxu0 0
    %4361 = vmatmul.mubr.bf16.gmra.mrb[0].mxu0 %v4290
    %v4362 = vpop.f32.mrb[0].mxu0
    %v4363 = vadd.f32 %v4066, %v4362
    %v4364 = vpop.f32.mrb[0].mxu0
    %v4365 = vpop.f32.mrb[0].mxu0
    %v4366 = vadd.f32 %v4066, %v4365
    %v4367 = vpop.f32.mrb[0].mxu0
    %4368 = vmatprep.mubr.bf16.mxu0 0
    %4369 = vmatmul.mubr.bf16.gmra.mrb[0].mxu0 %v4293
    %v4370 = vpop.f32.mrb[0].mxu0
    %v4371 = vadd.f32 %v4066, %v4370
    %v4372 = vpop.f32.mrb[0].mxu0
    %v4373 = vpop.f32.mrb[0].mxu0
    %v4374 = vadd.f32 %v4066, %v4373
    %v4375 = vpop.f32.mrb[0].mxu0
    %4376 = vmatprep.mubr.bf16.mxu0 0
    %4377 = vmatmul.mubr.bf16.gmra.mrb[0].mxu0 %v4296
    %v4378 = vpop.f32.mrb[0].mxu0
    %v4379 = vadd.f32 %v4066, %v4378
    %v4380 = vpop.f32.mrb[0].mxu0
    %v4381 = vpop.f32.mrb[0].mxu0
    %v4382 = vadd.f32 %v4066, %v4381
    %v4383 = vpop.f32.mrb[0].mxu0
    %4384 = vmatprep.mubr.bf16.mxu0 0
    %4385 = vmatmul.mubr.bf16.gmra.mrb[0].mxu0 %v4299
    %v4386 = vpop.f32.mrb[0].mxu0
    %v4387 = vadd.f32 %v4066, %v4386
    %v4388 = vpop.f32.mrb[0].mxu0
    %v4389 = vpop.f32.mrb[0].mxu0
    %v4390 = vadd.f32 %v4066, %v4389
    %v4391 = vpop.f32.mrb[0].mxu0
    %4392 = vmatprep.mubr.bf16.mxu0 0
    %4393 = vmatmul.mubr.bf16.gmra.mrb[0].mxu0 %v4302
    %v4394 = vpop.f32.mrb[0].mxu0
    %v4395 = vadd.f32 %v4066, %v4394
    %v4396 = vpop.f32.mrb[0].mxu0
    %v4397 = vpop.f32.mrb[0].mxu0
    %v4398 = vadd.f32 %v4066, %v4397
    %v4399 = vpop.f32.mrb[0].mxu0
    %4400 = vdwg.mxu0
    %v4401 = vsub.f32 0.0, %v4339
    %v4402 = vsub.f32 0.0, %v4342
    %v4403 = vsub.f32 0.0, %v4347
    %v4404 = vsub.f32 0.0, %v4350
    %v4405 = vsub.f32 0.0, %v4355
    %v4406 = vsub.f32 0.0, %v4358
    %v4407 = vsub.f32 0.0, %v4363
    %v4408 = vsub.f32 0.0, %v4366
    %v4409 = vsub.f32 0.0, %v4371
    %v4410 = vsub.f32 0.0, %v4374
    %v4411 = vsub.f32 0.0, %v4379
    %v4412 = vsub.f32 0.0, %v4382
    %v4413 = vsub.f32 0.0, %v4387
    %v4414 = vsub.f32 0.0, %v4390
    %v4415 = vsub.f32 0.0, %v4395
    %v4416 = vsub.f32 0.0, %v4398
    %v4417 = vmul.f32 %v4401, 1.442695
    %v4418 = vpow.pop %v4417
    %v4419 = vmul.f32 %v4402, 1.442695
    %v4420 = vpow.pop %v4419
    %v4421 = vmul.f32 %v4403, 1.442695
    %v4422 = vpow.pop %v4421
    %v4423 = vmul.f32 %v4404, 1.442695
    %v4424 = vpow.pop %v4423
    %v4425 = vmul.f32 %v4405, 1.442695
    %v4426 = vpow.pop %v4425
    %v4427 = vmul.f32 %v4406, 1.442695
    %v4428 = vpow.pop %v4427
    %v4429 = vmul.f32 %v4407, 1.442695
    %v4430 = vpow.pop %v4429
    %v4431 = vmul.f32 %v4408, 1.442695
    %v4432 = vpow.pop %v4431
    %v4433 = vmul.f32 %v4409, 1.442695
    %v4434 = vpow.pop %v4433
    %v4435 = vmul.f32 %v4410, 1.442695
    %v4436 = vpow.pop %v4435
    %v4437 = vmul.f32 %v4411, 1.442695
    %v4438 = vpow.pop %v4437
    %v4439 = vmul.f32 %v4412, 1.442695
    %v4440 = vpow.pop %v4439
    %v4441 = vmul.f32 %v4413, 1.442695
    %v4442 = vpow.pop %v4441
    %v4443 = vmul.f32 %v4414, 1.442695
    %v4444 = vpow.pop %v4443
    %v4445 = vmul.f32 %v4415, 1.442695
    %v4446 = vpow.pop %v4445
    %v4447 = vmul.f32 %v4416, 1.442695
    %v4448 = vpow.pop %v4447
    %v4449 = vadd.f32 %v4418, 1.0
    %v4450 = vadd.f32 %v4420, 1.0
    %v4451 = vadd.f32 %v4422, 1.0
    %v4452 = vadd.f32 %v4424, 1.0
    %v4453 = vadd.f32 %v4426, 1.0
    %v4454 = vadd.f32 %v4428, 1.0
    %v4455 = vadd.f32 %v4430, 1.0
    %v4456 = vadd.f32 %v4432, 1.0
    %v4457 = vadd.f32 %v4434, 1.0
    %v4458 = vadd.f32 %v4436, 1.0
    %v4459 = vadd.f32 %v4438, 1.0
    %v4460 = vadd.f32 %v4440, 1.0
    %v4461 = vadd.f32 %v4442, 1.0
    %v4462 = vadd.f32 %v4444, 1.0
    %v4463 = vadd.f32 %v4446, 1.0
    %v4464 = vadd.f32 %v4448, 1.0
    %v4465 = vrcp.pop %v4449
    %v4466 = vrcp.pop %v4450
    %v4467 = vrcp.pop %v4451
    %v4468 = vrcp.pop %v4452
    %v4469 = vrcp.pop %v4453
    %v4470 = vrcp.pop %v4454
    %v4471 = vrcp.pop %v4455
    %v4472 = vrcp.pop %v4456
    %v4473 = vrcp.pop %v4457
    %v4474 = vrcp.pop %v4458
    %v4475 = vrcp.pop %v4459
    %v4476 = vrcp.pop %v4460
    %v4477 = vrcp.pop %v4461
    %v4478 = vrcp.pop %v4462
    %v4479 = vrcp.pop %v4463
    %v4480 = vrcp.pop %v4464
    %v4481 = vpack.c.bf16 %v4466, %v4465
    %v4482 = vpack.c.bf16 %v4468, %v4467
    %v4483 = vpack.c.bf16 %v4470, %v4469
    %v4484 = vpack.c.bf16 %v4472, %v4471
    %v4485 = vpack.c.bf16 %v4474, %v4473
    %v4486 = vpack.c.bf16 %v4476, %v4475
    %v4487 = vpack.c.bf16 %v4478, %v4477
    %v4488 = vpack.c.bf16 %v4480, %v4479
    %v4489 = vld [vmem:[%s19] sm:$0x3]
    %v4491 = vsel %vm3637, %v4489, 0
    %v4494 = vsel %vm3637, %v4272, 0
    %v4497 = vsel %vm3637, %v4273, 0
    %v4500 = vsel %vm3637, %v4274, 0
    %v4503 = vsel %vm3637, %v4275, 0
    %v4506 = vsel %vm3637, %v4276, 0
    %v4509 = vsel %vm3637, %v4277, 0
    %v4512 = vsel %vm3637, %v4278, 0
    %v4515 = vsel %vm3637, %v4279, 0
    %4517 = vmatprep.subr.bf16.mxu0 0
    %4518 = vmatpush1.bf16.xpose.msra.mxu0 %v4494
    %4519 = vmatprep.subr.bf16.mxu0 0
    %4520 = vmatpush1.bf16.xpose.msra.mxu0 %v4497
    %4521 = vmatprep.subr.bf16.mxu0 0
    %4522 = vmatpush1.bf16.xpose.msra.mxu0 %v4500
    %4523 = vmatprep.subr.bf16.mxu0 0
    %4524 = vmatpush1.bf16.xpose.msra.mxu0 %v4503
    %4525 = vmatprep.subr.bf16.mxu0 0
    %4526 = vmatpush1.bf16.xpose.msra.mxu0 %v4506
    %4527 = vmatprep.subr.bf16.mxu0 0
    %4528 = vmatpush1.bf16.xpose.msra.mxu0 %v4509
    %4529 = vmatprep.subr.bf16.mxu0 0
    %4530 = vmatpush1.bf16.xpose.msra.mxu0 %v4512
    %4531 = vmatprep.subr.bf16.mxu0 0
    %4532 = vmatpush1.bf16.xpose.msra.mxu0 %v4515
    %4533 = vmatprep.subr.bf16.mxu0 0
    %4534 = vmatpush1.bf16.xpose.msra.mxu0 0
    %4535 = vmatprep.subr.bf16.mxu0 0
    %4536 = vmatpush1.bf16.xpose.msra.mxu0 0
    %4537 = vmatprep.subr.bf16.mxu0 0
    %4538 = vmatpush1.bf16.xpose.msra.mxu0 0
    %4539 = vmatprep.subr.bf16.mxu0 0
    %4540 = vmatpush1.bf16.xpose.msra.mxu0 0
    %4541 = vmatprep.subr.bf16.mxu0 0
    %4542 = vmatpush1.bf16.xpose.msra.mxu0 0
    %4543 = vmatprep.subr.bf16.mxu0 0
    %4544 = vmatpush1.bf16.xpose.msra.mxu0 0
    %4545 = vmatprep.subr.bf16.mxu0 0
    %4546 = vmatpush1.bf16.xpose.msra.mxu0 0
    %4547 = vmatprep.subr.bf16.mxu0 0
    %4548 = vmatpush1.bf16.xpose.msra.mxu0 0
    %4549 = vmatprep.mubr.bf16.mxu0 0
    %4550 = vmatmul.mubr.bf16.gmra.mrb[0].mxu0 %v4491
    %v4551 = vpop.f32.mrb[0].mxu0
    %v4552 = vadd.f32 0.0, %v4551
    %v4553 = vpop.f32.mrb[0].mxu0
    %v4554 = vpop.f32.mrb[0].mxu0
    %v4555 = vpop.f32.mrb[0].mxu0
    %4556 = vdwg.mxu0
    %s4557 = sld [smem:[#allocation12]]
    %v4558 = vstv %s4557
    %v4559 = vadd.f32 %v4552, %v4558
    %s4560 = sld [smem:[#allocation12 + $0x1]]
    %v4561 = vstv %s4560
    %v4562 = vadd.f32 %v4552, %v4561
    %s4563 = sld [smem:[#allocation12 + $0x2]]
    %v4564 = vstv %s4563
    %v4565 = vadd.f32 %v4552, %v4564
    %v4567 = vrot.slane %v4562, 1
    %v4569 = vmax.f32 %v4559, %v4567
    %v4571 = vrot.slane %v4565, 2
    %v4573 = vmax.f32 %v4569, %v4571
    %v4574 = vsub.f32 %v4559, %v4573
    %v4575 = vmul.f32 %v4574, 1.442695
    %v4576 = vpow.pop %v4575
    %v4578 = vrot.slane %v4573, 7
    %v4580 = vsub.f32 %v4562, %v4578
    %v4581 = vmul.f32 %v4580, 1.442695
    %v4582 = vpow.pop %v4581
    %v4583 = vrot.slane %v4573, 6
    %v4585 = vsub.f32 %v4565, %v4583
    %v4586 = vmul.f32 %v4585, 1.442695
    %v4587 = vpow.pop %v4586
    %v4589 = vrot.slane %v4582, 1
    %v4591 = vadd.f32 %v4576, %v4589
    %v4593 = vrot.slane %v4587, 2
    %v4595 = vadd.f32 %v4591, %v4593
    %v4596 = vrcp.pop %v4595
    %v4598 = vrot.slane %v4596, 6
    %v4600 = vmul.f32 %v4587, %v4598
    %v4603 = vunpack.c.l.s4 1966171168
    %v4604 = vunpack.c.0.s8 %v4603
    %v4605 = vlaneseq
    %v4606 = vshrl.u32 %v4605, 7
    %v4607 = vsub.s32 %v4604, %v4606
    %v4608 = vrot.slane %v4600, %v4607
    %v4610 = vunpack.c.l.s4 1966171168
    %v4611 = vunpack.c.0.s8 %v4610
    %v4612 = vlaneseq
    %v4613 = vshrl.u32 %v4612, 7
    %v4614 = vsub.s32 %v4611, %v4613
    %v4615 = vrot.slane %v4608, %v4614
    %v4616 = vcombine.high %v4615, %v4615
    %v4618 = vlaneseq
    %vm4619 = vcmp.ge.s32.totalorder %v4618, 0
    %vm4620 = vcmp.lt.s32.totalorder %v4618, 128
    %vm4621 = vmand %vm4619, %vm4620
    %4622 = vst.msk [vmem:[#allocation13] sm:$0x1] %vm4621, %v4616
    %v4623 = vld [vmem:[%s19] sm:$0x3]
    %v4625 = vsel %vm3637, %v4623, 0
    %v4628 = vsel %vm3637, %v4481, 0
    %v4631 = vsel %vm3637, %v4482, 0
    %v4634 = vsel %vm3637, %v4483, 0
    %v4637 = vsel %vm3637, %v4484, 0
    %v4640 = vsel %vm3637, %v4485, 0
    %v4643 = vsel %vm3637, %v4486, 0
    %v4646 = vsel %vm3637, %v4487, 0
    %v4649 = vsel %vm3637, %v4488, 0
    %4651 = vmatprep.subr.bf16.mxu0 0
    %4652 = vmatpush1.bf16.xpose.msra.mxu0 %v4628
    %4653 = vmatprep.subr.bf16.mxu0 0
    %4654 = vmatpush1.bf16.xpose.msra.mxu0 %v4631
    %4655 = vmatprep.subr.bf16.mxu0 0
    %4656 = vmatpush1.bf16.xpose.msra.mxu0 %v4634
    %4657 = vmatprep.subr.bf16.mxu0 0
    %4658 = vmatpush1.bf16.xpose.msra.mxu0 %v4637
    %4659 = vmatprep.subr.bf16.mxu0 0
    %4660 = vmatpush1.bf16.xpose.msra.mxu0 %v4640
    %4661 = vmatprep.subr.bf16.mxu0 0
    %4662 = vmatpush1.bf16.xpose.msra.mxu0 %v4643
    %4663 = vmatprep.subr.bf16.mxu0 0
    %4664 = vmatpush1.bf16.xpose.msra.mxu0 %v4646
    %4665 = vmatprep.subr.bf16.mxu0 0
    %4666 = vmatpush1.bf16.xpose.msra.mxu0 %v4649
    %4667 = vmatprep.subr.bf16.mxu0 0
    %4668 = vmatpush1.bf16.xpose.msra.mxu0 0
    %4669 = vmatprep.subr.bf16.mxu0 0
    %4670 = vmatpush1.bf16.xpose.msra.mxu0 0
    %4671 = vmatprep.subr.bf16.mxu0 0
    %4672 = vmatpush1.bf16.xpose.msra.mxu0 0
    %4673 = vmatprep.subr.bf16.mxu0 0
    %4674 = vmatpush1.bf16.xpose.msra.mxu0 0
    %4675 = vmatprep.subr.bf16.mxu0 0
    %4676 = vmatpush1.bf16.xpose.msra.mxu0 0
    %4677 = vmatprep.subr.bf16.mxu0 0
    %4678 = vmatpush1.bf16.xpose.msra.mxu0 0
    %4679 = vmatprep.subr.bf16.mxu0 0
    %4680 = vmatpush1.bf16.xpose.msra.mxu0 0
    %4681 = vmatprep.subr.bf16.mxu0 0
    %4682 = vmatpush1.bf16.xpose.msra.mxu0 0
    %4683 = vmatprep.mubr.bf16.mxu0 0
    %4684 = vmatmul.mubr.bf16.gmra.mrb[0].mxu0 %v4625
    %v4685 = vpop.f32.mrb[0].mxu0
    %v4686 = vadd.f32 0.0, %v4685
    %v4687 = vpop.f32.mrb[0].mxu0
    %v4688 = vpop.f32.mrb[0].mxu0
    %v4689 = vpop.f32.mrb[0].mxu0
    %4690 = vdwg.mxu0
    %s4691 = sld [smem:[#allocation12]]
    %v4692 = vstv %s4691
    %v4693 = vadd.f32 %v4686, %v4692
    %s4694 = sld [smem:[#allocation12 + $0x1]]
    %v4695 = vstv %s4694
    %v4696 = vadd.f32 %v4686, %v4695
    %s4697 = sld [smem:[#allocation12 + $0x2]]
    %v4698 = vstv %s4697
    %v4699 = vadd.f32 %v4686, %v4698
    %v4701 = vrot.slane %v4696, 1
    %v4703 = vmax.f32 %v4693, %v4701
    %v4705 = vrot.slane %v4699, 2
    %v4707 = vmax.f32 %v4703, %v4705
    %v4708 = vsub.f32 %v4693, %v4707
    %v4709 = vmul.f32 %v4708, 1.442695
    %v4710 = vpow.pop %v4709
    %v4712 = vrot.slane %v4707, 7
    %v4714 = vsub.f32 %v4696, %v4712
    %v4715 = vmul.f32 %v4714, 1.442695
    %v4716 = vpow.pop %v4715
    %v4717 = vrot.slane %v4707, 6
    %v4719 = vsub.f32 %v4699, %v4717
    %v4720 = vmul.f32 %v4719, 1.442695
    %v4721 = vpow.pop %v4720
    %v4723 = vrot.slane %v4716, 1
    %v4725 = vadd.f32 %v4710, %v4723
    %v4727 = vrot.slane %v4721, 2
    %v4729 = vadd.f32 %v4725, %v4727
    %v4730 = vrcp.pop %v4729
    %v4732 = vrot.slane %v4730, 6
    %v4734 = vmul.f32 %v4721, %v4732
    %v4737 = vunpack.c.l.s4 1966171168
    %v4738 = vunpack.c.0.s8 %v4737
    %v4739 = vlaneseq
    %v4740 = vshrl.u32 %v4739, 7
    %v4741 = vsub.s32 %v4738, %v4740
    %v4742 = vrot.slane %v4734, %v4741
    %v4744 = vunpack.c.l.s4 1966171168
    %v4745 = vunpack.c.0.s8 %v4744
    %v4746 = vlaneseq
    %v4747 = vshrl.u32 %v4746, 7
    %v4748 = vsub.s32 %v4745, %v4747
    %v4749 = vrot.slane %v4742, %v4748
    %v4750 = vcombine.high %v4749, %v4749
    %4752 = vst.msk [vmem:[#allocation13 + $0x1] sm:$0x1] %vm4621, %v4750
    // Predicated region
    $region110: #{tpu_custom_call.1} parent=1 // pred_check
      _
    $region111: #{tpu_custom_call.1} parent=1 // pred_check_branch
      %4754 = sbr.rel (0) target = $region113
    $region112: #{tpu_custom_call.1} parent=1 // pred_region
      %s4756 = ssub.s32 32, 32
      %4757 = vsyncadd [#allocation4], %s4756
      %s4759 = sshll.u32 [#allocation13], 4
      %s4760 = int_to_ptr.vmem [resolvable:$true] %s4759
      %4762 = dma.vmem_to_hbm [thread:$0]  %s4760, 32, %s21, [#allocation4]
    $region113: #{tpu_custom_call.1} parent=1 // pred_fallthru
      _
    // Predicated region
    $region114: #{tpu_custom_call.1} parent=1 // pred_check
      _
    $region115: #{tpu_custom_call.1} parent=1 // pred_check_branch
      %4764 = sbr.rel (0) target = $region117
    $region116: #{tpu_custom_call.1} parent=1 // pred_region
      %4765 = dma.done [#allocation4], 32
    $region117: #{tpu_custom_call.1} parent=1 // pred_fallthru
      _
    %4766 = vsyncpa [#allocation3], 1
    %4767 = vsyncpa [#allocation7], 1
    %4768 = vsyncpa [#allocation10], 1
    %4769 = vsyncpa [#allocation4], 1
    %4770 = vsyncpa [#allocation5], 1

</llo_original>
